<compile_context>
chip_gen: v5e
topology: v5e:2x2
jax: 0.10.0
libtpu: 0.0.40
codegen_flags: <defaults>
</compile_context>

<pallas_src>
import functools

import numpy as np
import jax
import jax.numpy as jnp
from jax.experimental import pallas as pl
from jax.experimental.pallas import tpu as pltpu


def _round_up(x, m):
    return ((x + m - 1) // m) * m


_VMEM_LIMIT_CACHE = [None]


def _vmem_limit():
    """Derive the scoped-VMEM budget from the actual chip (v5e/v6e 128MiB,
    v7x 64MiB); fall back to a conservative 48MiB if the query fails."""
    if _VMEM_LIMIT_CACHE[0] is None:
        try:
            cap = int(pltpu.get_tpu_info().vmem_capacity_bytes)
        except Exception:
            cap = 64 * 1024 * 1024
        _VMEM_LIMIT_CACHE[0] = int(min(cap * 3 // 4, 100 * 1024 * 1024))
    return _VMEM_LIMIT_CACHE[0]


def _mosaic_params(sem):
    return pltpu.CompilerParams(dimension_semantics=sem,
                                vmem_limit_bytes=_vmem_limit())


# --------------------------------------------------------------------------
# Generic matmul (bf16 MXU, fused bias/GELU, no HBM copies of A)
# --------------------------------------------------------------------------
def _mm_kernel_single(a_ref, b_ref, bias_ref, o_ref, *, gelu):
    r = jnp.dot(a_ref[...], b_ref[...], preferred_element_type=jnp.float32)
    r = r + bias_ref[...]
    if gelu:
        r = jax.nn.gelu(r, approximate=True)
    o_ref[...] = r.astype(o_ref.dtype)


def _mm_kernel_multi(a_ref, b_ref, bias_ref, o_ref, acc_ref, *, nk, gelu):
    @pl.when(pl.program_id(1) == 0)
    def _():
        acc_ref[...] = jnp.zeros_like(acc_ref)

    acc_ref[...] += jnp.dot(a_ref[...], b_ref[...],
                            preferred_element_type=jnp.float32)

    @pl.when(pl.program_id(1) == nk - 1)
    def _():
        r = acc_ref[...] + bias_ref[...]
        if gelu:
            r = jax.nn.gelu(r, approximate=True)
        o_ref[...] = r.astype(o_ref.dtype)


def _choose_tm(M):
    if M >= 1024:
        return 512
    if M <= 8:
        return M
    # keep >= 2 row chunks so both v7x TensorCores get work even at small M
    return min(512, _round_up(-(-M // 2), 8))


def _choose_tk(K):
    if K <= 512:
        return K
    for t in (512, 384, 256, 128):
        if K % t == 0:
            return t
    return K


def matmul_bias(a, b, bias=None, gelu=False, out_dtype=jnp.bfloat16):
    """out = gelu?(a @ b + bias). A is consumed unpadded (edge blocks masked)."""
    M, K = a.shape
    Kb, N = b.shape
    assert K == Kb
    if bias is None:
        bias = jnp.zeros((N,), jnp.float32)
    bias = bias.reshape(1, N).astype(jnp.float32)
    if a.dtype != jnp.bfloat16:
        a = a.astype(jnp.bfloat16)
    if b.dtype != jnp.bfloat16:
        b = b.astype(jnp.bfloat16)

    TM = _choose_tm(M)
    TK = _choose_tk(K)
    nk = pl.cdiv(K, TK)
    grid_m = pl.cdiv(M, TM)

    if nk == 1:
        kernel = functools.partial(_mm_kernel_single, gelu=gelu)
        scratch = []
    else:
        assert K % TK == 0
        kernel = functools.partial(_mm_kernel_multi, nk=nk, gelu=gelu)
        scratch = [pltpu.VMEM((TM, N), jnp.float32)]

    return pl.pallas_call(
        kernel,
        out_shape=jax.ShapeDtypeStruct((M, N), out_dtype),
        grid_spec=pltpu.PrefetchScalarGridSpec(
            num_scalar_prefetch=0,
            grid=(grid_m, nk),
            in_specs=[pl.BlockSpec((TM, TK), lambda i, k: (i, k)),
                      pl.BlockSpec((TK, N), lambda i, k: (k, 0)),
                      pl.BlockSpec((1, N), lambda i, k: (0, 0))],
            out_specs=pl.BlockSpec((TM, N), lambda i, k: (i, 0)),
            scratch_shapes=scratch),
        compiler_params=_mosaic_params(("parallel", "arbitrary")),
    )(a, b, bias)


# --------------------------------------------------------------------------
# Centered orthonormal DFT operators (host constants, f32)
# --------------------------------------------------------------------------
def _centered_dft(n, inverse):
    eye = np.eye(n)
    shifted = np.fft.ifftshift(eye, axes=0)
    F = (np.fft.ifft if inverse else np.fft.fft)(shifted, axis=0, norm="ortho")
    M = np.fft.fftshift(F, axes=0)            # y = M @ x  (centered, ortho)
    return M.real.astype(np.float32), M.imag.astype(np.float32)


def _box1d(n):
    i = np.arange(n)
    return (np.abs(i[:, None] - i[None, :]) <= 1).astype(np.float32) / 3.0


def build_dft_operators(H, W):
    fhr, fhi = _centered_dft(H, False)
    fwr, fwi = _centered_dft(W, False)
    ihr, ihi = _centered_dft(H, True)
    iwr, iwi = _centered_dft(W, True)
    bh, bw = _box1d(H), _box1d(W)
    asf = lambda m: jnp.asarray(m, jnp.float32)
    return {
        # forward: Y = M_H @ X @ M_W^T  (operators given as (hr, hi, wrT, wiT))
        "fwd": (asf(fhr), asf(fhi), asf(fwr.T), asf(fwi.T)),
        # plain inverse (final IFFT + complex abs)
        "inv": (asf(ihr), asf(ihi), asf(iwr.T), asf(iwi.T)),
        # inverse with the fixed 3x3 (1/9) box prefilter folded in (separable)
        "inv_pre": (asf(bh @ ihr), asf(bh @ ihi),
                    asf((bw @ iwr).T), asf((bw @ iwi).T)),
    }


# --------------------------------------------------------------------------
# Fused 2-D (I)FFT kernels on (B, 2, H, W) real/imag planes
# --------------------------------------------------------------------------
def _complex_dft2(xr, xi, hr, hi, wrT, wiT):
    f32 = jnp.float32
    tr = (jnp.dot(xr, wrT, preferred_element_type=f32) -
          jnp.dot(xi, wiT, preferred_element_type=f32))
    ti = (jnp.dot(xr, wiT, preferred_element_type=f32) +
          jnp.dot(xi, wrT, preferred_element_type=f32))
    yr = (jnp.dot(hr, tr, preferred_element_type=f32) -
          jnp.dot(hi, ti, preferred_element_type=f32))
    yi = (jnp.dot(hi, tr, preferred_element_type=f32) +
          jnp.dot(hr, ti, preferred_element_type=f32))
    return yr, yi


def _ifft2_img_kernel(k_ref, hr_ref, hi_ref, wr_ref, wi_ref, o_ref):
    kr = k_ref[0, 0].astype(jnp.float32)
    ki = k_ref[0, 1].astype(jnp.float32)
    yr, yi = _complex_dft2(kr, ki, hr_ref[...], hi_ref[...],
                           wr_ref[...], wi_ref[...])
    o_ref[0, 0] = yr.astype(o_ref.dtype)
    o_ref[0, 1] = yi.astype(o_ref.dtype)


def _ifft2_abs_kernel(k_ref, hr_ref, hi_ref, wr_ref, wi_ref, o_ref):
    kr = k_ref[0, 0].astype(jnp.float32)
    ki = k_ref[0, 1].astype(jnp.float32)
    yr, yi = _complex_dft2(kr, ki, hr_ref[...], hi_ref[...],
                           wr_ref[...], wi_ref[...])
    o_ref[0] = jnp.sqrt(yr * yr + yi * yi).astype(o_ref.dtype)


def _fft2_dc_kernel(x_ref, kin_ref, m_ref, hr_ref, hi_ref, wr_ref, wi_ref,
                    o_ref):
    xr = x_ref[0, 0].astype(jnp.float32)
    xi = x_ref[0, 1].astype(jnp.float32)
    yr, yi = _complex_dft2(xr, xi, hr_ref[...], hi_ref[...],
                           wr_ref[...], wi_ref[...])
    m = m_ref[...]                       # (1, W) broadcasts over rows
    o_ref[0, 0] = (m * kin_ref[0, 0] + (1.0 - m) * yr).astype(o_ref.dtype)
    o_ref[0, 1] = (m * kin_ref[0, 1] + (1.0 - m) * yi).astype(o_ref.dtype)


def _dft_specs(H, W):
    return [pl.BlockSpec((H, H), lambda b: (0, 0)),
            pl.BlockSpec((H, H), lambda b: (0, 0)),
            pl.BlockSpec((W, W), lambda b: (0, 0)),
            pl.BlockSpec((W, W), lambda b: (0, 0))]


def ifft2_image(k_planes, ops, out_dtype=jnp.bfloat16):
    B, _, H, W = k_planes.shape
    return pl.pallas_call(
        _ifft2_img_kernel,
        out_shape=jax.ShapeDtypeStruct((B, 2, H, W), out_dtype),
        grid_spec=pltpu.PrefetchScalarGridSpec(
            num_scalar_prefetch=0,
            grid=(B,),
            in_specs=[pl.BlockSpec((1, 2, H, W), lambda b: (b, 0, 0, 0))]
            + _dft_specs(H, W),
            out_specs=pl.BlockSpec((1, 2, H, W), lambda b: (b, 0, 0, 0))),
        compiler_params=_mosaic_params(("parallel",)),
    )(k_planes, *ops)


def ifft2_abs(k_planes, ops):
    B, _, H, W = k_planes.shape
    return pl.pallas_call(
        _ifft2_abs_kernel,
        out_shape=jax.ShapeDtypeStruct((B, H, W), jnp.float32),
        grid_spec=pltpu.PrefetchScalarGridSpec(
            num_scalar_prefetch=0,
            grid=(B,),
            in_specs=[pl.BlockSpec((1, 2, H, W), lambda b: (b, 0, 0, 0))]
            + _dft_specs(H, W),
            out_specs=pl.BlockSpec((1, H, W), lambda b: (b, 0, 0))),
        compiler_params=_mosaic_params(("parallel",)),
    )(k_planes, *ops)


def fft2_dc(img_planes, k_in, mask_w, ops):
    B, _, H, W = img_planes.shape
    return pl.pallas_call(
        _fft2_dc_kernel,
        out_shape=jax.ShapeDtypeStruct((B, 2, H, W), jnp.float32),
        grid_spec=pltpu.PrefetchScalarGridSpec(
            num_scalar_prefetch=0,
            grid=(B,),
            in_specs=[pl.BlockSpec((1, 2, H, W), lambda b: (b, 0, 0, 0)),
                      pl.BlockSpec((1, 2, H, W), lambda b: (b, 0, 0, 0)),
                      pl.BlockSpec((1, W), lambda b: (0, 0))]
            + _dft_specs(H, W),
            out_specs=pl.BlockSpec((1, 2, H, W), lambda b: (b, 0, 0, 0))),
        compiler_params=_mosaic_params(("parallel",)),
    )(img_planes, k_in, mask_w, *ops)


# --------------------------------------------------------------------------
# Depthwise conv (row-tiled, VMEM accumulator, hoisted sublane shifts)
# --------------------------------------------------------------------------
def _dw_kernel(x_ref, w_ref, b_ref, o_ref, acc_ref, slab_ref, *,
               k, pad, TR, W, C, gelu, residual):
    r0 = pl.multiple_of(pl.program_id(1) * TR, TR)
    hw = TR + 2 * pad
    acc_ref[...] = jnp.broadcast_to(b_ref[...].reshape(1, 1, C), (TR, W, C))
    for dx in range(k):                     # one sublane shift per dx (hoisted)
        slab_ref[...] = x_ref[0, pl.ds(r0, hw), dx:dx + W, :]
        for dy in range(k):
            acc_ref[...] += (slab_ref[dy:dy + TR].astype(jnp.float32) *
                             w_ref[dy * k + dx].reshape(1, 1, C))
    out = acc_ref[...]
    if gelu:
        out = jax.nn.gelu(out, approximate=True)
    if residual:
        out = out + x_ref[0, pl.ds(r0 + pad, TR),
                          pad:pad + W, :].astype(jnp.float32)
    o_ref[0] = out.astype(o_ref.dtype)


def _row_tile(H, cap=8):
    t = min(H, cap)
    while H % t:
        t -= 1
    return t


def depthwise_conv(x, w_kkc, bias_c, k, gelu=False, residual=False):
    B, H, W, C = x.shape
    pad = (k - 1) // 2
    xp = jnp.pad(x, ((0, 0), (pad, pad), (pad, pad), (0, 0)))
    Hp, Wp = H + 2 * pad, W + 2 * pad
    TR = _row_tile(H)
    return pl.pallas_call(
        functools.partial(_dw_kernel, k=k, pad=pad, TR=TR, W=W, C=C,
                          gelu=gelu, residual=residual),
        out_shape=jax.ShapeDtypeStruct((B, H, W, C), x.dtype),
        grid_spec=pltpu.PrefetchScalarGridSpec(
            num_scalar_prefetch=0,
            grid=(B, H // TR),
            in_specs=[pl.BlockSpec((1, Hp, Wp, C), lambda b, r: (b, 0, 0, 0)),
                      pl.BlockSpec((k * k, C), lambda b, r: (0, 0)),
                      pl.BlockSpec((1, C), lambda b, r: (0, 0))],
            out_specs=pl.BlockSpec((1, TR, W, C), lambda b, r: (b, r, 0, 0)),
            scratch_shapes=[pltpu.VMEM((TR, W, C), jnp.float32),
                            pltpu.VMEM((TR + 2 * pad, W, C), x.dtype)]),
        compiler_params=_mosaic_params(("parallel", "arbitrary")),
    )(xp, w_kkc.astype(jnp.float32), bias_c.reshape(1, C).astype(jnp.float32))


# --------------------------------------------------------------------------
# Out conv (3x3, C -> 2) writing directly into lane-dense (B, 2, H, W) planes
# --------------------------------------------------------------------------
def _out_conv_kernel(x_ref, wr_ref, wi_ref, b_ref, o_ref,
                     ar_ref, ai_ref, slab_ref, *, TR, W, C):
    r0 = pl.multiple_of(pl.program_id(1) * TR, TR)
    hw = TR + 2
    ar_ref[...] = jnp.broadcast_to(b_ref[0], (TR, W))
    ai_ref[...] = jnp.broadcast_to(b_ref[1], (TR, W))
    for dx in range(3):
        slab_ref[...] = x_ref[0, pl.ds(r0, hw), dx:dx + W, :]
        for dy in range(3):
            t = dy * 3 + dx
            tap = slab_ref[dy:dy + TR].astype(jnp.float32)
            ar_ref[...] += jnp.sum(tap * wr_ref[t].reshape(1, 1, C), axis=-1)
            ai_ref[...] += jnp.sum(tap * wi_ref[t].reshape(1, 1, C), axis=-1)
    o_ref[0, 0] = ar_ref[...]
    o_ref[0, 1] = ai_ref[...]


def out_conv_planes(x, w_r, w_i, bias):
    B, H, W, C = x.shape
    xp = jnp.pad(x, ((0, 0), (1, 1), (1, 1), (0, 0)))
    TR = 8 if H % 8 == 0 else H
    return pl.pallas_call(
        functools.partial(_out_conv_kernel, TR=TR, W=W, C=C),
        out_shape=jax.ShapeDtypeStruct((B, 2, H, W), jnp.float32),
        grid_spec=pltpu.PrefetchScalarGridSpec(
            num_scalar_prefetch=0,
            grid=(B, H // TR),
            in_specs=[pl.BlockSpec((1, H + 2, W + 2, C),
                                   lambda b, r: (b, 0, 0, 0)),
                      pl.BlockSpec((9, C), lambda b, r: (0, 0)),
                      pl.BlockSpec((9, C), lambda b, r: (0, 0)),
                      pl.BlockSpec((2, 1, 1), lambda b, r: (0, 0, 0))],
            out_specs=pl.BlockSpec((1, 2, TR, W), lambda b, r: (b, 0, r, 0)),
            scratch_shapes=[pltpu.VMEM((TR, W), jnp.float32),
                            pltpu.VMEM((TR, W), jnp.float32),
                            pltpu.VMEM((TR + 2, W, C), x.dtype)]),
        compiler_params=_mosaic_params(("parallel", "arbitrary")),
    )(xp, w_r.astype(jnp.float32), w_i.astype(jnp.float32),
      bias.reshape(2, 1, 1).astype(jnp.float32))


# --------------------------------------------------------------------------
# Conv wrappers (channel-last, matmul-based)
# --------------------------------------------------------------------------
def conv1x1(x, w_mat, bias, gelu=False):
    B, H, W, C = x.shape
    out = matmul_bias(x.reshape(B * H * W, C), w_mat, bias, gelu=gelu,
                      out_dtype=jnp.bfloat16)
    return out.reshape(B, H, W, w_mat.shape[1])


def embed_from_planes(img_planes, w_mat, bias, patch, stride):
    """patch x patch conv, stride=patch//2, via space-to-depth + one matmul."""
    B, C2, H, W = img_planes.shape
    p = (patch - stride) // 2
    xp = jnp.pad(img_planes, ((0, 0), (0, 0), (p, p), (p, p)))
    Hp, Wp = H + 2 * p, W + 2 * p
    nh, nw = Hp // stride, Wp // stride
    s2d = xp.reshape(B, C2, nh, stride, nw, stride)
    s2d = s2d.transpose(0, 2, 4, 1, 3, 5).reshape(B, nh, nw,
                                                  C2 * stride * stride)
    r = patch // stride
    oh, ow = nh - r + 1, nw - r + 1
    cols = [s2d[:, di:di + oh, dj:dj + ow, :]
            for di in range(r) for dj in range(r)]
    A = jnp.concatenate(cols, axis=-1).reshape(
        B * oh * ow, r * r * C2 * stride * stride)
    out = matmul_bias(A, w_mat, bias, gelu=False, out_dtype=jnp.bfloat16)
    return out.reshape(B, oh, ow, w_mat.shape[1])


def pixel_shuffle_nhwc(x, r):
    B, H, W, C = x.shape
    Co = C // (r * r)
    x = x.reshape(B, H, W, Co, r, r)
    x = x.transpose(0, 1, 4, 2, 5, 3)
    return x.reshape(B, H * r, W * r, Co)


# --------------------------------------------------------------------------
# Model
# --------------------------------------------------------------------------
def convmixer_stack(x, blocks, k):
    for blk in blocks:
        x = depthwise_conv(x, blk["dw_w"], blk["dw_b"], k,
                           gelu=True, residual=True)
        x = conv1x1(x, blk["pw_w"], blk["pw_b"], gelu=True)
    return x


def rm1dc_layer(k_planes, mask_w, p, cfg, dft):
    _, _, k, patch = cfg
    s = patch // 2
    # fused 2D IFFT (+ folded 3x3 box prefilter) -> image planes, bf16
    img = ifft2_image(k_planes, dft["inv_pre"], out_dtype=jnp.bfloat16)
    # PatchEmbeddingOverlap.embed (8x8 / stride 4) via space-to-depth + matmul
    x = embed_from_planes(img, p["embed_w"], p["embed_b"], patch, s)
    # ConvMixerStack + UnConvMixerStack
    x = convmixer_stack(x, p["mixer"], k)
    x = convmixer_stack(x, p["unmixer"], k)
    # UnPatchEmbeddingPixelShuffle
    x = conv1x1(x, p["proj_w"], p["proj_b"], gelu=False)
    x = pixel_shuffle_nhwc(x, s)
    planes = out_conv_planes(x, p["out_wr"], p["out_wi"], p["out_b"])
    # fused 2D FFT + data consistency
    return fft2_dc(planes, k_planes, mask_w, dft["fwd"])


def rm1multi_forward(k_planes, mask_w, params, cfg, dft):
    for p in params["layers"]:
        k_planes = rm1dc_layer(k_planes, mask_w, p, cfg, dft)
    # final fused IFFT + complex abs
    return ifft2_abs(k_planes, dft["inv"])


# --------------------------------------------------------------------------
# Parameter init (packed / channel-padded into Pallas-friendly layouts)
# --------------------------------------------------------------------------
def init_params(key, dim, depth, k, patch, n_layers, Cp):
    s = patch // 2
    r = patch // s
    cin = 2

    def nrm(shape, scale=0.05):
        nonlocal key
        key, sub = jax.random.split(key)
        return scale * jax.random.normal(sub, shape, jnp.float32)

    layers = []
    for _ in range(n_layers):
        # embed: (dim, cin, patch, patch) -> (di, dj, c, si, sj) x dim matmul
        w_e = nrm((dim, cin, patch, patch))
        w_e = w_e.reshape(dim, cin, r, s, r, s).transpose(2, 4, 1, 3, 5, 0)
        w_e = w_e.reshape(r * r * cin * s * s, dim)
        embed_w = jnp.pad(w_e, ((0, 0), (0, Cp - dim))).astype(jnp.bfloat16)
        embed_b = jnp.pad(nrm((dim,)), (0, Cp - dim))

        def mixer_block():
            dw_w = jnp.pad(nrm((k * k, dim)), ((0, 0), (0, Cp - dim)))
            dw_b = jnp.pad(nrm((dim,)), (0, Cp - dim))
            pw_w = jnp.pad(nrm((dim, dim)).T,
                           ((0, Cp - dim), (0, Cp - dim))).astype(jnp.bfloat16)
            pw_b = jnp.pad(nrm((dim,)), (0, Cp - dim))
            return {"dw_w": dw_w, "dw_b": dw_b, "pw_w": pw_w, "pw_b": pw_b}

        proj_w = jnp.pad(nrm((dim * s * s, dim)).T,
                         ((0, Cp - dim), (0, 0))).astype(jnp.bfloat16)
        proj_b = nrm((dim * s * s,))

        w_o = nrm((2, dim, 3, 3))
        out_wr = w_o[0].transpose(1, 2, 0).reshape(9, dim)
        out_wi = w_o[1].transpose(1, 2, 0).reshape(9, dim)
        out_b = nrm((2,))

        layers.append({
            "embed_w": embed_w, "embed_b": embed_b,
            "mixer": [mixer_block() for _ in range(depth)],
            "unmixer": [mixer_block() for _ in range(depth)],
            "proj_w": proj_w, "proj_b": proj_b,
            "out_wr": out_wr, "out_wi": out_wi, "out_b": out_b,
        })
    return {"layers": layers}


if __name__ == "__main__":
    # Demo hyper-parameters (module defaults are dim=64, depth=1, k=9,
    # patch=8, n_layers=4 at fastMRI-sized images).
    dim, depth, k, patch, n_layers = 32, 1, 3, 8, 2
    B, H, W = 2, 16, 16
    Cp = _round_up(dim, 128)
    cfg = (dim, depth, k, patch)

    root = jax.random.PRNGKey(0)
    pkey, dkey = jax.random.split(root)
    params = init_params(pkey, dim, depth, k, patch, n_layers, Cp)
    dft = build_dft_operators(H, W)

    # deterministic inputs: random full k-space, column undersampling mask
    kspace_full = jax.random.normal(dkey, (B, 2, H, W), jnp.float32)
    cols = jnp.arange(W)
    mask1d = ((cols % 3 == 0) | (jnp.abs(cols - W // 2) < 2)).astype(jnp.float32)
    kspace_masked = kspace_full * mask1d.reshape(1, 1, 1, W)
    mask_w = mask1d.reshape(1, W)

    fwd = jax.jit(lambda kp, m: rm1multi_forward(kp, m, params, cfg, dft))
    out = jax.block_until_ready(fwd(kspace_masked, mask_w))

    assert out.shape == (B, H, W), out.shape
    assert bool(jnp.all(jnp.isfinite(out)))
    print("KERNEL_OK")
</pallas_src>

<mosaic_0001>
module attributes {stable_mosaic.version = 11 : i64} {
  func.func @_ifft2_img_kernel(%arg0: i32, %arg1: memref<1x2x16x16xf32, #tpu.memory_space<vmem>>, %arg2: memref<16x16xf32, #tpu.memory_space<vmem>>, %arg3: memref<16x16xf32, #tpu.memory_space<vmem>>, %arg4: memref<16x16xf32, #tpu.memory_space<vmem>>, %arg5: memref<16x16xf32, #tpu.memory_space<vmem>>, %arg6: memref<1x2x16x16xbf16, #tpu.memory_space<vmem>>) attributes {dimension_semantics = [#tpu.dimension_semantics<parallel>], iteration_bounds = array<i64: 2>, scalar_prefetch = 0 : i64, scratch_operands = 0 : i64, tpu.core_type = #tpu.core_type<tc>, window_params = [{transform_indices = @transform_0, window_bounds = array<i64: 1, 2, 16, 16>}, {pipeline_mode = #tpu.pipeline_mode<synchronous>, transform_indices = @transform_1, window_bounds = array<i64: 16, 16>}, {pipeline_mode = #tpu.pipeline_mode<synchronous>, transform_indices = @transform_2, window_bounds = array<i64: 16, 16>}, {pipeline_mode = #tpu.pipeline_mode<synchronous>, transform_indices = @transform_3, window_bounds = array<i64: 16, 16>}, {pipeline_mode = #tpu.pipeline_mode<synchronous>, transform_indices = @transform_4, window_bounds = array<i64: 16, 16>}, {transform_indices = @transform_5, window_bounds = array<i64: 1, 2, 16, 16>}]} {
    %c0 = arith.constant 0 : index
    %c0_0 = arith.constant 0 : index
    %c0_1 = arith.constant 0 : index
    %c0_2 = arith.constant 0 : index
    %0 = vector.load %arg1[%c0, %c0_0, %c0_1, %c0_2] : memref<1x2x16x16xf32, #tpu.memory_space<vmem>>, vector<1x1x16x16xf32>
    %1 = vector.shape_cast %0 : vector<1x1x16x16xf32> to vector<16x16xf32>
    %c0_3 = arith.constant 0 : index
    %c1 = arith.constant 1 : index
    %c0_4 = arith.constant 0 : index
    %c0_5 = arith.constant 0 : index
    %2 = vector.load %arg1[%c0_3, %c1, %c0_4, %c0_5] : memref<1x2x16x16xf32, #tpu.memory_space<vmem>>, vector<1x1x16x16xf32>
    %3 = vector.shape_cast %2 : vector<1x1x16x16xf32> to vector<16x16xf32>
    %c0_6 = arith.constant 0 : index
    %c0_7 = arith.constant 0 : index
    %4 = vector.load %arg2[%c0_6, %c0_7] : memref<16x16xf32, #tpu.memory_space<vmem>>, vector<16x16xf32>
    %c0_8 = arith.constant 0 : index
    %c0_9 = arith.constant 0 : index
    %5 = vector.load %arg3[%c0_8, %c0_9] : memref<16x16xf32, #tpu.memory_space<vmem>>, vector<16x16xf32>
    %c0_10 = arith.constant 0 : index
    %c0_11 = arith.constant 0 : index
    %6 = vector.load %arg4[%c0_10, %c0_11] : memref<16x16xf32, #tpu.memory_space<vmem>>, vector<16x16xf32>
    %c0_12 = arith.constant 0 : index
    %c0_13 = arith.constant 0 : index
    %7 = vector.load %arg5[%c0_12, %c0_13] : memref<16x16xf32, #tpu.memory_space<vmem>>, vector<16x16xf32>
    %cst = arith.constant dense<0.000000e+00> : vector<16x16xf32>
    %8 = tpu.matmul %1, %6, %cst {dimension_numbers = #tpu.dot_dimension_numbers<[1], [0], [0], [1], [0, 0, 1, 1], [], []>} : vector<16x16xf32>, vector<16x16xf32>, vector<16x16xf32> -> vector<16x16xf32>
    %cst_14 = arith.constant dense<0.000000e+00> : vector<16x16xf32>
    %9 = tpu.matmul %3, %7, %cst_14 {dimension_numbers = #tpu.dot_dimension_numbers<[1], [0], [0], [1], [0, 0, 1, 1], [], []>} : vector<16x16xf32>, vector<16x16xf32>, vector<16x16xf32> -> vector<16x16xf32>
    %10 = arith.subf %8, %9 : vector<16x16xf32>
    %cst_15 = arith.constant dense<0.000000e+00> : vector<16x16xf32>
    %11 = tpu.matmul %1, %7, %cst_15 {dimension_numbers = #tpu.dot_dimension_numbers<[1], [0], [0], [1], [0, 0, 1, 1], [], []>} : vector<16x16xf32>, vector<16x16xf32>, vector<16x16xf32> -> vector<16x16xf32>
    %cst_16 = arith.constant dense<0.000000e+00> : vector<16x16xf32>
    %12 = tpu.matmul %3, %6, %cst_16 {dimension_numbers = #tpu.dot_dimension_numbers<[1], [0], [0], [1], [0, 0, 1, 1], [], []>} : vector<16x16xf32>, vector<16x16xf32>, vector<16x16xf32> -> vector<16x16xf32>
    %13 = arith.addf %11, %12 : vector<16x16xf32>
    %cst_17 = arith.constant dense<0.000000e+00> : vector<16x16xf32>
    %14 = tpu.matmul %4, %10, %cst_17 {dimension_numbers = #tpu.dot_dimension_numbers<[1], [0], [0], [1], [0, 0, 1, 1], [], []>} : vector<16x16xf32>, vector<16x16xf32>, vector<16x16xf32> -> vector<16x16xf32>
    %cst_18 = arith.constant dense<0.000000e+00> : vector<16x16xf32>
    %15 = tpu.matmul %5, %13, %cst_18 {dimension_numbers = #tpu.dot_dimension_numbers<[1], [0], [0], [1], [0, 0, 1, 1], [], []>} : vector<16x16xf32>, vector<16x16xf32>, vector<16x16xf32> -> vector<16x16xf32>
    %16 = arith.subf %14, %15 : vector<16x16xf32>
    %cst_19 = arith.constant dense<0.000000e+00> : vector<16x16xf32>
    %17 = tpu.matmul %5, %10, %cst_19 {dimension_numbers = #tpu.dot_dimension_numbers<[1], [0], [0], [1], [0, 0, 1, 1], [], []>} : vector<16x16xf32>, vector<16x16xf32>, vector<16x16xf32> -> vector<16x16xf32>
    %cst_20 = arith.constant dense<0.000000e+00> : vector<16x16xf32>
    %18 = tpu.matmul %4, %13, %cst_20 {dimension_numbers = #tpu.dot_dimension_numbers<[1], [0], [0], [1], [0, 0, 1, 1], [], []>} : vector<16x16xf32>, vector<16x16xf32>, vector<16x16xf32> -> vector<16x16xf32>
    %19 = arith.addf %17, %18 : vector<16x16xf32>
    %20 = arith.truncf %16 : vector<16x16xf32> to vector<16x16xbf16>
    %c0_21 = arith.constant 0 : index
    %c0_22 = arith.constant 0 : index
    %c0_23 = arith.constant 0 : index
    %c0_24 = arith.constant 0 : index
    %21 = vector.load %arg6[%c0_21, %c0_22, %c0_23, %c0_24] : memref<1x2x16x16xbf16, #tpu.memory_space<vmem>>, vector<1x1x16x16xbf16>
    %22 = vector.shape_cast %21 : vector<1x1x16x16xbf16> to vector<16x16xbf16>
    %23 = vector.shape_cast %20 : vector<16x16xbf16> to vector<1x1x16x16xbf16>
    tpu.vector_store %arg6[%c0_21, %c0_22, %c0_23, %c0_24], %23 {strides = array<i32>} : memref<1x2x16x16xbf16, #tpu.memory_space<vmem>>, vector<1x1x16x16xbf16>,
    %24 = arith.truncf %19 : vector<16x16xf32> to vector<16x16xbf16>
    %c0_25 = arith.constant 0 : index
    %c1_26 = arith.constant 1 : index
    %c0_27 = arith.constant 0 : index
    %c0_28 = arith.constant 0 : index
    %25 = vector.load %arg6[%c0_25, %c1_26, %c0_27, %c0_28] : memref<1x2x16x16xbf16, #tpu.memory_space<vmem>>, vector<1x1x16x16xbf16>
    %26 = vector.shape_cast %25 : vector<1x1x16x16xbf16> to vector<16x16xbf16>
    %27 = vector.shape_cast %24 : vector<16x16xbf16> to vector<1x1x16x16xbf16>
    tpu.vector_store %arg6[%c0_25, %c1_26, %c0_27, %c0_28], %27 {strides = array<i32>} : memref<1x2x16x16xbf16, #tpu.memory_space<vmem>>, vector<1x1x16x16xbf16>,
    return
  }
  func.func @transform_0(%arg0: i32) -> (i32, i32, i32, i32) {
    %c0_i32 = arith.constant 0 : i32
    %c0_i32_0 = arith.constant 0 : i32
    %c0_i32_1 = arith.constant 0 : i32
    %c0_i32_2 = arith.constant 0 : i32
    return %arg0, %c0_i32, %c0_i32_0, %c0_i32_1 : i32, i32, i32, i32
  }
  func.func @transform_1(%arg0: i32) -> (i32, i32) {
    %c0_i32 = arith.constant 0 : i32
    %c0_i32_0 = arith.constant 0 : i32
    %c0_i32_1 = arith.constant 0 : i32
    return %c0_i32, %c0_i32_0 : i32, i32
  }
  func.func @transform_2(%arg0: i32) -> (i32, i32) {
    %c0_i32 = arith.constant 0 : i32
    %c0_i32_0 = arith.constant 0 : i32
    %c0_i32_1 = arith.constant 0 : i32
    return %c0_i32, %c0_i32_0 : i32, i32
  }
  func.func @transform_3(%arg0: i32) -> (i32, i32) {
    %c0_i32 = arith.constant 0 : i32
    %c0_i32_0 = arith.constant 0 : i32
    %c0_i32_1 = arith.constant 0 : i32
    return %c0_i32, %c0_i32_0 : i32, i32
  }
  func.func @transform_4(%arg0: i32) -> (i32, i32) {
    %c0_i32 = arith.constant 0 : i32
    %c0_i32_0 = arith.constant 0 : i32
    %c0_i32_1 = arith.constant 0 : i32
    return %c0_i32, %c0_i32_0 : i32, i32
  }
  func.func @transform_5(%arg0: i32) -> (i32, i32, i32, i32) {
    %c0_i32 = arith.constant 0 : i32
    %c0_i32_0 = arith.constant 0 : i32
    %c0_i32_1 = arith.constant 0 : i32
    %c0_i32_2 = arith.constant 0 : i32
    return %arg0, %c0_i32, %c0_i32_0, %c0_i32_1 : i32, i32, i32, i32
  }
}

module attributes {stable_mosaic.version = 11 : i64} {
  func.func @_mm_kernel_single(%arg0: i32, %arg1: i32, %arg2: memref<16x128xbf16, #tpu.memory_space<vmem>>, %arg3: memref<128x128xbf16, #tpu.memory_space<vmem>>, %arg4: memref<1x128xf32, #tpu.memory_space<vmem>>, %arg5: memref<16x128xbf16, #tpu.memory_space<vmem>>) attributes {dimension_semantics = [#tpu.dimension_semantics<parallel>, #tpu.dimension_semantics<arbitrary>], iteration_bounds = array<i64: 2, 1>, scalar_prefetch = 0 : i64, scratch_operands = 0 : i64, tpu.core_type = #tpu.core_type<tc>, window_params = [{transform_indices = @transform_0, window_bounds = array<i64: 16, 128>}, {transform_indices = @transform_1, window_bounds = array<i64: 128, 128>}, {pipeline_mode = #tpu.pipeline_mode<synchronous>, transform_indices = @transform_2, window_bounds = array<i64: 1, 128>}, {transform_indices = @transform_3, window_bounds = array<i64: 16, 128>}]} {
    %c0 = arith.constant 0 : index
    %c0_0 = arith.constant 0 : index
    %0 = vector.load %arg2[%c0, %c0_0] : memref<16x128xbf16, #tpu.memory_space<vmem>>, vector<16x128xbf16>
    %c0_1 = arith.constant 0 : index
    %c0_2 = arith.constant 0 : index
    %1 = vector.load %arg3[%c0_1, %c0_2] : memref<128x128xbf16, #tpu.memory_space<vmem>>, vector<128x128xbf16>
    %cst = arith.constant dense<0.000000e+00> : vector<16x128xf32>
    %2 = tpu.matmul %0, %1, %cst {dimension_numbers = #tpu.dot_dimension_numbers<[1], [0], [0], [1], [0, 0, 1, 1], [], []>} : vector<16x128xbf16>, vector<128x128xbf16>, vector<16x128xf32> -> vector<16x128xf32>
    %c0_3 = arith.constant 0 : index
    %c0_4 = arith.constant 0 : index
    %3 = vector.load %arg4[%c0_3, %c0_4] : memref<1x128xf32, #tpu.memory_space<vmem>>, vector<1x128xf32>
    %4 = vector.broadcast %3 : vector<1x128xf32> to vector<16x128xf32>
    %5 = arith.addf %2, %4 : vector<16x128xf32>
    %6 = arith.truncf %5 : vector<16x128xf32> to vector<16x128xbf16>
    %c0_5 = arith.constant 0 : index
    %c0_6 = arith.constant 0 : index
    %7 = vector.load %arg5[%c0_5, %c0_6] : memref<16x128xbf16, #tpu.memory_space<vmem>>, vector<16x128xbf16>
    tpu.vector_store %arg5[%c0_5, %c0_6], %6 {strides = array<i32>} : memref<16x128xbf16, #tpu.memory_space<vmem>>, vector<16x128xbf16>,
    return
  }
  func.func @transform_0(%arg0: i32, %arg1: i32) -> (i32, i32) {
    %c0_i32 = arith.constant 0 : i32
    return %arg0, %arg1 : i32, i32
  }
  func.func @transform_1(%arg0: i32, %arg1: i32) -> (i32, i32) {
    %c0_i32 = arith.constant 0 : i32
    %c0_i32_0 = arith.constant 0 : i32
    return %arg1, %c0_i32 : i32, i32
  }
  func.func @transform_2(%arg0: i32, %arg1: i32) -> (i32, i32) {
    %c0_i32 = arith.constant 0 : i32
    %c0_i32_0 = arith.constant 0 : i32
    %c0_i32_1 = arith.constant 0 : i32
    return %c0_i32, %c0_i32_0 : i32, i32
  }
  func.func @transform_3(%arg0: i32, %arg1: i32) -> (i32, i32) {
    %c0_i32 = arith.constant 0 : i32
    %c0_i32_0 = arith.constant 0 : i32
    return %arg0, %c0_i32 : i32, i32
  }
}

module attributes {stable_mosaic.version = 11 : i64} {
  func.func @_mm_kernel_single(%arg0: i32, %arg1: i32, %arg2: memref<16x128xbf16, #tpu.memory_space<vmem>>, %arg3: memref<128x128xbf16, #tpu.memory_space<vmem>>, %arg4: memref<1x128xf32, #tpu.memory_space<vmem>>, %arg5: memref<16x128xbf16, #tpu.memory_space<vmem>>) attributes {dimension_semantics = [#tpu.dimension_semantics<parallel>, #tpu.dimension_semantics<arbitrary>], iteration_bounds = array<i64: 2, 1>, scalar_prefetch = 0 : i64, scratch_operands = 0 : i64, tpu.core_type = #tpu.core_type<tc>, window_params = [{transform_indices = @transform_0, window_bounds = array<i64: 16, 128>}, {transform_indices = @transform_1, window_bounds = array<i64: 128, 128>}, {pipeline_mode = #tpu.pipeline_mode<synchronous>, transform_indices = @transform_2, window_bounds = array<i64: 1, 128>}, {transform_indices = @transform_3, window_bounds = array<i64: 16, 128>}]} {
    %c0 = arith.constant 0 : index
    %c0_0 = arith.constant 0 : index
    %0 = vector.load %arg2[%c0, %c0_0] : memref<16x128xbf16, #tpu.memory_space<vmem>>, vector<16x128xbf16>
    %c0_1 = arith.constant 0 : index
    %c0_2 = arith.constant 0 : index
    %1 = vector.load %arg3[%c0_1, %c0_2] : memref<128x128xbf16, #tpu.memory_space<vmem>>, vector<128x128xbf16>
    %cst = arith.constant dense<0.000000e+00> : vector<16x128xf32>
    %2 = tpu.matmul %0, %1, %cst {dimension_numbers = #tpu.dot_dimension_numbers<[1], [0], [0], [1], [0, 0, 1, 1], [], []>} : vector<16x128xbf16>, vector<128x128xbf16>, vector<16x128xf32> -> vector<16x128xf32>
    %c0_3 = arith.constant 0 : index
    %c0_4 = arith.constant 0 : index
    %3 = vector.load %arg4[%c0_3, %c0_4] : memref<1x128xf32, #tpu.memory_space<vmem>>, vector<1x128xf32>
    %4 = vector.broadcast %3 : vector<1x128xf32> to vector<16x128xf32>
    %5 = arith.addf %2, %4 : vector<16x128xf32>
    %6 = arith.mulf %5, %5 : vector<16x128xf32>
    %7 = arith.mulf %5, %6 : vector<16x128xf32>
    %cst_5 = arith.constant 4.471500e-02 : f32
    %8 = vector.broadcast %cst_5 : f32 to vector<16x128xf32>
    %9 = arith.mulf %8, %7 : vector<16x128xf32>
    %10 = arith.addf %5, %9 : vector<16x128xf32>
    %cst_6 = arith.constant 0.797884583 : f32
    %11 = vector.broadcast %cst_6 : f32 to vector<16x128xf32>
    %12 = arith.mulf %11, %10 : vector<16x128xf32>
    %13 = math.tanh %12 : vector<16x128xf32>
    %cst_7 = arith.constant 1.000000e+00 : f32
    %14 = vector.broadcast %cst_7 : f32 to vector<16x128xf32>
    %15 = arith.addf %14, %13 : vector<16x128xf32>
    %cst_8 = arith.constant 5.000000e-01 : f32
    %16 = vector.broadcast %cst_8 : f32 to vector<16x128xf32>
    %17 = arith.mulf %16, %15 : vector<16x128xf32>
    %18 = arith.mulf %5, %17 : vector<16x128xf32>
    %19 = arith.truncf %18 : vector<16x128xf32> to vector<16x128xbf16>
    %c0_9 = arith.constant 0 : index
    %c0_10 = arith.constant 0 : index
    %20 = vector.load %arg5[%c0_9, %c0_10] : memref<16x128xbf16, #tpu.memory_space<vmem>>, vector<16x128xbf16>
    tpu.vector_store %arg5[%c0_9, %c0_10], %19 {strides = array<i32>} : memref<16x128xbf16, #tpu.memory_space<vmem>>, vector<16x128xbf16>,
    return
  }
  func.func @transform_0(%arg0: i32, %arg1: i32) -> (i32, i32) {
    %c0_i32 = arith.constant 0 : i32
    return %arg0, %arg1 : i32, i32
  }
  func.func @transform_1(%arg0: i32, %arg1: i32) -> (i32, i32) {
    %c0_i32 = arith.constant 0 : i32
    %c0_i32_0 = arith.constant 0 : i32
    return %arg1, %c0_i32 : i32, i32
  }
  func.func @transform_2(%arg0: i32, %arg1: i32) -> (i32, i32) {
    %c0_i32 = arith.constant 0 : i32
    %c0_i32_0 = arith.constant 0 : i32
    %c0_i32_1 = arith.constant 0 : i32
    return %c0_i32, %c0_i32_0 : i32, i32
  }
  func.func @transform_3(%arg0: i32, %arg1: i32) -> (i32, i32) {
    %c0_i32 = arith.constant 0 : i32
    %c0_i32_0 = arith.constant 0 : i32
    return %arg0, %c0_i32 : i32, i32
  }
}

module attributes {stable_mosaic.version = 11 : i64} {
  func.func @_dw_kernel(%arg0: i32, %arg1: i32, %arg2: memref<1x6x6x128xbf16, #tpu.memory_space<vmem>>, %arg3: memref<9x128xf32, #tpu.memory_space<vmem>>, %arg4: memref<1x128xf32, #tpu.memory_space<vmem>>, %arg5: memref<1x4x4x128xbf16, #tpu.memory_space<vmem>>, %arg6: memref<4x4x128xf32, #tpu.memory_space<vmem>>, %arg7: memref<6x4x128xbf16, #tpu.memory_space<vmem>>) attributes {dimension_semantics = [#tpu.dimension_semantics<parallel>, #tpu.dimension_semantics<arbitrary>], iteration_bounds = array<i64: 2, 1>, scalar_prefetch = 0 : i64, scratch_operands = 2 : i64, tpu.core_type = #tpu.core_type<tc>, window_params = [{transform_indices = @transform_0, window_bounds = array<i64: 1, 6, 6, 128>}, {pipeline_mode = #tpu.pipeline_mode<synchronous>, transform_indices = @transform_1, window_bounds = array<i64: 9, 128>}, {pipeline_mode = #tpu.pipeline_mode<synchronous>, transform_indices = @transform_2, window_bounds = array<i64: 1, 128>}, {transform_indices = @transform_3, window_bounds = array<i64: 1, 4, 4, 128>}]} {
    %c4_i32 = arith.constant 4 : i32
    %0 = arith.muli %arg1, %c4_i32 : i32
    %1 = tpu.assume_multiple %0, 4 : i32
    %c0 = arith.constant 0 : index
    %c0_0 = arith.constant 0 : index
    %2 = vector.load %arg4[%c0, %c0_0] : memref<1x128xf32, #tpu.memory_space<vmem>>, vector<1x128xf32>
    %3 = vector.shape_cast %2 : vector<1x128xf32> to vector<1x1x128xf32>
    %4 = vector.shape_cast %3 : vector<1x1x128xf32> to vector<1x1x128xf32>
    %5 = vector.broadcast %4 : vector<1x1x128xf32> to vector<4x4x128xf32>
    %c0_1 = arith.constant 0 : index
    %c0_2 = arith.constant 0 : index
    %c0_3 = arith.constant 0 : index
    %6 = vector.load %arg6[%c0_1, %c0_2, %c0_3] : memref<4x4x128xf32, #tpu.memory_space<vmem>>, vector<4x4x128xf32>
    tpu.vector_store %arg6[%c0_1, %c0_2, %c0_3], %5 {strides = array<i32>} : memref<4x4x128xf32, #tpu.memory_space<vmem>>, vector<4x4x128xf32>,
    %c0_4 = arith.constant 0 : index
    %7 = arith.index_cast %1 : i32 to index
    %c0_5 = arith.constant 0 : index
    %c0_6 = arith.constant 0 : index
    %8 = vector.load %arg2[%c0_4, %7, %c0_5, %c0_6] : memref<1x6x6x128xbf16, #tpu.memory_space<vmem>>, vector<1x6x4x128xbf16>
    %9 = vector.shape_cast %8 : vector<1x6x4x128xbf16> to vector<6x4x128xbf16>
    %c0_7 = arith.constant 0 : index
    %c0_8 = arith.constant 0 : index
    %c0_9 = arith.constant 0 : index
    %10 = vector.load %arg7[%c0_7, %c0_8, %c0_9] : memref<6x4x128xbf16, #tpu.memory_space<vmem>>, vector<6x4x128xbf16>
    tpu.vector_store %arg7[%c0_7, %c0_8, %c0_9], %9 {strides = array<i32>} : memref<6x4x128xbf16, #tpu.memory_space<vmem>>, vector<6x4x128xbf16>,
    %c0_10 = arith.constant 0 : index
    %c0_11 = arith.constant 0 : index
    %c0_12 = arith.constant 0 : index
    %11 = vector.load %arg6[%c0_10, %c0_11, %c0_12] : memref<4x4x128xf32, #tpu.memory_space<vmem>>, vector<4x4x128xf32>
    %c0_13 = arith.constant 0 : index
    %c0_14 = arith.constant 0 : index
    %c0_15 = arith.constant 0 : index
    %12 = vector.load %arg7[%c0_13, %c0_14, %c0_15] : memref<6x4x128xbf16, #tpu.memory_space<vmem>>, vector<4x4x128xbf16>
    %13 = arith.extf %12 : vector<4x4x128xbf16> to vector<4x4x128xf32>
    %c0_16 = arith.constant 0 : index
    %c0_17 = arith.constant 0 : index
    %14 = vector.load %arg3[%c0_16, %c0_17] : memref<9x128xf32, #tpu.memory_space<vmem>>, vector<1x128xf32>
    %15 = vector.shape_cast %14 : vector<1x128xf32> to vector<128xf32>
    %16 = vector.shape_cast %15 : vector<128xf32> to vector<1x1x128xf32>
    %17 = vector.broadcast %16 : vector<1x1x128xf32> to vector<4x4x128xf32>
    %18 = arith.mulf %13, %17 : vector<4x4x128xf32>
    %19 = arith.addf %11, %18 : vector<4x4x128xf32>
    %c0_18 = arith.constant 0 : index
    %c0_19 = arith.constant 0 : index
    %c0_20 = arith.constant 0 : index
    %20 = vector.load %arg6[%c0_18, %c0_19, %c0_20] : memref<4x4x128xf32, #tpu.memory_space<vmem>>, vector<4x4x128xf32>
    tpu.vector_store %arg6[%c0_18, %c0_19, %c0_20], %19 {strides = array<i32>} : memref<4x4x128xf32, #tpu.memory_space<vmem>>, vector<4x4x128xf32>,
    %c0_21 = arith.constant 0 : index
    %c0_22 = arith.constant 0 : index
    %c0_23 = arith.constant 0 : index
    %21 = vector.load %arg6[%c0_21, %c0_22, %c0_23] : memref<4x4x128xf32, #tpu.memory_space<vmem>>, vector<4x4x128xf32>
    %c1 = arith.constant 1 : index
    %c0_24 = arith.constant 0 : index
    %c0_25 = arith.constant 0 : index
    %22 = vector.load %arg7[%c1, %c0_24, %c0_25] : memref<6x4x128xbf16, #tpu.memory_space<vmem>>, vector<4x4x128xbf16>
    %23 = arith.extf %22 : vector<4x4x128xbf16> to vector<4x4x128xf32>
    %c3 = arith.constant 3 : index
    %c0_26 = arith.constant 0 : index
    %24 = vector.load %arg3[%c3, %c0_26] : memref<9x128xf32, #tpu.memory_space<vmem>>, vector<1x128xf32>
    %25 = vector.shape_cast %24 : vector<1x128xf32> to vector<128xf32>
    %26 = vector.shape_cast %25 : vector<128xf32> to vector<1x1x128xf32>
    %27 = vector.broadcast %26 : vector<1x1x128xf32> to vector<4x4x128xf32>
    %28 = arith.mulf %23, %27 : vector<4x4x128xf32>
    %29 = arith.addf %21, %28 : vector<4x4x128xf32>
    %c0_27 = arith.constant 0 : index
    %c0_28 = arith.constant 0 : index
    %c0_29 = arith.constant 0 : index
    %30 = vector.load %arg6[%c0_27, %c0_28, %c0_29] : memref<4x4x128xf32, #tpu.memory_space<vmem>>, vector<4x4x128xf32>
    tpu.vector_store %arg6[%c0_27, %c0_28, %c0_29], %29 {strides = array<i32>} : memref<4x4x128xf32, #tpu.memory_space<vmem>>, vector<4x4x128xf32>,
    %c0_30 = arith.constant 0 : index
    %c0_31 = arith.constant 0 : index
    %c0_32 = arith.constant 0 : index
    %31 = vector.load %arg6[%c0_30, %c0_31, %c0_32] : memref<4x4x128xf32, #tpu.memory_space<vmem>>, vector<4x4x128xf32>
    %c2 = arith.constant 2 : index
    %c0_33 = arith.constant 0 : index
    %c0_34 = arith.constant 0 : index
    %32 = vector.load %arg7[%c2, %c0_33, %c0_34] : memref<6x4x128xbf16, #tpu.memory_space<vmem>>, vector<4x4x128xbf16>
    %33 = arith.extf %32 : vector<4x4x128xbf16> to vector<4x4x128xf32>
    %c6 = arith.constant 6 : index
    %c0_35 = arith.constant 0 : index
    %34 = vector.load %arg3[%c6, %c0_35] : memref<9x128xf32, #tpu.memory_space<vmem>>, vector<1x128xf32>
    %35 = vector.shape_cast %34 : vector<1x128xf32> to vector<128xf32>
    %36 = vector.shape_cast %35 : vector<128xf32> to vector<1x1x128xf32>
    %37 = vector.broadcast %36 : vector<1x1x128xf32> to vector<4x4x128xf32>
    %38 = arith.mulf %33, %37 : vector<4x4x128xf32>
    %39 = arith.addf %31, %38 : vector<4x4x128xf32>
    %c0_36 = arith.constant 0 : index
    %c0_37 = arith.constant 0 : index
    %c0_38 = arith.constant 0 : index
    %40 = vector.load %arg6[%c0_36, %c0_37, %c0_38] : memref<4x4x128xf32, #tpu.memory_space<vmem>>, vector<4x4x128xf32>
    tpu.vector_store %arg6[%c0_36, %c0_37, %c0_38], %39 {strides = array<i32>} : memref<4x4x128xf32, #tpu.memory_space<vmem>>, vector<4x4x128xf32>,
    %c0_39 = arith.constant 0 : index
    %41 = arith.index_cast %1 : i32 to index
    %c1_40 = arith.constant 1 : index
    %c0_41 = arith.constant 0 : index
    %42 = vector.load %arg2[%c0_39, %41, %c1_40, %c0_41] : memref<1x6x6x128xbf16, #tpu.memory_space<vmem>>, vector<1x6x4x128xbf16>
    %43 = vector.shape_cast %42 : vector<1x6x4x128xbf16> to vector<6x4x128xbf16>
    %c0_42 = arith.constant 0 : index
    %c0_43 = arith.constant 0 : index
    %c0_44 = arith.constant 0 : index
    %44 = vector.load %arg7[%c0_42, %c0_43, %c0_44] : memref<6x4x128xbf16, #tpu.memory_space<vmem>>, vector<6x4x128xbf16>
    tpu.vector_store %arg7[%c0_42, %c0_43, %c0_44], %43 {strides = array<i32>} : memref<6x4x128xbf16, #tpu.memory_space<vmem>>, vector<6x4x128xbf16>,
    %c0_45 = arith.constant 0 : index
    %c0_46 = arith.constant 0 : index
    %c0_47 = arith.constant 0 : index
    %45 = vector.load %arg6[%c0_45, %c0_46, %c0_47] : memref<4x4x128xf32, #tpu.memory_space<vmem>>, vector<4x4x128xf32>
    %c0_48 = arith.constant 0 : index
    %c0_49 = arith.constant 0 : index
    %c0_50 = arith.constant 0 : index
    %46 = vector.load %arg7[%c0_48, %c0_49, %c0_50] : memref<6x4x128xbf16, #tpu.memory_space<vmem>>, vector<4x4x128xbf16>
    %47 = arith.extf %46 : vector<4x4x128xbf16> to vector<4x4x128xf32>
    %c1_51 = arith.constant 1 : index
    %c0_52 = arith.constant 0 : index
    %48 = vector.load %arg3[%c1_51, %c0_52] : memref<9x128xf32, #tpu.memory_space<vmem>>, vector<1x128xf32>
    %49 = vector.shape_cast %48 : vector<1x128xf32> to vector<128xf32>
    %50 = vector.shape_cast %49 : vector<128xf32> to vector<1x1x128xf32>
    %51 = vector.broadcast %50 : vector<1x1x128xf32> to vector<4x4x128xf32>
    %52 = arith.mulf %47, %51 : vector<4x4x128xf32>
    %53 = arith.addf %45, %52 : vector<4x4x128xf32>
    %c0_53 = arith.constant 0 : index
    %c0_54 = arith.constant 0 : index
    %c0_55 = arith.constant 0 : index
    %54 = vector.load %arg6[%c0_53, %c0_54, %c0_55] : memref<4x4x128xf32, #tpu.memory_space<vmem>>, vector<4x4x128xf32>
    tpu.vector_store %arg6[%c0_53, %c0_54, %c0_55], %53 {strides = array<i32>} : memref<4x4x128xf32, #tpu.memory_space<vmem>>, vector<4x4x128xf32>,
    %c0_56 = arith.constant 0 : index
    %c0_57 = arith.constant 0 : index
    %c0_58 = arith.constant 0 : index
    %55 = vector.load %arg6[%c0_56, %c0_57, %c0_58] : memref<4x4x128xf32, #tpu.memory_space<vmem>>, vector<4x4x128xf32>
    %c1_59 = arith.constant 1 : index
    %c0_60 = arith.constant 0 : index
    %c0_61 = arith.constant 0 : index
    %56 = vector.load %arg7[%c1_59, %c0_60, %c0_61] : memref<6x4x128xbf16, #tpu.memory_space<vmem>>, vector<4x4x128xbf16>
    %57 = arith.extf %56 : vector<4x4x128xbf16> to vector<4x4x128xf32>
    %c4 = arith.constant 4 : index
    %c0_62 = arith.constant 0 : index
    %58 = vector.load %arg3[%c4, %c0_62] : memref<9x128xf32, #tpu.memory_space<vmem>>, vector<1x128xf32>
    %59 = vector.shape_cast %58 : vector<1x128xf32> to vector<128xf32>
    %60 = vector.shape_cast %59 : vector<128xf32> to vector<1x1x128xf32>
    %61 = vector.broadcast %60 : vector<1x1x128xf32> to vector<4x4x128xf32>
    %62 = arith.mulf %57, %61 : vector<4x4x128xf32>
    %63 = arith.addf %55, %62 : vector<4x4x128xf32>
    %c0_63 = arith.constant 0 : index
    %c0_64 = arith.constant 0 : index
    %c0_65 = arith.constant 0 : index
    %64 = vector.load %arg6[%c0_63, %c0_64, %c0_65] : memref<4x4x128xf32, #tpu.memory_space<vmem>>, vector<4x4x128xf32>
    tpu.vector_store %arg6[%c0_63, %c0_64, %c0_65], %63 {strides = array<i32>} : memref<4x4x128xf32, #tpu.memory_space<vmem>>, vector<4x4x128xf32>,
    %c0_66 = arith.constant 0 : index
    %c0_67 = arith.constant 0 : index
    %c0_68 = arith.constant 0 : index
    %65 = vector.load %arg6[%c0_66, %c0_67, %c0_68] : memref<4x4x128xf32, #tpu.memory_space<vmem>>, vector<4x4x128xf32>
    %c2_69 = arith.constant 2 : index
    %c0_70 = arith.constant 0 : index
    %c0_71 = arith.constant 0 : index
    %66 = vector.load %arg7[%c2_69, %c0_70, %c0_71] : memref<6x4x128xbf16, #tpu.memory_space<vmem>>, vector<4x4x128xbf16>
    %67 = arith.extf %66 : vector<4x4x128xbf16> to vector<4x4x128xf32>
    %c7 = arith.constant 7 : index
    %c0_72 = arith.constant 0 : index
    %68 = vector.load %arg3[%c7, %c0_72] : memref<9x128xf32, #tpu.memory_space<vmem>>, vector<1x128xf32>
    %69 = vector.shape_cast %68 : vector<1x128xf32> to vector<128xf32>
    %70 = vector.shape_cast %69 : vector<128xf32> to vector<1x1x128xf32>
    %71 = vector.broadcast %70 : vector<1x1x128xf32> to vector<4x4x128xf32>
    %72 = arith.mulf %67, %71 : vector<4x4x128xf32>
    %73 = arith.addf %65, %72 : vector<4x4x128xf32>
    %c0_73 = arith.constant 0 : index
    %c0_74 = arith.constant 0 : index
    %c0_75 = arith.constant 0 : index
    %74 = vector.load %arg6[%c0_73, %c0_74, %c0_75] : memref<4x4x128xf32, #tpu.memory_space<vmem>>, vector<4x4x128xf32>
    tpu.vector_store %arg6[%c0_73, %c0_74, %c0_75], %73 {strides = array<i32>} : memref<4x4x128xf32, #tpu.memory_space<vmem>>, vector<4x4x128xf32>,
    %c0_76 = arith.constant 0 : index
    %75 = arith.index_cast %1 : i32 to index
    %c2_77 = arith.constant 2 : index
    %c0_78 = arith.constant 0 : index
    %76 = vector.load %arg2[%c0_76, %75, %c2_77, %c0_78] : memref<1x6x6x128xbf16, #tpu.memory_space<vmem>>, vector<1x6x4x128xbf16>
    %77 = vector.shape_cast %76 : vector<1x6x4x128xbf16> to vector<6x4x128xbf16>
    %c0_79 = arith.constant 0 : index
    %c0_80 = arith.constant 0 : index
    %c0_81 = arith.constant 0 : index
    %78 = vector.load %arg7[%c0_79, %c0_80, %c0_81] : memref<6x4x128xbf16, #tpu.memory_space<vmem>>, vector<6x4x128xbf16>
    tpu.vector_store %arg7[%c0_79, %c0_80, %c0_81], %77 {strides = array<i32>} : memref<6x4x128xbf16, #tpu.memory_space<vmem>>, vector<6x4x128xbf16>,
    %c0_82 = arith.constant 0 : index
    %c0_83 = arith.constant 0 : index
    %c0_84 = arith.constant 0 : index
    %79 = vector.load %arg6[%c0_82, %c0_83, %c0_84] : memref<4x4x128xf32, #tpu.memory_space<vmem>>, vector<4x4x128xf32>
    %c0_85 = arith.constant 0 : index
    %c0_86 = arith.constant 0 : index
    %c0_87 = arith.constant 0 : index
    %80 = vector.load %arg7[%c0_85, %c0_86, %c0_87] : memref<6x4x128xbf16, #tpu.memory_space<vmem>>, vector<4x4x128xbf16>
    %81 = arith.extf %80 : vector<4x4x128xbf16> to vector<4x4x128xf32>
    %c2_88 = arith.constant 2 : index
    %c0_89 = arith.constant 0 : index
    %82 = vector.load %arg3[%c2_88, %c0_89] : memref<9x128xf32, #tpu.memory_space<vmem>>, vector<1x128xf32>
    %83 = vector.shape_cast %82 : vector<1x128xf32> to vector<128xf32>
    %84 = vector.shape_cast %83 : vector<128xf32> to vector<1x1x128xf32>
    %85 = vector.broadcast %84 : vector<1x1x128xf32> to vector<4x4x128xf32>
    %86 = arith.mulf %81, %85 : vector<4x4x128xf32>
    %87 = arith.addf %79, %86 : vector<4x4x128xf32>
    %c0_90 = arith.constant 0 : index
    %c0_91 = arith.constant 0 : index
    %c0_92 = arith.constant 0 : index
    %88 = vector.load %arg6[%c0_90, %c0_91, %c0_92] : memref<4x4x128xf32, #tpu.memory_space<vmem>>, vector<4x4x128xf32>
    tpu.vector_store %arg6[%c0_90, %c0_91, %c0_92], %87 {strides = array<i32>} : memref<4x4x128xf32, #tpu.memory_space<vmem>>, vector<4x4x128xf32>,
    %c0_93 = arith.constant 0 : index
    %c0_94 = arith.constant 0 : index
    %c0_95 = arith.constant 0 : index
    %89 = vector.load %arg6[%c0_93, %c0_94, %c0_95] : memref<4x4x128xf32, #tpu.memory_space<vmem>>, vector<4x4x128xf32>
    %c1_96 = arith.constant 1 : index
    %c0_97 = arith.constant 0 : index
    %c0_98 = arith.constant 0 : index
    %90 = vector.load %arg7[%c1_96, %c0_97, %c0_98] : memref<6x4x128xbf16, #tpu.memory_space<vmem>>, vector<4x4x128xbf16>
    %91 = arith.extf %90 : vector<4x4x128xbf16> to vector<4x4x128xf32>
    %c5 = arith.constant 5 : index
    %c0_99 = arith.constant 0 : index
    %92 = vector.load %arg3[%c5, %c0_99] : memref<9x128xf32, #tpu.memory_space<vmem>>, vector<1x128xf32>
    %93 = vector.shape_cast %92 : vector<1x128xf32> to vector<128xf32>
    %94 = vector.shape_cast %93 : vector<128xf32> to vector<1x1x128xf32>
    %95 = vector.broadcast %94 : vector<1x1x128xf32> to vector<4x4x128xf32>
    %96 = arith.mulf %91, %95 : vector<4x4x128xf32>
    %97 = arith.addf %89, %96 : vector<4x4x128xf32>
    %c0_100 = arith.constant 0 : index
    %c0_101 = arith.constant 0 : index
    %c0_102 = arith.constant 0 : index
    %98 = vector.load %arg6[%c0_100, %c0_101, %c0_102] : memref<4x4x128xf32, #tpu.memory_space<vmem>>, vector<4x4x128xf32>
    tpu.vector_store %arg6[%c0_100, %c0_101, %c0_102], %97 {strides = array<i32>} : memref<4x4x128xf32, #tpu.memory_space<vmem>>, vector<4x4x128xf32>,
    %c0_103 = arith.constant 0 : index
    %c0_104 = arith.constant 0 : index
    %c0_105 = arith.constant 0 : index
    %99 = vector.load %arg6[%c0_103, %c0_104, %c0_105] : memref<4x4x128xf32, #tpu.memory_space<vmem>>, vector<4x4x128xf32>
    %c2_106 = arith.constant 2 : index
    %c0_107 = arith.constant 0 : index
    %c0_108 = arith.constant 0 : index
    %100 = vector.load %arg7[%c2_106, %c0_107, %c0_108] : memref<6x4x128xbf16, #tpu.memory_space<vmem>>, vector<4x4x128xbf16>
    %101 = arith.extf %100 : vector<4x4x128xbf16> to vector<4x4x128xf32>
    %c8 = arith.constant 8 : index
    %c0_109 = arith.constant 0 : index
    %102 = vector.load %arg3[%c8, %c0_109] : memref<9x128xf32, #tpu.memory_space<vmem>>, vector<1x128xf32>
    %103 = vector.shape_cast %102 : vector<1x128xf32> to vector<128xf32>
    %104 = vector.shape_cast %103 : vector<128xf32> to vector<1x1x128xf32>
    %105 = vector.broadcast %104 : vector<1x1x128xf32> to vector<4x4x128xf32>
    %106 = arith.mulf %101, %105 : vector<4x4x128xf32>
    %107 = arith.addf %99, %106 : vector<4x4x128xf32>
    %c0_110 = arith.constant 0 : index
    %c0_111 = arith.constant 0 : index
    %c0_112 = arith.constant 0 : index
    %108 = vector.load %arg6[%c0_110, %c0_111, %c0_112] : memref<4x4x128xf32, #tpu.memory_space<vmem>>, vector<4x4x128xf32>
    tpu.vector_store %arg6[%c0_110, %c0_111, %c0_112], %107 {strides = array<i32>} : memref<4x4x128xf32, #tpu.memory_space<vmem>>, vector<4x4x128xf32>,
    %c0_113 = arith.constant 0 : index
    %c0_114 = arith.constant 0 : index
    %c0_115 = arith.constant 0 : index
    %109 = vector.load %arg6[%c0_113, %c0_114, %c0_115] : memref<4x4x128xf32, #tpu.memory_space<vmem>>, vector<4x4x128xf32>
    %110 = arith.mulf %109, %109 : vector<4x4x128xf32>
    %111 = arith.mulf %109, %110 : vector<4x4x128xf32>
    %cst = arith.constant 4.471500e-02 : f32
    %112 = vector.broadcast %cst : f32 to vector<4x4x128xf32>
    %113 = arith.mulf %112, %111 : vector<4x4x128xf32>
    %114 = arith.addf %109, %113 : vector<4x4x128xf32>
    %cst_116 = arith.constant 0.797884583 : f32
    %115 = vector.broadcast %cst_116 : f32 to vector<4x4x128xf32>
    %116 = arith.mulf %115, %114 : vector<4x4x128xf32>
    %117 = math.tanh %116 : vector<4x4x128xf32>
    %cst_117 = arith.constant 1.000000e+00 : f32
    %118 = vector.broadcast %cst_117 : f32 to vector<4x4x128xf32>
    %119 = arith.addf %118, %117 : vector<4x4x128xf32>
    %cst_118 = arith.constant 5.000000e-01 : f32
    %120 = vector.broadcast %cst_118 : f32 to vector<4x4x128xf32>
    %121 = arith.mulf %120, %119 : vector<4x4x128xf32>
    %122 = arith.mulf %109, %121 : vector<4x4x128xf32>
    %c1_i32 = arith.constant 1 : i32
    %123 = arith.addi %1, %c1_i32 : i32
    %c0_119 = arith.constant 0 : index
    %124 = arith.index_cast %123 : i32 to index
    %c1_120 = arith.constant 1 : index
    %c0_121 = arith.constant 0 : index
    %125 = vector.load %arg2[%c0_119, %124, %c1_120, %c0_121] : memref<1x6x6x128xbf16, #tpu.memory_space<vmem>>, vector<1x4x4x128xbf16>
    %126 = vector.shape_cast %125 : vector<1x4x4x128xbf16> to vector<4x4x128xbf16>
    %127 = arith.extf %126 : vector<4x4x128xbf16> to vector<4x4x128xf32>
    %128 = arith.addf %122, %127 : vector<4x4x128xf32>
    %129 = arith.truncf %128 : vector<4x4x128xf32> to vector<4x4x128xbf16>
    %c0_122 = arith.constant 0 : index
    %c0_123 = arith.constant 0 : index
    %c0_124 = arith.constant 0 : index
    %c0_125 = arith.constant 0 : index
    %130 = vector.load %arg5[%c0_122, %c0_123, %c0_124, %c0_125] : memref<1x4x4x128xbf16, #tpu.memory_space<vmem>>, vector<1x4x4x128xbf16>
    %131 = vector.shape_cast %130 : vector<1x4x4x128xbf16> to vector<4x4x128xbf16>
    %132 = vector.shape_cast %129 : vector<4x4x128xbf16> to vector<1x4x4x128xbf16>
    tpu.vector_store %arg5[%c0_122, %c0_123, %c0_124, %c0_125], %132 {strides = array<i32>} : memref<1x4x4x128xbf16, #tpu.memory_space<vmem>>, vector<1x4x4x128xbf16>,
    return
  }
  func.func @transform_0(%arg0: i32, %arg1: i32) -> (i32, i32, i32, i32) {
    %c0_i32 = arith.constant 0 : i32
    %c0_i32_0 = arith.constant 0 : i32
    %c0_i32_1 = arith.constant 0 : i32
    %c0_i32_2 = arith.constant 0 : i32
    return %arg0, %c0_i32, %c0_i32_0, %c0_i32_1 : i32, i32, i32, i32
  }
  func.func @transform_1(%arg0: i32, %arg1: i32) -> (i32, i32) {
    %c0_i32 = arith.constant 0 : i32
    %c0_i32_0 = arith.constant 0 : i32
    %c0_i32_1 = arith.constant 0 : i32
    return %c0_i32, %c0_i32_0 : i32, i32
  }
  func.func @transform_2(%arg0: i32, %arg1: i32) -> (i32, i32) {
    %c0_i32 = arith.constant 0 : i32
    %c0_i32_0 = arith.constant 0 : i32
    %c0_i32_1 = arith.constant 0 : i32
    return %c0_i32, %c0_i32_0 : i32, i32
  }
  func.func @transform_3(%arg0: i32, %arg1: i32) -> (i32, i32, i32, i32) {
    %c0_i32 = arith.constant 0 : i32
    %c0_i32_0 = arith.constant 0 : i32
    %c0_i32_1 = arith.constant 0 : i32
    return %arg0, %arg1, %c0_i32, %c0_i32_0 : i32, i32, i32, i32
  }
}

module attributes {stable_mosaic.version = 11 : i64} {
  func.func @_mm_kernel_single(%arg0: i32, %arg1: i32, %arg2: memref<16x128xbf16, #tpu.memory_space<vmem>>, %arg3: memref<128x512xbf16, #tpu.memory_space<vmem>>, %arg4: memref<1x512xf32, #tpu.memory_space<vmem>>, %arg5: memref<16x512xbf16, #tpu.memory_space<vmem>>) attributes {dimension_semantics = [#tpu.dimension_semantics<parallel>, #tpu.dimension_semantics<arbitrary>], iteration_bounds = array<i64: 2, 1>, scalar_prefetch = 0 : i64, scratch_operands = 0 : i64, tpu.core_type = #tpu.core_type<tc>, window_params = [{transform_indices = @transform_0, window_bounds = array<i64: 16, 128>}, {transform_indices = @transform_1, window_bounds = array<i64: 128, 512>}, {pipeline_mode = #tpu.pipeline_mode<synchronous>, transform_indices = @transform_2, window_bounds = array<i64: 1, 512>}, {transform_indices = @transform_3, window_bounds = array<i64: 16, 512>}]} {
    %c0 = arith.constant 0 : index
    %c0_0 = arith.constant 0 : index
    %0 = vector.load %arg2[%c0, %c0_0] : memref<16x128xbf16, #tpu.memory_space<vmem>>, vector<16x128xbf16>
    %c0_1 = arith.constant 0 : index
    %c0_2 = arith.constant 0 : index
    %1 = vector.load %arg3[%c0_1, %c0_2] : memref<128x512xbf16, #tpu.memory_space<vmem>>, vector<128x512xbf16>
    %cst = arith.constant dense<0.000000e+00> : vector<16x512xf32>
    %2 = tpu.matmul %0, %1, %cst {dimension_numbers = #tpu.dot_dimension_numbers<[1], [0], [0], [1], [0, 0, 1, 1], [], []>} : vector<16x128xbf16>, vector<128x512xbf16>, vector<16x512xf32> -> vector<16x512xf32>
    %c0_3 = arith.constant 0 : index
    %c0_4 = arith.constant 0 : index
    %3 = vector.load %arg4[%c0_3, %c0_4] : memref<1x512xf32, #tpu.memory_space<vmem>>, vector<1x512xf32>
    %4 = vector.broadcast %3 : vector<1x512xf32> to vector<16x512xf32>
    %5 = arith.addf %2, %4 : vector<16x512xf32>
    %6 = arith.truncf %5 : vector<16x512xf32> to vector<16x512xbf16>
    %c0_5 = arith.constant 0 : index
    %c0_6 = arith.constant 0 : index
    %7 = vector.load %arg5[%c0_5, %c0_6] : memref<16x512xbf16, #tpu.memory_space<vmem>>, vector<16x512xbf16>
    tpu.vector_store %arg5[%c0_5, %c0_6], %6 {strides = array<i32>} : memref<16x512xbf16, #tpu.memory_space<vmem>>, vector<16x512xbf16>,
    return
  }
  func.func @transform_0(%arg0: i32, %arg1: i32) -> (i32, i32) {
    %c0_i32 = arith.constant 0 : i32
    return %arg0, %arg1 : i32, i32
  }
  func.func @transform_1(%arg0: i32, %arg1: i32) -> (i32, i32) {
    %c0_i32 = arith.constant 0 : i32
    %c0_i32_0 = arith.constant 0 : i32
    return %arg1, %c0_i32 : i32, i32
  }
  func.func @transform_2(%arg0: i32, %arg1: i32) -> (i32, i32) {
    %c0_i32 = arith.constant 0 : i32
    %c0_i32_0 = arith.constant 0 : i32
    %c0_i32_1 = arith.constant 0 : i32
    return %c0_i32, %c0_i32_0 : i32, i32
  }
  func.func @transform_3(%arg0: i32, %arg1: i32) -> (i32, i32) {
    %c0_i32 = arith.constant 0 : i32
    %c0_i32_0 = arith.constant 0 : i32
    return %arg0, %c0_i32 : i32, i32
  }
}

module attributes {stable_mosaic.version = 11 : i64} {
  func.func @_out_conv_kernel(%arg0: i32, %arg1: i32, %arg2: memref<1x18x18x32xbf16, #tpu.memory_space<vmem>>, %arg3: memref<9x32xf32, #tpu.memory_space<vmem>>, %arg4: memref<9x32xf32, #tpu.memory_space<vmem>>, %arg5: memref<2x1x1xf32, #tpu.memory_space<vmem>>, %arg6: memref<1x2x8x16xf32, #tpu.memory_space<vmem>>, %arg7: memref<8x16xf32, #tpu.memory_space<vmem>>, %arg8: memref<8x16xf32, #tpu.memory_space<vmem>>, %arg9: memref<10x16x32xbf16, #tpu.memory_space<vmem>>) attributes {dimension_semantics = [#tpu.dimension_semantics<parallel>, #tpu.dimension_semantics<arbitrary>], iteration_bounds = array<i64: 2, 2>, scalar_prefetch = 0 : i64, scratch_operands = 3 : i64, tpu.core_type = #tpu.core_type<tc>, window_params = [{transform_indices = @transform_0, window_bounds = array<i64: 1, 18, 18, 32>}, {pipeline_mode = #tpu.pipeline_mode<synchronous>, transform_indices = @transform_1, window_bounds = array<i64: 9, 32>}, {pipeline_mode = #tpu.pipeline_mode<synchronous>, transform_indices = @transform_2, window_bounds = array<i64: 9, 32>}, {pipeline_mode = #tpu.pipeline_mode<synchronous>, transform_indices = @transform_3, window_bounds = array<i64: 2, 1, 1>}, {transform_indices = @transform_4, window_bounds = array<i64: 1, 2, 8, 16>}]} {
    %c8_i32 = arith.constant 8 : i32
    %0 = arith.muli %arg1, %c8_i32 : i32
    %1 = tpu.assume_multiple %0, 8 : i32
    %c0 = arith.constant 0 : index
    %c0_0 = arith.constant 0 : index
    %c0_1 = arith.constant 0 : index
    %2 = vector.load %arg5[%c0, %c0_0, %c0_1] : memref<2x1x1xf32, #tpu.memory_space<vmem>>, vector<1x1x1xf32>
    %3 = vector.shape_cast %2 : vector<1x1x1xf32> to vector<1x1xf32>
    %4 = vector.shape_cast %3 : vector<1x1xf32> to vector<1x1xf32>
    %5 = vector.broadcast %4 : vector<1x1xf32> to vector<8x16xf32>
    %c0_2 = arith.constant 0 : index
    %c0_3 = arith.constant 0 : index
    %6 = vector.load %arg7[%c0_2, %c0_3] : memref<8x16xf32, #tpu.memory_space<vmem>>, vector<8x16xf32>
    tpu.vector_store %arg7[%c0_2, %c0_3], %5 {strides = array<i32>} : memref<8x16xf32, #tpu.memory_space<vmem>>, vector<8x16xf32>,
    %c1 = arith.constant 1 : index
    %c0_4 = arith.constant 0 : index
    %c0_5 = arith.constant 0 : index
    %7 = vector.load %arg5[%c1, %c0_4, %c0_5] : memref<2x1x1xf32, #tpu.memory_space<vmem>>, vector<1x1x1xf32>
    %8 = vector.shape_cast %7 : vector<1x1x1xf32> to vector<1x1xf32>
    %9 = vector.shape_cast %8 : vector<1x1xf32> to vector<1x1xf32>
    %10 = vector.broadcast %9 : vector<1x1xf32> to vector<8x16xf32>
    %c0_6 = arith.constant 0 : index
    %c0_7 = arith.constant 0 : index
    %11 = vector.load %arg8[%c0_6, %c0_7] : memref<8x16xf32, #tpu.memory_space<vmem>>, vector<8x16xf32>
    tpu.vector_store %arg8[%c0_6, %c0_7], %10 {strides = array<i32>} : memref<8x16xf32, #tpu.memory_space<vmem>>, vector<8x16xf32>,
    %c0_8 = arith.constant 0 : index
    %12 = arith.index_cast %1 : i32 to index
    %c0_9 = arith.constant 0 : index
    %c0_10 = arith.constant 0 : index
    %13 = vector.load %arg2[%c0_8, %12, %c0_9, %c0_10] : memref<1x18x18x32xbf16, #tpu.memory_space<vmem>>, vector<1x10x16x32xbf16>
    %14 = vector.shape_cast %13 : vector<1x10x16x32xbf16> to vector<10x16x32xbf16>
    %c0_11 = arith.constant 0 : index
    %c0_12 = arith.constant 0 : index
    %c0_13 = arith.constant 0 : index
    %15 = vector.load %arg9[%c0_11, %c0_12, %c0_13] : memref<10x16x32xbf16, #tpu.memory_space<vmem>>, vector<10x16x32xbf16>
    tpu.vector_store %arg9[%c0_11, %c0_12, %c0_13], %14 {strides = array<i32>} : memref<10x16x32xbf16, #tpu.memory_space<vmem>>, vector<10x16x32xbf16>,
    %c0_14 = arith.constant 0 : index
    %c0_15 = arith.constant 0 : index
    %c0_16 = arith.constant 0 : index
    %16 = vector.load %arg9[%c0_14, %c0_15, %c0_16] : memref<10x16x32xbf16, #tpu.memory_space<vmem>>, vector<8x16x32xbf16>
    %17 = arith.extf %16 : vector<8x16x32xbf16> to vector<8x16x32xf32>
    %c0_17 = arith.constant 0 : index
    %c0_18 = arith.constant 0 : index
    %18 = vector.load %arg7[%c0_17, %c0_18] : memref<8x16xf32, #tpu.memory_space<vmem>>, vector<8x16xf32>
    %c0_19 = arith.constant 0 : index
    %c0_20 = arith.constant 0 : index
    %19 = vector.load %arg3[%c0_19, %c0_20] : memref<9x32xf32, #tpu.memory_space<vmem>>, vector<1x32xf32>
    %20 = vector.shape_cast %19 : vector<1x32xf32> to vector<32xf32>
    %21 = vector.shape_cast %20 : vector<32xf32> to vector<1x1x32xf32>
    %22 = vector.broadcast %21 : vector<1x1x32xf32> to vector<8x16x32xf32>
    %23 = arith.mulf %17, %22 : vector<8x16x32xf32>
    %cst = arith.constant dense<0.000000e+00> : vector<8x16xf32>
    %24 = vector.multi_reduction <add>, %23, %cst [2] : vector<8x16x32xf32> to vector<8x16xf32>
    %25 = arith.addf %18, %24 : vector<8x16xf32>
    %c0_21 = arith.constant 0 : index
    %c0_22 = arith.constant 0 : index
    %26 = vector.load %arg7[%c0_21, %c0_22] : memref<8x16xf32, #tpu.memory_space<vmem>>, vector<8x16xf32>
    tpu.vector_store %arg7[%c0_21, %c0_22], %25 {strides = array<i32>} : memref<8x16xf32, #tpu.memory_space<vmem>>, vector<8x16xf32>,
    %c0_23 = arith.constant 0 : index
    %c0_24 = arith.constant 0 : index
    %27 = vector.load %arg8[%c0_23, %c0_24] : memref<8x16xf32, #tpu.memory_space<vmem>>, vector<8x16xf32>
    %c0_25 = arith.constant 0 : index
    %c0_26 = arith.constant 0 : index
    %28 = vector.load %arg4[%c0_25, %c0_26] : memref<9x32xf32, #tpu.memory_space<vmem>>, vector<1x32xf32>
    %29 = vector.shape_cast %28 : vector<1x32xf32> to vector<32xf32>
    %30 = vector.shape_cast %29 : vector<32xf32> to vector<1x1x32xf32>
    %31 = vector.broadcast %30 : vector<1x1x32xf32> to vector<8x16x32xf32>
    %32 = arith.mulf %17, %31 : vector<8x16x32xf32>
    %cst_27 = arith.constant dense<0.000000e+00> : vector<8x16xf32>
    %33 = vector.multi_reduction <add>, %32, %cst_27 [2] : vector<8x16x32xf32> to vector<8x16xf32>
    %34 = arith.addf %27, %33 : vector<8x16xf32>
    %c0_28 = arith.constant 0 : index
    %c0_29 = arith.constant 0 : index
    %35 = vector.load %arg8[%c0_28, %c0_29] : memref<8x16xf32, #tpu.memory_space<vmem>>, vector<8x16xf32>
    tpu.vector_store %arg8[%c0_28, %c0_29], %34 {strides = array<i32>} : memref<8x16xf32, #tpu.memory_space<vmem>>, vector<8x16xf32>,
    %c1_30 = arith.constant 1 : index
    %c0_31 = arith.constant 0 : index
    %c0_32 = arith.constant 0 : index
    %36 = vector.load %arg9[%c1_30, %c0_31, %c0_32] : memref<10x16x32xbf16, #tpu.memory_space<vmem>>, vector<8x16x32xbf16>
    %37 = arith.extf %36 : vector<8x16x32xbf16> to vector<8x16x32xf32>
    %c0_33 = arith.constant 0 : index
    %c0_34 = arith.constant 0 : index
    %38 = vector.load %arg7[%c0_33, %c0_34] : memref<8x16xf32, #tpu.memory_space<vmem>>, vector<8x16xf32>
    %c3 = arith.constant 3 : index
    %c0_35 = arith.constant 0 : index
    %39 = vector.load %arg3[%c3, %c0_35] : memref<9x32xf32, #tpu.memory_space<vmem>>, vector<1x32xf32>
    %40 = vector.shape_cast %39 : vector<1x32xf32> to vector<32xf32>
    %41 = vector.shape_cast %40 : vector<32xf32> to vector<1x1x32xf32>
    %42 = vector.broadcast %41 : vector<1x1x32xf32> to vector<8x16x32xf32>
    %43 = arith.mulf %37, %42 : vector<8x16x32xf32>
    %cst_36 = arith.constant dense<0.000000e+00> : vector<8x16xf32>
    %44 = vector.multi_reduction <add>, %43, %cst_36 [2] : vector<8x16x32xf32> to vector<8x16xf32>
    %45 = arith.addf %38, %44 : vector<8x16xf32>
    %c0_37 = arith.constant 0 : index
    %c0_38 = arith.constant 0 : index
    %46 = vector.load %arg7[%c0_37, %c0_38] : memref<8x16xf32, #tpu.memory_space<vmem>>, vector<8x16xf32>
    tpu.vector_store %arg7[%c0_37, %c0_38], %45 {strides = array<i32>} : memref<8x16xf32, #tpu.memory_space<vmem>>, vector<8x16xf32>,
    %c0_39 = arith.constant 0 : index
    %c0_40 = arith.constant 0 : index
    %47 = vector.load %arg8[%c0_39, %c0_40] : memref<8x16xf32, #tpu.memory_space<vmem>>, vector<8x16xf32>
    %c3_41 = arith.constant 3 : index
    %c0_42 = arith.constant 0 : index
    %48 = vector.load %arg4[%c3_41, %c0_42] : memref<9x32xf32, #tpu.memory_space<vmem>>, vector<1x32xf32>
    %49 = vector.shape_cast %48 : vector<1x32xf32> to vector<32xf32>
    %50 = vector.shape_cast %49 : vector<32xf32> to vector<1x1x32xf32>
    %51 = vector.broadcast %50 : vector<1x1x32xf32> to vector<8x16x32xf32>
    %52 = arith.mulf %37, %51 : vector<8x16x32xf32>
    %cst_43 = arith.constant dense<0.000000e+00> : vector<8x16xf32>
    %53 = vector.multi_reduction <add>, %52, %cst_43 [2] : vector<8x16x32xf32> to vector<8x16xf32>
    %54 = arith.addf %47, %53 : vector<8x16xf32>
    %c0_44 = arith.constant 0 : index
    %c0_45 = arith.constant 0 : index
    %55 = vector.load %arg8[%c0_44, %c0_45] : memref<8x16xf32, #tpu.memory_space<vmem>>, vector<8x16xf32>
    tpu.vector_store %arg8[%c0_44, %c0_45], %54 {strides = array<i32>} : memref<8x16xf32, #tpu.memory_space<vmem>>, vector<8x16xf32>,
    %c2 = arith.constant 2 : index
    %c0_46 = arith.constant 0 : index
    %c0_47 = arith.constant 0 : index
    %56 = vector.load %arg9[%c2, %c0_46, %c0_47] : memref<10x16x32xbf16, #tpu.memory_space<vmem>>, vector<8x16x32xbf16>
    %57 = arith.extf %56 : vector<8x16x32xbf16> to vector<8x16x32xf32>
    %c0_48 = arith.constant 0 : index
    %c0_49 = arith.constant 0 : index
    %58 = vector.load %arg7[%c0_48, %c0_49] : memref<8x16xf32, #tpu.memory_space<vmem>>, vector<8x16xf32>
    %c6 = arith.constant 6 : index
    %c0_50 = arith.constant 0 : index
    %59 = vector.load %arg3[%c6, %c0_50] : memref<9x32xf32, #tpu.memory_space<vmem>>, vector<1x32xf32>
    %60 = vector.shape_cast %59 : vector<1x32xf32> to vector<32xf32>
    %61 = vector.shape_cast %60 : vector<32xf32> to vector<1x1x32xf32>
    %62 = vector.broadcast %61 : vector<1x1x32xf32> to vector<8x16x32xf32>
    %63 = arith.mulf %57, %62 : vector<8x16x32xf32>
    %cst_51 = arith.constant dense<0.000000e+00> : vector<8x16xf32>
    %64 = vector.multi_reduction <add>, %63, %cst_51 [2] : vector<8x16x32xf32> to vector<8x16xf32>
    %65 = arith.addf %58, %64 : vector<8x16xf32>
    %c0_52 = arith.constant 0 : index
    %c0_53 = arith.constant 0 : index
    %66 = vector.load %arg7[%c0_52, %c0_53] : memref<8x16xf32, #tpu.memory_space<vmem>>, vector<8x16xf32>
    tpu.vector_store %arg7[%c0_52, %c0_53], %65 {strides = array<i32>} : memref<8x16xf32, #tpu.memory_space<vmem>>, vector<8x16xf32>,
    %c0_54 = arith.constant 0 : index
    %c0_55 = arith.constant 0 : index
    %67 = vector.load %arg8[%c0_54, %c0_55] : memref<8x16xf32, #tpu.memory_space<vmem>>, vector<8x16xf32>
    %c6_56 = arith.constant 6 : index
    %c0_57 = arith.constant 0 : index
    %68 = vector.load %arg4[%c6_56, %c0_57] : memref<9x32xf32, #tpu.memory_space<vmem>>, vector<1x32xf32>
    %69 = vector.shape_cast %68 : vector<1x32xf32> to vector<32xf32>
    %70 = vector.shape_cast %69 : vector<32xf32> to vector<1x1x32xf32>
    %71 = vector.broadcast %70 : vector<1x1x32xf32> to vector<8x16x32xf32>
    %72 = arith.mulf %57, %71 : vector<8x16x32xf32>
    %cst_58 = arith.constant dense<0.000000e+00> : vector<8x16xf32>
    %73 = vector.multi_reduction <add>, %72, %cst_58 [2] : vector<8x16x32xf32> to vector<8x16xf32>
    %74 = arith.addf %67, %73 : vector<8x16xf32>
    %c0_59 = arith.constant 0 : index
    %c0_60 = arith.constant 0 : index
    %75 = vector.load %arg8[%c0_59, %c0_60] : memref<8x16xf32, #tpu.memory_space<vmem>>, vector<8x16xf32>
    tpu.vector_store %arg8[%c0_59, %c0_60], %74 {strides = array<i32>} : memref<8x16xf32, #tpu.memory_space<vmem>>, vector<8x16xf32>,
    %c0_61 = arith.constant 0 : index
    %76 = arith.index_cast %1 : i32 to index
    %c1_62 = arith.constant 1 : index
    %c0_63 = arith.constant 0 : index
    %77 = vector.load %arg2[%c0_61, %76, %c1_62, %c0_63] : memref<1x18x18x32xbf16, #tpu.memory_space<vmem>>, vector<1x10x16x32xbf16>
    %78 = vector.shape_cast %77 : vector<1x10x16x32xbf16> to vector<10x16x32xbf16>
    %c0_64 = arith.constant 0 : index
    %c0_65 = arith.constant 0 : index
    %c0_66 = arith.constant 0 : index
    %79 = vector.load %arg9[%c0_64, %c0_65, %c0_66] : memref<10x16x32xbf16, #tpu.memory_space<vmem>>, vector<10x16x32xbf16>
    tpu.vector_store %arg9[%c0_64, %c0_65, %c0_66], %78 {strides = array<i32>} : memref<10x16x32xbf16, #tpu.memory_space<vmem>>, vector<10x16x32xbf16>,
    %c0_67 = arith.constant 0 : index
    %c0_68 = arith.constant 0 : index
    %c0_69 = arith.constant 0 : index
    %80 = vector.load %arg9[%c0_67, %c0_68, %c0_69] : memref<10x16x32xbf16, #tpu.memory_space<vmem>>, vector<8x16x32xbf16>
    %81 = arith.extf %80 : vector<8x16x32xbf16> to vector<8x16x32xf32>
    %c0_70 = arith.constant 0 : index
    %c0_71 = arith.constant 0 : index
    %82 = vector.load %arg7[%c0_70, %c0_71] : memref<8x16xf32, #tpu.memory_space<vmem>>, vector<8x16xf32>
    %c1_72 = arith.constant 1 : index
    %c0_73 = arith.constant 0 : index
    %83 = vector.load %arg3[%c1_72, %c0_73] : memref<9x32xf32, #tpu.memory_space<vmem>>, vector<1x32xf32>
    %84 = vector.shape_cast %83 : vector<1x32xf32> to vector<32xf32>
    %85 = vector.shape_cast %84 : vector<32xf32> to vector<1x1x32xf32>
    %86 = vector.broadcast %85 : vector<1x1x32xf32> to vector<8x16x32xf32>
    %87 = arith.mulf %81, %86 : vector<8x16x32xf32>
    %cst_74 = arith.constant dense<0.000000e+00> : vector<8x16xf32>
    %88 = vector.multi_reduction <add>, %87, %cst_74 [2] : vector<8x16x32xf32> to vector<8x16xf32>
    %89 = arith.addf %82, %88 : vector<8x16xf32>
    %c0_75 = arith.constant 0 : index
    %c0_76 = arith.constant 0 : index
    %90 = vector.load %arg7[%c0_75, %c0_76] : memref<8x16xf32, #tpu.memory_space<vmem>>, vector<8x16xf32>
    tpu.vector_store %arg7[%c0_75, %c0_76], %89 {strides = array<i32>} : memref<8x16xf32, #tpu.memory_space<vmem>>, vector<8x16xf32>,
    %c0_77 = arith.constant 0 : index
    %c0_78 = arith.constant 0 : index
    %91 = vector.load %arg8[%c0_77, %c0_78] : memref<8x16xf32, #tpu.memory_space<vmem>>, vector<8x16xf32>
    %c1_79 = arith.constant 1 : index
    %c0_80 = arith.constant 0 : index
    %92 = vector.load %arg4[%c1_79, %c0_80] : memref<9x32xf32, #tpu.memory_space<vmem>>, vector<1x32xf32>
    %93 = vector.shape_cast %92 : vector<1x32xf32> to vector<32xf32>
    %94 = vector.shape_cast %93 : vector<32xf32> to vector<1x1x32xf32>
    %95 = vector.broadcast %94 : vector<1x1x32xf32> to vector<8x16x32xf32>
    %96 = arith.mulf %81, %95 : vector<8x16x32xf32>
    %cst_81 = arith.constant dense<0.000000e+00> : vector<8x16xf32>
    %97 = vector.multi_reduction <add>, %96, %cst_81 [2] : vector<8x16x32xf32> to vector<8x16xf32>
    %98 = arith.addf %91, %97 : vector<8x16xf32>
    %c0_82 = arith.constant 0 : index
    %c0_83 = arith.constant 0 : index
    %99 = vector.load %arg8[%c0_82, %c0_83] : memref<8x16xf32, #tpu.memory_space<vmem>>, vector<8x16xf32>
    tpu.vector_store %arg8[%c0_82, %c0_83], %98 {strides = array<i32>} : memref<8x16xf32, #tpu.memory_space<vmem>>, vector<8x16xf32>,
    %c1_84 = arith.constant 1 : index
    %c0_85 = arith.constant 0 : index
    %c0_86 = arith.constant 0 : index
    %100 = vector.load %arg9[%c1_84, %c0_85, %c0_86] : memref<10x16x32xbf16, #tpu.memory_space<vmem>>, vector<8x16x32xbf16>
    %101 = arith.extf %100 : vector<8x16x32xbf16> to vector<8x16x32xf32>
    %c0_87 = arith.constant 0 : index
    %c0_88 = arith.constant 0 : index
    %102 = vector.load %arg7[%c0_87, %c0_88] : memref<8x16xf32, #tpu.memory_space<vmem>>, vector<8x16xf32>
    %c4 = arith.constant 4 : index
    %c0_89 = arith.constant 0 : index
    %103 = vector.load %arg3[%c4, %c0_89] : memref<9x32xf32, #tpu.memory_space<vmem>>, vector<1x32xf32>
    %104 = vector.shape_cast %103 : vector<1x32xf32> to vector<32xf32>
    %105 = vector.shape_cast %104 : vector<32xf32> to vector<1x1x32xf32>
    %106 = vector.broadcast %105 : vector<1x1x32xf32> to vector<8x16x32xf32>
    %107 = arith.mulf %101, %106 : vector<8x16x32xf32>
    %cst_90 = arith.constant dense<0.000000e+00> : vector<8x16xf32>
    %108 = vector.multi_reduction <add>, %107, %cst_90 [2] : vector<8x16x32xf32> to vector<8x16xf32>
    %109 = arith.addf %102, %108 : vector<8x16xf32>
    %c0_91 = arith.constant 0 : index
    %c0_92 = arith.constant 0 : index
    %110 = vector.load %arg7[%c0_91, %c0_92] : memref<8x16xf32, #tpu.memory_space<vmem>>, vector<8x16xf32>
    tpu.vector_store %arg7[%c0_91, %c0_92], %109 {strides = array<i32>} : memref<8x16xf32, #tpu.memory_space<vmem>>, vector<8x16xf32>,
    %c0_93 = arith.constant 0 : index
    %c0_94 = arith.constant 0 : index
    %111 = vector.load %arg8[%c0_93, %c0_94] : memref<8x16xf32, #tpu.memory_space<vmem>>, vector<8x16xf32>
    %c4_95 = arith.constant 4 : index
    %c0_96 = arith.constant 0 : index
    %112 = vector.load %arg4[%c4_95, %c0_96] : memref<9x32xf32, #tpu.memory_space<vmem>>, vector<1x32xf32>
    %113 = vector.shape_cast %112 : vector<1x32xf32> to vector<32xf32>
    %114 = vector.shape_cast %113 : vector<32xf32> to vector<1x1x32xf32>
    %115 = vector.broadcast %114 : vector<1x1x32xf32> to vector<8x16x32xf32>
    %116 = arith.mulf %101, %115 : vector<8x16x32xf32>
    %cst_97 = arith.constant dense<0.000000e+00> : vector<8x16xf32>
    %117 = vector.multi_reduction <add>, %116, %cst_97 [2] : vector<8x16x32xf32> to vector<8x16xf32>
    %118 = arith.addf %111, %117 : vector<8x16xf32>
    %c0_98 = arith.constant 0 : index
    %c0_99 = arith.constant 0 : index
    %119 = vector.load %arg8[%c0_98, %c0_99] : memref<8x16xf32, #tpu.memory_space<vmem>>, vector<8x16xf32>
    tpu.vector_store %arg8[%c0_98, %c0_99], %118 {strides = array<i32>} : memref<8x16xf32, #tpu.memory_space<vmem>>, vector<8x16xf32>,
    %c2_100 = arith.constant 2 : index
    %c0_101 = arith.constant 0 : index
    %c0_102 = arith.constant 0 : index
    %120 = vector.load %arg9[%c2_100, %c0_101, %c0_102] : memref<10x16x32xbf16, #tpu.memory_space<vmem>>, vector<8x16x32xbf16>
    %121 = arith.extf %120 : vector<8x16x32xbf16> to vector<8x16x32xf32>
    %c0_103 = arith.constant 0 : index
    %c0_104 = arith.constant 0 : index
    %122 = vector.load %arg7[%c0_103, %c0_104] : memref<8x16xf32, #tpu.memory_space<vmem>>, vector<8x16xf32>
    %c7 = arith.constant 7 : index
    %c0_105 = arith.constant 0 : index
    %123 = vector.load %arg3[%c7, %c0_105] : memref<9x32xf32, #tpu.memory_space<vmem>>, vector<1x32xf32>
    %124 = vector.shape_cast %123 : vector<1x32xf32> to vector<32xf32>
    %125 = vector.shape_cast %124 : vector<32xf32> to vector<1x1x32xf32>
    %126 = vector.broadcast %125 : vector<1x1x32xf32> to vector<8x16x32xf32>
    %127 = arith.mulf %121, %126 : vector<8x16x32xf32>
    %cst_106 = arith.constant dense<0.000000e+00> : vector<8x16xf32>
    %128 = vector.multi_reduction <add>, %127, %cst_106 [2] : vector<8x16x32xf32> to vector<8x16xf32>
    %129 = arith.addf %122, %128 : vector<8x16xf32>
    %c0_107 = arith.constant 0 : index
    %c0_108 = arith.constant 0 : index
    %130 = vector.load %arg7[%c0_107, %c0_108] : memref<8x16xf32, #tpu.memory_space<vmem>>, vector<8x16xf32>
    tpu.vector_store %arg7[%c0_107, %c0_108], %129 {strides = array<i32>} : memref<8x16xf32, #tpu.memory_space<vmem>>, vector<8x16xf32>,
    %c0_109 = arith.constant 0 : index
    %c0_110 = arith.constant 0 : index
    %131 = vector.load %arg8[%c0_109, %c0_110] : memref<8x16xf32, #tpu.memory_space<vmem>>, vector<8x16xf32>
    %c7_111 = arith.constant 7 : index
    %c0_112 = arith.constant 0 : index
    %132 = vector.load %arg4[%c7_111, %c0_112] : memref<9x32xf32, #tpu.memory_space<vmem>>, vector<1x32xf32>
    %133 = vector.shape_cast %132 : vector<1x32xf32> to vector<32xf32>
    %134 = vector.shape_cast %133 : vector<32xf32> to vector<1x1x32xf32>
    %135 = vector.broadcast %134 : vector<1x1x32xf32> to vector<8x16x32xf32>
    %136 = arith.mulf %121, %135 : vector<8x16x32xf32>
    %cst_113 = arith.constant dense<0.000000e+00> : vector<8x16xf32>
    %137 = vector.multi_reduction <add>, %136, %cst_113 [2] : vector<8x16x32xf32> to vector<8x16xf32>
    %138 = arith.addf %131, %137 : vector<8x16xf32>
    %c0_114 = arith.constant 0 : index
    %c0_115 = arith.constant 0 : index
    %139 = vector.load %arg8[%c0_114, %c0_115] : memref<8x16xf32, #tpu.memory_space<vmem>>, vector<8x16xf32>
    tpu.vector_store %arg8[%c0_114, %c0_115], %138 {strides = array<i32>} : memref<8x16xf32, #tpu.memory_space<vmem>>, vector<8x16xf32>,
    %c0_116 = arith.constant 0 : index
    %140 = arith.index_cast %1 : i32 to index
    %c2_117 = arith.constant 2 : index
    %c0_118 = arith.constant 0 : index
    %141 = vector.load %arg2[%c0_116, %140, %c2_117, %c0_118] : memref<1x18x18x32xbf16, #tpu.memory_space<vmem>>, vector<1x10x16x32xbf16>
    %142 = vector.shape_cast %141 : vector<1x10x16x32xbf16> to vector<10x16x32xbf16>
    %c0_119 = arith.constant 0 : index
    %c0_120 = arith.constant 0 : index
    %c0_121 = arith.constant 0 : index
    %143 = vector.load %arg9[%c0_119, %c0_120, %c0_121] : memref<10x16x32xbf16, #tpu.memory_space<vmem>>, vector<10x16x32xbf16>
    tpu.vector_store %arg9[%c0_119, %c0_120, %c0_121], %142 {strides = array<i32>} : memref<10x16x32xbf16, #tpu.memory_space<vmem>>, vector<10x16x32xbf16>,
    %c0_122 = arith.constant 0 : index
    %c0_123 = arith.constant 0 : index
    %c0_124 = arith.constant 0 : index
    %144 = vector.load %arg9[%c0_122, %c0_123, %c0_124] : memref<10x16x32xbf16, #tpu.memory_space<vmem>>, vector<8x16x32xbf16>
    %145 = arith.extf %144 : vector<8x16x32xbf16> to vector<8x16x32xf32>
    %c0_125 = arith.constant 0 : index
    %c0_126 = arith.constant 0 : index
    %146 = vector.load %arg7[%c0_125, %c0_126] : memref<8x16xf32, #tpu.memory_space<vmem>>, vector<8x16xf32>
    %c2_127 = arith.constant 2 : index
    %c0_128 = arith.constant 0 : index
    %147 = vector.load %arg3[%c2_127, %c0_128] : memref<9x32xf32, #tpu.memory_space<vmem>>, vector<1x32xf32>
    %148 = vector.shape_cast %147 : vector<1x32xf32> to vector<32xf32>
    %149 = vector.shape_cast %148 : vector<32xf32> to vector<1x1x32xf32>
    %150 = vector.broadcast %149 : vector<1x1x32xf32> to vector<8x16x32xf32>
    %151 = arith.mulf %145, %150 : vector<8x16x32xf32>
    %cst_129 = arith.constant dense<0.000000e+00> : vector<8x16xf32>
    %152 = vector.multi_reduction <add>, %151, %cst_129 [2] : vector<8x16x32xf32> to vector<8x16xf32>
    %153 = arith.addf %146, %152 : vector<8x16xf32>
    %c0_130 = arith.constant 0 : index
    %c0_131 = arith.constant 0 : index
    %154 = vector.load %arg7[%c0_130, %c0_131] : memref<8x16xf32, #tpu.memory_space<vmem>>, vector<8x16xf32>
    tpu.vector_store %arg7[%c0_130, %c0_131], %153 {strides = array<i32>} : memref<8x16xf32, #tpu.memory_space<vmem>>, vector<8x16xf32>,
    %c0_132 = arith.constant 0 : index
    %c0_133 = arith.constant 0 : index
    %155 = vector.load %arg8[%c0_132, %c0_133] : memref<8x16xf32, #tpu.memory_space<vmem>>, vector<8x16xf32>
    %c2_134 = arith.constant 2 : index
    %c0_135 = arith.constant 0 : index
    %156 = vector.load %arg4[%c2_134, %c0_135] : memref<9x32xf32, #tpu.memory_space<vmem>>, vector<1x32xf32>
    %157 = vector.shape_cast %156 : vector<1x32xf32> to vector<32xf32>
    %158 = vector.shape_cast %157 : vector<32xf32> to vector<1x1x32xf32>
    %159 = vector.broadcast %158 : vector<1x1x32xf32> to vector<8x16x32xf32>
    %160 = arith.mulf %145, %159 : vector<8x16x32xf32>
    %cst_136 = arith.constant dense<0.000000e+00> : vector<8x16xf32>
    %161 = vector.multi_reduction <add>, %160, %cst_136 [2] : vector<8x16x32xf32> to vector<8x16xf32>
    %162 = arith.addf %155, %161 : vector<8x16xf32>
    %c0_137 = arith.constant 0 : index
    %c0_138 = arith.constant 0 : index
    %163 = vector.load %arg8[%c0_137, %c0_138] : memref<8x16xf32, #tpu.memory_space<vmem>>, vector<8x16xf32>
    tpu.vector_store %arg8[%c0_137, %c0_138], %162 {strides = array<i32>} : memref<8x16xf32, #tpu.memory_space<vmem>>, vector<8x16xf32>,
    %c1_139 = arith.constant 1 : index
    %c0_140 = arith.constant 0 : index
    %c0_141 = arith.constant 0 : index
    %164 = vector.load %arg9[%c1_139, %c0_140, %c0_141] : memref<10x16x32xbf16, #tpu.memory_space<vmem>>, vector<8x16x32xbf16>
    %165 = arith.extf %164 : vector<8x16x32xbf16> to vector<8x16x32xf32>
    %c0_142 = arith.constant 0 : index
    %c0_143 = arith.constant 0 : index
    %166 = vector.load %arg7[%c0_142, %c0_143] : memref<8x16xf32, #tpu.memory_space<vmem>>, vector<8x16xf32>
    %c5 = arith.constant 5 : index
    %c0_144 = arith.constant 0 : index
    %167 = vector.load %arg3[%c5, %c0_144] : memref<9x32xf32, #tpu.memory_space<vmem>>, vector<1x32xf32>
    %168 = vector.shape_cast %167 : vector<1x32xf32> to vector<32xf32>
    %169 = vector.shape_cast %168 : vector<32xf32> to vector<1x1x32xf32>
    %170 = vector.broadcast %169 : vector<1x1x32xf32> to vector<8x16x32xf32>
    %171 = arith.mulf %165, %170 : vector<8x16x32xf32>
    %cst_145 = arith.constant dense<0.000000e+00> : vector<8x16xf32>
    %172 = vector.multi_reduction <add>, %171, %cst_145 [2] : vector<8x16x32xf32> to vector<8x16xf32>
    %173 = arith.addf %166, %172 : vector<8x16xf32>
    %c0_146 = arith.constant 0 : index
    %c0_147 = arith.constant 0 : index
    %174 = vector.load %arg7[%c0_146, %c0_147] : memref<8x16xf32, #tpu.memory_space<vmem>>, vector<8x16xf32>
    tpu.vector_store %arg7[%c0_146, %c0_147], %173 {strides = array<i32>} : memref<8x16xf32, #tpu.memory_space<vmem>>, vector<8x16xf32>,
    %c0_148 = arith.constant 0 : index
    %c0_149 = arith.constant 0 : index
    %175 = vector.load %arg8[%c0_148, %c0_149] : memref<8x16xf32, #tpu.memory_space<vmem>>, vector<8x16xf32>
    %c5_150 = arith.constant 5 : index
    %c0_151 = arith.constant 0 : index
    %176 = vector.load %arg4[%c5_150, %c0_151] : memref<9x32xf32, #tpu.memory_space<vmem>>, vector<1x32xf32>
    %177 = vector.shape_cast %176 : vector<1x32xf32> to vector<32xf32>
    %178 = vector.shape_cast %177 : vector<32xf32> to vector<1x1x32xf32>
    %179 = vector.broadcast %178 : vector<1x1x32xf32> to vector<8x16x32xf32>
    %180 = arith.mulf %165, %179 : vector<8x16x32xf32>
    %cst_152 = arith.constant dense<0.000000e+00> : vector<8x16xf32>
    %181 = vector.multi_reduction <add>, %180, %cst_152 [2] : vector<8x16x32xf32> to vector<8x16xf32>
    %182 = arith.addf %175, %181 : vector<8x16xf32>
    %c0_153 = arith.constant 0 : index
    %c0_154 = arith.constant 0 : index
    %183 = vector.load %arg8[%c0_153, %c0_154] : memref<8x16xf32, #tpu.memory_space<vmem>>, vector<8x16xf32>
    tpu.vector_store %arg8[%c0_153, %c0_154], %182 {strides = array<i32>} : memref<8x16xf32, #tpu.memory_space<vmem>>, vector<8x16xf32>,
    %c2_155 = arith.constant 2 : index
    %c0_156 = arith.constant 0 : index
    %c0_157 = arith.constant 0 : index
    %184 = vector.load %arg9[%c2_155, %c0_156, %c0_157] : memref<10x16x32xbf16, #tpu.memory_space<vmem>>, vector<8x16x32xbf16>
    %185 = arith.extf %184 : vector<8x16x32xbf16> to vector<8x16x32xf32>
    %c0_158 = arith.constant 0 : index
    %c0_159 = arith.constant 0 : index
    %186 = vector.load %arg7[%c0_158, %c0_159] : memref<8x16xf32, #tpu.memory_space<vmem>>, vector<8x16xf32>
    %c8 = arith.constant 8 : index
    %c0_160 = arith.constant 0 : index
    %187 = vector.load %arg3[%c8, %c0_160] : memref<9x32xf32, #tpu.memory_space<vmem>>, vector<1x32xf32>
    %188 = vector.shape_cast %187 : vector<1x32xf32> to vector<32xf32>
    %189 = vector.shape_cast %188 : vector<32xf32> to vector<1x1x32xf32>
    %190 = vector.broadcast %189 : vector<1x1x32xf32> to vector<8x16x32xf32>
    %191 = arith.mulf %185, %190 : vector<8x16x32xf32>
    %cst_161 = arith.constant dense<0.000000e+00> : vector<8x16xf32>
    %192 = vector.multi_reduction <add>, %191, %cst_161 [2] : vector<8x16x32xf32> to vector<8x16xf32>
    %193 = arith.addf %186, %192 : vector<8x16xf32>
    %c0_162 = arith.constant 0 : index
    %c0_163 = arith.constant 0 : index
    %194 = vector.load %arg7[%c0_162, %c0_163] : memref<8x16xf32, #tpu.memory_space<vmem>>, vector<8x16xf32>
    tpu.vector_store %arg7[%c0_162, %c0_163], %193 {strides = array<i32>} : memref<8x16xf32, #tpu.memory_space<vmem>>, vector<8x16xf32>,
    %c0_164 = arith.constant 0 : index
    %c0_165 = arith.constant 0 : index
    %195 = vector.load %arg8[%c0_164, %c0_165] : memref<8x16xf32, #tpu.memory_space<vmem>>, vector<8x16xf32>
    %c8_166 = arith.constant 8 : index
    %c0_167 = arith.constant 0 : index
    %196 = vector.load %arg4[%c8_166, %c0_167] : memref<9x32xf32, #tpu.memory_space<vmem>>, vector<1x32xf32>
    %197 = vector.shape_cast %196 : vector<1x32xf32> to vector<32xf32>
    %198 = vector.shape_cast %197 : vector<32xf32> to vector<1x1x32xf32>
    %199 = vector.broadcast %198 : vector<1x1x32xf32> to vector<8x16x32xf32>
    %200 = arith.mulf %185, %199 : vector<8x16x32xf32>
    %cst_168 = arith.constant dense<0.000000e+00> : vector<8x16xf32>
    %201 = vector.multi_reduction <add>, %200, %cst_168 [2] : vector<8x16x32xf32> to vector<8x16xf32>
    %202 = arith.addf %195, %201 : vector<8x16xf32>
    %c0_169 = arith.constant 0 : index
    %c0_170 = arith.constant 0 : index
    %203 = vector.load %arg8[%c0_169, %c0_170] : memref<8x16xf32, #tpu.memory_space<vmem>>, vector<8x16xf32>
    tpu.vector_store %arg8[%c0_169, %c0_170], %202 {strides = array<i32>} : memref<8x16xf32, #tpu.memory_space<vmem>>, vector<8x16xf32>,
    %c0_171 = arith.constant 0 : index
    %c0_172 = arith.constant 0 : index
    %204 = vector.load %arg7[%c0_171, %c0_172] : memref<8x16xf32, #tpu.memory_space<vmem>>, vector<8x16xf32>
    %c0_173 = arith.constant 0 : index
    %c0_174 = arith.constant 0 : index
    %c0_175 = arith.constant 0 : index
    %c0_176 = arith.constant 0 : index
    %205 = vector.load %arg6[%c0_173, %c0_174, %c0_175, %c0_176] : memref<1x2x8x16xf32, #tpu.memory_space<vmem>>, vector<1x1x8x16xf32>
    %206 = vector.shape_cast %205 : vector<1x1x8x16xf32> to vector<8x16xf32>
    %207 = vector.shape_cast %204 : vector<8x16xf32> to vector<1x1x8x16xf32>
    tpu.vector_store %arg6[%c0_173, %c0_174, %c0_175, %c0_176], %207 {strides = array<i32>} : memref<1x2x8x16xf32, #tpu.memory_space<vmem>>, vector<1x1x8x16xf32>,
    %c0_177 = arith.constant 0 : index
    %c0_178 = arith.constant 0 : index
    %208 = vector.load %arg8[%c0_177, %c0_178] : memref<8x16xf32, #tpu.memory_space<vmem>>, vector<8x16xf32>
    %c0_179 = arith.constant 0 : index
    %c1_180 = arith.constant 1 : index
    %c0_181 = arith.constant 0 : index
    %c0_182 = arith.constant 0 : index
    %209 = vector.load %arg6[%c0_179, %c1_180, %c0_181, %c0_182] : memref<1x2x8x16xf32, #tpu.memory_space<vmem>>, vector<1x1x8x16xf32>
    %210 = vector.shape_cast %209 : vector<1x1x8x16xf32> to vector<8x16xf32>
    %211 = vector.shape_cast %208 : vector<8x16xf32> to vector<1x1x8x16xf32>
    tpu.vector_store %arg6[%c0_179, %c1_180, %c0_181, %c0_182], %211 {strides = array<i32>} : memref<1x2x8x16xf32, #tpu.memory_space<vmem>>, vector<1x1x8x16xf32>,
    return
  }
  func.func @transform_0(%arg0: i32, %arg1: i32) -> (i32, i32, i32, i32) {
    %c0_i32 = arith.constant 0 : i32
    %c0_i32_0 = arith.constant 0 : i32
    %c0_i32_1 = arith.constant 0 : i32
    %c0_i32_2 = arith.constant 0 : i32
    return %arg0, %c0_i32, %c0_i32_0, %c0_i32_1 : i32, i32, i32, i32
  }
  func.func @transform_1(%arg0: i32, %arg1: i32) -> (i32, i32) {
    %c0_i32 = arith.constant 0 : i32
    %c0_i32_0 = arith.constant 0 : i32
    %c0_i32_1 = arith.constant 0 : i32
    return %c0_i32, %c0_i32_0 : i32, i32
  }
  func.func @transform_2(%arg0: i32, %arg1: i32) -> (i32, i32) {
    %c0_i32 = arith.constant 0 : i32
    %c0_i32_0 = arith.constant 0 : i32
    %c0_i32_1 = arith.constant 0 : i32
    return %c0_i32, %c0_i32_0 : i32, i32
  }
  func.func @transform_3(%arg0: i32, %arg1: i32) -> (i32, i32, i32) {
    %c0_i32 = arith.constant 0 : i32
    %c0_i32_0 = arith.constant 0 : i32
    %c0_i32_1 = arith.constant 0 : i32
    %c0_i32_2 = arith.constant 0 : i32
    return %c0_i32, %c0_i32_0, %c0_i32_1 : i32, i32, i32
  }
  func.func @transform_4(%arg0: i32, %arg1: i32) -> (i32, i32, i32, i32) {
    %c0_i32 = arith.constant 0 : i32
    %c0_i32_0 = arith.constant 0 : i32
    %c0_i32_1 = arith.constant 0 : i32
    return %arg0, %c0_i32, %arg1, %c0_i32_0 : i32, i32, i32, i32
  }
}

module attributes {stable_mosaic.version = 11 : i64} {
  func.func @_fft2_dc_kernel(%arg0: i32, %arg1: memref<1x2x16x16xf32, #tpu.memory_space<vmem>>, %arg2: memref<1x2x16x16xf32, #tpu.memory_space<vmem>>, %arg3: memref<1x16xf32, #tpu.memory_space<vmem>>, %arg4: memref<16x16xf32, #tpu.memory_space<vmem>>, %arg5: memref<16x16xf32, #tpu.memory_space<vmem>>, %arg6: memref<16x16xf32, #tpu.memory_space<vmem>>, %arg7: memref<16x16xf32, #tpu.memory_space<vmem>>, %arg8: memref<1x2x16x16xf32, #tpu.memory_space<vmem>>) attributes {dimension_semantics = [#tpu.dimension_semantics<parallel>], iteration_bounds = array<i64: 2>, scalar_prefetch = 0 : i64, scratch_operands = 0 : i64, tpu.core_type = #tpu.core_type<tc>, window_params = [{transform_indices = @transform_0, window_bounds = array<i64: 1, 2, 16, 16>}, {transform_indices = @transform_1, window_bounds = array<i64: 1, 2, 16, 16>}, {pipeline_mode = #tpu.pipeline_mode<synchronous>, transform_indices = @transform_2, window_bounds = array<i64: 1, 16>}, {pipeline_mode = #tpu.pipeline_mode<synchronous>, transform_indices = @transform_3, window_bounds = array<i64: 16, 16>}, {pipeline_mode = #tpu.pipeline_mode<synchronous>, transform_indices = @transform_4, window_bounds = array<i64: 16, 16>}, {pipeline_mode = #tpu.pipeline_mode<synchronous>, transform_indices = @transform_5, window_bounds = array<i64: 16, 16>}, {pipeline_mode = #tpu.pipeline_mode<synchronous>, transform_indices = @transform_6, window_bounds = array<i64: 16, 16>}, {transform_indices = @transform_7, window_bounds = array<i64: 1, 2, 16, 16>}]} {
    %c0 = arith.constant 0 : index
    %c0_0 = arith.constant 0 : index
    %c0_1 = arith.constant 0 : index
    %c0_2 = arith.constant 0 : index
    %0 = vector.load %arg1[%c0, %c0_0, %c0_1, %c0_2] : memref<1x2x16x16xf32, #tpu.memory_space<vmem>>, vector<1x1x16x16xf32>
    %1 = vector.shape_cast %0 : vector<1x1x16x16xf32> to vector<16x16xf32>
    %c0_3 = arith.constant 0 : index
    %c1 = arith.constant 1 : index
    %c0_4 = arith.constant 0 : index
    %c0_5 = arith.constant 0 : index
    %2 = vector.load %arg1[%c0_3, %c1, %c0_4, %c0_5] : memref<1x2x16x16xf32, #tpu.memory_space<vmem>>, vector<1x1x16x16xf32>
    %3 = vector.shape_cast %2 : vector<1x1x16x16xf32> to vector<16x16xf32>
    %c0_6 = arith.constant 0 : index
    %c0_7 = arith.constant 0 : index
    %4 = vector.load %arg4[%c0_6, %c0_7] : memref<16x16xf32, #tpu.memory_space<vmem>>, vector<16x16xf32>
    %c0_8 = arith.constant 0 : index
    %c0_9 = arith.constant 0 : index
    %5 = vector.load %arg5[%c0_8, %c0_9] : memref<16x16xf32, #tpu.memory_space<vmem>>, vector<16x16xf32>
    %c0_10 = arith.constant 0 : index
    %c0_11 = arith.constant 0 : index
    %6 = vector.load %arg6[%c0_10, %c0_11] : memref<16x16xf32, #tpu.memory_space<vmem>>, vector<16x16xf32>
    %c0_12 = arith.constant 0 : index
    %c0_13 = arith.constant 0 : index
    %7 = vector.load %arg7[%c0_12, %c0_13] : memref<16x16xf32, #tpu.memory_space<vmem>>, vector<16x16xf32>
    %cst = arith.constant dense<0.000000e+00> : vector<16x16xf32>
    %8 = tpu.matmul %1, %6, %cst {dimension_numbers = #tpu.dot_dimension_numbers<[1], [0], [0], [1], [0, 0, 1, 1], [], []>} : vector<16x16xf32>, vector<16x16xf32>, vector<16x16xf32> -> vector<16x16xf32>
    %cst_14 = arith.constant dense<0.000000e+00> : vector<16x16xf32>
    %9 = tpu.matmul %3, %7, %cst_14 {dimension_numbers = #tpu.dot_dimension_numbers<[1], [0], [0], [1], [0, 0, 1, 1], [], []>} : vector<16x16xf32>, vector<16x16xf32>, vector<16x16xf32> -> vector<16x16xf32>
    %10 = arith.subf %8, %9 : vector<16x16xf32>
    %cst_15 = arith.constant dense<0.000000e+00> : vector<16x16xf32>
    %11 = tpu.matmul %1, %7, %cst_15 {dimension_numbers = #tpu.dot_dimension_numbers<[1], [0], [0], [1], [0, 0, 1, 1], [], []>} : vector<16x16xf32>, vector<16x16xf32>, vector<16x16xf32> -> vector<16x16xf32>
    %cst_16 = arith.constant dense<0.000000e+00> : vector<16x16xf32>
    %12 = tpu.matmul %3, %6, %cst_16 {dimension_numbers = #tpu.dot_dimension_numbers<[1], [0], [0], [1], [0, 0, 1, 1], [], []>} : vector<16x16xf32>, vector<16x16xf32>, vector<16x16xf32> -> vector<16x16xf32>
    %13 = arith.addf %11, %12 : vector<16x16xf32>
    %cst_17 = arith.constant dense<0.000000e+00> : vector<16x16xf32>
    %14 = tpu.matmul %4, %10, %cst_17 {dimension_numbers = #tpu.dot_dimension_numbers<[1], [0], [0], [1], [0, 0, 1, 1], [], []>} : vector<16x16xf32>, vector<16x16xf32>, vector<16x16xf32> -> vector<16x16xf32>
    %cst_18 = arith.constant dense<0.000000e+00> : vector<16x16xf32>
    %15 = tpu.matmul %5, %13, %cst_18 {dimension_numbers = #tpu.dot_dimension_numbers<[1], [0], [0], [1], [0, 0, 1, 1], [], []>} : vector<16x16xf32>, vector<16x16xf32>, vector<16x16xf32> -> vector<16x16xf32>
    %16 = arith.subf %14, %15 : vector<16x16xf32>
    %cst_19 = arith.constant dense<0.000000e+00> : vector<16x16xf32>
    %17 = tpu.matmul %5, %10, %cst_19 {dimension_numbers = #tpu.dot_dimension_numbers<[1], [0], [0], [1], [0, 0, 1, 1], [], []>} : vector<16x16xf32>, vector<16x16xf32>, vector<16x16xf32> -> vector<16x16xf32>
    %cst_20 = arith.constant dense<0.000000e+00> : vector<16x16xf32>
    %18 = tpu.matmul %4, %13, %cst_20 {dimension_numbers = #tpu.dot_dimension_numbers<[1], [0], [0], [1], [0, 0, 1, 1], [], []>} : vector<16x16xf32>, vector<16x16xf32>, vector<16x16xf32> -> vector<16x16xf32>
    %19 = arith.addf %17, %18 : vector<16x16xf32>
    %c0_21 = arith.constant 0 : index
    %c0_22 = arith.constant 0 : index
    %20 = vector.load %arg3[%c0_21, %c0_22] : memref<1x16xf32, #tpu.memory_space<vmem>>, vector<1x16xf32>
    %c0_23 = arith.constant 0 : index
    %c0_24 = arith.constant 0 : index
    %c0_25 = arith.constant 0 : index
    %c0_26 = arith.constant 0 : index
    %21 = vector.load %arg2[%c0_23, %c0_24, %c0_25, %c0_26] : memref<1x2x16x16xf32, #tpu.memory_space<vmem>>, vector<1x1x16x16xf32>
    %22 = vector.shape_cast %21 : vector<1x1x16x16xf32> to vector<16x16xf32>
    %23 = vector.broadcast %20 : vector<1x16xf32> to vector<16x16xf32>
    %24 = arith.mulf %23, %22 : vector<16x16xf32>
    %cst_27 = arith.constant 1.000000e+00 : f32
    %25 = vector.broadcast %cst_27 : f32 to vector<1x16xf32>
    %26 = arith.subf %25, %20 : vector<1x16xf32>
    %27 = vector.broadcast %26 : vector<1x16xf32> to vector<16x16xf32>
    %28 = arith.mulf %27, %16 : vector<16x16xf32>
    %29 = arith.addf %24, %28 : vector<16x16xf32>
    %c0_28 = arith.constant 0 : index
    %c0_29 = arith.constant 0 : index
    %c0_30 = arith.constant 0 : index
    %c0_31 = arith.constant 0 : index
    %30 = vector.load %arg8[%c0_28, %c0_29, %c0_30, %c0_31] : memref<1x2x16x16xf32, #tpu.memory_space<vmem>>, vector<1x1x16x16xf32>
    %31 = vector.shape_cast %30 : vector<1x1x16x16xf32> to vector<16x16xf32>
    %32 = vector.shape_cast %29 : vector<16x16xf32> to vector<1x1x16x16xf32>
    tpu.vector_store %arg8[%c0_28, %c0_29, %c0_30, %c0_31], %32 {strides = array<i32>} : memref<1x2x16x16xf32, #tpu.memory_space<vmem>>, vector<1x1x16x16xf32>,
    %c0_32 = arith.constant 0 : index
    %c1_33 = arith.constant 1 : index
    %c0_34 = arith.constant 0 : index
    %c0_35 = arith.constant 0 : index
    %33 = vector.load %arg2[%c0_32, %c1_33, %c0_34, %c0_35] : memref<1x2x16x16xf32, #tpu.memory_space<vmem>>, vector<1x1x16x16xf32>
    %34 = vector.shape_cast %33 : vector<1x1x16x16xf32> to vector<16x16xf32>
    %35 = vector.broadcast %20 : vector<1x16xf32> to vector<16x16xf32>
    %36 = arith.mulf %35, %34 : vector<16x16xf32>
    %cst_36 = arith.constant 1.000000e+00 : f32
    %37 = vector.broadcast %cst_36 : f32 to vector<1x16xf32>
    %38 = arith.subf %37, %20 : vector<1x16xf32>
    %39 = vector.broadcast %38 : vector<1x16xf32> to vector<16x16xf32>
    %40 = arith.mulf %39, %19 : vector<16x16xf32>
    %41 = arith.addf %36, %40 : vector<16x16xf32>
    %c0_37 = arith.constant 0 : index
    %c1_38 = arith.constant 1 : index
    %c0_39 = arith.constant 0 : index
    %c0_40 = arith.constant 0 : index
    %42 = vector.load %arg8[%c0_37, %c1_38, %c0_39, %c0_40] : memref<1x2x16x16xf32, #tpu.memory_space<vmem>>, vector<1x1x16x16xf32>
    %43 = vector.shape_cast %42 : vector<1x1x16x16xf32> to vector<16x16xf32>
    %44 = vector.shape_cast %41 : vector<16x16xf32> to vector<1x1x16x16xf32>
    tpu.vector_store %arg8[%c0_37, %c1_38, %c0_39, %c0_40], %44 {strides = array<i32>} : memref<1x2x16x16xf32, #tpu.memory_space<vmem>>, vector<1x1x16x16xf32>,
    return
  }
  func.func @transform_0(%arg0: i32) -> (i32, i32, i32, i32) {
    %c0_i32 = arith.constant 0 : i32
    %c0_i32_0 = arith.constant 0 : i32
    %c0_i32_1 = arith.constant 0 : i32
    %c0_i32_2 = arith.constant 0 : i32
    return %arg0, %c0_i32, %c0_i32_0, %c0_i32_1 : i32, i32, i32, i32
  }
  func.func @transform_1(%arg0: i32) -> (i32, i32, i32, i32) {
    %c0_i32 = arith.constant 0 : i32
    %c0_i32_0 = arith.constant 0 : i32
    %c0_i32_1 = arith.constant 0 : i32
    %c0_i32_2 = arith.constant 0 : i32
    return %arg0, %c0_i32, %c0_i32_0, %c0_i32_1 : i32, i32, i32, i32
  }
  func.func @transform_2(%arg0: i32) -> (i32, i32) {
    %c0_i32 = arith.constant 0 : i32
    %c0_i32_0 = arith.constant 0 : i32
    %c0_i32_1 = arith.constant 0 : i32
    return %c0_i32, %c0_i32_0 : i32, i32
  }
  func.func @transform_3(%arg0: i32) -> (i32, i32) {
    %c0_i32 = arith.constant 0 : i32
    %c0_i32_0 = arith.constant 0 : i32
    %c0_i32_1 = arith.constant 0 : i32
    return %c0_i32, %c0_i32_0 : i32, i32
  }
  func.func @transform_4(%arg0: i32) -> (i32, i32) {
    %c0_i32 = arith.constant 0 : i32
    %c0_i32_0 = arith.constant 0 : i32
    %c0_i32_1 = arith.constant 0 : i32
    return %c0_i32, %c0_i32_0 : i32, i32
  }
  func.func @transform_5(%arg0: i32) -> (i32, i32) {
    %c0_i32 = arith.constant 0 : i32
    %c0_i32_0 = arith.constant 0 : i32
    %c0_i32_1 = arith.constant 0 : i32
    return %c0_i32, %c0_i32_0 : i32, i32
  }
  func.func @transform_6(%arg0: i32) -> (i32, i32) {
    %c0_i32 = arith.constant 0 : i32
    %c0_i32_0 = arith.constant 0 : i32
    %c0_i32_1 = arith.constant 0 : i32
    return %c0_i32, %c0_i32_0 : i32, i32
  }
  func.func @transform_7(%arg0: i32) -> (i32, i32, i32, i32) {
    %c0_i32 = arith.constant 0 : i32
    %c0_i32_0 = arith.constant 0 : i32
    %c0_i32_1 = arith.constant 0 : i32
    %c0_i32_2 = arith.constant 0 : i32
    return %arg0, %c0_i32, %c0_i32_0, %c0_i32_1 : i32, i32, i32, i32
  }
}

module attributes {stable_mosaic.version = 11 : i64} {
  func.func @_ifft2_img_kernel(%arg0: i32, %arg1: memref<1x2x16x16xf32, #tpu.memory_space<vmem>>, %arg2: memref<16x16xf32, #tpu.memory_space<vmem>>, %arg3: memref<16x16xf32, #tpu.memory_space<vmem>>, %arg4: memref<16x16xf32, #tpu.memory_space<vmem>>, %arg5: memref<16x16xf32, #tpu.memory_space<vmem>>, %arg6: memref<1x2x16x16xbf16, #tpu.memory_space<vmem>>) attributes {dimension_semantics = [#tpu.dimension_semantics<parallel>], iteration_bounds = array<i64: 2>, scalar_prefetch = 0 : i64, scratch_operands = 0 : i64, tpu.core_type = #tpu.core_type<tc>, window_params = [{transform_indices = @transform_0, window_bounds = array<i64: 1, 2, 16, 16>}, {pipeline_mode = #tpu.pipeline_mode<synchronous>, transform_indices = @transform_1, window_bounds = array<i64: 16, 16>}, {pipeline_mode = #tpu.pipeline_mode<synchronous>, transform_indices = @transform_2, window_bounds = array<i64: 16, 16>}, {pipeline_mode = #tpu.pipeline_mode<synchronous>, transform_indices = @transform_3, window_bounds = array<i64: 16, 16>}, {pipeline_mode = #tpu.pipeline_mode<synchronous>, transform_indices = @transform_4, window_bounds = array<i64: 16, 16>}, {transform_indices = @transform_5, window_bounds = array<i64: 1, 2, 16, 16>}]} {
    %c0 = arith.constant 0 : index
    %c0_0 = arith.constant 0 : index
    %c0_1 = arith.constant 0 : index
    %c0_2 = arith.constant 0 : index
    %0 = vector.load %arg1[%c0, %c0_0, %c0_1, %c0_2] : memref<1x2x16x16xf32, #tpu.memory_space<vmem>>, vector<1x1x16x16xf32>
    %1 = vector.shape_cast %0 : vector<1x1x16x16xf32> to vector<16x16xf32>
    %c0_3 = arith.constant 0 : index
    %c1 = arith.constant 1 : index
    %c0_4 = arith.constant 0 : index
    %c0_5 = arith.constant 0 : index
    %2 = vector.load %arg1[%c0_3, %c1, %c0_4, %c0_5] : memref<1x2x16x16xf32, #tpu.memory_space<vmem>>, vector<1x1x16x16xf32>
    %3 = vector.shape_cast %2 : vector<1x1x16x16xf32> to vector<16x16xf32>
    %c0_6 = arith.constant 0 : index
    %c0_7 = arith.constant 0 : index
    %4 = vector.load %arg2[%c0_6, %c0_7] : memref<16x16xf32, #tpu.memory_space<vmem>>, vector<16x16xf32>
    %c0_8 = arith.constant 0 : index
    %c0_9 = arith.constant 0 : index
    %5 = vector.load %arg3[%c0_8, %c0_9] : memref<16x16xf32, #tpu.memory_space<vmem>>, vector<16x16xf32>
    %c0_10 = arith.constant 0 : index
    %c0_11 = arith.constant 0 : index
    %6 = vector.load %arg4[%c0_10, %c0_11] : memref<16x16xf32, #tpu.memory_space<vmem>>, vector<16x16xf32>
    %c0_12 = arith.constant 0 : index
    %c0_13 = arith.constant 0 : index
    %7 = vector.load %arg5[%c0_12, %c0_13] : memref<16x16xf32, #tpu.memory_space<vmem>>, vector<16x16xf32>
    %cst = arith.constant dense<0.000000e+00> : vector<16x16xf32>
    %8 = tpu.matmul %1, %6, %cst {dimension_numbers = #tpu.dot_dimension_numbers<[1], [0], [0], [1], [0, 0, 1, 1], [], []>} : vector<16x16xf32>, vector<16x16xf32>, vector<16x16xf32> -> vector<16x16xf32>
    %cst_14 = arith.constant dense<0.000000e+00> : vector<16x16xf32>
    %9 = tpu.matmul %3, %7, %cst_14 {dimension_numbers = #tpu.dot_dimension_numbers<[1], [0], [0], [1], [0, 0, 1, 1], [], []>} : vector<16x16xf32>, vector<16x16xf32>, vector<16x16xf32> -> vector<16x16xf32>
    %10 = arith.subf %8, %9 : vector<16x16xf32>
    %cst_15 = arith.constant dense<0.000000e+00> : vector<16x16xf32>
    %11 = tpu.matmul %1, %7, %cst_15 {dimension_numbers = #tpu.dot_dimension_numbers<[1], [0], [0], [1], [0, 0, 1, 1], [], []>} : vector<16x16xf32>, vector<16x16xf32>, vector<16x16xf32> -> vector<16x16xf32>
    %cst_16 = arith.constant dense<0.000000e+00> : vector<16x16xf32>
    %12 = tpu.matmul %3, %6, %cst_16 {dimension_numbers = #tpu.dot_dimension_numbers<[1], [0], [0], [1], [0, 0, 1, 1], [], []>} : vector<16x16xf32>, vector<16x16xf32>, vector<16x16xf32> -> vector<16x16xf32>
    %13 = arith.addf %11, %12 : vector<16x16xf32>
    %cst_17 = arith.constant dense<0.000000e+00> : vector<16x16xf32>
    %14 = tpu.matmul %4, %10, %cst_17 {dimension_numbers = #tpu.dot_dimension_numbers<[1], [0], [0], [1], [0, 0, 1, 1], [], []>} : vector<16x16xf32>, vector<16x16xf32>, vector<16x16xf32> -> vector<16x16xf32>
    %cst_18 = arith.constant dense<0.000000e+00> : vector<16x16xf32>
    %15 = tpu.matmul %5, %13, %cst_18 {dimension_numbers = #tpu.dot_dimension_numbers<[1], [0], [0], [1], [0, 0, 1, 1], [], []>} : vector<16x16xf32>, vector<16x16xf32>, vector<16x16xf32> -> vector<16x16xf32>
    %16 = arith.subf %14, %15 : vector<16x16xf32>
    %cst_19 = arith.constant dense<0.000000e+00> : vector<16x16xf32>
    %17 = tpu.matmul %5, %10, %cst_19 {dimension_numbers = #tpu.dot_dimension_numbers<[1], [0], [0], [1], [0, 0, 1, 1], [], []>} : vector<16x16xf32>, vector<16x16xf32>, vector<16x16xf32> -> vector<16x16xf32>
    %cst_20 = arith.constant dense<0.000000e+00> : vector<16x16xf32>
    %18 = tpu.matmul %4, %13, %cst_20 {dimension_numbers = #tpu.dot_dimension_numbers<[1], [0], [0], [1], [0, 0, 1, 1], [], []>} : vector<16x16xf32>, vector<16x16xf32>, vector<16x16xf32> -> vector<16x16xf32>
    %19 = arith.addf %17, %18 : vector<16x16xf32>
    %20 = arith.truncf %16 : vector<16x16xf32> to vector<16x16xbf16>
    %c0_21 = arith.constant 0 : index
    %c0_22 = arith.constant 0 : index
    %c0_23 = arith.constant 0 : index
    %c0_24 = arith.constant 0 : index
    %21 = vector.load %arg6[%c0_21, %c0_22, %c0_23, %c0_24] : memref<1x2x16x16xbf16, #tpu.memory_space<vmem>>, vector<1x1x16x16xbf16>
    %22 = vector.shape_cast %21 : vector<1x1x16x16xbf16> to vector<16x16xbf16>
    %23 = vector.shape_cast %20 : vector<16x16xbf16> to vector<1x1x16x16xbf16>
    tpu.vector_store %arg6[%c0_21, %c0_22, %c0_23, %c0_24], %23 {strides = array<i32>} : memref<1x2x16x16xbf16, #tpu.memory_space<vmem>>, vector<1x1x16x16xbf16>,
    %24 = arith.truncf %19 : vector<16x16xf32> to vector<16x16xbf16>
    %c0_25 = arith.constant 0 : index
    %c1_26 = arith.constant 1 : index
    %c0_27 = arith.constant 0 : index
    %c0_28 = arith.constant 0 : index
    %25 = vector.load %arg6[%c0_25, %c1_26, %c0_27, %c0_28] : memref<1x2x16x16xbf16, #tpu.memory_space<vmem>>, vector<1x1x16x16xbf16>
    %26 = vector.shape_cast %25 : vector<1x1x16x16xbf16> to vector<16x16xbf16>
    %27 = vector.shape_cast %24 : vector<16x16xbf16> to vector<1x1x16x16xbf16>
    tpu.vector_store %arg6[%c0_25, %c1_26, %c0_27, %c0_28], %27 {strides = array<i32>} : memref<1x2x16x16xbf16, #tpu.memory_space<vmem>>, vector<1x1x16x16xbf16>,
    return
  }
  func.func @transform_0(%arg0: i32) -> (i32, i32, i32, i32) {
    %c0_i32 = arith.constant 0 : i32
    %c0_i32_0 = arith.constant 0 : i32
    %c0_i32_1 = arith.constant 0 : i32
    %c0_i32_2 = arith.constant 0 : i32
    return %arg0, %c0_i32, %c0_i32_0, %c0_i32_1 : i32, i32, i32, i32
  }
  func.func @transform_1(%arg0: i32) -> (i32, i32) {
    %c0_i32 = arith.constant 0 : i32
    %c0_i32_0 = arith.constant 0 : i32
    %c0_i32_1 = arith.constant 0 : i32
    return %c0_i32, %c0_i32_0 : i32, i32
  }
  func.func @transform_2(%arg0: i32) -> (i32, i32) {
    %c0_i32 = arith.constant 0 : i32
    %c0_i32_0 = arith.constant 0 : i32
    %c0_i32_1 = arith.constant 0 : i32
    return %c0_i32, %c0_i32_0 : i32, i32
  }
  func.func @transform_3(%arg0: i32) -> (i32, i32) {
    %c0_i32 = arith.constant 0 : i32
    %c0_i32_0 = arith.constant 0 : i32
    %c0_i32_1 = arith.constant 0 : i32
    return %c0_i32, %c0_i32_0 : i32, i32
  }
  func.func @transform_4(%arg0: i32) -> (i32, i32) {
    %c0_i32 = arith.constant 0 : i32
    %c0_i32_0 = arith.constant 0 : i32
    %c0_i32_1 = arith.constant 0 : i32
    return %c0_i32, %c0_i32_0 : i32, i32
  }
  func.func @transform_5(%arg0: i32) -> (i32, i32, i32, i32) {
    %c0_i32 = arith.constant 0 : i32
    %c0_i32_0 = arith.constant 0 : i32
    %c0_i32_1 = arith.constant 0 : i32
    %c0_i32_2 = arith.constant 0 : i32
    return %arg0, %c0_i32, %c0_i32_0, %c0_i32_1 : i32, i32, i32, i32
  }
}

module attributes {stable_mosaic.version = 11 : i64} {
  func.func @_ifft2_abs_kernel(%arg0: i32, %arg1: memref<1x2x16x16xf32, #tpu.memory_space<vmem>>, %arg2: memref<16x16xf32, #tpu.memory_space<vmem>>, %arg3: memref<16x16xf32, #tpu.memory_space<vmem>>, %arg4: memref<16x16xf32, #tpu.memory_space<vmem>>, %arg5: memref<16x16xf32, #tpu.memory_space<vmem>>, %arg6: memref<1x16x16xf32, #tpu.memory_space<vmem>>) attributes {dimension_semantics = [#tpu.dimension_semantics<parallel>], iteration_bounds = array<i64: 2>, scalar_prefetch = 0 : i64, scratch_operands = 0 : i64, tpu.core_type = #tpu.core_type<tc>, window_params = [{transform_indices = @transform_0, window_bounds = array<i64: 1, 2, 16, 16>}, {pipeline_mode = #tpu.pipeline_mode<synchronous>, transform_indices = @transform_1, window_bounds = array<i64: 16, 16>}, {pipeline_mode = #tpu.pipeline_mode<synchronous>, transform_indices = @transform_2, window_bounds = array<i64: 16, 16>}, {pipeline_mode = #tpu.pipeline_mode<synchronous>, transform_indices = @transform_3, window_bounds = array<i64: 16, 16>}, {pipeline_mode = #tpu.pipeline_mode<synchronous>, transform_indices = @transform_4, window_bounds = array<i64: 16, 16>}, {transform_indices = @transform_5, window_bounds = array<i64: 1, 16, 16>}]} {
    %c0 = arith.constant 0 : index
    %c0_0 = arith.constant 0 : index
    %c0_1 = arith.constant 0 : index
    %c0_2 = arith.constant 0 : index
    %0 = vector.load %arg1[%c0, %c0_0, %c0_1, %c0_2] : memref<1x2x16x16xf32, #tpu.memory_space<vmem>>, vector<1x1x16x16xf32>
    %1 = vector.shape_cast %0 : vector<1x1x16x16xf32> to vector<16x16xf32>
    %c0_3 = arith.constant 0 : index
    %c1 = arith.constant 1 : index
    %c0_4 = arith.constant 0 : index
    %c0_5 = arith.constant 0 : index
    %2 = vector.load %arg1[%c0_3, %c1, %c0_4, %c0_5] : memref<1x2x16x16xf32, #tpu.memory_space<vmem>>, vector<1x1x16x16xf32>
    %3 = vector.shape_cast %2 : vector<1x1x16x16xf32> to vector<16x16xf32>
    %c0_6 = arith.constant 0 : index
    %c0_7 = arith.constant 0 : index
    %4 = vector.load %arg2[%c0_6, %c0_7] : memref<16x16xf32, #tpu.memory_space<vmem>>, vector<16x16xf32>
    %c0_8 = arith.constant 0 : index
    %c0_9 = arith.constant 0 : index
    %5 = vector.load %arg3[%c0_8, %c0_9] : memref<16x16xf32, #tpu.memory_space<vmem>>, vector<16x16xf32>
    %c0_10 = arith.constant 0 : index
    %c0_11 = arith.constant 0 : index
    %6 = vector.load %arg4[%c0_10, %c0_11] : memref<16x16xf32, #tpu.memory_space<vmem>>, vector<16x16xf32>
    %c0_12 = arith.constant 0 : index
    %c0_13 = arith.constant 0 : index
    %7 = vector.load %arg5[%c0_12, %c0_13] : memref<16x16xf32, #tpu.memory_space<vmem>>, vector<16x16xf32>
    %cst = arith.constant dense<0.000000e+00> : vector<16x16xf32>
    %8 = tpu.matmul %1, %6, %cst {dimension_numbers = #tpu.dot_dimension_numbers<[1], [0], [0], [1], [0, 0, 1, 1], [], []>} : vector<16x16xf32>, vector<16x16xf32>, vector<16x16xf32> -> vector<16x16xf32>
    %cst_14 = arith.constant dense<0.000000e+00> : vector<16x16xf32>
    %9 = tpu.matmul %3, %7, %cst_14 {dimension_numbers = #tpu.dot_dimension_numbers<[1], [0], [0], [1], [0, 0, 1, 1], [], []>} : vector<16x16xf32>, vector<16x16xf32>, vector<16x16xf32> -> vector<16x16xf32>
    %10 = arith.subf %8, %9 : vector<16x16xf32>
    %cst_15 = arith.constant dense<0.000000e+00> : vector<16x16xf32>
    %11 = tpu.matmul %1, %7, %cst_15 {dimension_numbers = #tpu.dot_dimension_numbers<[1], [0], [0], [1], [0, 0, 1, 1], [], []>} : vector<16x16xf32>, vector<16x16xf32>, vector<16x16xf32> -> vector<16x16xf32>
    %cst_16 = arith.constant dense<0.000000e+00> : vector<16x16xf32>
    %12 = tpu.matmul %3, %6, %cst_16 {dimension_numbers = #tpu.dot_dimension_numbers<[1], [0], [0], [1], [0, 0, 1, 1], [], []>} : vector<16x16xf32>, vector<16x16xf32>, vector<16x16xf32> -> vector<16x16xf32>
    %13 = arith.addf %11, %12 : vector<16x16xf32>
    %cst_17 = arith.constant dense<0.000000e+00> : vector<16x16xf32>
    %14 = tpu.matmul %4, %10, %cst_17 {dimension_numbers = #tpu.dot_dimension_numbers<[1], [0], [0], [1], [0, 0, 1, 1], [], []>} : vector<16x16xf32>, vector<16x16xf32>, vector<16x16xf32> -> vector<16x16xf32>
    %cst_18 = arith.constant dense<0.000000e+00> : vector<16x16xf32>
    %15 = tpu.matmul %5, %13, %cst_18 {dimension_numbers = #tpu.dot_dimension_numbers<[1], [0], [0], [1], [0, 0, 1, 1], [], []>} : vector<16x16xf32>, vector<16x16xf32>, vector<16x16xf32> -> vector<16x16xf32>
    %16 = arith.subf %14, %15 : vector<16x16xf32>
    %cst_19 = arith.constant dense<0.000000e+00> : vector<16x16xf32>
    %17 = tpu.matmul %5, %10, %cst_19 {dimension_numbers = #tpu.dot_dimension_numbers<[1], [0], [0], [1], [0, 0, 1, 1], [], []>} : vector<16x16xf32>, vector<16x16xf32>, vector<16x16xf32> -> vector<16x16xf32>
    %cst_20 = arith.constant dense<0.000000e+00> : vector<16x16xf32>
    %18 = tpu.matmul %4, %13, %cst_20 {dimension_numbers = #tpu.dot_dimension_numbers<[1], [0], [0], [1], [0, 0, 1, 1], [], []>} : vector<16x16xf32>, vector<16x16xf32>, vector<16x16xf32> -> vector<16x16xf32>
    %19 = arith.addf %17, %18 : vector<16x16xf32>
    %20 = arith.mulf %16, %16 : vector<16x16xf32>
    %21 = arith.mulf %19, %19 : vector<16x16xf32>
    %22 = arith.addf %20, %21 : vector<16x16xf32>
    %23 = math.sqrt %22 : vector<16x16xf32>
    %c0_21 = arith.constant 0 : index
    %c0_22 = arith.constant 0 : index
    %c0_23 = arith.constant 0 : index
    %24 = vector.load %arg6[%c0_21, %c0_22, %c0_23] : memref<1x16x16xf32, #tpu.memory_space<vmem>>, vector<1x16x16xf32>
    %25 = vector.shape_cast %24 : vector<1x16x16xf32> to vector<16x16xf32>
    %26 = vector.shape_cast %23 : vector<16x16xf32> to vector<1x16x16xf32>
    tpu.vector_store %arg6[%c0_21, %c0_22, %c0_23], %26 {strides = array<i32>} : memref<1x16x16xf32, #tpu.memory_space<vmem>>, vector<1x16x16xf32>,
    return
  }
  func.func @transform_0(%arg0: i32) -> (i32, i32, i32, i32) {
    %c0_i32 = arith.constant 0 : i32
    %c0_i32_0 = arith.constant 0 : i32
    %c0_i32_1 = arith.constant 0 : i32
    %c0_i32_2 = arith.constant 0 : i32
    return %arg0, %c0_i32, %c0_i32_0, %c0_i32_1 : i32, i32, i32, i32
  }
  func.func @transform_1(%arg0: i32) -> (i32, i32) {
    %c0_i32 = arith.constant 0 : i32
    %c0_i32_0 = arith.constant 0 : i32
    %c0_i32_1 = arith.constant 0 : i32
    return %c0_i32, %c0_i32_0 : i32, i32
  }
  func.func @transform_2(%arg0: i32) -> (i32, i32) {
    %c0_i32 = arith.constant 0 : i32
    %c0_i32_0 = arith.constant 0 : i32
    %c0_i32_1 = arith.constant 0 : i32
    return %c0_i32, %c0_i32_0 : i32, i32
  }
  func.func @transform_3(%arg0: i32) -> (i32, i32) {
    %c0_i32 = arith.constant 0 : i32
    %c0_i32_0 = arith.constant 0 : i32
    %c0_i32_1 = arith.constant 0 : i32
    return %c0_i32, %c0_i32_0 : i32, i32
  }
  func.func @transform_4(%arg0: i32) -> (i32, i32) {
    %c0_i32 = arith.constant 0 : i32
    %c0_i32_0 = arith.constant 0 : i32
    %c0_i32_1 = arith.constant 0 : i32
    return %c0_i32, %c0_i32_0 : i32, i32
  }
  func.func @transform_5(%arg0: i32) -> (i32, i32, i32) {
    %c0_i32 = arith.constant 0 : i32
    %c0_i32_0 = arith.constant 0 : i32
    %c0_i32_1 = arith.constant 0 : i32
    return %arg0, %c0_i32, %c0_i32_0 : i32, i32, i32
  }
}

</mosaic_0001>

<llo_original>
// kernel: _lambda_.19
$region0: #{_lambda_.19}
  #allocation0 [shape = 'u32[]', space=smem, size = 0x4, offset = 0x4, fixed_abs, tag = 'smem constant byte address 0x4 - core index']
  #allocation1 [shape = 'u32[72,128]{1,0:T(1,128)}', space=vmem, size = 0x9000, scoped, tag = 'internal scratch']
  %s0 = inlined_call_operand.hbm [shape: f32[2,2,16,16], index: 0, kind: input, shape index: {}]
  %s1 = inlined_call_operand.hbm [shape: f32[16,16], index: 1, kind: input, shape index: {}]
  %s2 = inlined_call_operand.hbm [shape: f32[16,16], index: 2, kind: input, shape index: {}]
  %s3 = inlined_call_operand.vmem [shape: f32[16,16], index: 3, kind: input, shape index: {}]
  %s4 = inlined_call_operand.vmem [shape: f32[16,16], index: 4, kind: input, shape index: {}]
  %s5 = inlined_call_operand.vmem [shape: bf16[2,2,16,16], index: 5, kind: output, shape index: {}]
  %s6 = sld [smem:[#allocation0]]
  $region65: #{_lambda_.19} parent=0
    _
  %s8 = ssub.s32 1, %s6
  %s9 = scalar_select 0, %s8, %s6
  $region1: #{_lambda_.19} parent=0
    #allocation2 [shape = 'u8[32768]{0}', space=vmem, size = 0x8000, scoped, tag = 'input window, operand 0']
    #allocation3 [shape = 's32[2]{0}', space=sflag, size = 0x8, scoped, tag = 'scoped memory for _lambda_.19']
    #allocation4 [shape = 'u8[8192]{0}', space=vmem, size = 0x2000, scoped, tag = 'input window, operand 1, single buffered']
    #allocation5 [shape = 's32[1]{0}', space=sflag, size = 0x4, scoped, tag = 'scoped memory for _lambda_.19']
    #allocation6 [shape = 'u8[8192]{0}', space=vmem, size = 0x2000, scoped, tag = 'input window, operand 2, single buffered']
    %10 = vsyncpa [#allocation3], 0
    %s11 = scalar_lea.sflag [#allocation3], 1
    %12 = vsyncpa %s11, 0
    %13 = vsyncpa [#allocation5], 0
    loop: start=0, step=1, limit=4
    $region2: #{_lambda_.19} parent=1 // loop_pre_header
      _
    $region3: #{_lambda_.19} parent=1 // loop_header
      %s15 = sphi 0, %s19
      %p16 = scmp.ge.s32.totalorder %s15, 4
      %s25 = sphi 0, %s27
      %s28 = sphi 0, %s25
      %s29 = sphi 0, %s28
      %s45 = sphi 0, %s29
      %s49 = sphi 0, %s49
      %s51 = sphi 0, %s49
      %s52 = sphi 0, %s51
      %s66 = sphi 0, %s52
      %s70 = sphi 0, %s70
      %s72 = sphi 0, %s70
      %s73 = sphi 0, %s72
      %s87 = sphi 0, %s73
      %s91 = sphi 0, %s91
      %s93 = sphi 0, %s91
      %s94 = sphi 0, %s93
      %s108 = sphi 0, %s94
      %s112 = sphi 0, %s112
      %s114 = sphi 0, %s112
      %s115 = sphi 0, %s114
      %s129 = sphi 0, %s115
      %s135 = sphi 0, %s137
      %s138 = sphi 0, %s135
      %s139 = sphi 0, %s138
      %s155 = sphi 0, %s139
    $region4: #{_lambda_.19} parent=1 // loop_header_branch
      %18 = sbr.rel (%p16) target = $region8
    $region5: #{_lambda_.19} parent=1 // loop_body
      %s20 = ssub.s32 %s15, 1
      %s21 = ssub.s32 %s15, 2
      %s22 = sadd.s32 %s15, 1
      %s23 = ssub.s32 %s15, %s22
      %p24 = scmp.eq.s32.totalorder %s23, 0
      %s26 = sadd.s32 %s25, 1
      %s27 = scalar_select %p24, %s25, %s26
      %p30 = pneg %p24
      %p31 = scmp.eq.s32.totalorder %s15, 1
      %p32 = por %p30, %p31
      %p33 = scmp.ne.s32.totalorder %s25, %s28
      %p34 = scmp.eq.s32.totalorder %s15, 0
      %p35 = por %p33, %p34
      %p36 = scmp.ne.s32.totalorder %s25, %s28
      %p37 = scmp.eq.s32.totalorder %s20, 1
      %p38 = por %p36, %p37
      %p39 = scmp.ne.s32.totalorder %s28, %s29
      %p40 = scmp.eq.s32.totalorder %s20, 0
      %p41 = por %p39, %p40
      %p42 = scmp.ne.s32.totalorder %s28, %s29
      %p43 = scmp.eq.s32.totalorder %s21, 1
      %p44 = por %p42, %p43
      %p46 = scmp.ne.s32.totalorder %s29, %s45
      %p47 = scmp.eq.s32.totalorder %s21, 0
      %p48 = por %p46, %p47
      %s50 = sadd.s32 %s49, 1
      %p53 = scmp.eq.s32.totalorder %s15, 1
      %p54 = scmp.ne.s32.totalorder %s49, %s51
      %p55 = scmp.eq.s32.totalorder %s15, 0
      %p56 = por %p54, %p55
      %p57 = scmp.ne.s32.totalorder %s49, %s51
      %p58 = scmp.eq.s32.totalorder %s20, 1
      %p59 = por %p57, %p58
      %p60 = scmp.ne.s32.totalorder %s51, %s52
      %p61 = scmp.eq.s32.totalorder %s20, 0
      %p62 = por %p60, %p61
      %p63 = scmp.ne.s32.totalorder %s51, %s52
      %p64 = scmp.eq.s32.totalorder %s21, 1
      %p65 = por %p63, %p64
      %p67 = scmp.ne.s32.totalorder %s52, %s66
      %p68 = scmp.eq.s32.totalorder %s21, 0
      %p69 = por %p67, %p68
      %s71 = sadd.s32 %s70, 1
      %p74 = scmp.eq.s32.totalorder %s15, 1
      %p75 = scmp.ne.s32.totalorder %s70, %s72
      %p76 = scmp.eq.s32.totalorder %s15, 0
      %p77 = por %p75, %p76
      %p78 = scmp.ne.s32.totalorder %s70, %s72
      %p79 = scmp.eq.s32.totalorder %s20, 1
      %p80 = por %p78, %p79
      %p81 = scmp.ne.s32.totalorder %s72, %s73
      %p82 = scmp.eq.s32.totalorder %s20, 0
      %p83 = por %p81, %p82
      %p84 = scmp.ne.s32.totalorder %s72, %s73
      %p85 = scmp.eq.s32.totalorder %s21, 1
      %p86 = por %p84, %p85
      %p88 = scmp.ne.s32.totalorder %s73, %s87
      %p89 = scmp.eq.s32.totalorder %s21, 0
      %p90 = por %p88, %p89
      %s92 = sadd.s32 %s91, 1
      %p95 = scmp.eq.s32.totalorder %s15, 1
      %p96 = scmp.ne.s32.totalorder %s91, %s93
      %p97 = scmp.eq.s32.totalorder %s15, 0
      %p98 = por %p96, %p97
      %p99 = scmp.ne.s32.totalorder %s91, %s93
      %p100 = scmp.eq.s32.totalorder %s20, 1
      %p101 = por %p99, %p100
      %p102 = scmp.ne.s32.totalorder %s93, %s94
      %p103 = scmp.eq.s32.totalorder %s20, 0
      %p104 = por %p102, %p103
      %p105 = scmp.ne.s32.totalorder %s93, %s94
      %p106 = scmp.eq.s32.totalorder %s21, 1
      %p107 = por %p105, %p106
      %p109 = scmp.ne.s32.totalorder %s94, %s108
      %p110 = scmp.eq.s32.totalorder %s21, 0
      %p111 = por %p109, %p110
      %s113 = sadd.s32 %s112, 1
      %p116 = scmp.eq.s32.totalorder %s15, 1
      %p117 = scmp.ne.s32.totalorder %s112, %s114
      %p118 = scmp.eq.s32.totalorder %s15, 0
      %p119 = por %p117, %p118
      %p120 = scmp.ne.s32.totalorder %s112, %s114
      %p121 = scmp.eq.s32.totalorder %s20, 1
      %p122 = por %p120, %p121
      %p123 = scmp.ne.s32.totalorder %s114, %s115
      %p124 = scmp.eq.s32.totalorder %s20, 0
      %p125 = por %p123, %p124
      %p126 = scmp.ne.s32.totalorder %s114, %s115
      %p127 = scmp.eq.s32.totalorder %s21, 1
      %p128 = por %p126, %p127
      %p130 = scmp.ne.s32.totalorder %s115, %s129
      %p131 = scmp.eq.s32.totalorder %s21, 0
      %p132 = por %p130, %p131
      %s133 = ssub.s32 %s15, %s22
      %p134 = scmp.eq.s32.totalorder %s133, 0
      %s136 = sadd.s32 %s135, 1
      %s137 = scalar_select %p134, %s135, %s136
      %p140 = pneg %p134
      %p141 = scmp.eq.s32.totalorder %s15, 1
      %p142 = por %p140, %p141
      %p143 = scmp.ne.s32.totalorder %s135, %s138
      %p144 = scmp.eq.s32.totalorder %s15, 0
      %p145 = por %p143, %p144
      %p146 = scmp.ne.s32.totalorder %s135, %s138
      %p147 = scmp.eq.s32.totalorder %s20, 1
      %p148 = por %p146, %p147
      %p149 = scmp.ne.s32.totalorder %s138, %s139
      %p150 = scmp.eq.s32.totalorder %s20, 0
      %p151 = por %p149, %p150
      %p152 = scmp.ne.s32.totalorder %s138, %s139
      %p153 = scmp.eq.s32.totalorder %s21, 1
      %p154 = por %p152, %p153
      %p156 = scmp.ne.s32.totalorder %s139, %s155
      %p157 = scmp.eq.s32.totalorder %s21, 0
      %p158 = por %p156, %p157
      %p159 = scmp.le.s32.totalorder 1, %s15
      %p160 = scmp.lt.s32.totalorder %s15, 3
      %p161 = pnand %p159, %p160
      %p162 = pneg %p161
      // Predicated region
      $region9: #{_lambda_.19} parent=5 // pred_check
        _
      $region10: #{_lambda_.19} parent=5 // pred_check_branch
        %164 = sbr.rel (%p161) target = $region12
      $region11: #{_lambda_.19} parent=5 // pred_region
        %s165 = ssub.s32 %s15, 1
        // Predicated region
        $region13: #{_lambda_.19} parent=11 // pred_check
          %p166 = pneg %p62
        $region14: #{_lambda_.19} parent=11 // pred_check_branch
          %168 = sbr.rel (%p166) target = $region16
        $region15: #{_lambda_.19} parent=11 // pred_region
          %170 = vsyncadd [#allocation5], 0
          %s171 = sshll.u32 %s1, 4
          %s172 = int_to_ptr.hbm [resolvable:$true] %s171
          %s173 = sshll.u32 [#allocation4], 4
          %s174 = int_to_ptr.vmem [resolvable:$true] %s173
          %179 = dma.hbm_to_vmem [thread:$0]  %s172, 256, %s174, [#allocation5], 128, 128, 8
        $region16: #{_lambda_.19} parent=11 // pred_fallthru
          _
        // Predicated region
        $region17: #{_lambda_.19} parent=11 // pred_check
          %p180 = pneg %p83
        $region18: #{_lambda_.19} parent=11 // pred_check_branch
          %182 = sbr.rel (%p180) target = $region20
        $region19: #{_lambda_.19} parent=11 // pred_region
          %184 = vsyncadd [#allocation5], 0
          %s185 = sshll.u32 %s2, 4
          %s186 = int_to_ptr.hbm [resolvable:$true] %s185
          %s187 = sshll.u32 [#allocation6], 4
          %s188 = int_to_ptr.vmem [resolvable:$true] %s187
          %193 = dma.hbm_to_vmem [thread:$0]  %s186, 256, %s188, [#allocation5], 128, 128, 8
        $region20: #{_lambda_.19} parent=11 // pred_fallthru
          _
        // Predicated region
        $region21: #{_lambda_.19} parent=11 // pred_check
          %p194 = pneg %p104
        $region22: #{_lambda_.19} parent=11 // pred_check_branch
          %196 = sbr.rel (%p194) target = $region24
        $region23: #{_lambda_.19} parent=11 // pred_region
          _
        $region24: #{_lambda_.19} parent=11 // pred_fallthru
          _
        // Predicated region
        $region25: #{_lambda_.19} parent=11 // pred_check
          %p197 = pneg %p125
        $region26: #{_lambda_.19} parent=11 // pred_check_branch
          %199 = sbr.rel (%p197) target = $region28
        $region27: #{_lambda_.19} parent=11 // pred_region
          _
        $region28: #{_lambda_.19} parent=11 // pred_fallthru
          _
      $region12: #{_lambda_.19} parent=5 // pred_fallthru
        _
      %p200 = scmp.lt.s32.totalorder %s15, 2
      // Predicated region
      $region29: #{_lambda_.19} parent=5 // pred_check
        %p201 = pneg %p200
      $region30: #{_lambda_.19} parent=5 // pred_check_branch
        %203 = sbr.rel (%p201) target = $region32
      $region31: #{_lambda_.19} parent=5 // pred_region
        // Predicated region
        $region33: #{_lambda_.19} parent=31 // pred_check
          %p204 = pneg %p35
        $region34: #{_lambda_.19} parent=31 // pred_check_branch
          %206 = sbr.rel (%p204) target = $region36
        $region35: #{_lambda_.19} parent=31 // pred_region
          %s207 = sand.u32 %s25, 1
          %s208 = scalar_lea.sflag [#allocation3], %s207
          %s209 = sand.u32 %s25, 1
          %s210 = smul.addr %s209, 32
          %s211 = scalar_lea.vmem [#allocation2], %s210
          %213 = vsyncadd %s208, 0
          %s214 = smul.addr %s15, 4
          %s215 = smul.addr %s214, 8
          %s216 = scalar_lea.hbm %s0, %s215
          %s217 = sshll.u32 %s216, 4
          %s218 = int_to_ptr.hbm [resolvable:$true] %s217
          %s219 = sshll.u32 %s211, 4
          %s220 = int_to_ptr.vmem [resolvable:$true] %s219
          %225 = dma.hbm_to_vmem [thread:$0]  %s218, 512, %s220, %s208, 128, 128, 8
        $region36: #{_lambda_.19} parent=31 // pred_fallthru
          _
      $region32: #{_lambda_.19} parent=5 // pred_fallthru
        _
      %p226 = scmp.le.s32.totalorder 1, %s15
      %p227 = scmp.lt.s32.totalorder %s15, 3
      %p228 = pnand %p226, %p227
      %p229 = pneg %p228
      // Predicated region
      $region37: #{_lambda_.19} parent=5 // pred_check
        _
      $region38: #{_lambda_.19} parent=5 // pred_check_branch
        %231 = sbr.rel (%p228) target = $region40
      $region39: #{_lambda_.19} parent=5 // pred_region
        %s232 = ssub.s32 %s15, 1
        %s233 = sand.u32 %s28, 1
        %s234 = scalar_lea.sflag [#allocation3], %s233
        %s235 = sand.u32 %s28, 1
        %s236 = smul.addr %s235, 32
        %s237 = scalar_lea.vmem [#allocation2], %s236
        // Predicated region
        $region41: #{_lambda_.19} parent=39 // pred_check
          %p238 = pneg %p41
        $region42: #{_lambda_.19} parent=39 // pred_check_branch
          %240 = sbr.rel (%p238) target = $region44
        $region43: #{_lambda_.19} parent=39 // pred_region
          %242 = dma.done %s234, 512
        $region44: #{_lambda_.19} parent=39 // pred_fallthru
          _
        // Predicated region
        $region45: #{_lambda_.19} parent=39 // pred_check
          %p243 = pneg %p62
        $region46: #{_lambda_.19} parent=39 // pred_check_branch
          %245 = sbr.rel (%p243) target = $region48
        $region47: #{_lambda_.19} parent=39 // pred_region
          %247 = dma.done [#allocation5], 256
        $region48: #{_lambda_.19} parent=39 // pred_fallthru
          _
        // Predicated region
        $region49: #{_lambda_.19} parent=39 // pred_check
          %p248 = pneg %p83
        $region50: #{_lambda_.19} parent=39 // pred_check_branch
          %250 = sbr.rel (%p248) target = $region52
        $region51: #{_lambda_.19} parent=39 // pred_region
          %252 = dma.done [#allocation5], 256
        $region52: #{_lambda_.19} parent=39 // pred_fallthru
          _
        %s253 = sand.u32 %s28, 1
        %s254 = scalar_lea.sflag [#allocation3], %s253
        %s255 = sand.u32 %s28, 1
        %s256 = smul.addr %s255, 32
        %s257 = scalar_lea.vmem [#allocation2], %s256
        %p258 = pneg %p41
        %p259 = pneg %p38
        %p260 = pneg %p62
        %p261 = pneg %p59
        %p262 = pneg %p83
        %p263 = pneg %p80
        %p264 = pneg %p104
        %p265 = pneg %p101
        %p266 = pneg %p125
        %p267 = pneg %p122
        %p268 = pneg %p151
        %p269 = pneg %p148
        %p270 = scmp.lt.s32.totalorder %s20, 1
        %s271 = scalar_select %p270, %s20, 1
        %s272 = smul.addr %s271, 4
        %s273 = smul.addr %s272, 4
        %s274 = scalar_lea.vmem %s5, %s273
        %p275 = scmp.lt.s32.totalorder %s20, 1
        %s276 = scalar_select %p275, %s20, 1
        %s277 = smul.addr %s276, 4
        %s278 = smul.addr %s277, 4
        %s279 = scalar_lea.vmem %s5, %s278
        %v280 = vld [vmem:[%s237] sm:$0xff]
        %v281 = vld [vmem:[%s237 + $0x8] sm:$0xff]
        %s282 = scalar_lea.vmem %s237, 16 [#allocation2]
        %v283 = vld [vmem:[%s282] sm:$0xff]
        %v284 = vld [vmem:[%s282 + $0x8] sm:$0xff]
        %v285 = vld [vmem:[#allocation4] sm:$0xff]
        %v286 = vld [vmem:[#allocation4 + $0x8] sm:$0xff]
        %v287 = vld [vmem:[#allocation6] sm:$0xff]
        %v288 = vld [vmem:[#allocation6 + $0x8] sm:$0xff]
        %v289 = vld [vmem:[%s3] sm:$0xff]
        %v290 = vld [vmem:[%s3 + $0x8] sm:$0xff]
        %v291 = vld [vmem:[%s4] sm:$0xff]
        %v292 = vld [vmem:[%s4 + $0x8] sm:$0xff]
        %vm293 = vcmask 130048
        %v295 = vsel %vm293, %v280, 0
        %v298 = vsel %vm293, %v281, 0
        %300 = vmatpush.msra.mxu0 0.0
        %301 = vmatpush.msra.mxu0 0.0
        %302 = vmatpush.msra.mxu0 0.0
        %303 = vmatpush.msra.mxu0 0.0
        %304 = vmatpush.msra.mxu0 0.0
        %305 = vmatpush.msra.mxu0 0.0
        %306 = vmatpush.msra.mxu0 0.0
        %307 = vmatpush.msra.mxu0 0.0
        %308 = vmatpush.msra.mxu0 0.0
        %309 = vmatpush.msra.mxu0 0.0
        %310 = vmatpush.msra.mxu0 0.0
        %311 = vmatpush.msra.mxu0 0.0
        %312 = vmatpush.msra.mxu0 0.0
        %313 = vmatpush.msra.mxu0 0.0
        %314 = vmatpush.msra.mxu0 %v290
        %315 = vmatpush.msra.mxu0 %v289
        %316 = vmatmul.f32.gmra.mxu0 %v295
        %v317 = vpop.f32.mrf.mxu0
        %v318 = vadd.f32 0.0, %v317
        %319 = vmatmul.f32.gmra.mxu0 %v298
        %v320 = vpop.f32.mrf.mxu0
        %v321 = vadd.f32 0.0, %v320
        %322 = vdwg.mxu0
        %v324 = vsel %vm293, %v283, 0
        %v327 = vsel %vm293, %v284, 0
        %329 = vmatpush.msra.mxu0 0.0
        %330 = vmatpush.msra.mxu0 0.0
        %331 = vmatpush.msra.mxu0 0.0
        %332 = vmatpush.msra.mxu0 0.0
        %333 = vmatpush.msra.mxu0 0.0
        %334 = vmatpush.msra.mxu0 0.0
        %335 = vmatpush.msra.mxu0 0.0
        %336 = vmatpush.msra.mxu0 0.0
        %337 = vmatpush.msra.mxu0 0.0
        %338 = vmatpush.msra.mxu0 0.0
        %339 = vmatpush.msra.mxu0 0.0
        %340 = vmatpush.msra.mxu0 0.0
        %341 = vmatpush.msra.mxu0 0.0
        %342 = vmatpush.msra.mxu0 0.0
        %343 = vmatpush.msra.mxu0 %v292
        %344 = vmatpush.msra.mxu0 %v291
        %345 = vmatmul.f32.gmra.mxu0 %v324
        %v346 = vpop.f32.mrf.mxu0
        %v347 = vadd.f32 0.0, %v346
        %348 = vmatmul.f32.gmra.mxu0 %v327
        %v349 = vpop.f32.mrf.mxu0
        %v350 = vadd.f32 0.0, %v349
        %351 = vdwg.mxu0
        %v352 = vsub.f32 %v318, %v347
        %v353 = vsub.f32 %v321, %v350
        %354 = vmatpush.msra.mxu0 0.0
        %355 = vmatpush.msra.mxu0 0.0
        %356 = vmatpush.msra.mxu0 0.0
        %357 = vmatpush.msra.mxu0 0.0
        %358 = vmatpush.msra.mxu0 0.0
        %359 = vmatpush.msra.mxu0 0.0
        %360 = vmatpush.msra.mxu0 0.0
        %361 = vmatpush.msra.mxu0 0.0
        %362 = vmatpush.msra.mxu0 0.0
        %363 = vmatpush.msra.mxu0 0.0
        %364 = vmatpush.msra.mxu0 0.0
        %365 = vmatpush.msra.mxu0 0.0
        %366 = vmatpush.msra.mxu0 0.0
        %367 = vmatpush.msra.mxu0 0.0
        %368 = vmatpush.msra.mxu0 %v290
        %369 = vmatpush.msra.mxu0 %v289
        %370 = vmatmul.f32.gmra.mxu0 %v324
        %v371 = vpop.f32.mrf.mxu0
        %v372 = vadd.f32 0.0, %v371
        %373 = vmatmul.f32.gmra.mxu0 %v327
        %v374 = vpop.f32.mrf.mxu0
        %v375 = vadd.f32 0.0, %v374
        %376 = vdwg.mxu0
        %377 = vmatpush.msra.mxu0 0.0
        %378 = vmatpush.msra.mxu0 0.0
        %379 = vmatpush.msra.mxu0 0.0
        %380 = vmatpush.msra.mxu0 0.0
        %381 = vmatpush.msra.mxu0 0.0
        %382 = vmatpush.msra.mxu0 0.0
        %383 = vmatpush.msra.mxu0 0.0
        %384 = vmatpush.msra.mxu0 0.0
        %385 = vmatpush.msra.mxu0 0.0
        %386 = vmatpush.msra.mxu0 0.0
        %387 = vmatpush.msra.mxu0 0.0
        %388 = vmatpush.msra.mxu0 0.0
        %389 = vmatpush.msra.mxu0 0.0
        %390 = vmatpush.msra.mxu0 0.0
        %391 = vmatpush.msra.mxu0 %v292
        %392 = vmatpush.msra.mxu0 %v291
        %393 = vmatmul.f32.gmra.mxu0 %v295
        %v394 = vpop.f32.mrf.mxu0
        %v395 = vadd.f32 %v372, %v394
        %396 = vmatmul.f32.gmra.mxu0 %v298
        %v397 = vpop.f32.mrf.mxu0
        %v398 = vadd.f32 %v375, %v397
        %399 = vdwg.mxu0
        %v401 = vsel %vm293, %v285, 0
        %v404 = vsel %vm293, %v286, 0
        %406 = vmatpush.msra.mxu0 0.0
        %407 = vmatpush.msra.mxu0 0.0
        %408 = vmatpush.msra.mxu0 0.0
        %409 = vmatpush.msra.mxu0 0.0
        %410 = vmatpush.msra.mxu0 0.0
        %411 = vmatpush.msra.mxu0 0.0
        %412 = vmatpush.msra.mxu0 0.0
        %413 = vmatpush.msra.mxu0 0.0
        %414 = vmatpush.msra.mxu0 0.0
        %415 = vmatpush.msra.mxu0 0.0
        %416 = vmatpush.msra.mxu0 0.0
        %417 = vmatpush.msra.mxu0 0.0
        %418 = vmatpush.msra.mxu0 0.0
        %419 = vmatpush.msra.mxu0 0.0
        %420 = vmatpush.msra.mxu0 %v353
        %421 = vmatpush.msra.mxu0 %v352
        %422 = vmatmul.f32.gmra.mxu0 %v401
        %v423 = vpop.f32.mrf.mxu0
        %v424 = vadd.f32 0.0, %v423
        %425 = vmatmul.f32.gmra.mxu0 %v404
        %v426 = vpop.f32.mrf.mxu0
        %v427 = vadd.f32 0.0, %v426
        %428 = vdwg.mxu0
        %v430 = vsel %vm293, %v287, 0
        %v433 = vsel %vm293, %v288, 0
        %435 = vmatpush.msra.mxu0 0.0
        %436 = vmatpush.msra.mxu0 0.0
        %437 = vmatpush.msra.mxu0 0.0
        %438 = vmatpush.msra.mxu0 0.0
        %439 = vmatpush.msra.mxu0 0.0
        %440 = vmatpush.msra.mxu0 0.0
        %441 = vmatpush.msra.mxu0 0.0
        %442 = vmatpush.msra.mxu0 0.0
        %443 = vmatpush.msra.mxu0 0.0
        %444 = vmatpush.msra.mxu0 0.0
        %445 = vmatpush.msra.mxu0 0.0
        %446 = vmatpush.msra.mxu0 0.0
        %447 = vmatpush.msra.mxu0 0.0
        %448 = vmatpush.msra.mxu0 0.0
        %449 = vmatpush.msra.mxu0 %v398
        %450 = vmatpush.msra.mxu0 %v395
        %451 = vmatmul.f32.gmra.mxu0 %v430
        %v452 = vpop.f32.mrf.mxu0
        %v453 = vadd.f32 0.0, %v452
        %454 = vmatmul.f32.gmra.mxu0 %v433
        %v455 = vpop.f32.mrf.mxu0
        %v456 = vadd.f32 0.0, %v455
        %457 = vdwg.mxu0
        %v458 = vsub.f32 %v424, %v453
        %v459 = vsub.f32 %v427, %v456
        %460 = vmatpush.msra.mxu0 0.0
        %461 = vmatpush.msra.mxu0 0.0
        %462 = vmatpush.msra.mxu0 0.0
        %463 = vmatpush.msra.mxu0 0.0
        %464 = vmatpush.msra.mxu0 0.0
        %465 = vmatpush.msra.mxu0 0.0
        %466 = vmatpush.msra.mxu0 0.0
        %467 = vmatpush.msra.mxu0 0.0
        %468 = vmatpush.msra.mxu0 0.0
        %469 = vmatpush.msra.mxu0 0.0
        %470 = vmatpush.msra.mxu0 0.0
        %471 = vmatpush.msra.mxu0 0.0
        %472 = vmatpush.msra.mxu0 0.0
        %473 = vmatpush.msra.mxu0 0.0
        %474 = vmatpush.msra.mxu0 %v398
        %475 = vmatpush.msra.mxu0 %v395
        %476 = vmatmul.f32.gmra.mxu0 %v401
        %v477 = vpop.f32.mrf.mxu0
        %v478 = vadd.f32 0.0, %v477
        %479 = vmatmul.f32.gmra.mxu0 %v404
        %v480 = vpop.f32.mrf.mxu0
        %v481 = vadd.f32 0.0, %v480
        %482 = vdwg.mxu0
        %483 = vmatpush.msra.mxu0 0.0
        %484 = vmatpush.msra.mxu0 0.0
        %485 = vmatpush.msra.mxu0 0.0
        %486 = vmatpush.msra.mxu0 0.0
        %487 = vmatpush.msra.mxu0 0.0
        %488 = vmatpush.msra.mxu0 0.0
        %489 = vmatpush.msra.mxu0 0.0
        %490 = vmatpush.msra.mxu0 0.0
        %491 = vmatpush.msra.mxu0 0.0
        %492 = vmatpush.msra.mxu0 0.0
        %493 = vmatpush.msra.mxu0 0.0
        %494 = vmatpush.msra.mxu0 0.0
        %495 = vmatpush.msra.mxu0 0.0
        %496 = vmatpush.msra.mxu0 0.0
        %497 = vmatpush.msra.mxu0 %v353
        %498 = vmatpush.msra.mxu0 %v352
        %499 = vmatmul.f32.gmra.mxu0 %v430
        %v500 = vpop.f32.mrf.mxu0
        %v501 = vadd.f32 %v478, %v500
        %502 = vmatmul.f32.gmra.mxu0 %v433
        %v503 = vpop.f32.mrf.mxu0
        %v504 = vadd.f32 %v481, %v503
        %505 = vdwg.mxu0
        %v506 = vpack.c.bf16 %v458, %v458
        %v507 = vpack.c.bf16 %v459, %v459
        %vm508 = vcmask 125952
        %509 = vst.msk [vmem:[%s279] sm:$0xf] %vm508, %v506
        %510 = vst.msk [vmem:[%s279 + $0x4] sm:$0xf] %vm508, %v507
        %v511 = vpack.c.bf16 %v501, %v501
        %v512 = vpack.c.bf16 %v504, %v504
        %s513 = scalar_lea.vmem %s279, 8
        %514 = vst.msk [vmem:[%s513] sm:$0xf] %vm508, %v511
        %515 = vst.msk [vmem:[%s513 + $0x4] sm:$0xf] %vm508, %v512
        %p516 = scmp.lt.s32.totalorder %s20, 1
        %s517 = scalar_select %p516, %s20, 1
        %s518 = smul.addr %s517, 4
        %s519 = smul.addr %s518, 4
        %s520 = scalar_lea.vmem %s5, %s519
        // Predicated region
        $region53: #{_lambda_.19} parent=39 // pred_check
          %p521 = pneg %p148
        $region54: #{_lambda_.19} parent=39 // pred_check_branch
          %523 = sbr.rel (%p521) target = $region56
        $region55: #{_lambda_.19} parent=39 // pred_region
          _
        $region56: #{_lambda_.19} parent=39 // pred_fallthru
          _
      $region40: #{_lambda_.19} parent=5 // pred_fallthru
        _
      %p524 = scmp.le.s32.totalorder 2, %s15
      // Predicated region
      $region57: #{_lambda_.19} parent=5 // pred_check
        %p525 = pneg %p524
      $region58: #{_lambda_.19} parent=5 // pred_check_branch
        %527 = sbr.rel (%p525) target = $region60
      $region59: #{_lambda_.19} parent=5 // pred_region
        %s528 = ssub.s32 %s15, 2
        // Predicated region
        $region61: #{_lambda_.19} parent=59 // pred_check
          %p529 = pneg %p154
        $region62: #{_lambda_.19} parent=59 // pred_check_branch
          %531 = sbr.rel (%p529) target = $region64
        $region63: #{_lambda_.19} parent=59 // pred_region
          %p532 = scmp.lt.s32.totalorder %s21, 1
          %s533 = scalar_select %p532, %s21, 1
          %s534 = smul.addr %s533, 4
          %s535 = smul.addr %s534, 4
          %s536 = scalar_lea.vmem %s5, %s535
        $region64: #{_lambda_.19} parent=59 // pred_fallthru
          _
      $region60: #{_lambda_.19} parent=5 // pred_fallthru
        _
    $region6: #{_lambda_.19} parent=1 // loop_footer
      %s19 = sadd.s32 1, %s15
    $region7: #{_lambda_.19} parent=1 // loop_footer_branch
      %14 = sbr.rel target = $region3
    $region8: #{_lambda_.19} parent=1 // loop_exit
      _
    %537 = vsyncpa [#allocation3], 1
    %s538 = scalar_lea.sflag [#allocation3], 1
    %539 = vsyncpa %s538, 1
    %540 = vsyncpa [#allocation5], 1

// kernel: _lambda_.20
$region0: #{_lambda_.20}
  #allocation0 [shape = 'u32[]', space=smem, size = 0x4, offset = 0x4, fixed_abs, tag = 'smem constant byte address 0x4 - core index']
  #allocation1 [shape = 'u32[72,128]{1,0:T(1,128)}', space=vmem, size = 0x9000, scoped, tag = 'internal scratch']
  %s0 = inlined_call_operand.vmem [shape: bf16[32,128], index: 0, kind: input, shape index: {}]
  %s1 = inlined_call_operand.vmem [shape: bf16[128,128], index: 1, kind: input, shape index: {}]
  %s2 = inlined_call_operand.vmem [shape: f32[1,128], index: 2, kind: input, shape index: {}]
  %s3 = inlined_call_operand.vmem [shape: bf16[32,128], index: 3, kind: output, shape index: {}]
  %s4 = sld [smem:[#allocation0]]
  $region45: #{_lambda_.20} parent=0
    _
  %s6 = ssub.s32 1, %s4
  %s7 = scalar_select 0, %s6, %s4
  loop: start=0, step=1, limit=4
  $region2: #{_lambda_.20} parent=0 // loop_pre_header
    _
  $region3: #{_lambda_.20} parent=0 // loop_header
    %s9 = sphi 0, %s13
    %p10 = scmp.ge.s32.totalorder %s9, 4
    %s16 = sphi 0, %s28
    %s17 = sphi 0, %s24
    %s18 = sphi 0, %s16
    %s19 = sphi 0, %s17
    %s20 = sphi 0, %s18
    %s21 = sphi 0, %s19
    %s33 = sphi 0, %s35
    %s36 = sphi 0, %s33
    %s37 = sphi 0, %s36
    %s53 = sphi 0, %s37
    %s59 = sphi 0, %s61
    %s62 = sphi 0, %s59
    %s63 = sphi 0, %s62
    %s79 = sphi 0, %s63
    %s83 = sphi 0, %s83
    %s85 = sphi 0, %s83
    %s86 = sphi 0, %s85
    %s100 = sphi 0, %s86
    %s106 = sphi 0, %s108
    %s109 = sphi 0, %s106
    %s110 = sphi 0, %s109
    %s126 = sphi 0, %s110
  $region4: #{_lambda_.20} parent=0 // loop_header_branch
    %12 = sbr.rel (%p10) target = $region8
  $region5: #{_lambda_.20} parent=0 // loop_body
    %s14 = ssub.s32 %s9, 1
    %s15 = ssub.s32 %s9, 2
    %s22 = sadd.s32 1, %s17
    %p23 = scmp.ge.s32.totalorder %s22, 1
    %s24 = scalar_select %p23, 0, %s22
    %s25 = sadd.s32 1, %s16
    %s26 = scalar_select %p23, %s25, %s16
    %p27 = scmp.ge.s32.totalorder %s26, 2
    %s28 = scalar_select %p27, 0, %s26
    %s29 = ssub.s32 %s16, %s28
    %s30 = ssub.s32 %s17, %s24
    %s31 = sor.u32 %s29, %s30
    %p32 = scmp.eq.s32.totalorder %s31, 0
    %s34 = sadd.s32 %s33, 1
    %s35 = scalar_select %p32, %s33, %s34
    %p38 = pneg %p32
    %p39 = scmp.eq.s32.totalorder %s9, 1
    %p40 = por %p38, %p39
    %p41 = scmp.ne.s32.totalorder %s33, %s36
    %p42 = scmp.eq.s32.totalorder %s9, 0
    %p43 = por %p41, %p42
    %p44 = scmp.ne.s32.totalorder %s33, %s36
    %p45 = scmp.eq.s32.totalorder %s14, 1
    %p46 = por %p44, %p45
    %p47 = scmp.ne.s32.totalorder %s36, %s37
    %p48 = scmp.eq.s32.totalorder %s14, 0
    %p49 = por %p47, %p48
    %p50 = scmp.ne.s32.totalorder %s36, %s37
    %p51 = scmp.eq.s32.totalorder %s15, 1
    %p52 = por %p50, %p51
    %p54 = scmp.ne.s32.totalorder %s37, %s53
    %p55 = scmp.eq.s32.totalorder %s15, 0
    %p56 = por %p54, %p55
    %s57 = ssub.s32 %s17, %s24
    %p58 = scmp.eq.s32.totalorder %s57, 0
    %s60 = sadd.s32 %s59, 1
    %s61 = scalar_select %p58, %s59, %s60
    %p64 = pneg %p58
    %p65 = scmp.eq.s32.totalorder %s9, 1
    %p66 = por %p64, %p65
    %p67 = scmp.ne.s32.totalorder %s59, %s62
    %p68 = scmp.eq.s32.totalorder %s9, 0
    %p69 = por %p67, %p68
    %p70 = scmp.ne.s32.totalorder %s59, %s62
    %p71 = scmp.eq.s32.totalorder %s14, 1
    %p72 = por %p70, %p71
    %p73 = scmp.ne.s32.totalorder %s62, %s63
    %p74 = scmp.eq.s32.totalorder %s14, 0
    %p75 = por %p73, %p74
    %p76 = scmp.ne.s32.totalorder %s62, %s63
    %p77 = scmp.eq.s32.totalorder %s15, 1
    %p78 = por %p76, %p77
    %p80 = scmp.ne.s32.totalorder %s63, %s79
    %p81 = scmp.eq.s32.totalorder %s15, 0
    %p82 = por %p80, %p81
    %s84 = sadd.s32 %s83, 1
    %p87 = scmp.eq.s32.totalorder %s9, 1
    %p88 = scmp.ne.s32.totalorder %s83, %s85
    %p89 = scmp.eq.s32.totalorder %s9, 0
    %p90 = por %p88, %p89
    %p91 = scmp.ne.s32.totalorder %s83, %s85
    %p92 = scmp.eq.s32.totalorder %s14, 1
    %p93 = por %p91, %p92
    %p94 = scmp.ne.s32.totalorder %s85, %s86
    %p95 = scmp.eq.s32.totalorder %s14, 0
    %p96 = por %p94, %p95
    %p97 = scmp.ne.s32.totalorder %s85, %s86
    %p98 = scmp.eq.s32.totalorder %s15, 1
    %p99 = por %p97, %p98
    %p101 = scmp.ne.s32.totalorder %s86, %s100
    %p102 = scmp.eq.s32.totalorder %s15, 0
    %p103 = por %p101, %p102
    %s104 = ssub.s32 %s16, %s28
    %p105 = scmp.eq.s32.totalorder %s104, 0
    %s107 = sadd.s32 %s106, 1
    %s108 = scalar_select %p105, %s106, %s107
    %p111 = pneg %p105
    %p112 = scmp.eq.s32.totalorder %s9, 1
    %p113 = por %p111, %p112
    %p114 = scmp.ne.s32.totalorder %s106, %s109
    %p115 = scmp.eq.s32.totalorder %s9, 0
    %p116 = por %p114, %p115
    %p117 = scmp.ne.s32.totalorder %s106, %s109
    %p118 = scmp.eq.s32.totalorder %s14, 1
    %p119 = por %p117, %p118
    %p120 = scmp.ne.s32.totalorder %s109, %s110
    %p121 = scmp.eq.s32.totalorder %s14, 0
    %p122 = por %p120, %p121
    %p123 = scmp.ne.s32.totalorder %s109, %s110
    %p124 = scmp.eq.s32.totalorder %s15, 1
    %p125 = por %p123, %p124
    %p127 = scmp.ne.s32.totalorder %s110, %s126
    %p128 = scmp.eq.s32.totalorder %s15, 0
    %p129 = por %p127, %p128
    %p130 = scmp.le.s32.totalorder 1, %s9
    %p131 = scmp.lt.s32.totalorder %s9, 3
    %p132 = pnand %p130, %p131
    %p133 = pneg %p132
    // Predicated region
    $region9: #{_lambda_.20} parent=5 // pred_check
      _
    $region10: #{_lambda_.20} parent=5 // pred_check_branch
      %135 = sbr.rel (%p132) target = $region12
    $region11: #{_lambda_.20} parent=5 // pred_region
      %s136 = ssub.s32 %s9, 1
      // Predicated region
      $region13: #{_lambda_.20} parent=11 // pred_check
        %p137 = pneg %p75
      $region14: #{_lambda_.20} parent=11 // pred_check_branch
        %139 = sbr.rel (%p137) target = $region16
      $region15: #{_lambda_.20} parent=11 // pred_region
        %s140 = smul.u32 16, %s19
        %p141 = scmp.lt.s32.totalorder %s140, 15
        %s142 = scalar_select %p141, %s140, 15
        %s143 = smul.addr %s142, 4
        %s144 = scalar_lea.vmem %s1, %s143
        %s145 = smul.u32 16, %s19
      $region16: #{_lambda_.20} parent=11 // pred_fallthru
        _
      // Predicated region
      $region17: #{_lambda_.20} parent=11 // pred_check
        %p146 = pneg %p96
      $region18: #{_lambda_.20} parent=11 // pred_check_branch
        %148 = sbr.rel (%p146) target = $region20
      $region19: #{_lambda_.20} parent=11 // pred_region
        _
      $region20: #{_lambda_.20} parent=11 // pred_fallthru
        _
    $region12: #{_lambda_.20} parent=5 // pred_fallthru
      _
    %p149 = scmp.lt.s32.totalorder %s9, 2
    // Predicated region
    $region21: #{_lambda_.20} parent=5 // pred_check
      %p150 = pneg %p149
    $region22: #{_lambda_.20} parent=5 // pred_check_branch
      %152 = sbr.rel (%p150) target = $region24
    $region23: #{_lambda_.20} parent=5 // pred_region
      // Predicated region
      $region25: #{_lambda_.20} parent=23 // pred_check
        %p153 = pneg %p43
      $region26: #{_lambda_.20} parent=23 // pred_check_branch
        %155 = sbr.rel (%p153) target = $region28
      $region27: #{_lambda_.20} parent=23 // pred_region
        %s156 = smul.u32 2, %s16
        %p157 = scmp.lt.s32.totalorder %s156, 3
        %s158 = scalar_select %p157, %s156, 3
        %p159 = scmp.lt.s32.totalorder %s17, 0
        %s160 = scalar_select %p159, %s17, 0
        %s161 = sadd.s32 %s160, %s158
        %s162 = smul.addr %s161, 4
        %s163 = scalar_lea.vmem %s0, %s162
        %s164 = smul.u32 2, %s16
      $region28: #{_lambda_.20} parent=23 // pred_fallthru
        _
    $region24: #{_lambda_.20} parent=5 // pred_fallthru
      _
    %p165 = scmp.le.s32.totalorder 1, %s9
    %p166 = scmp.lt.s32.totalorder %s9, 3
    %p167 = pnand %p165, %p166
    %p168 = pneg %p167
    // Predicated region
    $region29: #{_lambda_.20} parent=5 // pred_check
      _
    $region30: #{_lambda_.20} parent=5 // pred_check_branch
      %170 = sbr.rel (%p167) target = $region32
    $region31: #{_lambda_.20} parent=5 // pred_region
      %s171 = ssub.s32 %s9, 1
      %s172 = smul.u32 2, %s18
      %p173 = scmp.lt.s32.totalorder %s172, 3
      %s174 = scalar_select %p173, %s172, 3
      %p175 = scmp.lt.s32.totalorder %s19, 0
      %s176 = scalar_select %p175, %s19, 0
      %s177 = sadd.s32 %s176, %s174
      %s178 = smul.addr %s177, 4
      %s179 = scalar_lea.vmem %s0, %s178
      %p180 = pneg %p49
      %p181 = pneg %p46
      %s182 = smul.u32 16, %s19
      %p183 = scmp.lt.s32.totalorder %s182, 15
      %s184 = scalar_select %p183, %s182, 15
      %s185 = smul.addr %s184, 4
      %s186 = scalar_lea.vmem %s1, %s185
      %p187 = pneg %p75
      %p188 = pneg %p72
      %p189 = pneg %p96
      %p190 = pneg %p93
      %p191 = pneg %p122
      %p192 = pneg %p119
      %s193 = smul.u32 2, %s18
      %p194 = scmp.lt.s32.totalorder %s193, 3
      %s195 = scalar_select %p194, %s193, 3
      %s196 = smul.addr %s195, 4
      %s197 = scalar_lea.vmem %s3, %s196
      %s198 = smul.u32 2, %s18
      %p199 = scmp.lt.s32.totalorder %s198, 3
      %s200 = scalar_select %p199, %s198, 3
      %p201 = scmp.lt.s32.totalorder %s19, 0
      %s202 = scalar_select %p201, %s19, 0
      %s203 = sadd.s32 %s202, %s200
      %s204 = smul.addr %s203, 4
      %s205 = scalar_lea.vmem %s0, %s204
      %s206 = smul.u32 2, %s18
      %s207 = smul.u32 16, %s19
      %p208 = scmp.lt.s32.totalorder %s207, 15
      %s209 = scalar_select %p208, %s207, 15
      %s210 = smul.addr %s209, 4
      %s211 = scalar_lea.vmem %s1, %s210
      %s212 = smul.u32 16, %s19
      %s213 = smul.u32 2, %s18
      %p214 = scmp.lt.s32.totalorder %s213, 3
      %s215 = scalar_select %p214, %s213, 3
      %s216 = smul.addr %s215, 4
      %s217 = scalar_lea.vmem %s3, %s216
      %s218 = smul.u32 2, %s18
      %v219 = vld [vmem:[%s205] sm:$0xf]
      %v220 = vld [vmem:[%s205 + $0x4] sm:$0xf]
      %v221 = vld [vmem:[%s211] sm:$0xf]
      %v222 = vld [vmem:[%s211 + $0x4] sm:$0xf]
      %v223 = vld [vmem:[%s211 + $0x8] sm:$0xf]
      %v224 = vld [vmem:[%s211 + $0xc] sm:$0xf]
      %v225 = vld [vmem:[%s211 + $0x10] sm:$0xf]
      %v226 = vld [vmem:[%s211 + $0x14] sm:$0xf]
      %v227 = vld [vmem:[%s211 + $0x18] sm:$0xf]
      %v228 = vld [vmem:[%s211 + $0x1c] sm:$0xf]
      %v229 = vld [vmem:[%s211 + $0x20] sm:$0xf]
      %v230 = vld [vmem:[%s211 + $0x24] sm:$0xf]
      %v231 = vld [vmem:[%s211 + $0x28] sm:$0xf]
      %v232 = vld [vmem:[%s211 + $0x2c] sm:$0xf]
      %v233 = vld [vmem:[%s211 + $0x30] sm:$0xf]
      %v234 = vld [vmem:[%s211 + $0x34] sm:$0xf]
      %v235 = vld [vmem:[%s211 + $0x38] sm:$0xf]
      %v236 = vld [vmem:[%s211 + $0x3c] sm:$0xf]
      %v237 = vld [vmem:[%s2] sm:$0x1]
      %v239 = vperm.slane %v237, 0
      %v243 = vunpack.c.l.b16 %v219
      %v244 = vunpack.c.l.b16 %v220
      %v245 = vpack.c.b16 %v244, %v243
      %v263 = vunpack.c.l.b16 %v221
      %v264 = vunpack.c.l.b16 %v222
      %v265 = vunpack.c.l.b16 %v223
      %v266 = vunpack.c.l.b16 %v224
      %v267 = vunpack.c.l.b16 %v225
      %v268 = vunpack.c.l.b16 %v226
      %v269 = vunpack.c.l.b16 %v227
      %v270 = vunpack.c.l.b16 %v228
      %v271 = vunpack.c.l.b16 %v229
      %v272 = vunpack.c.l.b16 %v230
      %v273 = vunpack.c.l.b16 %v231
      %v274 = vunpack.c.l.b16 %v232
      %v275 = vunpack.c.l.b16 %v233
      %v276 = vunpack.c.l.b16 %v234
      %v277 = vunpack.c.l.b16 %v235
      %v278 = vunpack.c.l.b16 %v236
      %v279 = vpack.c.b16 %v264, %v263
      %v280 = vpack.c.b16 %v266, %v265
      %v281 = vpack.c.b16 %v268, %v267
      %v282 = vpack.c.b16 %v270, %v269
      %v283 = vpack.c.b16 %v272, %v271
      %v284 = vpack.c.b16 %v274, %v273
      %v285 = vpack.c.b16 %v276, %v275
      %v286 = vpack.c.b16 %v278, %v277
      %295 = vmatpush.bf16.msra.mxu0 %v286
      %296 = vmatpush.bf16.msra.mxu0 %v285
      %297 = vmatpush.bf16.msra.mxu0 %v284
      %298 = vmatpush.bf16.msra.mxu0 %v283
      %299 = vmatpush.bf16.msra.mxu0 %v282
      %300 = vmatpush.bf16.msra.mxu0 %v281
      %301 = vmatpush.bf16.msra.mxu0 %v280
      %302 = vmatpush.bf16.msra.mxu0 %v279
      %303 = vmatmul.bf16.gmra.mxu0 %v245
      %v304 = vpop.f32.mrf.mxu0
      %v305 = vadd.f32 %v239, %v304
      %v306 = vpop.f32.mrf.mxu0
      %v307 = vadd.f32 %v239, %v306
      %308 = vdwg.mxu0
      %v309 = vpack.c.bf16 %v305, %v305
      %v310 = vpack.c.bf16 %v307, %v307
      %311 = vst [vmem:[%s217] sm:$0xf] %v309
      %312 = vst [vmem:[%s217 + $0x4] sm:$0xf] %v310
      %s313 = smul.u32 2, %s18
      %p314 = scmp.lt.s32.totalorder %s313, 3
      %s315 = scalar_select %p314, %s313, 3
      %s316 = smul.addr %s315, 4
      %s317 = scalar_lea.vmem %s3, %s316
      // Predicated region
      $region33: #{_lambda_.20} parent=31 // pred_check
        %p318 = pneg %p119
      $region34: #{_lambda_.20} parent=31 // pred_check_branch
        %320 = sbr.rel (%p318) target = $region36
      $region35: #{_lambda_.20} parent=31 // pred_region
        %s321 = smul.u32 2, %s18
      $region36: #{_lambda_.20} parent=31 // pred_fallthru
        _
    $region32: #{_lambda_.20} parent=5 // pred_fallthru
      _
    %p322 = scmp.le.s32.totalorder 2, %s9
    // Predicated region
    $region37: #{_lambda_.20} parent=5 // pred_check
      %p323 = pneg %p322
    $region38: #{_lambda_.20} parent=5 // pred_check_branch
      %325 = sbr.rel (%p323) target = $region40
    $region39: #{_lambda_.20} parent=5 // pred_region
      %s326 = ssub.s32 %s9, 2
      // Predicated region
      $region41: #{_lambda_.20} parent=39 // pred_check
        %p327 = pneg %p125
      $region42: #{_lambda_.20} parent=39 // pred_check_branch
        %329 = sbr.rel (%p327) target = $region44
      $region43: #{_lambda_.20} parent=39 // pred_region
        %s330 = smul.u32 2, %s20
        %p331 = scmp.lt.s32.totalorder %s330, 3
        %s332 = scalar_select %p331, %s330, 3
        %s333 = smul.addr %s332, 4
        %s334 = scalar_lea.vmem %s3, %s333
      $region44: #{_lambda_.20} parent=39 // pred_fallthru
        _
    $region40: #{_lambda_.20} parent=5 // pred_fallthru
      _
  $region6: #{_lambda_.20} parent=0 // loop_footer
    %s13 = sadd.s32 1, %s9
  $region7: #{_lambda_.20} parent=0 // loop_footer_branch
    %8 = sbr.rel target = $region3
  $region8: #{_lambda_.20} parent=0 // loop_exit
    _

// kernel: _lambda_.22
$region0: #{_lambda_.22}
  #allocation0 [shape = 'u32[]', space=smem, size = 0x4, offset = 0x4, fixed_abs, tag = 'smem constant byte address 0x4 - core index']
  #allocation1 [shape = 'u32[72,128]{1,0:T(1,128)}', space=vmem, size = 0x9000, scoped, tag = 'internal scratch']
  %s0 = inlined_call_operand.vmem [shape: bf16[32,128], index: 0, kind: input, shape index: {}]
  %s1 = inlined_call_operand.vmem [shape: bf16[128,128], index: 1, kind: input, shape index: {}]
  %s2 = inlined_call_operand.vmem [shape: f32[1,128], index: 2, kind: input, shape index: {}]
  %s3 = inlined_call_operand.vmem [shape: bf16[32,128], index: 3, kind: output, shape index: {}]
  %s4 = sld [smem:[#allocation0]]
  $region45: #{_lambda_.22} parent=0
    _
  %s6 = ssub.s32 1, %s4
  %s7 = scalar_select 0, %s6, %s4
  loop: start=0, step=1, limit=4
  $region2: #{_lambda_.22} parent=0 // loop_pre_header
    _
  $region3: #{_lambda_.22} parent=0 // loop_header
    %s9 = sphi 0, %s13
    %p10 = scmp.ge.s32.totalorder %s9, 4
    %s16 = sphi 0, %s28
    %s17 = sphi 0, %s24
    %s18 = sphi 0, %s16
    %s19 = sphi 0, %s17
    %s20 = sphi 0, %s18
    %s21 = sphi 0, %s19
    %s33 = sphi 0, %s35
    %s36 = sphi 0, %s33
    %s37 = sphi 0, %s36
    %s53 = sphi 0, %s37
    %s59 = sphi 0, %s61
    %s62 = sphi 0, %s59
    %s63 = sphi 0, %s62
    %s79 = sphi 0, %s63
    %s83 = sphi 0, %s83
    %s85 = sphi 0, %s83
    %s86 = sphi 0, %s85
    %s100 = sphi 0, %s86
    %s106 = sphi 0, %s108
    %s109 = sphi 0, %s106
    %s110 = sphi 0, %s109
    %s126 = sphi 0, %s110
  $region4: #{_lambda_.22} parent=0 // loop_header_branch
    %12 = sbr.rel (%p10) target = $region8
  $region5: #{_lambda_.22} parent=0 // loop_body
    %s14 = ssub.s32 %s9, 1
    %s15 = ssub.s32 %s9, 2
    %s22 = sadd.s32 1, %s17
    %p23 = scmp.ge.s32.totalorder %s22, 1
    %s24 = scalar_select %p23, 0, %s22
    %s25 = sadd.s32 1, %s16
    %s26 = scalar_select %p23, %s25, %s16
    %p27 = scmp.ge.s32.totalorder %s26, 2
    %s28 = scalar_select %p27, 0, %s26
    %s29 = ssub.s32 %s16, %s28
    %s30 = ssub.s32 %s17, %s24
    %s31 = sor.u32 %s29, %s30
    %p32 = scmp.eq.s32.totalorder %s31, 0
    %s34 = sadd.s32 %s33, 1
    %s35 = scalar_select %p32, %s33, %s34
    %p38 = pneg %p32
    %p39 = scmp.eq.s32.totalorder %s9, 1
    %p40 = por %p38, %p39
    %p41 = scmp.ne.s32.totalorder %s33, %s36
    %p42 = scmp.eq.s32.totalorder %s9, 0
    %p43 = por %p41, %p42
    %p44 = scmp.ne.s32.totalorder %s33, %s36
    %p45 = scmp.eq.s32.totalorder %s14, 1
    %p46 = por %p44, %p45
    %p47 = scmp.ne.s32.totalorder %s36, %s37
    %p48 = scmp.eq.s32.totalorder %s14, 0
    %p49 = por %p47, %p48
    %p50 = scmp.ne.s32.totalorder %s36, %s37
    %p51 = scmp.eq.s32.totalorder %s15, 1
    %p52 = por %p50, %p51
    %p54 = scmp.ne.s32.totalorder %s37, %s53
    %p55 = scmp.eq.s32.totalorder %s15, 0
    %p56 = por %p54, %p55
    %s57 = ssub.s32 %s17, %s24
    %p58 = scmp.eq.s32.totalorder %s57, 0
    %s60 = sadd.s32 %s59, 1
    %s61 = scalar_select %p58, %s59, %s60
    %p64 = pneg %p58
    %p65 = scmp.eq.s32.totalorder %s9, 1
    %p66 = por %p64, %p65
    %p67 = scmp.ne.s32.totalorder %s59, %s62
    %p68 = scmp.eq.s32.totalorder %s9, 0
    %p69 = por %p67, %p68
    %p70 = scmp.ne.s32.totalorder %s59, %s62
    %p71 = scmp.eq.s32.totalorder %s14, 1
    %p72 = por %p70, %p71
    %p73 = scmp.ne.s32.totalorder %s62, %s63
    %p74 = scmp.eq.s32.totalorder %s14, 0
    %p75 = por %p73, %p74
    %p76 = scmp.ne.s32.totalorder %s62, %s63
    %p77 = scmp.eq.s32.totalorder %s15, 1
    %p78 = por %p76, %p77
    %p80 = scmp.ne.s32.totalorder %s63, %s79
    %p81 = scmp.eq.s32.totalorder %s15, 0
    %p82 = por %p80, %p81
    %s84 = sadd.s32 %s83, 1
    %p87 = scmp.eq.s32.totalorder %s9, 1
    %p88 = scmp.ne.s32.totalorder %s83, %s85
    %p89 = scmp.eq.s32.totalorder %s9, 0
    %p90 = por %p88, %p89
    %p91 = scmp.ne.s32.totalorder %s83, %s85
    %p92 = scmp.eq.s32.totalorder %s14, 1
    %p93 = por %p91, %p92
    %p94 = scmp.ne.s32.totalorder %s85, %s86
    %p95 = scmp.eq.s32.totalorder %s14, 0
    %p96 = por %p94, %p95
    %p97 = scmp.ne.s32.totalorder %s85, %s86
    %p98 = scmp.eq.s32.totalorder %s15, 1
    %p99 = por %p97, %p98
    %p101 = scmp.ne.s32.totalorder %s86, %s100
    %p102 = scmp.eq.s32.totalorder %s15, 0
    %p103 = por %p101, %p102
    %s104 = ssub.s32 %s16, %s28
    %p105 = scmp.eq.s32.totalorder %s104, 0
    %s107 = sadd.s32 %s106, 1
    %s108 = scalar_select %p105, %s106, %s107
    %p111 = pneg %p105
    %p112 = scmp.eq.s32.totalorder %s9, 1
    %p113 = por %p111, %p112
    %p114 = scmp.ne.s32.totalorder %s106, %s109
    %p115 = scmp.eq.s32.totalorder %s9, 0
    %p116 = por %p114, %p115
    %p117 = scmp.ne.s32.totalorder %s106, %s109
    %p118 = scmp.eq.s32.totalorder %s14, 1
    %p119 = por %p117, %p118
    %p120 = scmp.ne.s32.totalorder %s109, %s110
    %p121 = scmp.eq.s32.totalorder %s14, 0
    %p122 = por %p120, %p121
    %p123 = scmp.ne.s32.totalorder %s109, %s110
    %p124 = scmp.eq.s32.totalorder %s15, 1
    %p125 = por %p123, %p124
    %p127 = scmp.ne.s32.totalorder %s110, %s126
    %p128 = scmp.eq.s32.totalorder %s15, 0
    %p129 = por %p127, %p128
    %p130 = scmp.le.s32.totalorder 1, %s9
    %p131 = scmp.lt.s32.totalorder %s9, 3
    %p132 = pnand %p130, %p131
    %p133 = pneg %p132
    // Predicated region
    $region9: #{_lambda_.22} parent=5 // pred_check
      _
    $region10: #{_lambda_.22} parent=5 // pred_check_branch
      %135 = sbr.rel (%p132) target = $region12
    $region11: #{_lambda_.22} parent=5 // pred_region
      %s136 = ssub.s32 %s9, 1
      // Predicated region
      $region13: #{_lambda_.22} parent=11 // pred_check
        %p137 = pneg %p75
      $region14: #{_lambda_.22} parent=11 // pred_check_branch
        %139 = sbr.rel (%p137) target = $region16
      $region15: #{_lambda_.22} parent=11 // pred_region
        %s140 = smul.u32 16, %s19
        %p141 = scmp.lt.s32.totalorder %s140, 15
        %s142 = scalar_select %p141, %s140, 15
        %s143 = smul.addr %s142, 4
        %s144 = scalar_lea.vmem %s1, %s143
        %s145 = smul.u32 16, %s19
      $region16: #{_lambda_.22} parent=11 // pred_fallthru
        _
      // Predicated region
      $region17: #{_lambda_.22} parent=11 // pred_check
        %p146 = pneg %p96
      $region18: #{_lambda_.22} parent=11 // pred_check_branch
        %148 = sbr.rel (%p146) target = $region20
      $region19: #{_lambda_.22} parent=11 // pred_region
        _
      $region20: #{_lambda_.22} parent=11 // pred_fallthru
        _
    $region12: #{_lambda_.22} parent=5 // pred_fallthru
      _
    %p149 = scmp.lt.s32.totalorder %s9, 2
    // Predicated region
    $region21: #{_lambda_.22} parent=5 // pred_check
      %p150 = pneg %p149
    $region22: #{_lambda_.22} parent=5 // pred_check_branch
      %152 = sbr.rel (%p150) target = $region24
    $region23: #{_lambda_.22} parent=5 // pred_region
      // Predicated region
      $region25: #{_lambda_.22} parent=23 // pred_check
        %p153 = pneg %p43
      $region26: #{_lambda_.22} parent=23 // pred_check_branch
        %155 = sbr.rel (%p153) target = $region28
      $region27: #{_lambda_.22} parent=23 // pred_region
        %s156 = smul.u32 2, %s16
        %p157 = scmp.lt.s32.totalorder %s156, 3
        %s158 = scalar_select %p157, %s156, 3
        %p159 = scmp.lt.s32.totalorder %s17, 0
        %s160 = scalar_select %p159, %s17, 0
        %s161 = sadd.s32 %s160, %s158
        %s162 = smul.addr %s161, 4
        %s163 = scalar_lea.vmem %s0, %s162
        %s164 = smul.u32 2, %s16
      $region28: #{_lambda_.22} parent=23 // pred_fallthru
        _
    $region24: #{_lambda_.22} parent=5 // pred_fallthru
      _
    %p165 = scmp.le.s32.totalorder 1, %s9
    %p166 = scmp.lt.s32.totalorder %s9, 3
    %p167 = pnand %p165, %p166
    %p168 = pneg %p167
    // Predicated region
    $region29: #{_lambda_.22} parent=5 // pred_check
      _
    $region30: #{_lambda_.22} parent=5 // pred_check_branch
      %170 = sbr.rel (%p167) target = $region32
    $region31: #{_lambda_.22} parent=5 // pred_region
      %s171 = ssub.s32 %s9, 1
      %s172 = smul.u32 2, %s18
      %p173 = scmp.lt.s32.totalorder %s172, 3
      %s174 = scalar_select %p173, %s172, 3
      %p175 = scmp.lt.s32.totalorder %s19, 0
      %s176 = scalar_select %p175, %s19, 0
      %s177 = sadd.s32 %s176, %s174
      %s178 = smul.addr %s177, 4
      %s179 = scalar_lea.vmem %s0, %s178
      %p180 = pneg %p49
      %p181 = pneg %p46
      %s182 = smul.u32 16, %s19
      %p183 = scmp.lt.s32.totalorder %s182, 15
      %s184 = scalar_select %p183, %s182, 15
      %s185 = smul.addr %s184, 4
      %s186 = scalar_lea.vmem %s1, %s185
      %p187 = pneg %p75
      %p188 = pneg %p72
      %p189 = pneg %p96
      %p190 = pneg %p93
      %p191 = pneg %p122
      %p192 = pneg %p119
      %s193 = smul.u32 2, %s18
      %p194 = scmp.lt.s32.totalorder %s193, 3
      %s195 = scalar_select %p194, %s193, 3
      %s196 = smul.addr %s195, 4
      %s197 = scalar_lea.vmem %s3, %s196
      %s198 = smul.u32 2, %s18
      %p199 = scmp.lt.s32.totalorder %s198, 3
      %s200 = scalar_select %p199, %s198, 3
      %p201 = scmp.lt.s32.totalorder %s19, 0
      %s202 = scalar_select %p201, %s19, 0
      %s203 = sadd.s32 %s202, %s200
      %s204 = smul.addr %s203, 4
      %s205 = scalar_lea.vmem %s0, %s204
      %s206 = smul.u32 2, %s18
      %s207 = smul.u32 16, %s19
      %p208 = scmp.lt.s32.totalorder %s207, 15
      %s209 = scalar_select %p208, %s207, 15
      %s210 = smul.addr %s209, 4
      %s211 = scalar_lea.vmem %s1, %s210
      %s212 = smul.u32 16, %s19
      %s213 = smul.u32 2, %s18
      %p214 = scmp.lt.s32.totalorder %s213, 3
      %s215 = scalar_select %p214, %s213, 3
      %s216 = smul.addr %s215, 4
      %s217 = scalar_lea.vmem %s3, %s216
      %s218 = smul.u32 2, %s18
      %v219 = vld [vmem:[%s205] sm:$0xf]
      %v220 = vld [vmem:[%s205 + $0x4] sm:$0xf]
      %v221 = vld [vmem:[%s211] sm:$0xf]
      %v222 = vld [vmem:[%s211 + $0x4] sm:$0xf]
      %v223 = vld [vmem:[%s211 + $0x8] sm:$0xf]
      %v224 = vld [vmem:[%s211 + $0xc] sm:$0xf]
      %v225 = vld [vmem:[%s211 + $0x10] sm:$0xf]
      %v226 = vld [vmem:[%s211 + $0x14] sm:$0xf]
      %v227 = vld [vmem:[%s211 + $0x18] sm:$0xf]
      %v228 = vld [vmem:[%s211 + $0x1c] sm:$0xf]
      %v229 = vld [vmem:[%s211 + $0x20] sm:$0xf]
      %v230 = vld [vmem:[%s211 + $0x24] sm:$0xf]
      %v231 = vld [vmem:[%s211 + $0x28] sm:$0xf]
      %v232 = vld [vmem:[%s211 + $0x2c] sm:$0xf]
      %v233 = vld [vmem:[%s211 + $0x30] sm:$0xf]
      %v234 = vld [vmem:[%s211 + $0x34] sm:$0xf]
      %v235 = vld [vmem:[%s211 + $0x38] sm:$0xf]
      %v236 = vld [vmem:[%s211 + $0x3c] sm:$0xf]
      %v237 = vld [vmem:[%s2] sm:$0x1]
      %v239 = vperm.slane %v237, 0
      %v243 = vunpack.c.l.b16 %v219
      %v244 = vunpack.c.l.b16 %v220
      %v245 = vpack.c.b16 %v244, %v243
      %v263 = vunpack.c.l.b16 %v221
      %v264 = vunpack.c.l.b16 %v222
      %v265 = vunpack.c.l.b16 %v223
      %v266 = vunpack.c.l.b16 %v224
      %v267 = vunpack.c.l.b16 %v225
      %v268 = vunpack.c.l.b16 %v226
      %v269 = vunpack.c.l.b16 %v227
      %v270 = vunpack.c.l.b16 %v228
      %v271 = vunpack.c.l.b16 %v229
      %v272 = vunpack.c.l.b16 %v230
      %v273 = vunpack.c.l.b16 %v231
      %v274 = vunpack.c.l.b16 %v232
      %v275 = vunpack.c.l.b16 %v233
      %v276 = vunpack.c.l.b16 %v234
      %v277 = vunpack.c.l.b16 %v235
      %v278 = vunpack.c.l.b16 %v236
      %v279 = vpack.c.b16 %v264, %v263
      %v280 = vpack.c.b16 %v266, %v265
      %v281 = vpack.c.b16 %v268, %v267
      %v282 = vpack.c.b16 %v270, %v269
      %v283 = vpack.c.b16 %v272, %v271
      %v284 = vpack.c.b16 %v274, %v273
      %v285 = vpack.c.b16 %v276, %v275
      %v286 = vpack.c.b16 %v278, %v277
      %295 = vmatpush.bf16.msra.mxu0 %v286
      %296 = vmatpush.bf16.msra.mxu0 %v285
      %297 = vmatpush.bf16.msra.mxu0 %v284
      %298 = vmatpush.bf16.msra.mxu0 %v283
      %299 = vmatpush.bf16.msra.mxu0 %v282
      %300 = vmatpush.bf16.msra.mxu0 %v281
      %301 = vmatpush.bf16.msra.mxu0 %v280
      %302 = vmatpush.bf16.msra.mxu0 %v279
      %303 = vmatmul.bf16.gmra.mxu0 %v245
      %v304 = vpop.f32.mrf.mxu0
      %v305 = vadd.f32 %v239, %v304
      %v306 = vpop.f32.mrf.mxu0
      %v307 = vadd.f32 %v239, %v306
      %308 = vdwg.mxu0
      %v309 = vmul.f32 %v305, %v305
      %v310 = vmul.f32 %v307, %v307
      %v311 = vmul.f32 %v305, %v309
      %v312 = vmul.f32 %v307, %v310
      %v313 = vmul.f32 %v311, 0.044715
      %v314 = vmul.f32 %v312, 0.044715
      %v315 = vadd.f32 %v305, %v313
      %v316 = vadd.f32 %v307, %v314
      %v317 = vmul.f32 %v315, 0.7978846
      %v318 = vmul.f32 %v316, 0.7978846
      %v319 = vtanh.pop %v317
      %v320 = vtanh.pop %v318
      %v321 = vadd.f32 %v319, 1.0
      %v322 = vadd.f32 %v320, 1.0
      %v323 = vmul.f32 %v321, 0.5
      %v324 = vmul.f32 %v322, 0.5
      %v325 = vmul.f32 %v305, %v323
      %v326 = vmul.f32 %v307, %v324
      %v327 = vpack.c.bf16 %v325, %v325
      %v328 = vpack.c.bf16 %v326, %v326
      %329 = vst [vmem:[%s217] sm:$0xf] %v327
      %330 = vst [vmem:[%s217 + $0x4] sm:$0xf] %v328
      %s331 = smul.u32 2, %s18
      %p332 = scmp.lt.s32.totalorder %s331, 3
      %s333 = scalar_select %p332, %s331, 3
      %s334 = smul.addr %s333, 4
      %s335 = scalar_lea.vmem %s3, %s334
      // Predicated region
      $region33: #{_lambda_.22} parent=31 // pred_check
        %p336 = pneg %p119
      $region34: #{_lambda_.22} parent=31 // pred_check_branch
        %338 = sbr.rel (%p336) target = $region36
      $region35: #{_lambda_.22} parent=31 // pred_region
        %s339 = smul.u32 2, %s18
      $region36: #{_lambda_.22} parent=31 // pred_fallthru
        _
    $region32: #{_lambda_.22} parent=5 // pred_fallthru
      _
    %p340 = scmp.le.s32.totalorder 2, %s9
    // Predicated region
    $region37: #{_lambda_.22} parent=5 // pred_check
      %p341 = pneg %p340
    $region38: #{_lambda_.22} parent=5 // pred_check_branch
      %343 = sbr.rel (%p341) target = $region40
    $region39: #{_lambda_.22} parent=5 // pred_region
      %s344 = ssub.s32 %s9, 2
      // Predicated region
      $region41: #{_lambda_.22} parent=39 // pred_check
        %p345 = pneg %p125
      $region42: #{_lambda_.22} parent=39 // pred_check_branch
        %347 = sbr.rel (%p345) target = $region44
      $region43: #{_lambda_.22} parent=39 // pred_region
        %s348 = smul.u32 2, %s20
        %p349 = scmp.lt.s32.totalorder %s348, 3
        %s350 = scalar_select %p349, %s348, 3
        %s351 = smul.addr %s350, 4
        %s352 = scalar_lea.vmem %s3, %s351
      $region44: #{_lambda_.22} parent=39 // pred_fallthru
        _
    $region40: #{_lambda_.22} parent=5 // pred_fallthru
      _
  $region6: #{_lambda_.22} parent=0 // loop_footer
    %s13 = sadd.s32 1, %s9
  $region7: #{_lambda_.22} parent=0 // loop_footer_branch
    %8 = sbr.rel target = $region3
  $region8: #{_lambda_.22} parent=0 // loop_exit
    _

// kernel: _lambda_.25
$region0: #{_lambda_.25}
  #allocation0 [shape = 'u32[]', space=smem, size = 0x4, offset = 0x4, fixed_abs, tag = 'smem constant byte address 0x4 - core index']
  #allocation1 [shape = 'u32[72,128]{1,0:T(1,128)}', space=vmem, size = 0x9000, scoped, tag = 'internal scratch']
  %s0 = inlined_call_operand.vmem [shape: bf16[32,128], index: 0, kind: input, shape index: {}]
  %s1 = inlined_call_operand.vmem [shape: bf16[128,512], index: 1, kind: input, shape index: {}]
  %s2 = inlined_call_operand.vmem [shape: f32[1,512], index: 2, kind: input, shape index: {}]
  %s3 = inlined_call_operand.vmem [shape: bf16[32,512], index: 3, kind: output, shape index: {}]
  %s4 = sld [smem:[#allocation0]]
  $region45: #{_lambda_.25} parent=0
    _
  %s6 = ssub.s32 1, %s4
  %s7 = scalar_select 0, %s6, %s4
  loop: start=0, step=1, limit=4
  $region2: #{_lambda_.25} parent=0 // loop_pre_header
    _
  $region3: #{_lambda_.25} parent=0 // loop_header
    %s9 = sphi 0, %s13
    %p10 = scmp.ge.s32.totalorder %s9, 4
    %s16 = sphi 0, %s28
    %s17 = sphi 0, %s24
    %s18 = sphi 0, %s16
    %s19 = sphi 0, %s17
    %s20 = sphi 0, %s18
    %s21 = sphi 0, %s19
    %s33 = sphi 0, %s35
    %s36 = sphi 0, %s33
    %s37 = sphi 0, %s36
    %s53 = sphi 0, %s37
    %s59 = sphi 0, %s61
    %s62 = sphi 0, %s59
    %s63 = sphi 0, %s62
    %s79 = sphi 0, %s63
    %s83 = sphi 0, %s83
    %s85 = sphi 0, %s83
    %s86 = sphi 0, %s85
    %s100 = sphi 0, %s86
    %s106 = sphi 0, %s108
    %s109 = sphi 0, %s106
    %s110 = sphi 0, %s109
    %s126 = sphi 0, %s110
  $region4: #{_lambda_.25} parent=0 // loop_header_branch
    %12 = sbr.rel (%p10) target = $region8
  $region5: #{_lambda_.25} parent=0 // loop_body
    %s14 = ssub.s32 %s9, 1
    %s15 = ssub.s32 %s9, 2
    %s22 = sadd.s32 1, %s17
    %p23 = scmp.ge.s32.totalorder %s22, 1
    %s24 = scalar_select %p23, 0, %s22
    %s25 = sadd.s32 1, %s16
    %s26 = scalar_select %p23, %s25, %s16
    %p27 = scmp.ge.s32.totalorder %s26, 2
    %s28 = scalar_select %p27, 0, %s26
    %s29 = ssub.s32 %s16, %s28
    %s30 = ssub.s32 %s17, %s24
    %s31 = sor.u32 %s29, %s30
    %p32 = scmp.eq.s32.totalorder %s31, 0
    %s34 = sadd.s32 %s33, 1
    %s35 = scalar_select %p32, %s33, %s34
    %p38 = pneg %p32
    %p39 = scmp.eq.s32.totalorder %s9, 1
    %p40 = por %p38, %p39
    %p41 = scmp.ne.s32.totalorder %s33, %s36
    %p42 = scmp.eq.s32.totalorder %s9, 0
    %p43 = por %p41, %p42
    %p44 = scmp.ne.s32.totalorder %s33, %s36
    %p45 = scmp.eq.s32.totalorder %s14, 1
    %p46 = por %p44, %p45
    %p47 = scmp.ne.s32.totalorder %s36, %s37
    %p48 = scmp.eq.s32.totalorder %s14, 0
    %p49 = por %p47, %p48
    %p50 = scmp.ne.s32.totalorder %s36, %s37
    %p51 = scmp.eq.s32.totalorder %s15, 1
    %p52 = por %p50, %p51
    %p54 = scmp.ne.s32.totalorder %s37, %s53
    %p55 = scmp.eq.s32.totalorder %s15, 0
    %p56 = por %p54, %p55
    %s57 = ssub.s32 %s17, %s24
    %p58 = scmp.eq.s32.totalorder %s57, 0
    %s60 = sadd.s32 %s59, 1
    %s61 = scalar_select %p58, %s59, %s60
    %p64 = pneg %p58
    %p65 = scmp.eq.s32.totalorder %s9, 1
    %p66 = por %p64, %p65
    %p67 = scmp.ne.s32.totalorder %s59, %s62
    %p68 = scmp.eq.s32.totalorder %s9, 0
    %p69 = por %p67, %p68
    %p70 = scmp.ne.s32.totalorder %s59, %s62
    %p71 = scmp.eq.s32.totalorder %s14, 1
    %p72 = por %p70, %p71
    %p73 = scmp.ne.s32.totalorder %s62, %s63
    %p74 = scmp.eq.s32.totalorder %s14, 0
    %p75 = por %p73, %p74
    %p76 = scmp.ne.s32.totalorder %s62, %s63
    %p77 = scmp.eq.s32.totalorder %s15, 1
    %p78 = por %p76, %p77
    %p80 = scmp.ne.s32.totalorder %s63, %s79
    %p81 = scmp.eq.s32.totalorder %s15, 0
    %p82 = por %p80, %p81
    %s84 = sadd.s32 %s83, 1
    %p87 = scmp.eq.s32.totalorder %s9, 1
    %p88 = scmp.ne.s32.totalorder %s83, %s85
    %p89 = scmp.eq.s32.totalorder %s9, 0
    %p90 = por %p88, %p89
    %p91 = scmp.ne.s32.totalorder %s83, %s85
    %p92 = scmp.eq.s32.totalorder %s14, 1
    %p93 = por %p91, %p92
    %p94 = scmp.ne.s32.totalorder %s85, %s86
    %p95 = scmp.eq.s32.totalorder %s14, 0
    %p96 = por %p94, %p95
    %p97 = scmp.ne.s32.totalorder %s85, %s86
    %p98 = scmp.eq.s32.totalorder %s15, 1
    %p99 = por %p97, %p98
    %p101 = scmp.ne.s32.totalorder %s86, %s100
    %p102 = scmp.eq.s32.totalorder %s15, 0
    %p103 = por %p101, %p102
    %s104 = ssub.s32 %s16, %s28
    %p105 = scmp.eq.s32.totalorder %s104, 0
    %s107 = sadd.s32 %s106, 1
    %s108 = scalar_select %p105, %s106, %s107
    %p111 = pneg %p105
    %p112 = scmp.eq.s32.totalorder %s9, 1
    %p113 = por %p111, %p112
    %p114 = scmp.ne.s32.totalorder %s106, %s109
    %p115 = scmp.eq.s32.totalorder %s9, 0
    %p116 = por %p114, %p115
    %p117 = scmp.ne.s32.totalorder %s106, %s109
    %p118 = scmp.eq.s32.totalorder %s14, 1
    %p119 = por %p117, %p118
    %p120 = scmp.ne.s32.totalorder %s109, %s110
    %p121 = scmp.eq.s32.totalorder %s14, 0
    %p122 = por %p120, %p121
    %p123 = scmp.ne.s32.totalorder %s109, %s110
    %p124 = scmp.eq.s32.totalorder %s15, 1
    %p125 = por %p123, %p124
    %p127 = scmp.ne.s32.totalorder %s110, %s126
    %p128 = scmp.eq.s32.totalorder %s15, 0
    %p129 = por %p127, %p128
    %p130 = scmp.le.s32.totalorder 1, %s9
    %p131 = scmp.lt.s32.totalorder %s9, 3
    %p132 = pnand %p130, %p131
    %p133 = pneg %p132
    // Predicated region
    $region9: #{_lambda_.25} parent=5 // pred_check
      _
    $region10: #{_lambda_.25} parent=5 // pred_check_branch
      %135 = sbr.rel (%p132) target = $region12
    $region11: #{_lambda_.25} parent=5 // pred_region
      %s136 = ssub.s32 %s9, 1
      // Predicated region
      $region13: #{_lambda_.25} parent=11 // pred_check
        %p137 = pneg %p75
      $region14: #{_lambda_.25} parent=11 // pred_check_branch
        %139 = sbr.rel (%p137) target = $region16
      $region15: #{_lambda_.25} parent=11 // pred_region
        %s140 = smul.u32 16, %s19
        %p141 = scmp.lt.s32.totalorder %s140, 15
        %s142 = scalar_select %p141, %s140, 15
        %s143 = smul.addr %s142, 4
        %s144 = smul.addr %s143, 4
        %s145 = scalar_lea.vmem %s1, %s144
        %s146 = smul.u32 16, %s19
      $region16: #{_lambda_.25} parent=11 // pred_fallthru
        _
      // Predicated region
      $region17: #{_lambda_.25} parent=11 // pred_check
        %p147 = pneg %p96
      $region18: #{_lambda_.25} parent=11 // pred_check_branch
        %149 = sbr.rel (%p147) target = $region20
      $region19: #{_lambda_.25} parent=11 // pred_region
        _
      $region20: #{_lambda_.25} parent=11 // pred_fallthru
        _
    $region12: #{_lambda_.25} parent=5 // pred_fallthru
      _
    %p150 = scmp.lt.s32.totalorder %s9, 2
    // Predicated region
    $region21: #{_lambda_.25} parent=5 // pred_check
      %p151 = pneg %p150
    $region22: #{_lambda_.25} parent=5 // pred_check_branch
      %153 = sbr.rel (%p151) target = $region24
    $region23: #{_lambda_.25} parent=5 // pred_region
      // Predicated region
      $region25: #{_lambda_.25} parent=23 // pred_check
        %p154 = pneg %p43
      $region26: #{_lambda_.25} parent=23 // pred_check_branch
        %156 = sbr.rel (%p154) target = $region28
      $region27: #{_lambda_.25} parent=23 // pred_region
        %s157 = smul.u32 2, %s16
        %p158 = scmp.lt.s32.totalorder %s157, 3
        %s159 = scalar_select %p158, %s157, 3
        %p160 = scmp.lt.s32.totalorder %s17, 0
        %s161 = scalar_select %p160, %s17, 0
        %s162 = sadd.s32 %s161, %s159
        %s163 = smul.addr %s162, 4
        %s164 = scalar_lea.vmem %s0, %s163
        %s165 = smul.u32 2, %s16
      $region28: #{_lambda_.25} parent=23 // pred_fallthru
        _
    $region24: #{_lambda_.25} parent=5 // pred_fallthru
      _
    %p166 = scmp.le.s32.totalorder 1, %s9
    %p167 = scmp.lt.s32.totalorder %s9, 3
    %p168 = pnand %p166, %p167
    %p169 = pneg %p168
    // Predicated region
    $region29: #{_lambda_.25} parent=5 // pred_check
      _
    $region30: #{_lambda_.25} parent=5 // pred_check_branch
      %171 = sbr.rel (%p168) target = $region32
    $region31: #{_lambda_.25} parent=5 // pred_region
      %s172 = ssub.s32 %s9, 1
      %s173 = smul.u32 2, %s18
      %p174 = scmp.lt.s32.totalorder %s173, 3
      %s175 = scalar_select %p174, %s173, 3
      %p176 = scmp.lt.s32.totalorder %s19, 0
      %s177 = scalar_select %p176, %s19, 0
      %s178 = sadd.s32 %s177, %s175
      %s179 = smul.addr %s178, 4
      %s180 = scalar_lea.vmem %s0, %s179
      %p181 = pneg %p49
      %p182 = pneg %p46
      %s183 = smul.u32 16, %s19
      %p184 = scmp.lt.s32.totalorder %s183, 15
      %s185 = scalar_select %p184, %s183, 15
      %s186 = smul.addr %s185, 4
      %s187 = smul.addr %s186, 4
      %s188 = scalar_lea.vmem %s1, %s187
      %p189 = pneg %p75
      %p190 = pneg %p72
      %p191 = pneg %p96
      %p192 = pneg %p93
      %p193 = pneg %p122
      %p194 = pneg %p119
      %s195 = smul.u32 2, %s18
      %p196 = scmp.lt.s32.totalorder %s195, 3
      %s197 = scalar_select %p196, %s195, 3
      %s198 = smul.addr %s197, 4
      %s199 = smul.addr %s198, 4
      %s200 = scalar_lea.vmem %s3, %s199
      %s201 = smul.u32 2, %s18
      %p202 = scmp.lt.s32.totalorder %s201, 3
      %s203 = scalar_select %p202, %s201, 3
      %p204 = scmp.lt.s32.totalorder %s19, 0
      %s205 = scalar_select %p204, %s19, 0
      %s206 = sadd.s32 %s205, %s203
      %s207 = smul.addr %s206, 4
      %s208 = scalar_lea.vmem %s0, %s207
      %s209 = smul.u32 2, %s18
      %s210 = smul.u32 16, %s19
      %p211 = scmp.lt.s32.totalorder %s210, 15
      %s212 = scalar_select %p211, %s210, 15
      %s213 = smul.addr %s212, 4
      %s214 = smul.addr %s213, 4
      %s215 = scalar_lea.vmem %s1, %s214
      %s216 = smul.u32 16, %s19
      %s217 = smul.u32 2, %s18
      %p218 = scmp.lt.s32.totalorder %s217, 3
      %s219 = scalar_select %p218, %s217, 3
      %s220 = smul.addr %s219, 4
      %s221 = smul.addr %s220, 4
      %s222 = scalar_lea.vmem %s3, %s221
      %s223 = smul.u32 2, %s18
      %v224 = vld [vmem:[%s208] sm:$0xf]
      %v225 = vld [vmem:[%s208 + $0x4] sm:$0xf]
      %v226 = vld [vmem:[%s215] sm:$0xff]
      %v227 = vld [vmem:[%s215 + $0x8] sm:$0xff]
      %v228 = vld [vmem:[%s215 + $0x10] sm:$0xff]
      %v229 = vld [vmem:[%s215 + $0x18] sm:$0xff]
      %v230 = vld [vmem:[%s215 + $0x20] sm:$0xff]
      %v231 = vld [vmem:[%s215 + $0x28] sm:$0xff]
      %v232 = vld [vmem:[%s215 + $0x30] sm:$0xff]
      %v233 = vld [vmem:[%s215 + $0x38] sm:$0xff]
      %v234 = vld [vmem:[%s215 + $0x40] sm:$0xff]
      %v235 = vld [vmem:[%s215 + $0x48] sm:$0xff]
      %v236 = vld [vmem:[%s215 + $0x50] sm:$0xff]
      %v237 = vld [vmem:[%s215 + $0x58] sm:$0xff]
      %v238 = vld [vmem:[%s215 + $0x60] sm:$0xff]
      %v239 = vld [vmem:[%s215 + $0x68] sm:$0xff]
      %v240 = vld [vmem:[%s215 + $0x70] sm:$0xff]
      %v241 = vld [vmem:[%s215 + $0x78] sm:$0xff]
      %v242 = vld [vmem:[%s215 + $0x80] sm:$0xff]
      %v243 = vld [vmem:[%s215 + $0x88] sm:$0xff]
      %v244 = vld [vmem:[%s215 + $0x90] sm:$0xff]
      %v245 = vld [vmem:[%s215 + $0x98] sm:$0xff]
      %v246 = vld [vmem:[%s215 + $0xa0] sm:$0xff]
      %v247 = vld [vmem:[%s215 + $0xa8] sm:$0xff]
      %v248 = vld [vmem:[%s215 + $0xb0] sm:$0xff]
      %v249 = vld [vmem:[%s215 + $0xb8] sm:$0xff]
      %v250 = vld [vmem:[%s215 + $0xc0] sm:$0xff]
      %v251 = vld [vmem:[%s215 + $0xc8] sm:$0xff]
      %v252 = vld [vmem:[%s215 + $0xd0] sm:$0xff]
      %v253 = vld [vmem:[%s215 + $0xd8] sm:$0xff]
      %v254 = vld [vmem:[%s215 + $0xe0] sm:$0xff]
      %v255 = vld [vmem:[%s215 + $0xe8] sm:$0xff]
      %v256 = vld [vmem:[%s215 + $0xf0] sm:$0xff]
      %v257 = vld [vmem:[%s215 + $0xf8] sm:$0xff]
      %v258 = vld [vmem:[%s2] sm:$0xf]
      %v260 = vperm.slane %v258, 0
      %v261 = vperm.slane %v258, 1
      %v262 = vperm.slane %v258, 2
      %v263 = vperm.slane %v258, 3
      %v270 = vunpack.c.l.b16 %v224
      %v271 = vunpack.c.l.b16 %v225
      %v272 = vpack.c.b16 %v271, %v270
      %v306 = vunpack.c.l.b16 %v226
      %v307 = vunpack.c.h.b16 %v226
      %v308 = vunpack.c.l.b16 %v227
      %v309 = vunpack.c.h.b16 %v227
      %v310 = vunpack.c.l.b16 %v228
      %v311 = vunpack.c.h.b16 %v228
      %v312 = vunpack.c.l.b16 %v229
      %v313 = vunpack.c.h.b16 %v229
      %v314 = vunpack.c.l.b16 %v230
      %v315 = vunpack.c.h.b16 %v230
      %v316 = vunpack.c.l.b16 %v231
      %v317 = vunpack.c.h.b16 %v231
      %v318 = vunpack.c.l.b16 %v232
      %v319 = vunpack.c.h.b16 %v232
      %v320 = vunpack.c.l.b16 %v233
      %v321 = vunpack.c.h.b16 %v233
      %v322 = vunpack.c.l.b16 %v234
      %v323 = vunpack.c.h.b16 %v234
      %v324 = vunpack.c.l.b16 %v235
      %v325 = vunpack.c.h.b16 %v235
      %v326 = vunpack.c.l.b16 %v236
      %v327 = vunpack.c.h.b16 %v236
      %v328 = vunpack.c.l.b16 %v237
      %v329 = vunpack.c.h.b16 %v237
      %v330 = vunpack.c.l.b16 %v238
      %v331 = vunpack.c.h.b16 %v238
      %v332 = vunpack.c.l.b16 %v239
      %v333 = vunpack.c.h.b16 %v239
      %v334 = vunpack.c.l.b16 %v240
      %v335 = vunpack.c.h.b16 %v240
      %v336 = vunpack.c.l.b16 %v241
      %v337 = vunpack.c.h.b16 %v241
      %v338 = vunpack.c.l.b16 %v242
      %v339 = vunpack.c.h.b16 %v242
      %v340 = vunpack.c.l.b16 %v243
      %v341 = vunpack.c.h.b16 %v243
      %v342 = vunpack.c.l.b16 %v244
      %v343 = vunpack.c.h.b16 %v244
      %v344 = vunpack.c.l.b16 %v245
      %v345 = vunpack.c.h.b16 %v245
      %v346 = vunpack.c.l.b16 %v246
      %v347 = vunpack.c.h.b16 %v246
      %v348 = vunpack.c.l.b16 %v247
      %v349 = vunpack.c.h.b16 %v247
      %v350 = vunpack.c.l.b16 %v248
      %v351 = vunpack.c.h.b16 %v248
      %v352 = vunpack.c.l.b16 %v249
      %v353 = vunpack.c.h.b16 %v249
      %v354 = vunpack.c.l.b16 %v250
      %v355 = vunpack.c.h.b16 %v250
      %v356 = vunpack.c.l.b16 %v251
      %v357 = vunpack.c.h.b16 %v251
      %v358 = vunpack.c.l.b16 %v252
      %v359 = vunpack.c.h.b16 %v252
      %v360 = vunpack.c.l.b16 %v253
      %v361 = vunpack.c.h.b16 %v253
      %v362 = vunpack.c.l.b16 %v254
      %v363 = vunpack.c.h.b16 %v254
      %v364 = vunpack.c.l.b16 %v255
      %v365 = vunpack.c.h.b16 %v255
      %v366 = vunpack.c.l.b16 %v256
      %v367 = vunpack.c.h.b16 %v256
      %v368 = vunpack.c.l.b16 %v257
      %v369 = vunpack.c.h.b16 %v257
      %v370 = vpack.c.b16 %v310, %v306
      %v371 = vpack.c.b16 %v311, %v307
      %v372 = vpack.c.b16 %v312, %v308
      %v373 = vpack.c.b16 %v313, %v309
      %v374 = vpack.c.b16 %v318, %v314
      %v375 = vpack.c.b16 %v319, %v315
      %v376 = vpack.c.b16 %v320, %v316
      %v377 = vpack.c.b16 %v321, %v317
      %v378 = vpack.c.b16 %v326, %v322
      %v379 = vpack.c.b16 %v327, %v323
      %v380 = vpack.c.b16 %v328, %v324
      %v381 = vpack.c.b16 %v329, %v325
      %v382 = vpack.c.b16 %v334, %v330
      %v383 = vpack.c.b16 %v335, %v331
      %v384 = vpack.c.b16 %v336, %v332
      %v385 = vpack.c.b16 %v337, %v333
      %v386 = vpack.c.b16 %v342, %v338
      %v387 = vpack.c.b16 %v343, %v339
      %v388 = vpack.c.b16 %v344, %v340
      %v389 = vpack.c.b16 %v345, %v341
      %v390 = vpack.c.b16 %v350, %v346
      %v391 = vpack.c.b16 %v351, %v347
      %v392 = vpack.c.b16 %v352, %v348
      %v393 = vpack.c.b16 %v353, %v349
      %v394 = vpack.c.b16 %v358, %v354
      %v395 = vpack.c.b16 %v359, %v355
      %v396 = vpack.c.b16 %v360, %v356
      %v397 = vpack.c.b16 %v361, %v357
      %v398 = vpack.c.b16 %v366, %v362
      %v399 = vpack.c.b16 %v367, %v363
      %v400 = vpack.c.b16 %v368, %v364
      %v401 = vpack.c.b16 %v369, %v365
      %434 = vmatpush.bf16.msra.mxu0 %v398
      %435 = vmatpush.bf16.msra.mxu0 %v394
      %436 = vmatpush.bf16.msra.mxu0 %v390
      %437 = vmatpush.bf16.msra.mxu0 %v386
      %438 = vmatpush.bf16.msra.mxu0 %v382
      %439 = vmatpush.bf16.msra.mxu0 %v378
      %440 = vmatpush.bf16.msra.mxu0 %v374
      %441 = vmatpush.bf16.msra.mxu0 %v370
      %442 = vmatmul.bf16.gmra.mxu0 %v272
      %v443 = vpop.f32.mrf.mxu0
      %v444 = vadd.f32 %v260, %v443
      %v445 = vpop.f32.mrf.mxu0
      %v446 = vadd.f32 %v260, %v445
      %447 = vdwg.mxu0
      %448 = vmatpush.bf16.msra.mxu0 %v399
      %449 = vmatpush.bf16.msra.mxu0 %v395
      %450 = vmatpush.bf16.msra.mxu0 %v391
      %451 = vmatpush.bf16.msra.mxu0 %v387
      %452 = vmatpush.bf16.msra.mxu0 %v383
      %453 = vmatpush.bf16.msra.mxu0 %v379
      %454 = vmatpush.bf16.msra.mxu0 %v375
      %455 = vmatpush.bf16.msra.mxu0 %v371
      %456 = vmatmul.bf16.gmra.mxu0 %v272
      %v457 = vpop.f32.mrf.mxu0
      %v458 = vadd.f32 %v261, %v457
      %v459 = vpop.f32.mrf.mxu0
      %v460 = vadd.f32 %v261, %v459
      %461 = vdwg.mxu0
      %462 = vmatpush.bf16.msra.mxu0 %v400
      %463 = vmatpush.bf16.msra.mxu0 %v396
      %464 = vmatpush.bf16.msra.mxu0 %v392
      %465 = vmatpush.bf16.msra.mxu0 %v388
      %466 = vmatpush.bf16.msra.mxu0 %v384
      %467 = vmatpush.bf16.msra.mxu0 %v380
      %468 = vmatpush.bf16.msra.mxu0 %v376
      %469 = vmatpush.bf16.msra.mxu0 %v372
      %470 = vmatmul.bf16.gmra.mxu0 %v272
      %v471 = vpop.f32.mrf.mxu0
      %v472 = vadd.f32 %v262, %v471
      %v473 = vpop.f32.mrf.mxu0
      %v474 = vadd.f32 %v262, %v473
      %475 = vdwg.mxu0
      %476 = vmatpush.bf16.msra.mxu0 %v401
      %477 = vmatpush.bf16.msra.mxu0 %v397
      %478 = vmatpush.bf16.msra.mxu0 %v393
      %479 = vmatpush.bf16.msra.mxu0 %v389
      %480 = vmatpush.bf16.msra.mxu0 %v385
      %481 = vmatpush.bf16.msra.mxu0 %v381
      %482 = vmatpush.bf16.msra.mxu0 %v377
      %483 = vmatpush.bf16.msra.mxu0 %v373
      %484 = vmatmul.bf16.gmra.mxu0 %v272
      %v485 = vpop.f32.mrf.mxu0
      %v486 = vadd.f32 %v263, %v485
      %v487 = vpop.f32.mrf.mxu0
      %v488 = vadd.f32 %v263, %v487
      %489 = vdwg.mxu0
      %v490 = vpack.c.bf16 %v458, %v444
      %v491 = vpack.c.bf16 %v486, %v472
      %v492 = vpack.c.bf16 %v460, %v446
      %v493 = vpack.c.bf16 %v488, %v474
      %494 = vst [vmem:[%s222] sm:$0xff] %v490
      %495 = vst [vmem:[%s222 + $0x8] sm:$0xff] %v491
      %496 = vst [vmem:[%s222 + $0x10] sm:$0xff] %v492
      %497 = vst [vmem:[%s222 + $0x18] sm:$0xff] %v493
      %s498 = smul.u32 2, %s18
      %p499 = scmp.lt.s32.totalorder %s498, 3
      %s500 = scalar_select %p499, %s498, 3
      %s501 = smul.addr %s500, 4
      %s502 = smul.addr %s501, 4
      %s503 = scalar_lea.vmem %s3, %s502
      // Predicated region
      $region33: #{_lambda_.25} parent=31 // pred_check
        %p504 = pneg %p119
      $region34: #{_lambda_.25} parent=31 // pred_check_branch
        %506 = sbr.rel (%p504) target = $region36
      $region35: #{_lambda_.25} parent=31 // pred_region
        %s507 = smul.u32 2, %s18
      $region36: #{_lambda_.25} parent=31 // pred_fallthru
        _
    $region32: #{_lambda_.25} parent=5 // pred_fallthru
      _
    %p508 = scmp.le.s32.totalorder 2, %s9
    // Predicated region
    $region37: #{_lambda_.25} parent=5 // pred_check
      %p509 = pneg %p508
    $region38: #{_lambda_.25} parent=5 // pred_check_branch
      %511 = sbr.rel (%p509) target = $region40
    $region39: #{_lambda_.25} parent=5 // pred_region
      %s512 = ssub.s32 %s9, 2
      // Predicated region
      $region41: #{_lambda_.25} parent=39 // pred_check
        %p513 = pneg %p125
      $region42: #{_lambda_.25} parent=39 // pred_check_branch
        %515 = sbr.rel (%p513) target = $region44
      $region43: #{_lambda_.25} parent=39 // pred_region
        %s516 = smul.u32 2, %s20
        %p517 = scmp.lt.s32.totalorder %s516, 3
        %s518 = scalar_select %p517, %s516, 3
        %s519 = smul.addr %s518, 4
        %s520 = smul.addr %s519, 4
        %s521 = scalar_lea.vmem %s3, %s520
      $region44: #{_lambda_.25} parent=39 // pred_fallthru
        _
    $region40: #{_lambda_.25} parent=5 // pred_fallthru
      _
  $region6: #{_lambda_.25} parent=0 // loop_footer
    %s13 = sadd.s32 1, %s9
  $region7: #{_lambda_.25} parent=0 // loop_footer_branch
    %8 = sbr.rel target = $region3
  $region8: #{_lambda_.25} parent=0 // loop_exit
    _

// kernel: _lambda_.21
$region0: #{_lambda_.21}
  #allocation0 [shape = 'u32[]', space=smem, size = 0x4, offset = 0x4, fixed_abs, tag = 'smem constant byte address 0x4 - core index']
  #allocation1 [shape = 'u32[72,128]{1,0:T(1,128)}', space=vmem, size = 0x9000, scoped, tag = 'internal scratch']
  #allocation2 [shape = 'f32[4,4,128]{2,1,0:T(4,128)}', space=vmem, size = 0x2000, scoped, tag = 'scratch operand']
  #allocation3 [shape = 'bf16[6,4,128]{2,1,0:T(4,128)(2,1)}', space=vmem, size = 0x1800, scoped, tag = 'scratch operand']
  %s0 = inlined_call_operand.vmem [shape: bf16[2,6,6,128], index: 0, kind: input, shape index: {}]
  %s1 = inlined_call_operand.vmem [shape: f32[9,128], index: 1, kind: input, shape index: {}]
  %s2 = inlined_call_operand.vmem [shape: f32[1,128], index: 2, kind: input, shape index: {}]
  %s3 = inlined_call_operand.vmem [shape: bf16[2,4,4,128], index: 3, kind: output, shape index: {}]
  %s4 = sld [smem:[#allocation0]]
  $region45: #{_lambda_.21} parent=0
    _
  %s6 = ssub.s32 1, %s4
  %s7 = scalar_select 0, %s6, %s4
  loop: start=0, step=1, limit=4
  $region2: #{_lambda_.21} parent=0 // loop_pre_header
    _
  $region3: #{_lambda_.21} parent=0 // loop_header
    %s9 = sphi 0, %s13
    %p10 = scmp.ge.s32.totalorder %s9, 4
    %s16 = sphi 0, %s28
    %s17 = sphi 0, %s24
    %s18 = sphi 0, %s16
    %s19 = sphi 0, %s17
    %s20 = sphi 0, %s18
    %s21 = sphi 0, %s19
    %s31 = sphi 0, %s33
    %s34 = sphi 0, %s31
    %s35 = sphi 0, %s34
    %s51 = sphi 0, %s35
    %s55 = sphi 0, %s55
    %s57 = sphi 0, %s55
    %s58 = sphi 0, %s57
    %s72 = sphi 0, %s58
    %s76 = sphi 0, %s76
    %s78 = sphi 0, %s76
    %s79 = sphi 0, %s78
    %s93 = sphi 0, %s79
    %s101 = sphi 0, %s103
    %s104 = sphi 0, %s101
    %s105 = sphi 0, %s104
    %s121 = sphi 0, %s105
  $region4: #{_lambda_.21} parent=0 // loop_header_branch
    %12 = sbr.rel (%p10) target = $region8
  $region5: #{_lambda_.21} parent=0 // loop_body
    %s14 = ssub.s32 %s9, 1
    %s15 = ssub.s32 %s9, 2
    %s22 = sadd.s32 1, %s17
    %p23 = scmp.ge.s32.totalorder %s22, 1
    %s24 = scalar_select %p23, 0, %s22
    %s25 = sadd.s32 1, %s16
    %s26 = scalar_select %p23, %s25, %s16
    %p27 = scmp.ge.s32.totalorder %s26, 2
    %s28 = scalar_select %p27, 0, %s26
    %s29 = ssub.s32 %s16, %s28
    %p30 = scmp.eq.s32.totalorder %s29, 0
    %s32 = sadd.s32 %s31, 1
    %s33 = scalar_select %p30, %s31, %s32
    %p36 = pneg %p30
    %p37 = scmp.eq.s32.totalorder %s9, 1
    %p38 = por %p36, %p37
    %p39 = scmp.ne.s32.totalorder %s31, %s34
    %p40 = scmp.eq.s32.totalorder %s9, 0
    %p41 = por %p39, %p40
    %p42 = scmp.ne.s32.totalorder %s31, %s34
    %p43 = scmp.eq.s32.totalorder %s14, 1
    %p44 = por %p42, %p43
    %p45 = scmp.ne.s32.totalorder %s34, %s35
    %p46 = scmp.eq.s32.totalorder %s14, 0
    %p47 = por %p45, %p46
    %p48 = scmp.ne.s32.totalorder %s34, %s35
    %p49 = scmp.eq.s32.totalorder %s15, 1
    %p50 = por %p48, %p49
    %p52 = scmp.ne.s32.totalorder %s35, %s51
    %p53 = scmp.eq.s32.totalorder %s15, 0
    %p54 = por %p52, %p53
    %s56 = sadd.s32 %s55, 1
    %p59 = scmp.eq.s32.totalorder %s9, 1
    %p60 = scmp.ne.s32.totalorder %s55, %s57
    %p61 = scmp.eq.s32.totalorder %s9, 0
    %p62 = por %p60, %p61
    %p63 = scmp.ne.s32.totalorder %s55, %s57
    %p64 = scmp.eq.s32.totalorder %s14, 1
    %p65 = por %p63, %p64
    %p66 = scmp.ne.s32.totalorder %s57, %s58
    %p67 = scmp.eq.s32.totalorder %s14, 0
    %p68 = por %p66, %p67
    %p69 = scmp.ne.s32.totalorder %s57, %s58
    %p70 = scmp.eq.s32.totalorder %s15, 1
    %p71 = por %p69, %p70
    %p73 = scmp.ne.s32.totalorder %s58, %s72
    %p74 = scmp.eq.s32.totalorder %s15, 0
    %p75 = por %p73, %p74
    %s77 = sadd.s32 %s76, 1
    %p80 = scmp.eq.s32.totalorder %s9, 1
    %p81 = scmp.ne.s32.totalorder %s76, %s78
    %p82 = scmp.eq.s32.totalorder %s9, 0
    %p83 = por %p81, %p82
    %p84 = scmp.ne.s32.totalorder %s76, %s78
    %p85 = scmp.eq.s32.totalorder %s14, 1
    %p86 = por %p84, %p85
    %p87 = scmp.ne.s32.totalorder %s78, %s79
    %p88 = scmp.eq.s32.totalorder %s14, 0
    %p89 = por %p87, %p88
    %p90 = scmp.ne.s32.totalorder %s78, %s79
    %p91 = scmp.eq.s32.totalorder %s15, 1
    %p92 = por %p90, %p91
    %p94 = scmp.ne.s32.totalorder %s79, %s93
    %p95 = scmp.eq.s32.totalorder %s15, 0
    %p96 = por %p94, %p95
    %s97 = ssub.s32 %s16, %s28
    %s98 = ssub.s32 %s17, %s24
    %s99 = sor.u32 %s97, %s98
    %p100 = scmp.eq.s32.totalorder %s99, 0
    %s102 = sadd.s32 %s101, 1
    %s103 = scalar_select %p100, %s101, %s102
    %p106 = pneg %p100
    %p107 = scmp.eq.s32.totalorder %s9, 1
    %p108 = por %p106, %p107
    %p109 = scmp.ne.s32.totalorder %s101, %s104
    %p110 = scmp.eq.s32.totalorder %s9, 0
    %p111 = por %p109, %p110
    %p112 = scmp.ne.s32.totalorder %s101, %s104
    %p113 = scmp.eq.s32.totalorder %s14, 1
    %p114 = por %p112, %p113
    %p115 = scmp.ne.s32.totalorder %s104, %s105
    %p116 = scmp.eq.s32.totalorder %s14, 0
    %p117 = por %p115, %p116
    %p118 = scmp.ne.s32.totalorder %s104, %s105
    %p119 = scmp.eq.s32.totalorder %s15, 1
    %p120 = por %p118, %p119
    %p122 = scmp.ne.s32.totalorder %s105, %s121
    %p123 = scmp.eq.s32.totalorder %s15, 0
    %p124 = por %p122, %p123
    %p125 = scmp.le.s32.totalorder 1, %s9
    %p126 = scmp.lt.s32.totalorder %s9, 3
    %p127 = pnand %p125, %p126
    %p128 = pneg %p127
    // Predicated region
    $region9: #{_lambda_.21} parent=5 // pred_check
      _
    $region10: #{_lambda_.21} parent=5 // pred_check_branch
      %130 = sbr.rel (%p127) target = $region12
    $region11: #{_lambda_.21} parent=5 // pred_region
      %s131 = ssub.s32 %s9, 1
      // Predicated region
      $region13: #{_lambda_.21} parent=11 // pred_check
        %p132 = pneg %p68
      $region14: #{_lambda_.21} parent=11 // pred_check_branch
        %134 = sbr.rel (%p132) target = $region16
      $region15: #{_lambda_.21} parent=11 // pred_region
        _
      $region16: #{_lambda_.21} parent=11 // pred_fallthru
        _
      // Predicated region
      $region17: #{_lambda_.21} parent=11 // pred_check
        %p135 = pneg %p89
      $region18: #{_lambda_.21} parent=11 // pred_check_branch
        %137 = sbr.rel (%p135) target = $region20
      $region19: #{_lambda_.21} parent=11 // pred_region
        _
      $region20: #{_lambda_.21} parent=11 // pred_fallthru
        _
    $region12: #{_lambda_.21} parent=5 // pred_fallthru
      _
    %p138 = scmp.lt.s32.totalorder %s9, 2
    // Predicated region
    $region21: #{_lambda_.21} parent=5 // pred_check
      %p139 = pneg %p138
    $region22: #{_lambda_.21} parent=5 // pred_check_branch
      %141 = sbr.rel (%p139) target = $region24
    $region23: #{_lambda_.21} parent=5 // pred_region
      // Predicated region
      $region25: #{_lambda_.21} parent=23 // pred_check
        %p142 = pneg %p41
      $region26: #{_lambda_.21} parent=23 // pred_check_branch
        %144 = sbr.rel (%p142) target = $region28
      $region27: #{_lambda_.21} parent=23 // pred_region
        %p145 = scmp.lt.s32.totalorder %s16, 1
        %s146 = scalar_select %p145, %s16, 1
        %s147 = smul.addr %s146, 6
        %s148 = smul.addr %s147, 4
        %s149 = scalar_lea.vmem %s0, %s148
      $region28: #{_lambda_.21} parent=23 // pred_fallthru
        _
    $region24: #{_lambda_.21} parent=5 // pred_fallthru
      _
    %p150 = scmp.le.s32.totalorder 1, %s9
    %p151 = scmp.lt.s32.totalorder %s9, 3
    %p152 = pnand %p150, %p151
    %p153 = pneg %p152
    // Predicated region
    $region29: #{_lambda_.21} parent=5 // pred_check
      _
    $region30: #{_lambda_.21} parent=5 // pred_check_branch
      %155 = sbr.rel (%p152) target = $region32
    $region31: #{_lambda_.21} parent=5 // pred_region
      %s156 = ssub.s32 %s9, 1
      %p157 = scmp.lt.s32.totalorder %s18, 1
      %s158 = scalar_select %p157, %s18, 1
      %s159 = smul.addr %s158, 6
      %s160 = smul.addr %s159, 4
      %s161 = scalar_lea.vmem %s0, %s160
      %p162 = pneg %p47
      %p163 = pneg %p44
      %p164 = pneg %p68
      %p165 = pneg %p65
      %p166 = pneg %p89
      %p167 = pneg %p86
      %p168 = pneg %p117
      %p169 = pneg %p114
      %s170 = smul.u32 4, %s19
      %p171 = scmp.lt.s32.totalorder %s18, 1
      %s172 = scalar_select %p171, %s18, 1
      %p173 = scmp.lt.s32.totalorder %s170, 3
      %s174 = scalar_select %p173, %s170, 3
      %s175 = smul.addr %s172, 4
      %s176 = sadd.s32 %s174, %s175
      %s177 = smul.addr %s176, 2
      %s178 = scalar_lea.vmem %s3, %s177
      %p179 = scmp.lt.s32.totalorder %s18, 1
      %s180 = scalar_select %p179, %s18, 1
      %s181 = smul.addr %s180, 6
      %s182 = smul.addr %s181, 4
      %s183 = scalar_lea.vmem %s0, %s182
      %s184 = smul.u32 4, %s19
      %p185 = scmp.lt.s32.totalorder %s18, 1
      %s186 = scalar_select %p185, %s18, 1
      %p187 = scmp.lt.s32.totalorder %s184, 3
      %s188 = scalar_select %p187, %s184, 3
      %s189 = smul.addr %s186, 4
      %s190 = sadd.s32 %s188, %s189
      %s191 = smul.addr %s190, 2
      %s192 = scalar_lea.vmem %s3, %s191
      %s193 = smul.u32 4, %s19
      %s194 = smul.u32 %s19, 4
      %v195 = vld [vmem:[%s2] sm:$0x1]
      %v197 = vperm.slane %v195, 0
      %199 = vst [vmem:[#allocation2] sm:$0xf] %v197
      %200 = vst [vmem:[#allocation2 + $0x4] sm:$0xf] %v197
      %201 = vst [vmem:[#allocation2 + $0x8] sm:$0xf] %v197
      %202 = vst [vmem:[#allocation2 + $0xc] sm:$0xf] %v197
      %s203 = smul.addr %s194, 4
      %s204 = scalar_lea.vmem %s183, %s203
      %v205 = vld [vmem:[%s204] sm:$0x3]
      %v206 = vld [vmem:[%s204 + $0x4] sm:$0x3]
      %v207 = vld [vmem:[%s204 + $0x8] sm:$0x3]
      %v208 = vld [vmem:[%s204 + $0xc] sm:$0x3]
      %v209 = vld [vmem:[%s204 + $0x10] sm:$0x3]
      %v210 = vld [vmem:[%s204 + $0x14] sm:$0x3]
      %211 = vst [vmem:[#allocation3] sm:$0x3] %v205
      %212 = vst [vmem:[#allocation3 + $0x2] sm:$0x3] %v206
      %213 = vst [vmem:[#allocation3 + $0x4] sm:$0x3] %v207
      %214 = vst [vmem:[#allocation3 + $0x6] sm:$0x3] %v208
      %215 = vst [vmem:[#allocation3 + $0x8] sm:$0x3] %v209
      %216 = vst [vmem:[#allocation3 + $0xa] sm:$0x3] %v210
      %v217 = vld [vmem:[#allocation2] sm:$0xf]
      %v218 = vld [vmem:[#allocation2 + $0x4] sm:$0xf]
      %v219 = vld [vmem:[#allocation2 + $0x8] sm:$0xf]
      %v220 = vld [vmem:[#allocation2 + $0xc] sm:$0xf]
      %v221 = vld [vmem:[#allocation3] sm:$0x3]
      %v222 = vld [vmem:[#allocation3 + $0x2] sm:$0x3]
      %v223 = vld [vmem:[#allocation3 + $0x4] sm:$0x3]
      %v224 = vld [vmem:[#allocation3 + $0x6] sm:$0x3]
      %v225 = vunpack.c.l.bf16 %v221
      %v226 = vunpack.c.l.bf16 %v222
      %v227 = vunpack.c.l.bf16 %v223
      %v228 = vunpack.c.l.bf16 %v224
      %v229 = vld [vmem:[%s1] sm:$0x1]
      %v230 = vperm.slane %v229, 0
      %v231 = vmul.f32 %v225, %v230
      %v232 = vmul.f32 %v226, %v230
      %v233 = vmul.f32 %v227, %v230
      %v234 = vmul.f32 %v228, %v230
      %v235 = vadd.f32 %v217, %v231
      %v236 = vadd.f32 %v218, %v232
      %v237 = vadd.f32 %v219, %v233
      %v238 = vadd.f32 %v220, %v234
      %239 = vst [vmem:[#allocation2] sm:$0xf] %v235
      %240 = vst [vmem:[#allocation2 + $0x4] sm:$0xf] %v236
      %241 = vst [vmem:[#allocation2 + $0x8] sm:$0xf] %v237
      %242 = vst [vmem:[#allocation2 + $0xc] sm:$0xf] %v238
      %v243 = vld [vmem:[#allocation2] sm:$0xf]
      %v244 = vld [vmem:[#allocation2 + $0x4] sm:$0xf]
      %v245 = vld [vmem:[#allocation2 + $0x8] sm:$0xf]
      %v246 = vld [vmem:[#allocation2 + $0xc] sm:$0xf]
      %s247 = scalar_lea.vmem [#allocation3], 2
      %v248 = vld [vmem:[%s247] sm:$0x3]
      %v249 = vld [vmem:[%s247 + $0x2] sm:$0x3]
      %v250 = vld [vmem:[%s247 + $0x4] sm:$0x3]
      %v251 = vld [vmem:[%s247 + $0x6] sm:$0x3]
      %v252 = vunpack.c.l.bf16 %v248
      %v253 = vunpack.c.l.bf16 %v249
      %v254 = vunpack.c.l.bf16 %v250
      %v255 = vunpack.c.l.bf16 %v251
      %v256 = vld [vmem:[%s1 + $0x3] sm:$0x1]
      %v257 = vperm.slane %v256, 0
      %v258 = vmul.f32 %v252, %v257
      %v259 = vmul.f32 %v253, %v257
      %v260 = vmul.f32 %v254, %v257
      %v261 = vmul.f32 %v255, %v257
      %v262 = vadd.f32 %v243, %v258
      %v263 = vadd.f32 %v244, %v259
      %v264 = vadd.f32 %v245, %v260
      %v265 = vadd.f32 %v246, %v261
      %266 = vst [vmem:[#allocation2] sm:$0xf] %v262
      %267 = vst [vmem:[#allocation2 + $0x4] sm:$0xf] %v263
      %268 = vst [vmem:[#allocation2 + $0x8] sm:$0xf] %v264
      %269 = vst [vmem:[#allocation2 + $0xc] sm:$0xf] %v265
      %v270 = vld [vmem:[#allocation2] sm:$0xf]
      %v271 = vld [vmem:[#allocation2 + $0x4] sm:$0xf]
      %v272 = vld [vmem:[#allocation2 + $0x8] sm:$0xf]
      %v273 = vld [vmem:[#allocation2 + $0xc] sm:$0xf]
      %s274 = scalar_lea.vmem [#allocation3], 4
      %v275 = vld [vmem:[%s274] sm:$0x3]
      %v276 = vld [vmem:[%s274 + $0x2] sm:$0x3]
      %v277 = vld [vmem:[%s274 + $0x4] sm:$0x3]
      %v278 = vld [vmem:[%s274 + $0x6] sm:$0x3]
      %v279 = vunpack.c.l.bf16 %v275
      %v280 = vunpack.c.l.bf16 %v276
      %v281 = vunpack.c.l.bf16 %v277
      %v282 = vunpack.c.l.bf16 %v278
      %v283 = vld [vmem:[%s1 + $0x6] sm:$0x1]
      %v284 = vperm.slane %v283, 0
      %v285 = vmul.f32 %v279, %v284
      %v286 = vmul.f32 %v280, %v284
      %v287 = vmul.f32 %v281, %v284
      %v288 = vmul.f32 %v282, %v284
      %v289 = vadd.f32 %v270, %v285
      %v290 = vadd.f32 %v271, %v286
      %v291 = vadd.f32 %v272, %v287
      %v292 = vadd.f32 %v273, %v288
      %293 = vst [vmem:[#allocation2] sm:$0xf] %v289
      %294 = vst [vmem:[#allocation2 + $0x4] sm:$0xf] %v290
      %295 = vst [vmem:[#allocation2 + $0x8] sm:$0xf] %v291
      %296 = vst [vmem:[#allocation2 + $0xc] sm:$0xf] %v292
      %v297 = vld [vmem:[%s204] sm:$0x7]
      %v298 = vld [vmem:[%s204 + $0x4] sm:$0x7]
      %v299 = vld [vmem:[%s204 + $0x8] sm:$0x7]
      %v300 = vld [vmem:[%s204 + $0xc] sm:$0x7]
      %v301 = vld [vmem:[%s204 + $0x10] sm:$0x7]
      %v302 = vld [vmem:[%s204 + $0x14] sm:$0x7]
      %v309 = vrot.slane %v297, 2
      %v310 = vrot.slane %v298, 2
      %v311 = vrot.slane %v299, 2
      %v312 = vrot.slane %v300, 2
      %v313 = vrot.slane %v301, 2
      %v314 = vrot.slane %v302, 2
      %vm315 = vcmask 1041408
      %v318 = vsel %vm315, %v297, %v309
      %vm319 = vcmask 1043458
      %v320 = vsel %vm319, %v297, %v309
      %v322 = vrot.slane %v320, 2
      %v325 = vsel %vm315, %v298, %v310
      %v326 = vsel %vm319, %v298, %v310
      %v328 = vrot.slane %v326, 2
      %v331 = vsel %vm315, %v299, %v311
      %v332 = vsel %vm319, %v299, %v311
      %v334 = vrot.slane %v332, 2
      %v337 = vsel %vm315, %v300, %v312
      %v338 = vsel %vm319, %v300, %v312
      %v340 = vrot.slane %v338, 2
      %v343 = vsel %vm315, %v301, %v313
      %v344 = vsel %vm319, %v301, %v313
      %v346 = vrot.slane %v344, 2
      %v349 = vsel %vm315, %v302, %v314
      %v350 = vsel %vm319, %v302, %v314
      %v352 = vrot.slane %v350, 2
      %vm353 = vsmask.f32 1280
      %vm354 = vsmask.f32 3336
      %vm355 = vmor %vm353, %vm354
      %vm356 = vsmask.f32 5392
      %vm357 = vmor %vm355, %vm356
      %vm358 = vsmask.f32 7448
      %vm359 = vmor %vm357, %vm358
      %v360 = vshrl.u32 %v318, 16
      %v362 = vrot.slane %v360, 6
      %v363 = vshll.u32 %v318, 16
      %v365 = vrot.slane %v363, 7
      %v366 = vor.u32 %v362, %v365
      %v367 = vrot.slane %v366, 2
      %v369 = vshll.u32 %v322, 16
      %v371 = vrot.slane %v369, 7
      %v372 = vsel %vm359, %v367, %v371
      %v373 = vshrl.u32 %v325, 16
      %v375 = vrot.slane %v373, 6
      %v376 = vshll.u32 %v325, 16
      %v378 = vrot.slane %v376, 7
      %v379 = vor.u32 %v375, %v378
      %v380 = vrot.slane %v379, 2
      %v382 = vshll.u32 %v328, 16
      %v384 = vrot.slane %v382, 7
      %v385 = vsel %vm359, %v380, %v384
      %v386 = vshrl.u32 %v331, 16
      %v388 = vrot.slane %v386, 6
      %v389 = vshll.u32 %v331, 16
      %v391 = vrot.slane %v389, 7
      %v392 = vor.u32 %v388, %v391
      %v393 = vrot.slane %v392, 2
      %v395 = vshll.u32 %v334, 16
      %v397 = vrot.slane %v395, 7
      %v398 = vsel %vm359, %v393, %v397
      %v399 = vshrl.u32 %v337, 16
      %v401 = vrot.slane %v399, 6
      %v402 = vshll.u32 %v337, 16
      %v404 = vrot.slane %v402, 7
      %v405 = vor.u32 %v401, %v404
      %v406 = vrot.slane %v405, 2
      %v408 = vshll.u32 %v340, 16
      %v410 = vrot.slane %v408, 7
      %v411 = vsel %vm359, %v406, %v410
      %v412 = vshrl.u32 %v343, 16
      %v414 = vrot.slane %v412, 6
      %v415 = vshll.u32 %v343, 16
      %v417 = vrot.slane %v415, 7
      %v418 = vor.u32 %v414, %v417
      %v419 = vrot.slane %v418, 2
      %v421 = vshll.u32 %v346, 16
      %v423 = vrot.slane %v421, 7
      %v424 = vsel %vm359, %v419, %v423
      %v425 = vshrl.u32 %v349, 16
      %v427 = vrot.slane %v425, 6
      %v428 = vshll.u32 %v349, 16
      %v430 = vrot.slane %v428, 7
      %v431 = vor.u32 %v427, %v430
      %v432 = vrot.slane %v431, 2
      %v434 = vshll.u32 %v352, 16
      %v436 = vrot.slane %v434, 7
      %v437 = vsel %vm359, %v432, %v436
      %444 = vst [vmem:[#allocation3] sm:$0x3] %v372
      %445 = vst [vmem:[#allocation3 + $0x2] sm:$0x3] %v385
      %446 = vst [vmem:[#allocation3 + $0x4] sm:$0x3] %v398
      %447 = vst [vmem:[#allocation3 + $0x6] sm:$0x3] %v411
      %448 = vst [vmem:[#allocation3 + $0x8] sm:$0x3] %v424
      %449 = vst [vmem:[#allocation3 + $0xa] sm:$0x3] %v437
      %v450 = vld [vmem:[#allocation2] sm:$0xf]
      %v451 = vld [vmem:[#allocation2 + $0x4] sm:$0xf]
      %v452 = vld [vmem:[#allocation2 + $0x8] sm:$0xf]
      %v453 = vld [vmem:[#allocation2 + $0xc] sm:$0xf]
      %v454 = vld [vmem:[#allocation3] sm:$0x3]
      %v455 = vld [vmem:[#allocation3 + $0x2] sm:$0x3]
      %v456 = vld [vmem:[#allocation3 + $0x4] sm:$0x3]
      %v457 = vld [vmem:[#allocation3 + $0x6] sm:$0x3]
      %v458 = vunpack.c.l.bf16 %v454
      %v459 = vunpack.c.l.bf16 %v455
      %v460 = vunpack.c.l.bf16 %v456
      %v461 = vunpack.c.l.bf16 %v457
      %v462 = vld [vmem:[%s1 + $0x1] sm:$0x1]
      %v463 = vperm.slane %v462, 0
      %v464 = vmul.f32 %v458, %v463
      %v465 = vmul.f32 %v459, %v463
      %v466 = vmul.f32 %v460, %v463
      %v467 = vmul.f32 %v461, %v463
      %v468 = vadd.f32 %v450, %v464
      %v469 = vadd.f32 %v451, %v465
      %v470 = vadd.f32 %v452, %v466
      %v471 = vadd.f32 %v453, %v467
      %472 = vst [vmem:[#allocation2] sm:$0xf] %v468
      %473 = vst [vmem:[#allocation2 + $0x4] sm:$0xf] %v469
      %474 = vst [vmem:[#allocation2 + $0x8] sm:$0xf] %v470
      %475 = vst [vmem:[#allocation2 + $0xc] sm:$0xf] %v471
      %v476 = vld [vmem:[#allocation2] sm:$0xf]
      %v477 = vld [vmem:[#allocation2 + $0x4] sm:$0xf]
      %v478 = vld [vmem:[#allocation2 + $0x8] sm:$0xf]
      %v479 = vld [vmem:[#allocation2 + $0xc] sm:$0xf]
      %v480 = vld [vmem:[%s247] sm:$0x3]
      %v481 = vld [vmem:[%s247 + $0x2] sm:$0x3]
      %v482 = vld [vmem:[%s247 + $0x4] sm:$0x3]
      %v483 = vld [vmem:[%s247 + $0x6] sm:$0x3]
      %v484 = vunpack.c.l.bf16 %v480
      %v485 = vunpack.c.l.bf16 %v481
      %v486 = vunpack.c.l.bf16 %v482
      %v487 = vunpack.c.l.bf16 %v483
      %v488 = vld [vmem:[%s1 + $0x4] sm:$0x1]
      %v489 = vperm.slane %v488, 0
      %v490 = vmul.f32 %v484, %v489
      %v491 = vmul.f32 %v485, %v489
      %v492 = vmul.f32 %v486, %v489
      %v493 = vmul.f32 %v487, %v489
      %v494 = vadd.f32 %v476, %v490
      %v495 = vadd.f32 %v477, %v491
      %v496 = vadd.f32 %v478, %v492
      %v497 = vadd.f32 %v479, %v493
      %498 = vst [vmem:[#allocation2] sm:$0xf] %v494
      %499 = vst [vmem:[#allocation2 + $0x4] sm:$0xf] %v495
      %500 = vst [vmem:[#allocation2 + $0x8] sm:$0xf] %v496
      %501 = vst [vmem:[#allocation2 + $0xc] sm:$0xf] %v497
      %v502 = vld [vmem:[#allocation2] sm:$0xf]
      %v503 = vld [vmem:[#allocation2 + $0x4] sm:$0xf]
      %v504 = vld [vmem:[#allocation2 + $0x8] sm:$0xf]
      %v505 = vld [vmem:[#allocation2 + $0xc] sm:$0xf]
      %v506 = vld [vmem:[%s274] sm:$0x3]
      %v507 = vld [vmem:[%s274 + $0x2] sm:$0x3]
      %v508 = vld [vmem:[%s274 + $0x4] sm:$0x3]
      %v509 = vld [vmem:[%s274 + $0x6] sm:$0x3]
      %v510 = vunpack.c.l.bf16 %v506
      %v511 = vunpack.c.l.bf16 %v507
      %v512 = vunpack.c.l.bf16 %v508
      %v513 = vunpack.c.l.bf16 %v509
      %v514 = vld [vmem:[%s1 + $0x7] sm:$0x1]
      %v515 = vperm.slane %v514, 0
      %v516 = vmul.f32 %v510, %v515
      %v517 = vmul.f32 %v511, %v515
      %v518 = vmul.f32 %v512, %v515
      %v519 = vmul.f32 %v513, %v515
      %v520 = vadd.f32 %v502, %v516
      %v521 = vadd.f32 %v503, %v517
      %v522 = vadd.f32 %v504, %v518
      %v523 = vadd.f32 %v505, %v519
      %524 = vst [vmem:[#allocation2] sm:$0xf] %v520
      %525 = vst [vmem:[#allocation2 + $0x4] sm:$0xf] %v521
      %526 = vst [vmem:[#allocation2 + $0x8] sm:$0xf] %v522
      %527 = vst [vmem:[#allocation2 + $0xc] sm:$0xf] %v523
      %v528 = vld [vmem:[%s204] sm:$0x6]
      %v529 = vld [vmem:[%s204 + $0x4] sm:$0x6]
      %v530 = vld [vmem:[%s204 + $0x8] sm:$0x6]
      %v531 = vld [vmem:[%s204 + $0xc] sm:$0x6]
      %v532 = vld [vmem:[%s204 + $0x10] sm:$0x6]
      %v533 = vld [vmem:[%s204 + $0x14] sm:$0x6]
      %v540 = vrot.slane %v528, 2
      %v541 = vrot.slane %v529, 2
      %v542 = vrot.slane %v530, 2
      %v543 = vrot.slane %v531, 2
      %v544 = vrot.slane %v532, 2
      %v545 = vrot.slane %v533, 2
      %v548 = vsel %vm315, %v528, %v540
      %v550 = vsel %vm319, %v528, %v540
      %v552 = vrot.slane %v550, 2
      %v555 = vsel %vm315, %v529, %v541
      %v557 = vsel %vm319, %v529, %v541
      %v559 = vrot.slane %v557, 2
      %v562 = vsel %vm315, %v530, %v542
      %v564 = vsel %vm319, %v530, %v542
      %v566 = vrot.slane %v564, 2
      %v569 = vsel %vm315, %v531, %v543
      %v571 = vsel %vm319, %v531, %v543
      %v573 = vrot.slane %v571, 2
      %v576 = vsel %vm315, %v532, %v544
      %v578 = vsel %vm319, %v532, %v544
      %v580 = vrot.slane %v578, 2
      %v583 = vsel %vm315, %v533, %v545
      %v585 = vsel %vm319, %v533, %v545
      %v587 = vrot.slane %v585, 2
      %vm588 = vcmask 1040384
      %vm589 = vcmask 1042434
      %vm590 = vmor %vm588, %vm589
      %vm591 = vcmask 1044484
      %vm592 = vmor %vm590, %vm591
      %vm593 = vcmask 1046534
      %vm594 = vmor %vm592, %vm593
      %v595 = vrot.slane %v548, 7
      %v596 = vrot.slane %v595, 2
      %v597 = vrot.slane %v552, 7
      %v598 = vsel %vm594, %v596, %v597
      %v599 = vrot.slane %v555, 7
      %v600 = vrot.slane %v599, 2
      %v601 = vrot.slane %v559, 7
      %v602 = vsel %vm594, %v600, %v601
      %v603 = vrot.slane %v562, 7
      %v604 = vrot.slane %v603, 2
      %v605 = vrot.slane %v566, 7
      %v606 = vsel %vm594, %v604, %v605
      %v607 = vrot.slane %v569, 7
      %v608 = vrot.slane %v607, 2
      %v609 = vrot.slane %v573, 7
      %v610 = vsel %vm594, %v608, %v609
      %v611 = vrot.slane %v576, 7
      %v612 = vrot.slane %v611, 2
      %v613 = vrot.slane %v580, 7
      %v614 = vsel %vm594, %v612, %v613
      %v615 = vrot.slane %v583, 7
      %v616 = vrot.slane %v615, 2
      %v617 = vrot.slane %v587, 7
      %v618 = vsel %vm594, %v616, %v617
      %625 = vst [vmem:[#allocation3] sm:$0x3] %v598
      %626 = vst [vmem:[#allocation3 + $0x2] sm:$0x3] %v602
      %627 = vst [vmem:[#allocation3 + $0x4] sm:$0x3] %v606
      %628 = vst [vmem:[#allocation3 + $0x6] sm:$0x3] %v610
      %629 = vst [vmem:[#allocation3 + $0x8] sm:$0x3] %v614
      %630 = vst [vmem:[#allocation3 + $0xa] sm:$0x3] %v618
      %v631 = vld [vmem:[#allocation2] sm:$0xf]
      %v632 = vld [vmem:[#allocation2 + $0x4] sm:$0xf]
      %v633 = vld [vmem:[#allocation2 + $0x8] sm:$0xf]
      %v634 = vld [vmem:[#allocation2 + $0xc] sm:$0xf]
      %v635 = vld [vmem:[#allocation3] sm:$0x3]
      %v636 = vld [vmem:[#allocation3 + $0x2] sm:$0x3]
      %v637 = vld [vmem:[#allocation3 + $0x4] sm:$0x3]
      %v638 = vld [vmem:[#allocation3 + $0x6] sm:$0x3]
      %v639 = vunpack.c.l.bf16 %v635
      %v640 = vunpack.c.l.bf16 %v636
      %v641 = vunpack.c.l.bf16 %v637
      %v642 = vunpack.c.l.bf16 %v638
      %v643 = vld [vmem:[%s1 + $0x2] sm:$0x1]
      %v644 = vperm.slane %v643, 0
      %v645 = vmul.f32 %v639, %v644
      %v646 = vmul.f32 %v640, %v644
      %v647 = vmul.f32 %v641, %v644
      %v648 = vmul.f32 %v642, %v644
      %v649 = vadd.f32 %v631, %v645
      %v650 = vadd.f32 %v632, %v646
      %v651 = vadd.f32 %v633, %v647
      %v652 = vadd.f32 %v634, %v648
      %653 = vst [vmem:[#allocation2] sm:$0xf] %v649
      %654 = vst [vmem:[#allocation2 + $0x4] sm:$0xf] %v650
      %655 = vst [vmem:[#allocation2 + $0x8] sm:$0xf] %v651
      %656 = vst [vmem:[#allocation2 + $0xc] sm:$0xf] %v652
      %v657 = vld [vmem:[#allocation2] sm:$0xf]
      %v658 = vld [vmem:[#allocation2 + $0x4] sm:$0xf]
      %v659 = vld [vmem:[#allocation2 + $0x8] sm:$0xf]
      %v660 = vld [vmem:[#allocation2 + $0xc] sm:$0xf]
      %v661 = vld [vmem:[%s247] sm:$0x3]
      %v662 = vld [vmem:[%s247 + $0x2] sm:$0x3]
      %v663 = vld [vmem:[%s247 + $0x4] sm:$0x3]
      %v664 = vld [vmem:[%s247 + $0x6] sm:$0x3]
      %v665 = vunpack.c.l.bf16 %v661
      %v666 = vunpack.c.l.bf16 %v662
      %v667 = vunpack.c.l.bf16 %v663
      %v668 = vunpack.c.l.bf16 %v664
      %v669 = vld [vmem:[%s1 + $0x5] sm:$0x1]
      %v670 = vperm.slane %v669, 0
      %v671 = vmul.f32 %v665, %v670
      %v672 = vmul.f32 %v666, %v670
      %v673 = vmul.f32 %v667, %v670
      %v674 = vmul.f32 %v668, %v670
      %v675 = vadd.f32 %v657, %v671
      %v676 = vadd.f32 %v658, %v672
      %v677 = vadd.f32 %v659, %v673
      %v678 = vadd.f32 %v660, %v674
      %679 = vst [vmem:[#allocation2] sm:$0xf] %v675
      %680 = vst [vmem:[#allocation2 + $0x4] sm:$0xf] %v676
      %681 = vst [vmem:[#allocation2 + $0x8] sm:$0xf] %v677
      %682 = vst [vmem:[#allocation2 + $0xc] sm:$0xf] %v678
      %v683 = vld [vmem:[#allocation2] sm:$0xf]
      %v684 = vld [vmem:[#allocation2 + $0x4] sm:$0xf]
      %v685 = vld [vmem:[#allocation2 + $0x8] sm:$0xf]
      %v686 = vld [vmem:[#allocation2 + $0xc] sm:$0xf]
      %v687 = vld [vmem:[%s274] sm:$0x3]
      %v688 = vld [vmem:[%s274 + $0x2] sm:$0x3]
      %v689 = vld [vmem:[%s274 + $0x4] sm:$0x3]
      %v690 = vld [vmem:[%s274 + $0x6] sm:$0x3]
      %v691 = vunpack.c.l.bf16 %v687
      %v692 = vunpack.c.l.bf16 %v688
      %v693 = vunpack.c.l.bf16 %v689
      %v694 = vunpack.c.l.bf16 %v690
      %v695 = vld [vmem:[%s1 + $0x8] sm:$0x1]
      %v696 = vperm.slane %v695, 0
      %v697 = vmul.f32 %v691, %v696
      %v698 = vmul.f32 %v692, %v696
      %v699 = vmul.f32 %v693, %v696
      %v700 = vmul.f32 %v694, %v696
      %v701 = vadd.f32 %v683, %v697
      %v702 = vadd.f32 %v684, %v698
      %v703 = vadd.f32 %v685, %v699
      %v704 = vadd.f32 %v686, %v700
      %705 = vst [vmem:[#allocation2] sm:$0xf] %v701
      %706 = vst [vmem:[#allocation2 + $0x4] sm:$0xf] %v702
      %707 = vst [vmem:[#allocation2 + $0x8] sm:$0xf] %v703
      %708 = vst [vmem:[#allocation2 + $0xc] sm:$0xf] %v704
      %v709 = vld [vmem:[#allocation2] sm:$0xf]
      %v710 = vld [vmem:[#allocation2 + $0x4] sm:$0xf]
      %v711 = vld [vmem:[#allocation2 + $0x8] sm:$0xf]
      %v712 = vld [vmem:[#allocation2 + $0xc] sm:$0xf]
      %v713 = vmul.f32 %v709, %v709
      %v714 = vmul.f32 %v710, %v710
      %v715 = vmul.f32 %v711, %v711
      %v716 = vmul.f32 %v712, %v712
      %v717 = vmul.f32 %v709, %v713
      %v718 = vmul.f32 %v710, %v714
      %v719 = vmul.f32 %v711, %v715
      %v720 = vmul.f32 %v712, %v716
      %v721 = vmul.f32 %v717, 0.044715
      %v722 = vmul.f32 %v718, 0.044715
      %v723 = vmul.f32 %v719, 0.044715
      %v724 = vmul.f32 %v720, 0.044715
      %v725 = vadd.f32 %v709, %v721
      %v726 = vadd.f32 %v710, %v722
      %v727 = vadd.f32 %v711, %v723
      %v728 = vadd.f32 %v712, %v724
      %v729 = vmul.f32 %v725, 0.7978846
      %v730 = vmul.f32 %v726, 0.7978846
      %v731 = vmul.f32 %v727, 0.7978846
      %v732 = vmul.f32 %v728, 0.7978846
      %v733 = vtanh.pop %v729
      %v734 = vtanh.pop %v730
      %v735 = vtanh.pop %v731
      %v736 = vtanh.pop %v732
      %v737 = vadd.f32 %v733, 1.0
      %v738 = vadd.f32 %v734, 1.0
      %v739 = vadd.f32 %v735, 1.0
      %v740 = vadd.f32 %v736, 1.0
      %v741 = vmul.f32 %v737, 0.5
      %v742 = vmul.f32 %v738, 0.5
      %v743 = vmul.f32 %v739, 0.5
      %v744 = vmul.f32 %v740, 0.5
      %v745 = vmul.f32 %v709, %v741
      %v746 = vmul.f32 %v710, %v742
      %v747 = vmul.f32 %v711, %v743
      %v748 = vmul.f32 %v712, %v744
      %s749 = sadd.s32 %s194, 1
      %s750 = smul.addr %s749, 4
      %s751 = scalar_lea.vmem %s183, %s750
      %v752 = vld [vmem:[%s751] sm:$0x7]
      %v753 = vld [vmem:[%s751 + $0x4] sm:$0x7]
      %v754 = vld [vmem:[%s751 + $0x8] sm:$0x7]
      %v755 = vld [vmem:[%s751 + $0xc] sm:$0x7]
      %v756 = vunpack.c.l.bf16 %v752
      %v757 = vunpack.c.l.bf16 %v753
      %v758 = vunpack.c.l.bf16 %v754
      %v759 = vunpack.c.l.bf16 %v755
      %v764 = vrot.slane %v756, 1
      %v765 = vrot.slane %v757, 1
      %v766 = vrot.slane %v758, 1
      %v767 = vrot.slane %v759, 1
      %v772 = vadd.f32 %v745, %v764
      %v773 = vadd.f32 %v746, %v765
      %v774 = vadd.f32 %v747, %v766
      %v775 = vadd.f32 %v748, %v767
      %v776 = vpack.c.bf16 %v772, %v772
      %v777 = vpack.c.bf16 %v773, %v773
      %v778 = vpack.c.bf16 %v774, %v774
      %v779 = vpack.c.bf16 %v775, %v775
      %780 = vst [vmem:[%s192] sm:$0x3] %v776
      %781 = vst [vmem:[%s192 + $0x2] sm:$0x3] %v777
      %782 = vst [vmem:[%s192 + $0x4] sm:$0x3] %v778
      %783 = vst [vmem:[%s192 + $0x6] sm:$0x3] %v779
      %s784 = smul.u32 4, %s19
      %p785 = scmp.lt.s32.totalorder %s18, 1
      %s786 = scalar_select %p785, %s18, 1
      %p787 = scmp.lt.s32.totalorder %s784, 3
      %s788 = scalar_select %p787, %s784, 3
      %s789 = smul.addr %s786, 4
      %s790 = sadd.s32 %s788, %s789
      %s791 = smul.addr %s790, 2
      %s792 = scalar_lea.vmem %s3, %s791
      // Predicated region
      $region33: #{_lambda_.21} parent=31 // pred_check
        %p793 = pneg %p114
      $region34: #{_lambda_.21} parent=31 // pred_check_branch
        %795 = sbr.rel (%p793) target = $region36
      $region35: #{_lambda_.21} parent=31 // pred_region
        %s796 = smul.u32 4, %s19
      $region36: #{_lambda_.21} parent=31 // pred_fallthru
        _
    $region32: #{_lambda_.21} parent=5 // pred_fallthru
      _
    %p797 = scmp.le.s32.totalorder 2, %s9
    // Predicated region
    $region37: #{_lambda_.21} parent=5 // pred_check
      %p798 = pneg %p797
    $region38: #{_lambda_.21} parent=5 // pred_check_branch
      %800 = sbr.rel (%p798) target = $region40
    $region39: #{_lambda_.21} parent=5 // pred_region
      %s801 = ssub.s32 %s9, 2
      // Predicated region
      $region41: #{_lambda_.21} parent=39 // pred_check
        %p802 = pneg %p120
      $region42: #{_lambda_.21} parent=39 // pred_check_branch
        %804 = sbr.rel (%p802) target = $region44
      $region43: #{_lambda_.21} parent=39 // pred_region
        %s805 = smul.u32 4, %s21
        %p806 = scmp.lt.s32.totalorder %s20, 1
        %s807 = scalar_select %p806, %s20, 1
        %p808 = scmp.lt.s32.totalorder %s805, 3
        %s809 = scalar_select %p808, %s805, 3
        %s810 = smul.addr %s807, 4
        %s811 = sadd.s32 %s809, %s810
        %s812 = smul.addr %s811, 2
        %s813 = scalar_lea.vmem %s3, %s812
      $region44: #{_lambda_.21} parent=39 // pred_fallthru
        _
    $region40: #{_lambda_.21} parent=5 // pred_fallthru
      _
  $region6: #{_lambda_.21} parent=0 // loop_footer
    %s13 = sadd.s32 1, %s9
  $region7: #{_lambda_.21} parent=0 // loop_footer_branch
    %8 = sbr.rel target = $region3
  $region8: #{_lambda_.21} parent=0 // loop_exit
    _

// kernel: _lambda_.27
$region0: #{_lambda_.27}
  #allocation0 [shape = 'u32[]', space=smem, size = 0x4, offset = 0x4, fixed_abs, tag = 'smem constant byte address 0x4 - core index']
  #allocation1 [shape = 'u32[72,128]{1,0:T(1,128)}', space=vmem, size = 0x9000, scoped, tag = 'internal scratch']
  %s0 = inlined_call_operand.vmem [shape: f32[2,2,16,16], index: 0, kind: input, shape index: {}]
  %s1 = inlined_call_operand.vmem [shape: f32[2,2,16,16], index: 1, kind: input, shape index: {}]
  %s2 = inlined_call_operand.vmem [shape: f32[1,16], index: 2, kind: input, shape index: {}]
  %s3 = inlined_call_operand.vmem [shape: f32[16,16], index: 3, kind: input, shape index: {}, may-alias: {3,5}]
  %s4 = inlined_call_operand.vmem [shape: f32[16,16], index: 4, kind: input, shape index: {}, may-alias: {4,6}]
  %s5 = inlined_call_operand.vmem [shape: f32[16,16], index: 5, kind: input, shape index: {}, may-alias: {3,5}]
  %s6 = inlined_call_operand.vmem [shape: f32[16,16], index: 6, kind: input, shape index: {}, may-alias: {4,6}]
  %s7 = inlined_call_operand.vmem [shape: f32[2,2,16,16], index: 7, kind: output, shape index: {}]
  %s8 = sld [smem:[#allocation0]]
  $region61: #{_lambda_.27} parent=0
    _
  %s10 = ssub.s32 1, %s8
  %s11 = scalar_select 0, %s10, %s8
  loop: start=0, step=1, limit=4
  $region2: #{_lambda_.27} parent=0 // loop_pre_header
    _
  $region3: #{_lambda_.27} parent=0 // loop_header
    %s13 = sphi 0, %s17
    %p14 = scmp.ge.s32.totalorder %s13, 4
    %s23 = sphi 0, %s25
    %s26 = sphi 0, %s23
    %s27 = sphi 0, %s26
    %s43 = sphi 0, %s27
    %s49 = sphi 0, %s51
    %s52 = sphi 0, %s49
    %s53 = sphi 0, %s52
    %s69 = sphi 0, %s53
    %s73 = sphi 0, %s73
    %s75 = sphi 0, %s73
    %s76 = sphi 0, %s75
    %s90 = sphi 0, %s76
    %s94 = sphi 0, %s94
    %s96 = sphi 0, %s94
    %s97 = sphi 0, %s96
    %s111 = sphi 0, %s97
    %s115 = sphi 0, %s115
    %s117 = sphi 0, %s115
    %s118 = sphi 0, %s117
    %s132 = sphi 0, %s118
    %s136 = sphi 0, %s136
    %s138 = sphi 0, %s136
    %s139 = sphi 0, %s138
    %s153 = sphi 0, %s139
    %s157 = sphi 0, %s157
    %s159 = sphi 0, %s157
    %s160 = sphi 0, %s159
    %s174 = sphi 0, %s160
    %s180 = sphi 0, %s182
    %s183 = sphi 0, %s180
    %s184 = sphi 0, %s183
    %s200 = sphi 0, %s184
  $region4: #{_lambda_.27} parent=0 // loop_header_branch
    %16 = sbr.rel (%p14) target = $region8
  $region5: #{_lambda_.27} parent=0 // loop_body
    %s18 = ssub.s32 %s13, 1
    %s19 = ssub.s32 %s13, 2
    %s20 = sadd.s32 %s13, 1
    %s21 = ssub.s32 %s13, %s20
    %p22 = scmp.eq.s32.totalorder %s21, 0
    %s24 = sadd.s32 %s23, 1
    %s25 = scalar_select %p22, %s23, %s24
    %p28 = pneg %p22
    %p29 = scmp.eq.s32.totalorder %s13, 1
    %p30 = por %p28, %p29
    %p31 = scmp.ne.s32.totalorder %s23, %s26
    %p32 = scmp.eq.s32.totalorder %s13, 0
    %p33 = por %p31, %p32
    %p34 = scmp.ne.s32.totalorder %s23, %s26
    %p35 = scmp.eq.s32.totalorder %s18, 1
    %p36 = por %p34, %p35
    %p37 = scmp.ne.s32.totalorder %s26, %s27
    %p38 = scmp.eq.s32.totalorder %s18, 0
    %p39 = por %p37, %p38
    %p40 = scmp.ne.s32.totalorder %s26, %s27
    %p41 = scmp.eq.s32.totalorder %s19, 1
    %p42 = por %p40, %p41
    %p44 = scmp.ne.s32.totalorder %s27, %s43
    %p45 = scmp.eq.s32.totalorder %s19, 0
    %p46 = por %p44, %p45
    %s47 = ssub.s32 %s13, %s20
    %p48 = scmp.eq.s32.totalorder %s47, 0
    %s50 = sadd.s32 %s49, 1
    %s51 = scalar_select %p48, %s49, %s50
    %p54 = pneg %p48
    %p55 = scmp.eq.s32.totalorder %s13, 1
    %p56 = por %p54, %p55
    %p57 = scmp.ne.s32.totalorder %s49, %s52
    %p58 = scmp.eq.s32.totalorder %s13, 0
    %p59 = por %p57, %p58
    %p60 = scmp.ne.s32.totalorder %s49, %s52
    %p61 = scmp.eq.s32.totalorder %s18, 1
    %p62 = por %p60, %p61
    %p63 = scmp.ne.s32.totalorder %s52, %s53
    %p64 = scmp.eq.s32.totalorder %s18, 0
    %p65 = por %p63, %p64
    %p66 = scmp.ne.s32.totalorder %s52, %s53
    %p67 = scmp.eq.s32.totalorder %s19, 1
    %p68 = por %p66, %p67
    %p70 = scmp.ne.s32.totalorder %s53, %s69
    %p71 = scmp.eq.s32.totalorder %s19, 0
    %p72 = por %p70, %p71
    %s74 = sadd.s32 %s73, 1
    %p77 = scmp.eq.s32.totalorder %s13, 1
    %p78 = scmp.ne.s32.totalorder %s73, %s75
    %p79 = scmp.eq.s32.totalorder %s13, 0
    %p80 = por %p78, %p79
    %p81 = scmp.ne.s32.totalorder %s73, %s75
    %p82 = scmp.eq.s32.totalorder %s18, 1
    %p83 = por %p81, %p82
    %p84 = scmp.ne.s32.totalorder %s75, %s76
    %p85 = scmp.eq.s32.totalorder %s18, 0
    %p86 = por %p84, %p85
    %p87 = scmp.ne.s32.totalorder %s75, %s76
    %p88 = scmp.eq.s32.totalorder %s19, 1
    %p89 = por %p87, %p88
    %p91 = scmp.ne.s32.totalorder %s76, %s90
    %p92 = scmp.eq.s32.totalorder %s19, 0
    %p93 = por %p91, %p92
    %s95 = sadd.s32 %s94, 1
    %p98 = scmp.eq.s32.totalorder %s13, 1
    %p99 = scmp.ne.s32.totalorder %s94, %s96
    %p100 = scmp.eq.s32.totalorder %s13, 0
    %p101 = por %p99, %p100
    %p102 = scmp.ne.s32.totalorder %s94, %s96
    %p103 = scmp.eq.s32.totalorder %s18, 1
    %p104 = por %p102, %p103
    %p105 = scmp.ne.s32.totalorder %s96, %s97
    %p106 = scmp.eq.s32.totalorder %s18, 0
    %p107 = por %p105, %p106
    %p108 = scmp.ne.s32.totalorder %s96, %s97
    %p109 = scmp.eq.s32.totalorder %s19, 1
    %p110 = por %p108, %p109
    %p112 = scmp.ne.s32.totalorder %s97, %s111
    %p113 = scmp.eq.s32.totalorder %s19, 0
    %p114 = por %p112, %p113
    %s116 = sadd.s32 %s115, 1
    %p119 = scmp.eq.s32.totalorder %s13, 1
    %p120 = scmp.ne.s32.totalorder %s115, %s117
    %p121 = scmp.eq.s32.totalorder %s13, 0
    %p122 = por %p120, %p121
    %p123 = scmp.ne.s32.totalorder %s115, %s117
    %p124 = scmp.eq.s32.totalorder %s18, 1
    %p125 = por %p123, %p124
    %p126 = scmp.ne.s32.totalorder %s117, %s118
    %p127 = scmp.eq.s32.totalorder %s18, 0
    %p128 = por %p126, %p127
    %p129 = scmp.ne.s32.totalorder %s117, %s118
    %p130 = scmp.eq.s32.totalorder %s19, 1
    %p131 = por %p129, %p130
    %p133 = scmp.ne.s32.totalorder %s118, %s132
    %p134 = scmp.eq.s32.totalorder %s19, 0
    %p135 = por %p133, %p134
    %s137 = sadd.s32 %s136, 1
    %p140 = scmp.eq.s32.totalorder %s13, 1
    %p141 = scmp.ne.s32.totalorder %s136, %s138
    %p142 = scmp.eq.s32.totalorder %s13, 0
    %p143 = por %p141, %p142
    %p144 = scmp.ne.s32.totalorder %s136, %s138
    %p145 = scmp.eq.s32.totalorder %s18, 1
    %p146 = por %p144, %p145
    %p147 = scmp.ne.s32.totalorder %s138, %s139
    %p148 = scmp.eq.s32.totalorder %s18, 0
    %p149 = por %p147, %p148
    %p150 = scmp.ne.s32.totalorder %s138, %s139
    %p151 = scmp.eq.s32.totalorder %s19, 1
    %p152 = por %p150, %p151
    %p154 = scmp.ne.s32.totalorder %s139, %s153
    %p155 = scmp.eq.s32.totalorder %s19, 0
    %p156 = por %p154, %p155
    %s158 = sadd.s32 %s157, 1
    %p161 = scmp.eq.s32.totalorder %s13, 1
    %p162 = scmp.ne.s32.totalorder %s157, %s159
    %p163 = scmp.eq.s32.totalorder %s13, 0
    %p164 = por %p162, %p163
    %p165 = scmp.ne.s32.totalorder %s157, %s159
    %p166 = scmp.eq.s32.totalorder %s18, 1
    %p167 = por %p165, %p166
    %p168 = scmp.ne.s32.totalorder %s159, %s160
    %p169 = scmp.eq.s32.totalorder %s18, 0
    %p170 = por %p168, %p169
    %p171 = scmp.ne.s32.totalorder %s159, %s160
    %p172 = scmp.eq.s32.totalorder %s19, 1
    %p173 = por %p171, %p172
    %p175 = scmp.ne.s32.totalorder %s160, %s174
    %p176 = scmp.eq.s32.totalorder %s19, 0
    %p177 = por %p175, %p176
    %s178 = ssub.s32 %s13, %s20
    %p179 = scmp.eq.s32.totalorder %s178, 0
    %s181 = sadd.s32 %s180, 1
    %s182 = scalar_select %p179, %s180, %s181
    %p185 = pneg %p179
    %p186 = scmp.eq.s32.totalorder %s13, 1
    %p187 = por %p185, %p186
    %p188 = scmp.ne.s32.totalorder %s180, %s183
    %p189 = scmp.eq.s32.totalorder %s13, 0
    %p190 = por %p188, %p189
    %p191 = scmp.ne.s32.totalorder %s180, %s183
    %p192 = scmp.eq.s32.totalorder %s18, 1
    %p193 = por %p191, %p192
    %p194 = scmp.ne.s32.totalorder %s183, %s184
    %p195 = scmp.eq.s32.totalorder %s18, 0
    %p196 = por %p194, %p195
    %p197 = scmp.ne.s32.totalorder %s183, %s184
    %p198 = scmp.eq.s32.totalorder %s19, 1
    %p199 = por %p197, %p198
    %p201 = scmp.ne.s32.totalorder %s184, %s200
    %p202 = scmp.eq.s32.totalorder %s19, 0
    %p203 = por %p201, %p202
    %p204 = scmp.le.s32.totalorder 1, %s13
    %p205 = scmp.lt.s32.totalorder %s13, 3
    %p206 = pnand %p204, %p205
    %p207 = pneg %p206
    // Predicated region
    $region9: #{_lambda_.27} parent=5 // pred_check
      _
    $region10: #{_lambda_.27} parent=5 // pred_check_branch
      %209 = sbr.rel (%p206) target = $region12
    $region11: #{_lambda_.27} parent=5 // pred_region
      %s210 = ssub.s32 %s13, 1
      // Predicated region
      $region13: #{_lambda_.27} parent=11 // pred_check
        %p211 = pneg %p86
      $region14: #{_lambda_.27} parent=11 // pred_check_branch
        %213 = sbr.rel (%p211) target = $region16
      $region15: #{_lambda_.27} parent=11 // pred_region
        _
      $region16: #{_lambda_.27} parent=11 // pred_fallthru
        _
      // Predicated region
      $region17: #{_lambda_.27} parent=11 // pred_check
        %p214 = pneg %p107
      $region18: #{_lambda_.27} parent=11 // pred_check_branch
        %216 = sbr.rel (%p214) target = $region20
      $region19: #{_lambda_.27} parent=11 // pred_region
        _
      $region20: #{_lambda_.27} parent=11 // pred_fallthru
        _
      // Predicated region
      $region21: #{_lambda_.27} parent=11 // pred_check
        %p217 = pneg %p128
      $region22: #{_lambda_.27} parent=11 // pred_check_branch
        %219 = sbr.rel (%p217) target = $region24
      $region23: #{_lambda_.27} parent=11 // pred_region
        _
      $region24: #{_lambda_.27} parent=11 // pred_fallthru
        _
      // Predicated region
      $region25: #{_lambda_.27} parent=11 // pred_check
        %p220 = pneg %p149
      $region26: #{_lambda_.27} parent=11 // pred_check_branch
        %222 = sbr.rel (%p220) target = $region28
      $region27: #{_lambda_.27} parent=11 // pred_region
        _
      $region28: #{_lambda_.27} parent=11 // pred_fallthru
        _
      // Predicated region
      $region29: #{_lambda_.27} parent=11 // pred_check
        %p223 = pneg %p170
      $region30: #{_lambda_.27} parent=11 // pred_check_branch
        %225 = sbr.rel (%p223) target = $region32
      $region31: #{_lambda_.27} parent=11 // pred_region
        _
      $region32: #{_lambda_.27} parent=11 // pred_fallthru
        _
    $region12: #{_lambda_.27} parent=5 // pred_fallthru
      _
    %p226 = scmp.lt.s32.totalorder %s13, 2
    // Predicated region
    $region33: #{_lambda_.27} parent=5 // pred_check
      %p227 = pneg %p226
    $region34: #{_lambda_.27} parent=5 // pred_check_branch
      %229 = sbr.rel (%p227) target = $region36
    $region35: #{_lambda_.27} parent=5 // pred_region
      // Predicated region
      $region37: #{_lambda_.27} parent=35 // pred_check
        %p230 = pneg %p33
      $region38: #{_lambda_.27} parent=35 // pred_check_branch
        %232 = sbr.rel (%p230) target = $region40
      $region39: #{_lambda_.27} parent=35 // pred_region
        %p233 = scmp.lt.s32.totalorder %s13, 1
        %s234 = scalar_select %p233, %s13, 1
        %s235 = smul.addr %s234, 4
        %s236 = smul.addr %s235, 8
        %s237 = scalar_lea.vmem %s0, %s236
      $region40: #{_lambda_.27} parent=35 // pred_fallthru
        _
      // Predicated region
      $region41: #{_lambda_.27} parent=35 // pred_check
        %p238 = pneg %p59
      $region42: #{_lambda_.27} parent=35 // pred_check_branch
        %240 = sbr.rel (%p238) target = $region44
      $region43: #{_lambda_.27} parent=35 // pred_region
        %p241 = scmp.lt.s32.totalorder %s13, 1
        %s242 = scalar_select %p241, %s13, 1
        %s243 = smul.addr %s242, 4
        %s244 = smul.addr %s243, 8
        %s245 = scalar_lea.vmem %s1, %s244
      $region44: #{_lambda_.27} parent=35 // pred_fallthru
        _
    $region36: #{_lambda_.27} parent=5 // pred_fallthru
      _
    %p246 = scmp.le.s32.totalorder 1, %s13
    %p247 = scmp.lt.s32.totalorder %s13, 3
    %p248 = pnand %p246, %p247
    %p249 = pneg %p248
    // Predicated region
    $region45: #{_lambda_.27} parent=5 // pred_check
      _
    $region46: #{_lambda_.27} parent=5 // pred_check_branch
      %251 = sbr.rel (%p248) target = $region48
    $region47: #{_lambda_.27} parent=5 // pred_region
      %s252 = ssub.s32 %s13, 1
      %p253 = scmp.lt.s32.totalorder %s18, 1
      %s254 = scalar_select %p253, %s18, 1
      %s255 = smul.addr %s254, 4
      %s256 = smul.addr %s255, 8
      %s257 = scalar_lea.vmem %s0, %s256
      %p258 = pneg %p39
      %p259 = pneg %p36
      %p260 = scmp.lt.s32.totalorder %s18, 1
      %s261 = scalar_select %p260, %s18, 1
      %s262 = smul.addr %s261, 4
      %s263 = smul.addr %s262, 8
      %s264 = scalar_lea.vmem %s1, %s263
      %p265 = pneg %p65
      %p266 = pneg %p62
      %p267 = pneg %p86
      %p268 = pneg %p83
      %p269 = pneg %p107
      %p270 = pneg %p104
      %p271 = pneg %p128
      %p272 = pneg %p125
      %p273 = pneg %p149
      %p274 = pneg %p146
      %p275 = pneg %p170
      %p276 = pneg %p167
      %p277 = pneg %p196
      %p278 = pneg %p193
      %p279 = scmp.lt.s32.totalorder %s18, 1
      %s280 = scalar_select %p279, %s18, 1
      %s281 = smul.addr %s280, 4
      %s282 = smul.addr %s281, 8
      %s283 = scalar_lea.vmem %s7, %s282
      %p284 = scmp.lt.s32.totalorder %s18, 1
      %s285 = scalar_select %p284, %s18, 1
      %s286 = smul.addr %s285, 4
      %s287 = smul.addr %s286, 8
      %s288 = scalar_lea.vmem %s0, %s287
      %p289 = scmp.lt.s32.totalorder %s18, 1
      %s290 = scalar_select %p289, %s18, 1
      %s291 = smul.addr %s290, 4
      %s292 = smul.addr %s291, 8
      %s293 = scalar_lea.vmem %s1, %s292
      %p294 = scmp.lt.s32.totalorder %s18, 1
      %s295 = scalar_select %p294, %s18, 1
      %s296 = smul.addr %s295, 4
      %s297 = smul.addr %s296, 8
      %s298 = scalar_lea.vmem %s7, %s297
      %v299 = vld [vmem:[%s288] sm:$0xff]
      %v300 = vld [vmem:[%s288 + $0x8] sm:$0xff]
      %s301 = scalar_lea.vmem %s288, 16
      %v302 = vld [vmem:[%s301] sm:$0xff]
      %v303 = vld [vmem:[%s301 + $0x8] sm:$0xff]
      %v304 = vld [vmem:[%s3] sm:$0xff]
      %v305 = vld [vmem:[%s3 + $0x8] sm:$0xff]
      %v306 = vld [vmem:[%s4] sm:$0xff]
      %v307 = vld [vmem:[%s4 + $0x8] sm:$0xff]
      %v308 = vld [vmem:[%s5] sm:$0xff]
      %v309 = vld [vmem:[%s5 + $0x8] sm:$0xff]
      %v310 = vld [vmem:[%s6] sm:$0xff]
      %v311 = vld [vmem:[%s6 + $0x8] sm:$0xff]
      %vm312 = vcmask 130048
      %v314 = vsel %vm312, %v299, 0
      %v317 = vsel %vm312, %v300, 0
      %319 = vmatpush.msra.mxu0 0.0
      %320 = vmatpush.msra.mxu0 0.0
      %321 = vmatpush.msra.mxu0 0.0
      %322 = vmatpush.msra.mxu0 0.0
      %323 = vmatpush.msra.mxu0 0.0
      %324 = vmatpush.msra.mxu0 0.0
      %325 = vmatpush.msra.mxu0 0.0
      %326 = vmatpush.msra.mxu0 0.0
      %327 = vmatpush.msra.mxu0 0.0
      %328 = vmatpush.msra.mxu0 0.0
      %329 = vmatpush.msra.mxu0 0.0
      %330 = vmatpush.msra.mxu0 0.0
      %331 = vmatpush.msra.mxu0 0.0
      %332 = vmatpush.msra.mxu0 0.0
      %333 = vmatpush.msra.mxu0 %v309
      %334 = vmatpush.msra.mxu0 %v308
      %335 = vmatmul.f32.gmra.mxu0 %v314
      %v336 = vpop.f32.mrf.mxu0
      %v337 = vadd.f32 0.0, %v336
      %338 = vmatmul.f32.gmra.mxu0 %v317
      %v339 = vpop.f32.mrf.mxu0
      %v340 = vadd.f32 0.0, %v339
      %341 = vdwg.mxu0
      %v343 = vsel %vm312, %v302, 0
      %v346 = vsel %vm312, %v303, 0
      %348 = vmatpush.msra.mxu0 0.0
      %349 = vmatpush.msra.mxu0 0.0
      %350 = vmatpush.msra.mxu0 0.0
      %351 = vmatpush.msra.mxu0 0.0
      %352 = vmatpush.msra.mxu0 0.0
      %353 = vmatpush.msra.mxu0 0.0
      %354 = vmatpush.msra.mxu0 0.0
      %355 = vmatpush.msra.mxu0 0.0
      %356 = vmatpush.msra.mxu0 0.0
      %357 = vmatpush.msra.mxu0 0.0
      %358 = vmatpush.msra.mxu0 0.0
      %359 = vmatpush.msra.mxu0 0.0
      %360 = vmatpush.msra.mxu0 0.0
      %361 = vmatpush.msra.mxu0 0.0
      %362 = vmatpush.msra.mxu0 %v311
      %363 = vmatpush.msra.mxu0 %v310
      %364 = vmatmul.f32.gmra.mxu0 %v343
      %v365 = vpop.f32.mrf.mxu0
      %v366 = vadd.f32 0.0, %v365
      %367 = vmatmul.f32.gmra.mxu0 %v346
      %v368 = vpop.f32.mrf.mxu0
      %v369 = vadd.f32 0.0, %v368
      %370 = vdwg.mxu0
      %v371 = vsub.f32 %v337, %v366
      %v372 = vsub.f32 %v340, %v369
      %373 = vmatpush.msra.mxu0 0.0
      %374 = vmatpush.msra.mxu0 0.0
      %375 = vmatpush.msra.mxu0 0.0
      %376 = vmatpush.msra.mxu0 0.0
      %377 = vmatpush.msra.mxu0 0.0
      %378 = vmatpush.msra.mxu0 0.0
      %379 = vmatpush.msra.mxu0 0.0
      %380 = vmatpush.msra.mxu0 0.0
      %381 = vmatpush.msra.mxu0 0.0
      %382 = vmatpush.msra.mxu0 0.0
      %383 = vmatpush.msra.mxu0 0.0
      %384 = vmatpush.msra.mxu0 0.0
      %385 = vmatpush.msra.mxu0 0.0
      %386 = vmatpush.msra.mxu0 0.0
      %387 = vmatpush.msra.mxu0 %v309
      %388 = vmatpush.msra.mxu0 %v308
      %389 = vmatmul.f32.gmra.mxu0 %v343
      %v390 = vpop.f32.mrf.mxu0
      %v391 = vadd.f32 0.0, %v390
      %392 = vmatmul.f32.gmra.mxu0 %v346
      %v393 = vpop.f32.mrf.mxu0
      %v394 = vadd.f32 0.0, %v393
      %395 = vdwg.mxu0
      %396 = vmatpush.msra.mxu0 0.0
      %397 = vmatpush.msra.mxu0 0.0
      %398 = vmatpush.msra.mxu0 0.0
      %399 = vmatpush.msra.mxu0 0.0
      %400 = vmatpush.msra.mxu0 0.0
      %401 = vmatpush.msra.mxu0 0.0
      %402 = vmatpush.msra.mxu0 0.0
      %403 = vmatpush.msra.mxu0 0.0
      %404 = vmatpush.msra.mxu0 0.0
      %405 = vmatpush.msra.mxu0 0.0
      %406 = vmatpush.msra.mxu0 0.0
      %407 = vmatpush.msra.mxu0 0.0
      %408 = vmatpush.msra.mxu0 0.0
      %409 = vmatpush.msra.mxu0 0.0
      %410 = vmatpush.msra.mxu0 %v311
      %411 = vmatpush.msra.mxu0 %v310
      %412 = vmatmul.f32.gmra.mxu0 %v314
      %v413 = vpop.f32.mrf.mxu0
      %v414 = vadd.f32 %v391, %v413
      %415 = vmatmul.f32.gmra.mxu0 %v317
      %v416 = vpop.f32.mrf.mxu0
      %v417 = vadd.f32 %v394, %v416
      %418 = vdwg.mxu0
      %v420 = vsel %vm312, %v304, 0
      %v423 = vsel %vm312, %v305, 0
      %425 = vmatpush.msra.mxu0 0.0
      %426 = vmatpush.msra.mxu0 0.0
      %427 = vmatpush.msra.mxu0 0.0
      %428 = vmatpush.msra.mxu0 0.0
      %429 = vmatpush.msra.mxu0 0.0
      %430 = vmatpush.msra.mxu0 0.0
      %431 = vmatpush.msra.mxu0 0.0
      %432 = vmatpush.msra.mxu0 0.0
      %433 = vmatpush.msra.mxu0 0.0
      %434 = vmatpush.msra.mxu0 0.0
      %435 = vmatpush.msra.mxu0 0.0
      %436 = vmatpush.msra.mxu0 0.0
      %437 = vmatpush.msra.mxu0 0.0
      %438 = vmatpush.msra.mxu0 0.0
      %439 = vmatpush.msra.mxu0 %v372
      %440 = vmatpush.msra.mxu0 %v371
      %441 = vmatmul.f32.gmra.mxu0 %v420
      %v442 = vpop.f32.mrf.mxu0
      %v443 = vadd.f32 0.0, %v442
      %444 = vmatmul.f32.gmra.mxu0 %v423
      %v445 = vpop.f32.mrf.mxu0
      %v446 = vadd.f32 0.0, %v445
      %447 = vdwg.mxu0
      %v449 = vsel %vm312, %v306, 0
      %v452 = vsel %vm312, %v307, 0
      %454 = vmatpush.msra.mxu0 0.0
      %455 = vmatpush.msra.mxu0 0.0
      %456 = vmatpush.msra.mxu0 0.0
      %457 = vmatpush.msra.mxu0 0.0
      %458 = vmatpush.msra.mxu0 0.0
      %459 = vmatpush.msra.mxu0 0.0
      %460 = vmatpush.msra.mxu0 0.0
      %461 = vmatpush.msra.mxu0 0.0
      %462 = vmatpush.msra.mxu0 0.0
      %463 = vmatpush.msra.mxu0 0.0
      %464 = vmatpush.msra.mxu0 0.0
      %465 = vmatpush.msra.mxu0 0.0
      %466 = vmatpush.msra.mxu0 0.0
      %467 = vmatpush.msra.mxu0 0.0
      %468 = vmatpush.msra.mxu0 %v417
      %469 = vmatpush.msra.mxu0 %v414
      %470 = vmatmul.f32.gmra.mxu0 %v449
      %v471 = vpop.f32.mrf.mxu0
      %v472 = vadd.f32 0.0, %v471
      %473 = vmatmul.f32.gmra.mxu0 %v452
      %v474 = vpop.f32.mrf.mxu0
      %v475 = vadd.f32 0.0, %v474
      %476 = vdwg.mxu0
      %v477 = vsub.f32 %v443, %v472
      %v478 = vsub.f32 %v446, %v475
      %479 = vmatpush.msra.mxu0 0.0
      %480 = vmatpush.msra.mxu0 0.0
      %481 = vmatpush.msra.mxu0 0.0
      %482 = vmatpush.msra.mxu0 0.0
      %483 = vmatpush.msra.mxu0 0.0
      %484 = vmatpush.msra.mxu0 0.0
      %485 = vmatpush.msra.mxu0 0.0
      %486 = vmatpush.msra.mxu0 0.0
      %487 = vmatpush.msra.mxu0 0.0
      %488 = vmatpush.msra.mxu0 0.0
      %489 = vmatpush.msra.mxu0 0.0
      %490 = vmatpush.msra.mxu0 0.0
      %491 = vmatpush.msra.mxu0 0.0
      %492 = vmatpush.msra.mxu0 0.0
      %493 = vmatpush.msra.mxu0 %v417
      %494 = vmatpush.msra.mxu0 %v414
      %495 = vmatmul.f32.gmra.mxu0 %v420
      %v496 = vpop.f32.mrf.mxu0
      %v497 = vadd.f32 0.0, %v496
      %498 = vmatmul.f32.gmra.mxu0 %v423
      %v499 = vpop.f32.mrf.mxu0
      %v500 = vadd.f32 0.0, %v499
      %501 = vdwg.mxu0
      %502 = vmatpush.msra.mxu0 0.0
      %503 = vmatpush.msra.mxu0 0.0
      %504 = vmatpush.msra.mxu0 0.0
      %505 = vmatpush.msra.mxu0 0.0
      %506 = vmatpush.msra.mxu0 0.0
      %507 = vmatpush.msra.mxu0 0.0
      %508 = vmatpush.msra.mxu0 0.0
      %509 = vmatpush.msra.mxu0 0.0
      %510 = vmatpush.msra.mxu0 0.0
      %511 = vmatpush.msra.mxu0 0.0
      %512 = vmatpush.msra.mxu0 0.0
      %513 = vmatpush.msra.mxu0 0.0
      %514 = vmatpush.msra.mxu0 0.0
      %515 = vmatpush.msra.mxu0 0.0
      %516 = vmatpush.msra.mxu0 %v372
      %517 = vmatpush.msra.mxu0 %v371
      %518 = vmatmul.f32.gmra.mxu0 %v449
      %v519 = vpop.f32.mrf.mxu0
      %v520 = vadd.f32 %v497, %v519
      %521 = vmatmul.f32.gmra.mxu0 %v452
      %v522 = vpop.f32.mrf.mxu0
      %v523 = vadd.f32 %v500, %v522
      %524 = vdwg.mxu0
      %v525 = vld [vmem:[%s2] sm:$0x1]
      %v526 = vld [vmem:[%s293] sm:$0xff]
      %v527 = vld [vmem:[%s293 + $0x8] sm:$0xff]
      %v529 = vperm.slane %v525, 0
      %v531 = vmul.f32 %v529, %v526
      %v532 = vmul.f32 %v529, %v527
      %v533 = vsub.f32 1.0, %v525
      %v535 = vperm.slane %v533, 0
      %v537 = vmul.f32 %v535, %v477
      %v538 = vmul.f32 %v535, %v478
      %v539 = vadd.f32 %v531, %v537
      %v540 = vadd.f32 %v532, %v538
      %541 = vst.msk [vmem:[%s298] sm:$0xff] %vm312, %v539
      %542 = vst.msk [vmem:[%s298 + $0x8] sm:$0xff] %vm312, %v540
      %s543 = scalar_lea.vmem %s293, 16
      %v544 = vld [vmem:[%s543] sm:$0xff]
      %v545 = vld [vmem:[%s543 + $0x8] sm:$0xff]
      %v546 = vmul.f32 %v529, %v544
      %v547 = vmul.f32 %v529, %v545
      %v548 = vmul.f32 %v535, %v520
      %v549 = vmul.f32 %v535, %v523
      %v550 = vadd.f32 %v546, %v548
      %v551 = vadd.f32 %v547, %v549
      %s552 = scalar_lea.vmem %s298, 16
      %553 = vst.msk [vmem:[%s552] sm:$0xff] %vm312, %v550
      %554 = vst.msk [vmem:[%s552 + $0x8] sm:$0xff] %vm312, %v551
      %p555 = scmp.lt.s32.totalorder %s18, 1
      %s556 = scalar_select %p555, %s18, 1
      %s557 = smul.addr %s556, 4
      %s558 = smul.addr %s557, 8
      %s559 = scalar_lea.vmem %s7, %s558
      // Predicated region
      $region49: #{_lambda_.27} parent=47 // pred_check
        %p560 = pneg %p193
      $region50: #{_lambda_.27} parent=47 // pred_check_branch
        %562 = sbr.rel (%p560) target = $region52
      $region51: #{_lambda_.27} parent=47 // pred_region
        _
      $region52: #{_lambda_.27} parent=47 // pred_fallthru
        _
    $region48: #{_lambda_.27} parent=5 // pred_fallthru
      _
    %p563 = scmp.le.s32.totalorder 2, %s13
    // Predicated region
    $region53: #{_lambda_.27} parent=5 // pred_check
      %p564 = pneg %p563
    $region54: #{_lambda_.27} parent=5 // pred_check_branch
      %566 = sbr.rel (%p564) target = $region56
    $region55: #{_lambda_.27} parent=5 // pred_region
      %s567 = ssub.s32 %s13, 2
      // Predicated region
      $region57: #{_lambda_.27} parent=55 // pred_check
        %p568 = pneg %p199
      $region58: #{_lambda_.27} parent=55 // pred_check_branch
        %570 = sbr.rel (%p568) target = $region60
      $region59: #{_lambda_.27} parent=55 // pred_region
        %p571 = scmp.lt.s32.totalorder %s19, 1
        %s572 = scalar_select %p571, %s19, 1
        %s573 = smul.addr %s572, 4
        %s574 = smul.addr %s573, 8
        %s575 = scalar_lea.vmem %s7, %s574
      $region60: #{_lambda_.27} parent=55 // pred_fallthru
        _
    $region56: #{_lambda_.27} parent=5 // pred_fallthru
      _
  $region6: #{_lambda_.27} parent=0 // loop_footer
    %s17 = sadd.s32 1, %s13
  $region7: #{_lambda_.27} parent=0 // loop_footer_branch
    %12 = sbr.rel target = $region3
  $region8: #{_lambda_.27} parent=0 // loop_exit
    _

// kernel: _lambda_.28
$region0: #{_lambda_.28}
  #allocation0 [shape = 'u32[]', space=smem, size = 0x4, offset = 0x4, fixed_abs, tag = 'smem constant byte address 0x4 - core index']
  #allocation1 [shape = 'u32[72,128]{1,0:T(1,128)}', space=vmem, size = 0x9000, scoped, tag = 'internal scratch']
  %s0 = inlined_call_operand.vmem [shape: f32[2,2,16,16], index: 0, kind: input, shape index: {}]
  %s1 = inlined_call_operand.vmem [shape: f32[16,16], index: 1, kind: input, shape index: {}]
  %s2 = inlined_call_operand.vmem [shape: f32[16,16], index: 2, kind: input, shape index: {}]
  %s3 = inlined_call_operand.vmem [shape: f32[16,16], index: 3, kind: input, shape index: {}]
  %s4 = inlined_call_operand.vmem [shape: f32[16,16], index: 4, kind: input, shape index: {}]
  %s5 = inlined_call_operand.vmem [shape: bf16[2,2,16,16], index: 5, kind: output, shape index: {}]
  %s6 = sld [smem:[#allocation0]]
  $region53: #{_lambda_.28} parent=0
    _
  %s8 = ssub.s32 1, %s6
  %s9 = scalar_select 0, %s8, %s6
  loop: start=0, step=1, limit=4
  $region2: #{_lambda_.28} parent=0 // loop_pre_header
    _
  $region3: #{_lambda_.28} parent=0 // loop_header
    %s11 = sphi 0, %s15
    %p12 = scmp.ge.s32.totalorder %s11, 4
    %s21 = sphi 0, %s23
    %s24 = sphi 0, %s21
    %s25 = sphi 0, %s24
    %s41 = sphi 0, %s25
    %s45 = sphi 0, %s45
    %s47 = sphi 0, %s45
    %s48 = sphi 0, %s47
    %s62 = sphi 0, %s48
    %s66 = sphi 0, %s66
    %s68 = sphi 0, %s66
    %s69 = sphi 0, %s68
    %s83 = sphi 0, %s69
    %s87 = sphi 0, %s87
    %s89 = sphi 0, %s87
    %s90 = sphi 0, %s89
    %s104 = sphi 0, %s90
    %s108 = sphi 0, %s108
    %s110 = sphi 0, %s108
    %s111 = sphi 0, %s110
    %s125 = sphi 0, %s111
    %s131 = sphi 0, %s133
    %s134 = sphi 0, %s131
    %s135 = sphi 0, %s134
    %s151 = sphi 0, %s135
  $region4: #{_lambda_.28} parent=0 // loop_header_branch
    %14 = sbr.rel (%p12) target = $region8
  $region5: #{_lambda_.28} parent=0 // loop_body
    %s16 = ssub.s32 %s11, 1
    %s17 = ssub.s32 %s11, 2
    %s18 = sadd.s32 %s11, 1
    %s19 = ssub.s32 %s11, %s18
    %p20 = scmp.eq.s32.totalorder %s19, 0
    %s22 = sadd.s32 %s21, 1
    %s23 = scalar_select %p20, %s21, %s22
    %p26 = pneg %p20
    %p27 = scmp.eq.s32.totalorder %s11, 1
    %p28 = por %p26, %p27
    %p29 = scmp.ne.s32.totalorder %s21, %s24
    %p30 = scmp.eq.s32.totalorder %s11, 0
    %p31 = por %p29, %p30
    %p32 = scmp.ne.s32.totalorder %s21, %s24
    %p33 = scmp.eq.s32.totalorder %s16, 1
    %p34 = por %p32, %p33
    %p35 = scmp.ne.s32.totalorder %s24, %s25
    %p36 = scmp.eq.s32.totalorder %s16, 0
    %p37 = por %p35, %p36
    %p38 = scmp.ne.s32.totalorder %s24, %s25
    %p39 = scmp.eq.s32.totalorder %s17, 1
    %p40 = por %p38, %p39
    %p42 = scmp.ne.s32.totalorder %s25, %s41
    %p43 = scmp.eq.s32.totalorder %s17, 0
    %p44 = por %p42, %p43
    %s46 = sadd.s32 %s45, 1
    %p49 = scmp.eq.s32.totalorder %s11, 1
    %p50 = scmp.ne.s32.totalorder %s45, %s47
    %p51 = scmp.eq.s32.totalorder %s11, 0
    %p52 = por %p50, %p51
    %p53 = scmp.ne.s32.totalorder %s45, %s47
    %p54 = scmp.eq.s32.totalorder %s16, 1
    %p55 = por %p53, %p54
    %p56 = scmp.ne.s32.totalorder %s47, %s48
    %p57 = scmp.eq.s32.totalorder %s16, 0
    %p58 = por %p56, %p57
    %p59 = scmp.ne.s32.totalorder %s47, %s48
    %p60 = scmp.eq.s32.totalorder %s17, 1
    %p61 = por %p59, %p60
    %p63 = scmp.ne.s32.totalorder %s48, %s62
    %p64 = scmp.eq.s32.totalorder %s17, 0
    %p65 = por %p63, %p64
    %s67 = sadd.s32 %s66, 1
    %p70 = scmp.eq.s32.totalorder %s11, 1
    %p71 = scmp.ne.s32.totalorder %s66, %s68
    %p72 = scmp.eq.s32.totalorder %s11, 0
    %p73 = por %p71, %p72
    %p74 = scmp.ne.s32.totalorder %s66, %s68
    %p75 = scmp.eq.s32.totalorder %s16, 1
    %p76 = por %p74, %p75
    %p77 = scmp.ne.s32.totalorder %s68, %s69
    %p78 = scmp.eq.s32.totalorder %s16, 0
    %p79 = por %p77, %p78
    %p80 = scmp.ne.s32.totalorder %s68, %s69
    %p81 = scmp.eq.s32.totalorder %s17, 1
    %p82 = por %p80, %p81
    %p84 = scmp.ne.s32.totalorder %s69, %s83
    %p85 = scmp.eq.s32.totalorder %s17, 0
    %p86 = por %p84, %p85
    %s88 = sadd.s32 %s87, 1
    %p91 = scmp.eq.s32.totalorder %s11, 1
    %p92 = scmp.ne.s32.totalorder %s87, %s89
    %p93 = scmp.eq.s32.totalorder %s11, 0
    %p94 = por %p92, %p93
    %p95 = scmp.ne.s32.totalorder %s87, %s89
    %p96 = scmp.eq.s32.totalorder %s16, 1
    %p97 = por %p95, %p96
    %p98 = scmp.ne.s32.totalorder %s89, %s90
    %p99 = scmp.eq.s32.totalorder %s16, 0
    %p100 = por %p98, %p99
    %p101 = scmp.ne.s32.totalorder %s89, %s90
    %p102 = scmp.eq.s32.totalorder %s17, 1
    %p103 = por %p101, %p102
    %p105 = scmp.ne.s32.totalorder %s90, %s104
    %p106 = scmp.eq.s32.totalorder %s17, 0
    %p107 = por %p105, %p106
    %s109 = sadd.s32 %s108, 1
    %p112 = scmp.eq.s32.totalorder %s11, 1
    %p113 = scmp.ne.s32.totalorder %s108, %s110
    %p114 = scmp.eq.s32.totalorder %s11, 0
    %p115 = por %p113, %p114
    %p116 = scmp.ne.s32.totalorder %s108, %s110
    %p117 = scmp.eq.s32.totalorder %s16, 1
    %p118 = por %p116, %p117
    %p119 = scmp.ne.s32.totalorder %s110, %s111
    %p120 = scmp.eq.s32.totalorder %s16, 0
    %p121 = por %p119, %p120
    %p122 = scmp.ne.s32.totalorder %s110, %s111
    %p123 = scmp.eq.s32.totalorder %s17, 1
    %p124 = por %p122, %p123
    %p126 = scmp.ne.s32.totalorder %s111, %s125
    %p127 = scmp.eq.s32.totalorder %s17, 0
    %p128 = por %p126, %p127
    %s129 = ssub.s32 %s11, %s18
    %p130 = scmp.eq.s32.totalorder %s129, 0
    %s132 = sadd.s32 %s131, 1
    %s133 = scalar_select %p130, %s131, %s132
    %p136 = pneg %p130
    %p137 = scmp.eq.s32.totalorder %s11, 1
    %p138 = por %p136, %p137
    %p139 = scmp.ne.s32.totalorder %s131, %s134
    %p140 = scmp.eq.s32.totalorder %s11, 0
    %p141 = por %p139, %p140
    %p142 = scmp.ne.s32.totalorder %s131, %s134
    %p143 = scmp.eq.s32.totalorder %s16, 1
    %p144 = por %p142, %p143
    %p145 = scmp.ne.s32.totalorder %s134, %s135
    %p146 = scmp.eq.s32.totalorder %s16, 0
    %p147 = por %p145, %p146
    %p148 = scmp.ne.s32.totalorder %s134, %s135
    %p149 = scmp.eq.s32.totalorder %s17, 1
    %p150 = por %p148, %p149
    %p152 = scmp.ne.s32.totalorder %s135, %s151
    %p153 = scmp.eq.s32.totalorder %s17, 0
    %p154 = por %p152, %p153
    %p155 = scmp.le.s32.totalorder 1, %s11
    %p156 = scmp.lt.s32.totalorder %s11, 3
    %p157 = pnand %p155, %p156
    %p158 = pneg %p157
    // Predicated region
    $region9: #{_lambda_.28} parent=5 // pred_check
      _
    $region10: #{_lambda_.28} parent=5 // pred_check_branch
      %160 = sbr.rel (%p157) target = $region12
    $region11: #{_lambda_.28} parent=5 // pred_region
      %s161 = ssub.s32 %s11, 1
      // Predicated region
      $region13: #{_lambda_.28} parent=11 // pred_check
        %p162 = pneg %p58
      $region14: #{_lambda_.28} parent=11 // pred_check_branch
        %164 = sbr.rel (%p162) target = $region16
      $region15: #{_lambda_.28} parent=11 // pred_region
        _
      $region16: #{_lambda_.28} parent=11 // pred_fallthru
        _
      // Predicated region
      $region17: #{_lambda_.28} parent=11 // pred_check
        %p165 = pneg %p79
      $region18: #{_lambda_.28} parent=11 // pred_check_branch
        %167 = sbr.rel (%p165) target = $region20
      $region19: #{_lambda_.28} parent=11 // pred_region
        _
      $region20: #{_lambda_.28} parent=11 // pred_fallthru
        _
      // Predicated region
      $region21: #{_lambda_.28} parent=11 // pred_check
        %p168 = pneg %p100
      $region22: #{_lambda_.28} parent=11 // pred_check_branch
        %170 = sbr.rel (%p168) target = $region24
      $region23: #{_lambda_.28} parent=11 // pred_region
        _
      $region24: #{_lambda_.28} parent=11 // pred_fallthru
        _
      // Predicated region
      $region25: #{_lambda_.28} parent=11 // pred_check
        %p171 = pneg %p121
      $region26: #{_lambda_.28} parent=11 // pred_check_branch
        %173 = sbr.rel (%p171) target = $region28
      $region27: #{_lambda_.28} parent=11 // pred_region
        _
      $region28: #{_lambda_.28} parent=11 // pred_fallthru
        _
    $region12: #{_lambda_.28} parent=5 // pred_fallthru
      _
    %p174 = scmp.lt.s32.totalorder %s11, 2
    // Predicated region
    $region29: #{_lambda_.28} parent=5 // pred_check
      %p175 = pneg %p174
    $region30: #{_lambda_.28} parent=5 // pred_check_branch
      %177 = sbr.rel (%p175) target = $region32
    $region31: #{_lambda_.28} parent=5 // pred_region
      // Predicated region
      $region33: #{_lambda_.28} parent=31 // pred_check
        %p178 = pneg %p31
      $region34: #{_lambda_.28} parent=31 // pred_check_branch
        %180 = sbr.rel (%p178) target = $region36
      $region35: #{_lambda_.28} parent=31 // pred_region
        %p181 = scmp.lt.s32.totalorder %s11, 1
        %s182 = scalar_select %p181, %s11, 1
        %s183 = smul.addr %s182, 4
        %s184 = smul.addr %s183, 8
        %s185 = scalar_lea.vmem %s0, %s184
      $region36: #{_lambda_.28} parent=31 // pred_fallthru
        _
    $region32: #{_lambda_.28} parent=5 // pred_fallthru
      _
    %p186 = scmp.le.s32.totalorder 1, %s11
    %p187 = scmp.lt.s32.totalorder %s11, 3
    %p188 = pnand %p186, %p187
    %p189 = pneg %p188
    // Predicated region
    $region37: #{_lambda_.28} parent=5 // pred_check
      _
    $region38: #{_lambda_.28} parent=5 // pred_check_branch
      %191 = sbr.rel (%p188) target = $region40
    $region39: #{_lambda_.28} parent=5 // pred_region
      %s192 = ssub.s32 %s11, 1
      %p193 = scmp.lt.s32.totalorder %s16, 1
      %s194 = scalar_select %p193, %s16, 1
      %s195 = smul.addr %s194, 4
      %s196 = smul.addr %s195, 8
      %s197 = scalar_lea.vmem %s0, %s196
      %p198 = pneg %p37
      %p199 = pneg %p34
      %p200 = pneg %p58
      %p201 = pneg %p55
      %p202 = pneg %p79
      %p203 = pneg %p76
      %p204 = pneg %p100
      %p205 = pneg %p97
      %p206 = pneg %p121
      %p207 = pneg %p118
      %p208 = pneg %p147
      %p209 = pneg %p144
      %p210 = scmp.lt.s32.totalorder %s16, 1
      %s211 = scalar_select %p210, %s16, 1
      %s212 = smul.addr %s211, 4
      %s213 = smul.addr %s212, 4
      %s214 = scalar_lea.vmem %s5, %s213
      %p215 = scmp.lt.s32.totalorder %s16, 1
      %s216 = scalar_select %p215, %s16, 1
      %s217 = smul.addr %s216, 4
      %s218 = smul.addr %s217, 8
      %s219 = scalar_lea.vmem %s0, %s218
      %p220 = scmp.lt.s32.totalorder %s16, 1
      %s221 = scalar_select %p220, %s16, 1
      %s222 = smul.addr %s221, 4
      %s223 = smul.addr %s222, 4
      %s224 = scalar_lea.vmem %s5, %s223
      %v225 = vld [vmem:[%s219] sm:$0xff]
      %v226 = vld [vmem:[%s219 + $0x8] sm:$0xff]
      %s227 = scalar_lea.vmem %s219, 16
      %v228 = vld [vmem:[%s227] sm:$0xff]
      %v229 = vld [vmem:[%s227 + $0x8] sm:$0xff]
      %v230 = vld [vmem:[%s1] sm:$0xff]
      %v231 = vld [vmem:[%s1 + $0x8] sm:$0xff]
      %v232 = vld [vmem:[%s2] sm:$0xff]
      %v233 = vld [vmem:[%s2 + $0x8] sm:$0xff]
      %v234 = vld [vmem:[%s3] sm:$0xff]
      %v235 = vld [vmem:[%s3 + $0x8] sm:$0xff]
      %v236 = vld [vmem:[%s4] sm:$0xff]
      %v237 = vld [vmem:[%s4 + $0x8] sm:$0xff]
      %vm238 = vcmask 130048
      %v240 = vsel %vm238, %v225, 0
      %v243 = vsel %vm238, %v226, 0
      %245 = vmatpush.msra.mxu0 0.0
      %246 = vmatpush.msra.mxu0 0.0
      %247 = vmatpush.msra.mxu0 0.0
      %248 = vmatpush.msra.mxu0 0.0
      %249 = vmatpush.msra.mxu0 0.0
      %250 = vmatpush.msra.mxu0 0.0
      %251 = vmatpush.msra.mxu0 0.0
      %252 = vmatpush.msra.mxu0 0.0
      %253 = vmatpush.msra.mxu0 0.0
      %254 = vmatpush.msra.mxu0 0.0
      %255 = vmatpush.msra.mxu0 0.0
      %256 = vmatpush.msra.mxu0 0.0
      %257 = vmatpush.msra.mxu0 0.0
      %258 = vmatpush.msra.mxu0 0.0
      %259 = vmatpush.msra.mxu0 %v235
      %260 = vmatpush.msra.mxu0 %v234
      %261 = vmatmul.f32.gmra.mxu0 %v240
      %v262 = vpop.f32.mrf.mxu0
      %v263 = vadd.f32 0.0, %v262
      %264 = vmatmul.f32.gmra.mxu0 %v243
      %v265 = vpop.f32.mrf.mxu0
      %v266 = vadd.f32 0.0, %v265
      %267 = vdwg.mxu0
      %v269 = vsel %vm238, %v228, 0
      %v272 = vsel %vm238, %v229, 0
      %274 = vmatpush.msra.mxu0 0.0
      %275 = vmatpush.msra.mxu0 0.0
      %276 = vmatpush.msra.mxu0 0.0
      %277 = vmatpush.msra.mxu0 0.0
      %278 = vmatpush.msra.mxu0 0.0
      %279 = vmatpush.msra.mxu0 0.0
      %280 = vmatpush.msra.mxu0 0.0
      %281 = vmatpush.msra.mxu0 0.0
      %282 = vmatpush.msra.mxu0 0.0
      %283 = vmatpush.msra.mxu0 0.0
      %284 = vmatpush.msra.mxu0 0.0
      %285 = vmatpush.msra.mxu0 0.0
      %286 = vmatpush.msra.mxu0 0.0
      %287 = vmatpush.msra.mxu0 0.0
      %288 = vmatpush.msra.mxu0 %v237
      %289 = vmatpush.msra.mxu0 %v236
      %290 = vmatmul.f32.gmra.mxu0 %v269
      %v291 = vpop.f32.mrf.mxu0
      %v292 = vadd.f32 0.0, %v291
      %293 = vmatmul.f32.gmra.mxu0 %v272
      %v294 = vpop.f32.mrf.mxu0
      %v295 = vadd.f32 0.0, %v294
      %296 = vdwg.mxu0
      %v297 = vsub.f32 %v263, %v292
      %v298 = vsub.f32 %v266, %v295
      %299 = vmatpush.msra.mxu0 0.0
      %300 = vmatpush.msra.mxu0 0.0
      %301 = vmatpush.msra.mxu0 0.0
      %302 = vmatpush.msra.mxu0 0.0
      %303 = vmatpush.msra.mxu0 0.0
      %304 = vmatpush.msra.mxu0 0.0
      %305 = vmatpush.msra.mxu0 0.0
      %306 = vmatpush.msra.mxu0 0.0
      %307 = vmatpush.msra.mxu0 0.0
      %308 = vmatpush.msra.mxu0 0.0
      %309 = vmatpush.msra.mxu0 0.0
      %310 = vmatpush.msra.mxu0 0.0
      %311 = vmatpush.msra.mxu0 0.0
      %312 = vmatpush.msra.mxu0 0.0
      %313 = vmatpush.msra.mxu0 %v235
      %314 = vmatpush.msra.mxu0 %v234
      %315 = vmatmul.f32.gmra.mxu0 %v269
      %v316 = vpop.f32.mrf.mxu0
      %v317 = vadd.f32 0.0, %v316
      %318 = vmatmul.f32.gmra.mxu0 %v272
      %v319 = vpop.f32.mrf.mxu0
      %v320 = vadd.f32 0.0, %v319
      %321 = vdwg.mxu0
      %322 = vmatpush.msra.mxu0 0.0
      %323 = vmatpush.msra.mxu0 0.0
      %324 = vmatpush.msra.mxu0 0.0
      %325 = vmatpush.msra.mxu0 0.0
      %326 = vmatpush.msra.mxu0 0.0
      %327 = vmatpush.msra.mxu0 0.0
      %328 = vmatpush.msra.mxu0 0.0
      %329 = vmatpush.msra.mxu0 0.0
      %330 = vmatpush.msra.mxu0 0.0
      %331 = vmatpush.msra.mxu0 0.0
      %332 = vmatpush.msra.mxu0 0.0
      %333 = vmatpush.msra.mxu0 0.0
      %334 = vmatpush.msra.mxu0 0.0
      %335 = vmatpush.msra.mxu0 0.0
      %336 = vmatpush.msra.mxu0 %v237
      %337 = vmatpush.msra.mxu0 %v236
      %338 = vmatmul.f32.gmra.mxu0 %v240
      %v339 = vpop.f32.mrf.mxu0
      %v340 = vadd.f32 %v317, %v339
      %341 = vmatmul.f32.gmra.mxu0 %v243
      %v342 = vpop.f32.mrf.mxu0
      %v343 = vadd.f32 %v320, %v342
      %344 = vdwg.mxu0
      %v346 = vsel %vm238, %v230, 0
      %v349 = vsel %vm238, %v231, 0
      %351 = vmatpush.msra.mxu0 0.0
      %352 = vmatpush.msra.mxu0 0.0
      %353 = vmatpush.msra.mxu0 0.0
      %354 = vmatpush.msra.mxu0 0.0
      %355 = vmatpush.msra.mxu0 0.0
      %356 = vmatpush.msra.mxu0 0.0
      %357 = vmatpush.msra.mxu0 0.0
      %358 = vmatpush.msra.mxu0 0.0
      %359 = vmatpush.msra.mxu0 0.0
      %360 = vmatpush.msra.mxu0 0.0
      %361 = vmatpush.msra.mxu0 0.0
      %362 = vmatpush.msra.mxu0 0.0
      %363 = vmatpush.msra.mxu0 0.0
      %364 = vmatpush.msra.mxu0 0.0
      %365 = vmatpush.msra.mxu0 %v298
      %366 = vmatpush.msra.mxu0 %v297
      %367 = vmatmul.f32.gmra.mxu0 %v346
      %v368 = vpop.f32.mrf.mxu0
      %v369 = vadd.f32 0.0, %v368
      %370 = vmatmul.f32.gmra.mxu0 %v349
      %v371 = vpop.f32.mrf.mxu0
      %v372 = vadd.f32 0.0, %v371
      %373 = vdwg.mxu0
      %v375 = vsel %vm238, %v232, 0
      %v378 = vsel %vm238, %v233, 0
      %380 = vmatpush.msra.mxu0 0.0
      %381 = vmatpush.msra.mxu0 0.0
      %382 = vmatpush.msra.mxu0 0.0
      %383 = vmatpush.msra.mxu0 0.0
      %384 = vmatpush.msra.mxu0 0.0
      %385 = vmatpush.msra.mxu0 0.0
      %386 = vmatpush.msra.mxu0 0.0
      %387 = vmatpush.msra.mxu0 0.0
      %388 = vmatpush.msra.mxu0 0.0
      %389 = vmatpush.msra.mxu0 0.0
      %390 = vmatpush.msra.mxu0 0.0
      %391 = vmatpush.msra.mxu0 0.0
      %392 = vmatpush.msra.mxu0 0.0
      %393 = vmatpush.msra.mxu0 0.0
      %394 = vmatpush.msra.mxu0 %v343
      %395 = vmatpush.msra.mxu0 %v340
      %396 = vmatmul.f32.gmra.mxu0 %v375
      %v397 = vpop.f32.mrf.mxu0
      %v398 = vadd.f32 0.0, %v397
      %399 = vmatmul.f32.gmra.mxu0 %v378
      %v400 = vpop.f32.mrf.mxu0
      %v401 = vadd.f32 0.0, %v400
      %402 = vdwg.mxu0
      %v403 = vsub.f32 %v369, %v398
      %v404 = vsub.f32 %v372, %v401
      %405 = vmatpush.msra.mxu0 0.0
      %406 = vmatpush.msra.mxu0 0.0
      %407 = vmatpush.msra.mxu0 0.0
      %408 = vmatpush.msra.mxu0 0.0
      %409 = vmatpush.msra.mxu0 0.0
      %410 = vmatpush.msra.mxu0 0.0
      %411 = vmatpush.msra.mxu0 0.0
      %412 = vmatpush.msra.mxu0 0.0
      %413 = vmatpush.msra.mxu0 0.0
      %414 = vmatpush.msra.mxu0 0.0
      %415 = vmatpush.msra.mxu0 0.0
      %416 = vmatpush.msra.mxu0 0.0
      %417 = vmatpush.msra.mxu0 0.0
      %418 = vmatpush.msra.mxu0 0.0
      %419 = vmatpush.msra.mxu0 %v343
      %420 = vmatpush.msra.mxu0 %v340
      %421 = vmatmul.f32.gmra.mxu0 %v346
      %v422 = vpop.f32.mrf.mxu0
      %v423 = vadd.f32 0.0, %v422
      %424 = vmatmul.f32.gmra.mxu0 %v349
      %v425 = vpop.f32.mrf.mxu0
      %v426 = vadd.f32 0.0, %v425
      %427 = vdwg.mxu0
      %428 = vmatpush.msra.mxu0 0.0
      %429 = vmatpush.msra.mxu0 0.0
      %430 = vmatpush.msra.mxu0 0.0
      %431 = vmatpush.msra.mxu0 0.0
      %432 = vmatpush.msra.mxu0 0.0
      %433 = vmatpush.msra.mxu0 0.0
      %434 = vmatpush.msra.mxu0 0.0
      %435 = vmatpush.msra.mxu0 0.0
      %436 = vmatpush.msra.mxu0 0.0
      %437 = vmatpush.msra.mxu0 0.0
      %438 = vmatpush.msra.mxu0 0.0
      %439 = vmatpush.msra.mxu0 0.0
      %440 = vmatpush.msra.mxu0 0.0
      %441 = vmatpush.msra.mxu0 0.0
      %442 = vmatpush.msra.mxu0 %v298
      %443 = vmatpush.msra.mxu0 %v297
      %444 = vmatmul.f32.gmra.mxu0 %v375
      %v445 = vpop.f32.mrf.mxu0
      %v446 = vadd.f32 %v423, %v445
      %447 = vmatmul.f32.gmra.mxu0 %v378
      %v448 = vpop.f32.mrf.mxu0
      %v449 = vadd.f32 %v426, %v448
      %450 = vdwg.mxu0
      %v451 = vpack.c.bf16 %v403, %v403
      %v452 = vpack.c.bf16 %v404, %v404
      %vm453 = vcmask 125952
      %454 = vst.msk [vmem:[%s224] sm:$0xf] %vm453, %v451
      %455 = vst.msk [vmem:[%s224 + $0x4] sm:$0xf] %vm453, %v452
      %v456 = vpack.c.bf16 %v446, %v446
      %v457 = vpack.c.bf16 %v449, %v449
      %s458 = scalar_lea.vmem %s224, 8
      %459 = vst.msk [vmem:[%s458] sm:$0xf] %vm453, %v456
      %460 = vst.msk [vmem:[%s458 + $0x4] sm:$0xf] %vm453, %v457
      %p461 = scmp.lt.s32.totalorder %s16, 1
      %s462 = scalar_select %p461, %s16, 1
      %s463 = smul.addr %s462, 4
      %s464 = smul.addr %s463, 4
      %s465 = scalar_lea.vmem %s5, %s464
      // Predicated region
      $region41: #{_lambda_.28} parent=39 // pred_check
        %p466 = pneg %p144
      $region42: #{_lambda_.28} parent=39 // pred_check_branch
        %468 = sbr.rel (%p466) target = $region44
      $region43: #{_lambda_.28} parent=39 // pred_region
        _
      $region44: #{_lambda_.28} parent=39 // pred_fallthru
        _
    $region40: #{_lambda_.28} parent=5 // pred_fallthru
      _
    %p469 = scmp.le.s32.totalorder 2, %s11
    // Predicated region
    $region45: #{_lambda_.28} parent=5 // pred_check
      %p470 = pneg %p469
    $region46: #{_lambda_.28} parent=5 // pred_check_branch
      %472 = sbr.rel (%p470) target = $region48
    $region47: #{_lambda_.28} parent=5 // pred_region
      %s473 = ssub.s32 %s11, 2
      // Predicated region
      $region49: #{_lambda_.28} parent=47 // pred_check
        %p474 = pneg %p150
      $region50: #{_lambda_.28} parent=47 // pred_check_branch
        %476 = sbr.rel (%p474) target = $region52
      $region51: #{_lambda_.28} parent=47 // pred_region
        %p477 = scmp.lt.s32.totalorder %s17, 1
        %s478 = scalar_select %p477, %s17, 1
        %s479 = smul.addr %s478, 4
        %s480 = smul.addr %s479, 4
        %s481 = scalar_lea.vmem %s5, %s480
      $region52: #{_lambda_.28} parent=47 // pred_fallthru
        _
    $region48: #{_lambda_.28} parent=5 // pred_fallthru
      _
  $region6: #{_lambda_.28} parent=0 // loop_footer
    %s15 = sadd.s32 1, %s11
  $region7: #{_lambda_.28} parent=0 // loop_footer_branch
    %10 = sbr.rel target = $region3
  $region8: #{_lambda_.28} parent=0 // loop_exit
    _

// kernel: _lambda_.37
$region0: #{_lambda_.37}
  #allocation0 [shape = 'u32[]', space=smem, size = 0x4, offset = 0x4, fixed_abs, tag = 'smem constant byte address 0x4 - core index']
  #allocation1 [shape = 'u32[72,128]{1,0:T(1,128)}', space=vmem, size = 0x9000, scoped, tag = 'internal scratch']
  %s0 = inlined_call_operand.vmem [shape: f32[2,2,16,16], index: 0, kind: input, shape index: {}]
  %s1 = inlined_call_operand.vmem [shape: f32[16,16], index: 1, kind: input, shape index: {}, may-alias: {1,3}]
  %s2 = inlined_call_operand.vmem [shape: f32[16,16], index: 2, kind: input, shape index: {}, may-alias: {2,4}]
  %s3 = inlined_call_operand.vmem [shape: f32[16,16], index: 3, kind: input, shape index: {}, may-alias: {1,3}]
  %s4 = inlined_call_operand.vmem [shape: f32[16,16], index: 4, kind: input, shape index: {}, may-alias: {2,4}]
  %s5 = inlined_call_operand.hbm [shape: f32[2,16,16], index: 5, kind: output, shape index: {}]
  %s6 = sld [smem:[#allocation0]]
  $region53: #{_lambda_.37} parent=0
    _
  %s8 = ssub.s32 1, %s6
  %s9 = scalar_select 0, %s8, %s6
  $region1: #{_lambda_.37} parent=0
    #allocation2 [shape = 'u8[16384]{0}', space=vmem, size = 0x4000, scoped, tag = 'output window, operand 0']
    #allocation3 [shape = 's32[2]{0}', space=sflag, size = 0x8, scoped, tag = 'scoped memory for _lambda_.37']
    %10 = vsyncpa [#allocation3], 0
    %s11 = scalar_lea.sflag [#allocation3], 1
    %12 = vsyncpa %s11, 0
    loop: start=0, step=1, limit=4
    $region2: #{_lambda_.37} parent=1 // loop_pre_header
      _
    $region3: #{_lambda_.37} parent=1 // loop_header
      %s14 = sphi 0, %s18
      %p15 = scmp.ge.s32.totalorder %s14, 4
      %s24 = sphi 0, %s26
      %s27 = sphi 0, %s24
      %s28 = sphi 0, %s27
      %s44 = sphi 0, %s28
      %s48 = sphi 0, %s48
      %s50 = sphi 0, %s48
      %s51 = sphi 0, %s50
      %s65 = sphi 0, %s51
      %s69 = sphi 0, %s69
      %s71 = sphi 0, %s69
      %s72 = sphi 0, %s71
      %s86 = sphi 0, %s72
      %s90 = sphi 0, %s90
      %s92 = sphi 0, %s90
      %s93 = sphi 0, %s92
      %s107 = sphi 0, %s93
      %s111 = sphi 0, %s111
      %s113 = sphi 0, %s111
      %s114 = sphi 0, %s113
      %s128 = sphi 0, %s114
      %s134 = sphi 0, %s136
      %s137 = sphi 0, %s134
      %s138 = sphi 0, %s137
      %s154 = sphi 0, %s138
    $region4: #{_lambda_.37} parent=1 // loop_header_branch
      %17 = sbr.rel (%p15) target = $region8
    $region5: #{_lambda_.37} parent=1 // loop_body
      %s19 = ssub.s32 %s14, 1
      %s20 = ssub.s32 %s14, 2
      %s21 = sadd.s32 %s14, 1
      %s22 = ssub.s32 %s14, %s21
      %p23 = scmp.eq.s32.totalorder %s22, 0
      %s25 = sadd.s32 %s24, 1
      %s26 = scalar_select %p23, %s24, %s25
      %p29 = pneg %p23
      %p30 = scmp.eq.s32.totalorder %s14, 1
      %p31 = por %p29, %p30
      %p32 = scmp.ne.s32.totalorder %s24, %s27
      %p33 = scmp.eq.s32.totalorder %s14, 0
      %p34 = por %p32, %p33
      %p35 = scmp.ne.s32.totalorder %s24, %s27
      %p36 = scmp.eq.s32.totalorder %s19, 1
      %p37 = por %p35, %p36
      %p38 = scmp.ne.s32.totalorder %s27, %s28
      %p39 = scmp.eq.s32.totalorder %s19, 0
      %p40 = por %p38, %p39
      %p41 = scmp.ne.s32.totalorder %s27, %s28
      %p42 = scmp.eq.s32.totalorder %s20, 1
      %p43 = por %p41, %p42
      %p45 = scmp.ne.s32.totalorder %s28, %s44
      %p46 = scmp.eq.s32.totalorder %s20, 0
      %p47 = por %p45, %p46
      %s49 = sadd.s32 %s48, 1
      %p52 = scmp.eq.s32.totalorder %s14, 1
      %p53 = scmp.ne.s32.totalorder %s48, %s50
      %p54 = scmp.eq.s32.totalorder %s14, 0
      %p55 = por %p53, %p54
      %p56 = scmp.ne.s32.totalorder %s48, %s50
      %p57 = scmp.eq.s32.totalorder %s19, 1
      %p58 = por %p56, %p57
      %p59 = scmp.ne.s32.totalorder %s50, %s51
      %p60 = scmp.eq.s32.totalorder %s19, 0
      %p61 = por %p59, %p60
      %p62 = scmp.ne.s32.totalorder %s50, %s51
      %p63 = scmp.eq.s32.totalorder %s20, 1
      %p64 = por %p62, %p63
      %p66 = scmp.ne.s32.totalorder %s51, %s65
      %p67 = scmp.eq.s32.totalorder %s20, 0
      %p68 = por %p66, %p67
      %s70 = sadd.s32 %s69, 1
      %p73 = scmp.eq.s32.totalorder %s14, 1
      %p74 = scmp.ne.s32.totalorder %s69, %s71
      %p75 = scmp.eq.s32.totalorder %s14, 0
      %p76 = por %p74, %p75
      %p77 = scmp.ne.s32.totalorder %s69, %s71
      %p78 = scmp.eq.s32.totalorder %s19, 1
      %p79 = por %p77, %p78
      %p80 = scmp.ne.s32.totalorder %s71, %s72
      %p81 = scmp.eq.s32.totalorder %s19, 0
      %p82 = por %p80, %p81
      %p83 = scmp.ne.s32.totalorder %s71, %s72
      %p84 = scmp.eq.s32.totalorder %s20, 1
      %p85 = por %p83, %p84
      %p87 = scmp.ne.s32.totalorder %s72, %s86
      %p88 = scmp.eq.s32.totalorder %s20, 0
      %p89 = por %p87, %p88
      %s91 = sadd.s32 %s90, 1
      %p94 = scmp.eq.s32.totalorder %s14, 1
      %p95 = scmp.ne.s32.totalorder %s90, %s92
      %p96 = scmp.eq.s32.totalorder %s14, 0
      %p97 = por %p95, %p96
      %p98 = scmp.ne.s32.totalorder %s90, %s92
      %p99 = scmp.eq.s32.totalorder %s19, 1
      %p100 = por %p98, %p99
      %p101 = scmp.ne.s32.totalorder %s92, %s93
      %p102 = scmp.eq.s32.totalorder %s19, 0
      %p103 = por %p101, %p102
      %p104 = scmp.ne.s32.totalorder %s92, %s93
      %p105 = scmp.eq.s32.totalorder %s20, 1
      %p106 = por %p104, %p105
      %p108 = scmp.ne.s32.totalorder %s93, %s107
      %p109 = scmp.eq.s32.totalorder %s20, 0
      %p110 = por %p108, %p109
      %s112 = sadd.s32 %s111, 1
      %p115 = scmp.eq.s32.totalorder %s14, 1
      %p116 = scmp.ne.s32.totalorder %s111, %s113
      %p117 = scmp.eq.s32.totalorder %s14, 0
      %p118 = por %p116, %p117
      %p119 = scmp.ne.s32.totalorder %s111, %s113
      %p120 = scmp.eq.s32.totalorder %s19, 1
      %p121 = por %p119, %p120
      %p122 = scmp.ne.s32.totalorder %s113, %s114
      %p123 = scmp.eq.s32.totalorder %s19, 0
      %p124 = por %p122, %p123
      %p125 = scmp.ne.s32.totalorder %s113, %s114
      %p126 = scmp.eq.s32.totalorder %s20, 1
      %p127 = por %p125, %p126
      %p129 = scmp.ne.s32.totalorder %s114, %s128
      %p130 = scmp.eq.s32.totalorder %s20, 0
      %p131 = por %p129, %p130
      %s132 = ssub.s32 %s14, %s21
      %p133 = scmp.eq.s32.totalorder %s132, 0
      %s135 = sadd.s32 %s134, 1
      %s136 = scalar_select %p133, %s134, %s135
      %p139 = pneg %p133
      %p140 = scmp.eq.s32.totalorder %s14, 1
      %p141 = por %p139, %p140
      %p142 = scmp.ne.s32.totalorder %s134, %s137
      %p143 = scmp.eq.s32.totalorder %s14, 0
      %p144 = por %p142, %p143
      %p145 = scmp.ne.s32.totalorder %s134, %s137
      %p146 = scmp.eq.s32.totalorder %s19, 1
      %p147 = por %p145, %p146
      %p148 = scmp.ne.s32.totalorder %s137, %s138
      %p149 = scmp.eq.s32.totalorder %s19, 0
      %p150 = por %p148, %p149
      %p151 = scmp.ne.s32.totalorder %s137, %s138
      %p152 = scmp.eq.s32.totalorder %s20, 1
      %p153 = por %p151, %p152
      %p155 = scmp.ne.s32.totalorder %s138, %s154
      %p156 = scmp.eq.s32.totalorder %s20, 0
      %p157 = por %p155, %p156
      %p158 = scmp.le.s32.totalorder 1, %s14
      %p159 = scmp.lt.s32.totalorder %s14, 3
      %p160 = pnand %p158, %p159
      %p161 = pneg %p160
      // Predicated region
      $region9: #{_lambda_.37} parent=5 // pred_check
        _
      $region10: #{_lambda_.37} parent=5 // pred_check_branch
        %163 = sbr.rel (%p160) target = $region12
      $region11: #{_lambda_.37} parent=5 // pred_region
        %s164 = ssub.s32 %s14, 1
        // Predicated region
        $region13: #{_lambda_.37} parent=11 // pred_check
          %p165 = pneg %p61
        $region14: #{_lambda_.37} parent=11 // pred_check_branch
          %167 = sbr.rel (%p165) target = $region16
        $region15: #{_lambda_.37} parent=11 // pred_region
          _
        $region16: #{_lambda_.37} parent=11 // pred_fallthru
          _
        // Predicated region
        $region17: #{_lambda_.37} parent=11 // pred_check
          %p168 = pneg %p82
        $region18: #{_lambda_.37} parent=11 // pred_check_branch
          %170 = sbr.rel (%p168) target = $region20
        $region19: #{_lambda_.37} parent=11 // pred_region
          _
        $region20: #{_lambda_.37} parent=11 // pred_fallthru
          _
        // Predicated region
        $region21: #{_lambda_.37} parent=11 // pred_check
          %p171 = pneg %p103
        $region22: #{_lambda_.37} parent=11 // pred_check_branch
          %173 = sbr.rel (%p171) target = $region24
        $region23: #{_lambda_.37} parent=11 // pred_region
          _
        $region24: #{_lambda_.37} parent=11 // pred_fallthru
          _
        // Predicated region
        $region25: #{_lambda_.37} parent=11 // pred_check
          %p174 = pneg %p124
        $region26: #{_lambda_.37} parent=11 // pred_check_branch
          %176 = sbr.rel (%p174) target = $region28
        $region27: #{_lambda_.37} parent=11 // pred_region
          _
        $region28: #{_lambda_.37} parent=11 // pred_fallthru
          _
      $region12: #{_lambda_.37} parent=5 // pred_fallthru
        _
      %p177 = scmp.lt.s32.totalorder %s14, 2
      // Predicated region
      $region29: #{_lambda_.37} parent=5 // pred_check
        %p178 = pneg %p177
      $region30: #{_lambda_.37} parent=5 // pred_check_branch
        %180 = sbr.rel (%p178) target = $region32
      $region31: #{_lambda_.37} parent=5 // pred_region
        // Predicated region
        $region33: #{_lambda_.37} parent=31 // pred_check
          %p181 = pneg %p34
        $region34: #{_lambda_.37} parent=31 // pred_check_branch
          %183 = sbr.rel (%p181) target = $region36
        $region35: #{_lambda_.37} parent=31 // pred_region
          %p184 = scmp.lt.s32.totalorder %s14, 1
          %s185 = scalar_select %p184, %s14, 1
          %s186 = smul.addr %s185, 4
          %s187 = smul.addr %s186, 8
          %s188 = scalar_lea.vmem %s0, %s187
        $region36: #{_lambda_.37} parent=31 // pred_fallthru
          _
      $region32: #{_lambda_.37} parent=5 // pred_fallthru
        _
      %p189 = scmp.le.s32.totalorder 1, %s14
      %p190 = scmp.lt.s32.totalorder %s14, 3
      %p191 = pnand %p189, %p190
      %p192 = pneg %p191
      // Predicated region
      $region37: #{_lambda_.37} parent=5 // pred_check
        _
      $region38: #{_lambda_.37} parent=5 // pred_check_branch
        %194 = sbr.rel (%p191) target = $region40
      $region39: #{_lambda_.37} parent=5 // pred_region
        %s195 = ssub.s32 %s14, 1
        %p196 = scmp.lt.s32.totalorder %s19, 1
        %s197 = scalar_select %p196, %s19, 1
        %s198 = smul.addr %s197, 4
        %s199 = smul.addr %s198, 8
        %s200 = scalar_lea.vmem %s0, %s199
        %p201 = pneg %p40
        %p202 = pneg %p37
        %p203 = pneg %p61
        %p204 = pneg %p58
        %p205 = pneg %p82
        %p206 = pneg %p79
        %p207 = pneg %p103
        %p208 = pneg %p100
        %p209 = pneg %p124
        %p210 = pneg %p121
        %p211 = pneg %p150
        %p212 = pneg %p147
        %s213 = sand.u32 %s137, 1
        %s214 = scalar_lea.sflag [#allocation3], %s213
        %s215 = sand.u32 %s137, 1
        %s216 = smul.addr %s215, 16
        %s217 = scalar_lea.vmem [#allocation2], %s216
        %p218 = scmp.lt.s32.totalorder %s19, 1
        %s219 = scalar_select %p218, %s19, 1
        %s220 = smul.addr %s219, 4
        %s221 = smul.addr %s220, 8
        %s222 = scalar_lea.vmem %s0, %s221
        %v223 = vld [vmem:[%s222] sm:$0xff]
        %v224 = vld [vmem:[%s222 + $0x8] sm:$0xff]
        %s225 = scalar_lea.vmem %s222, 16
        %v226 = vld [vmem:[%s225] sm:$0xff]
        %v227 = vld [vmem:[%s225 + $0x8] sm:$0xff]
        %v228 = vld [vmem:[%s1] sm:$0xff]
        %v229 = vld [vmem:[%s1 + $0x8] sm:$0xff]
        %v230 = vld [vmem:[%s2] sm:$0xff]
        %v231 = vld [vmem:[%s2 + $0x8] sm:$0xff]
        %v232 = vld [vmem:[%s3] sm:$0xff]
        %v233 = vld [vmem:[%s3 + $0x8] sm:$0xff]
        %v234 = vld [vmem:[%s4] sm:$0xff]
        %v235 = vld [vmem:[%s4 + $0x8] sm:$0xff]
        %vm236 = vcmask 130048
        %v238 = vsel %vm236, %v223, 0
        %v241 = vsel %vm236, %v224, 0
        %243 = vmatpush.msra.mxu0 0.0
        %244 = vmatpush.msra.mxu0 0.0
        %245 = vmatpush.msra.mxu0 0.0
        %246 = vmatpush.msra.mxu0 0.0
        %247 = vmatpush.msra.mxu0 0.0
        %248 = vmatpush.msra.mxu0 0.0
        %249 = vmatpush.msra.mxu0 0.0
        %250 = vmatpush.msra.mxu0 0.0
        %251 = vmatpush.msra.mxu0 0.0
        %252 = vmatpush.msra.mxu0 0.0
        %253 = vmatpush.msra.mxu0 0.0
        %254 = vmatpush.msra.mxu0 0.0
        %255 = vmatpush.msra.mxu0 0.0
        %256 = vmatpush.msra.mxu0 0.0
        %257 = vmatpush.msra.mxu0 %v233
        %258 = vmatpush.msra.mxu0 %v232
        %259 = vmatmul.f32.gmra.mxu0 %v238
        %v260 = vpop.f32.mrf.mxu0
        %v261 = vadd.f32 0.0, %v260
        %262 = vmatmul.f32.gmra.mxu0 %v241
        %v263 = vpop.f32.mrf.mxu0
        %v264 = vadd.f32 0.0, %v263
        %265 = vdwg.mxu0
        %v267 = vsel %vm236, %v226, 0
        %v270 = vsel %vm236, %v227, 0
        %272 = vmatpush.msra.mxu0 0.0
        %273 = vmatpush.msra.mxu0 0.0
        %274 = vmatpush.msra.mxu0 0.0
        %275 = vmatpush.msra.mxu0 0.0
        %276 = vmatpush.msra.mxu0 0.0
        %277 = vmatpush.msra.mxu0 0.0
        %278 = vmatpush.msra.mxu0 0.0
        %279 = vmatpush.msra.mxu0 0.0
        %280 = vmatpush.msra.mxu0 0.0
        %281 = vmatpush.msra.mxu0 0.0
        %282 = vmatpush.msra.mxu0 0.0
        %283 = vmatpush.msra.mxu0 0.0
        %284 = vmatpush.msra.mxu0 0.0
        %285 = vmatpush.msra.mxu0 0.0
        %286 = vmatpush.msra.mxu0 %v235
        %287 = vmatpush.msra.mxu0 %v234
        %288 = vmatmul.f32.gmra.mxu0 %v267
        %v289 = vpop.f32.mrf.mxu0
        %v290 = vadd.f32 0.0, %v289
        %291 = vmatmul.f32.gmra.mxu0 %v270
        %v292 = vpop.f32.mrf.mxu0
        %v293 = vadd.f32 0.0, %v292
        %294 = vdwg.mxu0
        %v295 = vsub.f32 %v261, %v290
        %v296 = vsub.f32 %v264, %v293
        %297 = vmatpush.msra.mxu0 0.0
        %298 = vmatpush.msra.mxu0 0.0
        %299 = vmatpush.msra.mxu0 0.0
        %300 = vmatpush.msra.mxu0 0.0
        %301 = vmatpush.msra.mxu0 0.0
        %302 = vmatpush.msra.mxu0 0.0
        %303 = vmatpush.msra.mxu0 0.0
        %304 = vmatpush.msra.mxu0 0.0
        %305 = vmatpush.msra.mxu0 0.0
        %306 = vmatpush.msra.mxu0 0.0
        %307 = vmatpush.msra.mxu0 0.0
        %308 = vmatpush.msra.mxu0 0.0
        %309 = vmatpush.msra.mxu0 0.0
        %310 = vmatpush.msra.mxu0 0.0
        %311 = vmatpush.msra.mxu0 %v233
        %312 = vmatpush.msra.mxu0 %v232
        %313 = vmatmul.f32.gmra.mxu0 %v267
        %v314 = vpop.f32.mrf.mxu0
        %v315 = vadd.f32 0.0, %v314
        %316 = vmatmul.f32.gmra.mxu0 %v270
        %v317 = vpop.f32.mrf.mxu0
        %v318 = vadd.f32 0.0, %v317
        %319 = vdwg.mxu0
        %320 = vmatpush.msra.mxu0 0.0
        %321 = vmatpush.msra.mxu0 0.0
        %322 = vmatpush.msra.mxu0 0.0
        %323 = vmatpush.msra.mxu0 0.0
        %324 = vmatpush.msra.mxu0 0.0
        %325 = vmatpush.msra.mxu0 0.0
        %326 = vmatpush.msra.mxu0 0.0
        %327 = vmatpush.msra.mxu0 0.0
        %328 = vmatpush.msra.mxu0 0.0
        %329 = vmatpush.msra.mxu0 0.0
        %330 = vmatpush.msra.mxu0 0.0
        %331 = vmatpush.msra.mxu0 0.0
        %332 = vmatpush.msra.mxu0 0.0
        %333 = vmatpush.msra.mxu0 0.0
        %334 = vmatpush.msra.mxu0 %v235
        %335 = vmatpush.msra.mxu0 %v234
        %336 = vmatmul.f32.gmra.mxu0 %v238
        %v337 = vpop.f32.mrf.mxu0
        %v338 = vadd.f32 %v315, %v337
        %339 = vmatmul.f32.gmra.mxu0 %v241
        %v340 = vpop.f32.mrf.mxu0
        %v341 = vadd.f32 %v318, %v340
        %342 = vdwg.mxu0
        %v344 = vsel %vm236, %v228, 0
        %v347 = vsel %vm236, %v229, 0
        %349 = vmatpush.msra.mxu0 0.0
        %350 = vmatpush.msra.mxu0 0.0
        %351 = vmatpush.msra.mxu0 0.0
        %352 = vmatpush.msra.mxu0 0.0
        %353 = vmatpush.msra.mxu0 0.0
        %354 = vmatpush.msra.mxu0 0.0
        %355 = vmatpush.msra.mxu0 0.0
        %356 = vmatpush.msra.mxu0 0.0
        %357 = vmatpush.msra.mxu0 0.0
        %358 = vmatpush.msra.mxu0 0.0
        %359 = vmatpush.msra.mxu0 0.0
        %360 = vmatpush.msra.mxu0 0.0
        %361 = vmatpush.msra.mxu0 0.0
        %362 = vmatpush.msra.mxu0 0.0
        %363 = vmatpush.msra.mxu0 %v296
        %364 = vmatpush.msra.mxu0 %v295
        %365 = vmatmul.f32.gmra.mxu0 %v344
        %v366 = vpop.f32.mrf.mxu0
        %v367 = vadd.f32 0.0, %v366
        %368 = vmatmul.f32.gmra.mxu0 %v347
        %v369 = vpop.f32.mrf.mxu0
        %v370 = vadd.f32 0.0, %v369
        %371 = vdwg.mxu0
        %v373 = vsel %vm236, %v230, 0
        %v376 = vsel %vm236, %v231, 0
        %378 = vmatpush.msra.mxu0 0.0
        %379 = vmatpush.msra.mxu0 0.0
        %380 = vmatpush.msra.mxu0 0.0
        %381 = vmatpush.msra.mxu0 0.0
        %382 = vmatpush.msra.mxu0 0.0
        %383 = vmatpush.msra.mxu0 0.0
        %384 = vmatpush.msra.mxu0 0.0
        %385 = vmatpush.msra.mxu0 0.0
        %386 = vmatpush.msra.mxu0 0.0
        %387 = vmatpush.msra.mxu0 0.0
        %388 = vmatpush.msra.mxu0 0.0
        %389 = vmatpush.msra.mxu0 0.0
        %390 = vmatpush.msra.mxu0 0.0
        %391 = vmatpush.msra.mxu0 0.0
        %392 = vmatpush.msra.mxu0 %v341
        %393 = vmatpush.msra.mxu0 %v338
        %394 = vmatmul.f32.gmra.mxu0 %v373
        %v395 = vpop.f32.mrf.mxu0
        %v396 = vadd.f32 0.0, %v395
        %397 = vmatmul.f32.gmra.mxu0 %v376
        %v398 = vpop.f32.mrf.mxu0
        %v399 = vadd.f32 0.0, %v398
        %400 = vdwg.mxu0
        %v401 = vsub.f32 %v367, %v396
        %v402 = vsub.f32 %v370, %v399
        %403 = vmatpush.msra.mxu0 0.0
        %404 = vmatpush.msra.mxu0 0.0
        %405 = vmatpush.msra.mxu0 0.0
        %406 = vmatpush.msra.mxu0 0.0
        %407 = vmatpush.msra.mxu0 0.0
        %408 = vmatpush.msra.mxu0 0.0
        %409 = vmatpush.msra.mxu0 0.0
        %410 = vmatpush.msra.mxu0 0.0
        %411 = vmatpush.msra.mxu0 0.0
        %412 = vmatpush.msra.mxu0 0.0
        %413 = vmatpush.msra.mxu0 0.0
        %414 = vmatpush.msra.mxu0 0.0
        %415 = vmatpush.msra.mxu0 0.0
        %416 = vmatpush.msra.mxu0 0.0
        %417 = vmatpush.msra.mxu0 %v341
        %418 = vmatpush.msra.mxu0 %v338
        %419 = vmatmul.f32.gmra.mxu0 %v344
        %v420 = vpop.f32.mrf.mxu0
        %v421 = vadd.f32 0.0, %v420
        %422 = vmatmul.f32.gmra.mxu0 %v347
        %v423 = vpop.f32.mrf.mxu0
        %v424 = vadd.f32 0.0, %v423
        %425 = vdwg.mxu0
        %426 = vmatpush.msra.mxu0 0.0
        %427 = vmatpush.msra.mxu0 0.0
        %428 = vmatpush.msra.mxu0 0.0
        %429 = vmatpush.msra.mxu0 0.0
        %430 = vmatpush.msra.mxu0 0.0
        %431 = vmatpush.msra.mxu0 0.0
        %432 = vmatpush.msra.mxu0 0.0
        %433 = vmatpush.msra.mxu0 0.0
        %434 = vmatpush.msra.mxu0 0.0
        %435 = vmatpush.msra.mxu0 0.0
        %436 = vmatpush.msra.mxu0 0.0
        %437 = vmatpush.msra.mxu0 0.0
        %438 = vmatpush.msra.mxu0 0.0
        %439 = vmatpush.msra.mxu0 0.0
        %440 = vmatpush.msra.mxu0 %v296
        %441 = vmatpush.msra.mxu0 %v295
        %442 = vmatmul.f32.gmra.mxu0 %v373
        %v443 = vpop.f32.mrf.mxu0
        %v444 = vadd.f32 %v421, %v443
        %445 = vmatmul.f32.gmra.mxu0 %v376
        %v446 = vpop.f32.mrf.mxu0
        %v447 = vadd.f32 %v424, %v446
        %448 = vdwg.mxu0
        %v449 = vmul.f32 %v401, %v401
        %v450 = vmul.f32 %v402, %v402
        %v451 = vmul.f32 %v444, %v444
        %v452 = vmul.f32 %v447, %v447
        %v453 = vadd.f32 %v449, %v451
        %v454 = vadd.f32 %v450, %v452
        %v455 = vrsqrt.pop %v453
        %v456 = vmul.f32 %v455, %v453
        %v457 = vmul.f32 %v456, %v455
        %v458 = vmul.f32 0.5, %v457
        %v459 = vsub.f32 1.5, %v458
        %v460 = vmul.f32 %v455, %v459
        %v461 = vmul.f32 %v453, %v460
        %vm462 = vcmp.eq.f32.partialorder %v453, inf
        %v463 = vsel %vm462, %v453, %v461
        %vm464 = vcmp.eq.f32.partialorder %v453, 0.0
        %v465 = vand.u32 %v453, 2147483648
        %v466 = vsel %vm464, %v465, %v463
        %v467 = vrsqrt.pop %v454
        %v468 = vmul.f32 %v467, %v454
        %v469 = vmul.f32 %v468, %v467
        %v470 = vmul.f32 0.5, %v469
        %v471 = vsub.f32 1.5, %v470
        %v472 = vmul.f32 %v467, %v471
        %v473 = vmul.f32 %v454, %v472
        %vm474 = vcmp.eq.f32.partialorder %v454, inf
        %v475 = vsel %vm474, %v454, %v473
        %vm476 = vcmp.eq.f32.partialorder %v454, 0.0
        %v477 = vand.u32 %v454, 2147483648
        %v478 = vsel %vm476, %v477, %v475
        %479 = vst.msk [vmem:[%s217] sm:$0xff] %vm236, %v466
        %480 = vst.msk [vmem:[%s217 + $0x8] sm:$0xff] %vm236, %v478
        %s481 = sand.u32 %s137, 1
        %s482 = scalar_lea.sflag [#allocation3], %s481
        %s483 = sand.u32 %s137, 1
        %s484 = smul.addr %s483, 16
        %s485 = scalar_lea.vmem [#allocation2], %s484
        // Predicated region
        $region41: #{_lambda_.37} parent=39 // pred_check
          %p486 = pneg %p147
        $region42: #{_lambda_.37} parent=39 // pred_check_branch
          %488 = sbr.rel (%p486) target = $region44
        $region43: #{_lambda_.37} parent=39 // pred_region
          %490 = vsyncadd %s482, 0
          %s491 = smul.addr %s19, 2
          %s492 = smul.addr %s491, 8
          %s493 = scalar_lea.hbm %s5, %s492
          %s494 = sshll.u32 %s485, 4
          %s495 = int_to_ptr.vmem [resolvable:$true] %s494
          %s496 = sshll.u32 %s493, 4
          %s497 = int_to_ptr.hbm [resolvable:$true] %s496
          %502 = dma.vmem_to_hbm [thread:$0]  %s495, 256, %s497, %s482, 128, 128, 8
        $region44: #{_lambda_.37} parent=39 // pred_fallthru
          _
      $region40: #{_lambda_.37} parent=5 // pred_fallthru
        _
      %p503 = scmp.le.s32.totalorder 2, %s14
      // Predicated region
      $region45: #{_lambda_.37} parent=5 // pred_check
        %p504 = pneg %p503
      $region46: #{_lambda_.37} parent=5 // pred_check_branch
        %506 = sbr.rel (%p504) target = $region48
      $region47: #{_lambda_.37} parent=5 // pred_region
        %s507 = ssub.s32 %s14, 2
        // Predicated region
        $region49: #{_lambda_.37} parent=47 // pred_check
          %p508 = pneg %p153
        $region50: #{_lambda_.37} parent=47 // pred_check_branch
          %510 = sbr.rel (%p508) target = $region52
        $region51: #{_lambda_.37} parent=47 // pred_region
          %s511 = sand.u32 %s138, 1
          %s512 = scalar_lea.sflag [#allocation3], %s511
          %s513 = sand.u32 %s138, 1
          %s514 = smul.addr %s513, 16
          %s515 = scalar_lea.vmem [#allocation2], %s514
          %517 = dma.done %s512, 256
        $region52: #{_lambda_.37} parent=47 // pred_fallthru
          _
      $region48: #{_lambda_.37} parent=5 // pred_fallthru
        _
    $region6: #{_lambda_.37} parent=1 // loop_footer
      %s18 = sadd.s32 1, %s14
    $region7: #{_lambda_.37} parent=1 // loop_footer_branch
      %13 = sbr.rel target = $region3
    $region8: #{_lambda_.37} parent=1 // loop_exit
      _
    %518 = vsyncpa [#allocation3], 1
    %s519 = scalar_lea.sflag [#allocation3], 1
    %520 = vsyncpa %s519, 1

// kernel: _lambda_.26
$region0: #{_lambda_.26}
  #allocation0 [shape = 'u32[]', space=smem, size = 0x4, offset = 0x4, fixed_abs, tag = 'smem constant byte address 0x4 - core index']
  #allocation1 [shape = 'u32[72,128]{1,0:T(1,128)}', space=vmem, size = 0x9000, scoped, tag = 'internal scratch']
  #allocation2 [shape = 'f32[8,16]{1,0:T(8,128)}', space=vmem, size = 0x1000, scoped, tag = 'scratch operand']
  #allocation3 [shape = 'f32[8,16]{1,0:T(8,128)}', space=vmem, size = 0x1000, scoped, tag = 'scratch operand']
  #allocation4 [shape = 'bf16[10,16,32]{2,1,0:T(8,128)(2,1)}', space=vmem, size = 0xa000, scoped, tag = 'scratch operand']
  %s0 = inlined_call_operand.vmem [shape: bf16[2,18,18,32], index: 0, kind: input, shape index: {}]
  %s1 = inlined_call_operand.vmem [shape: f32[9,32], index: 1, kind: input, shape index: {}]
  %s2 = inlined_call_operand.vmem [shape: f32[9,32], index: 2, kind: input, shape index: {}]
  %s3 = inlined_call_operand.vmem [shape: f32[2,1,1], index: 3, kind: input, shape index: {}]
  %s4 = inlined_call_operand.vmem [shape: f32[2,2,16,16], index: 4, kind: output, shape index: {}]
  %s5 = sld [smem:[#allocation0]]
  $region83: #{_lambda_.26} parent=0
    _
  %s7 = ssub.s32 1, %s5
  %s8 = scalar_select 0, %s7, %s5
  $region1: #{_lambda_.26} parent=0
    #allocation5 [shape = 'u8[16384]{0}', space=vmem, size = 0x4000, scoped, tag = 'output window, operand 0']
    loop: start=0, step=1, limit=6
    $region2: #{_lambda_.26} parent=1 // loop_pre_header
      _
    $region3: #{_lambda_.26} parent=1 // loop_header
      %s10 = sphi 0, %s14
      %p11 = scmp.ge.s32.totalorder %s10, 6
      %s17 = sphi 0, %s29
      %s18 = sphi 0, %s25
      %s19 = sphi 0, %s17
      %s20 = sphi 0, %s18
      %s21 = sphi 0, %s19
      %s22 = sphi 0, %s20
      %s32 = sphi 0, %s34
      %s35 = sphi 0, %s32
      %s36 = sphi 0, %s35
      %s52 = sphi 0, %s36
      %s56 = sphi 0, %s56
      %s58 = sphi 0, %s56
      %s59 = sphi 0, %s58
      %s73 = sphi 0, %s59
      %s77 = sphi 0, %s77
      %s79 = sphi 0, %s77
      %s80 = sphi 0, %s79
      %s94 = sphi 0, %s80
      %s98 = sphi 0, %s98
      %s100 = sphi 0, %s98
      %s101 = sphi 0, %s100
      %s115 = sphi 0, %s101
      %s123 = sphi 0, %s125
      %s126 = sphi 0, %s123
      %s127 = sphi 0, %s126
      %s143 = sphi 0, %s127
    $region4: #{_lambda_.26} parent=1 // loop_header_branch
      %13 = sbr.rel (%p11) target = $region8
    $region5: #{_lambda_.26} parent=1 // loop_body
      %s15 = ssub.s32 %s10, 1
      %s16 = ssub.s32 %s10, 2
      %s23 = sadd.s32 1, %s18
      %p24 = scmp.ge.s32.totalorder %s23, 2
      %s25 = scalar_select %p24, 0, %s23
      %s26 = sadd.s32 1, %s17
      %s27 = scalar_select %p24, %s26, %s17
      %p28 = scmp.ge.s32.totalorder %s27, 2
      %s29 = scalar_select %p28, 0, %s27
      %s30 = ssub.s32 %s17, %s29
      %p31 = scmp.eq.s32.totalorder %s30, 0
      %s33 = sadd.s32 %s32, 1
      %s34 = scalar_select %p31, %s32, %s33
      %p37 = pneg %p31
      %p38 = scmp.eq.s32.totalorder %s10, 3
      %p39 = por %p37, %p38
      %p40 = scmp.ne.s32.totalorder %s32, %s35
      %p41 = scmp.eq.s32.totalorder %s10, 0
      %p42 = por %p40, %p41
      %p43 = scmp.ne.s32.totalorder %s32, %s35
      %p44 = scmp.eq.s32.totalorder %s15, 3
      %p45 = por %p43, %p44
      %p46 = scmp.ne.s32.totalorder %s35, %s36
      %p47 = scmp.eq.s32.totalorder %s15, 0
      %p48 = por %p46, %p47
      %p49 = scmp.ne.s32.totalorder %s35, %s36
      %p50 = scmp.eq.s32.totalorder %s16, 3
      %p51 = por %p49, %p50
      %p53 = scmp.ne.s32.totalorder %s36, %s52
      %p54 = scmp.eq.s32.totalorder %s16, 0
      %p55 = por %p53, %p54
      %s57 = sadd.s32 %s56, 1
      %p60 = scmp.eq.s32.totalorder %s10, 3
      %p61 = scmp.ne.s32.totalorder %s56, %s58
      %p62 = scmp.eq.s32.totalorder %s10, 0
      %p63 = por %p61, %p62
      %p64 = scmp.ne.s32.totalorder %s56, %s58
      %p65 = scmp.eq.s32.totalorder %s15, 3
      %p66 = por %p64, %p65
      %p67 = scmp.ne.s32.totalorder %s58, %s59
      %p68 = scmp.eq.s32.totalorder %s15, 0
      %p69 = por %p67, %p68
      %p70 = scmp.ne.s32.totalorder %s58, %s59
      %p71 = scmp.eq.s32.totalorder %s16, 3
      %p72 = por %p70, %p71
      %p74 = scmp.ne.s32.totalorder %s59, %s73
      %p75 = scmp.eq.s32.totalorder %s16, 0
      %p76 = por %p74, %p75
      %s78 = sadd.s32 %s77, 1
      %p81 = scmp.eq.s32.totalorder %s10, 3
      %p82 = scmp.ne.s32.totalorder %s77, %s79
      %p83 = scmp.eq.s32.totalorder %s10, 0
      %p84 = por %p82, %p83
      %p85 = scmp.ne.s32.totalorder %s77, %s79
      %p86 = scmp.eq.s32.totalorder %s15, 3
      %p87 = por %p85, %p86
      %p88 = scmp.ne.s32.totalorder %s79, %s80
      %p89 = scmp.eq.s32.totalorder %s15, 0
      %p90 = por %p88, %p89
      %p91 = scmp.ne.s32.totalorder %s79, %s80
      %p92 = scmp.eq.s32.totalorder %s16, 3
      %p93 = por %p91, %p92
      %p95 = scmp.ne.s32.totalorder %s80, %s94
      %p96 = scmp.eq.s32.totalorder %s16, 0
      %p97 = por %p95, %p96
      %s99 = sadd.s32 %s98, 1
      %p102 = scmp.eq.s32.totalorder %s10, 3
      %p103 = scmp.ne.s32.totalorder %s98, %s100
      %p104 = scmp.eq.s32.totalorder %s10, 0
      %p105 = por %p103, %p104
      %p106 = scmp.ne.s32.totalorder %s98, %s100
      %p107 = scmp.eq.s32.totalorder %s15, 3
      %p108 = por %p106, %p107
      %p109 = scmp.ne.s32.totalorder %s100, %s101
      %p110 = scmp.eq.s32.totalorder %s15, 0
      %p111 = por %p109, %p110
      %p112 = scmp.ne.s32.totalorder %s100, %s101
      %p113 = scmp.eq.s32.totalorder %s16, 3
      %p114 = por %p112, %p113
      %p116 = scmp.ne.s32.totalorder %s101, %s115
      %p117 = scmp.eq.s32.totalorder %s16, 0
      %p118 = por %p116, %p117
      %s119 = ssub.s32 %s17, %s29
      %s120 = ssub.s32 %s18, %s25
      %s121 = sor.u32 %s119, %s120
      %p122 = scmp.eq.s32.totalorder %s121, 0
      %s124 = sadd.s32 %s123, 1
      %s125 = scalar_select %p122, %s123, %s124
      %p128 = pneg %p122
      %p129 = scmp.eq.s32.totalorder %s10, 3
      %p130 = por %p128, %p129
      %p131 = scmp.ne.s32.totalorder %s123, %s126
      %p132 = scmp.eq.s32.totalorder %s10, 0
      %p133 = por %p131, %p132
      %p134 = scmp.ne.s32.totalorder %s123, %s126
      %p135 = scmp.eq.s32.totalorder %s15, 3
      %p136 = por %p134, %p135
      %p137 = scmp.ne.s32.totalorder %s126, %s127
      %p138 = scmp.eq.s32.totalorder %s15, 0
      %p139 = por %p137, %p138
      %p140 = scmp.ne.s32.totalorder %s126, %s127
      %p141 = scmp.eq.s32.totalorder %s16, 3
      %p142 = por %p140, %p141
      %p144 = scmp.ne.s32.totalorder %s127, %s143
      %p145 = scmp.eq.s32.totalorder %s16, 0
      %p146 = por %p144, %p145
      %p147 = scmp.le.s32.totalorder 1, %s10
      %p148 = scmp.lt.s32.totalorder %s10, 5
      %p149 = pnand %p147, %p148
      %p150 = pneg %p149
      // Predicated region
      $region9: #{_lambda_.26} parent=5 // pred_check
        _
      $region10: #{_lambda_.26} parent=5 // pred_check_branch
        %152 = sbr.rel (%p149) target = $region12
      $region11: #{_lambda_.26} parent=5 // pred_region
        %s153 = ssub.s32 %s10, 1
        // Predicated region
        $region13: #{_lambda_.26} parent=11 // pred_check
          %p154 = pneg %p69
        $region14: #{_lambda_.26} parent=11 // pred_check_branch
          %156 = sbr.rel (%p154) target = $region16
        $region15: #{_lambda_.26} parent=11 // pred_region
          _
        $region16: #{_lambda_.26} parent=11 // pred_fallthru
          _
        // Predicated region
        $region17: #{_lambda_.26} parent=11 // pred_check
          %p157 = pneg %p90
        $region18: #{_lambda_.26} parent=11 // pred_check_branch
          %159 = sbr.rel (%p157) target = $region20
        $region19: #{_lambda_.26} parent=11 // pred_region
          _
        $region20: #{_lambda_.26} parent=11 // pred_fallthru
          _
        // Predicated region
        $region21: #{_lambda_.26} parent=11 // pred_check
          %p160 = pneg %p111
        $region22: #{_lambda_.26} parent=11 // pred_check_branch
          %162 = sbr.rel (%p160) target = $region24
        $region23: #{_lambda_.26} parent=11 // pred_region
          _
        $region24: #{_lambda_.26} parent=11 // pred_fallthru
          _
      $region12: #{_lambda_.26} parent=5 // pred_fallthru
        _
      %p163 = scmp.lt.s32.totalorder %s10, 4
      // Predicated region
      $region25: #{_lambda_.26} parent=5 // pred_check
        %p164 = pneg %p163
      $region26: #{_lambda_.26} parent=5 // pred_check_branch
        %166 = sbr.rel (%p164) target = $region28
      $region27: #{_lambda_.26} parent=5 // pred_region
        // Predicated region
        $region29: #{_lambda_.26} parent=27 // pred_check
          %p167 = pneg %p42
        $region30: #{_lambda_.26} parent=27 // pred_check_branch
          %169 = sbr.rel (%p167) target = $region32
        $region31: #{_lambda_.26} parent=27 // pred_region
          %p170 = scmp.lt.s32.totalorder %s17, 1
          %s171 = scalar_select %p170, %s17, 1
          %s172 = smul.addr %s171, 54
          %s173 = smul.addr %s172, 4
          %s174 = scalar_lea.vmem %s0, %s173
        $region32: #{_lambda_.26} parent=27 // pred_fallthru
          _
      $region28: #{_lambda_.26} parent=5 // pred_fallthru
        _
      %p175 = scmp.le.s32.totalorder 1, %s10
      %p176 = scmp.lt.s32.totalorder %s10, 5
      %p177 = pnand %p175, %p176
      %p178 = pneg %p177
      // Predicated region
      $region33: #{_lambda_.26} parent=5 // pred_check
        _
      $region34: #{_lambda_.26} parent=5 // pred_check_branch
        %180 = sbr.rel (%p177) target = $region36
      $region35: #{_lambda_.26} parent=5 // pred_region
        %s181 = ssub.s32 %s10, 1
        %p182 = scmp.lt.s32.totalorder %s19, 1
        %s183 = scalar_select %p182, %s19, 1
        %s184 = smul.addr %s183, 54
        %s185 = smul.addr %s184, 4
        %s186 = scalar_lea.vmem %s0, %s185
        %p187 = pneg %p48
        %p188 = pneg %p45
        %p189 = pneg %p69
        %p190 = pneg %p66
        %p191 = pneg %p90
        %p192 = pneg %p87
        %p193 = pneg %p111
        %p194 = pneg %p108
        %p195 = pneg %p139
        %p196 = pneg %p136
        %s197 = sand.u32 %s126, 1
        %s198 = sand.u32 %s126, 1
        %s199 = smul.addr %s198, 16
        %s200 = scalar_lea.vmem [#allocation5], %s199
        %p201 = scmp.lt.s32.totalorder %s19, 1
        %s202 = scalar_select %p201, %s19, 1
        %s203 = smul.addr %s202, 54
        %s204 = smul.addr %s203, 4
        %s205 = scalar_lea.vmem %s0, %s204
        %s206 = smul.u32 %s20, 8
        %v207 = vld [vmem:[%s3] sm:$0x1]
        %v209 = vperm.slane %v207, 0
        %210 = vset.pattern.permute.xlu0 0
        %211 = vperm.xlu0 %210, %v209
        %v212 = vpop.permute.xlu0 %211
        %vm214 = vcmask 130048
        %215 = vst.msk [vmem:[#allocation2] sm:$0xff] %vm214, %v212
        %s216 = scalar_lea.vmem %s3, 1
        %v217 = vld [vmem:[%s216] sm:$0x1]
        %v219 = vperm.slane %v217, 0
        %220 = vset.pattern.permute.xlu0 0
        %221 = vperm.xlu0 %220, %v219
        %v222 = vpop.permute.xlu0 %221
        %224 = vst.msk [vmem:[#allocation3] sm:$0xff] %vm214, %v222
        %s225 = smul.u32 %s206, 3
        %s226 = smul.addr %s225, 4
        %s227 = scalar_lea.vmem %s205, %s226
        %v228 = vld [vmem:[%s227] sm:$0xf]
        %v229 = vld [vmem:[%s227 + $0x4] sm:$0xf]
        %v230 = vld [vmem:[%s227 + $0xc] sm:$0xf]
        %v231 = vld [vmem:[%s227 + $0x10] sm:$0xf]
        %v232 = vld [vmem:[%s227 + $0x18] sm:$0xf]
        %v233 = vld [vmem:[%s227 + $0x1c] sm:$0xf]
        %v234 = vld [vmem:[%s227 + $0x24] sm:$0xf]
        %v235 = vld [vmem:[%s227 + $0x28] sm:$0xf]
        %v236 = vld [vmem:[%s227 + $0x30] sm:$0xf]
        %v237 = vld [vmem:[%s227 + $0x34] sm:$0xf]
        %v238 = vld [vmem:[%s227 + $0x3c] sm:$0xf]
        %v239 = vld [vmem:[%s227 + $0x40] sm:$0xf]
        %v240 = vld [vmem:[%s227 + $0x48] sm:$0xf]
        %v241 = vld [vmem:[%s227 + $0x4c] sm:$0xf]
        %v242 = vld [vmem:[%s227 + $0x54] sm:$0xf]
        %v243 = vld [vmem:[%s227 + $0x58] sm:$0xf]
        %v244 = vld [vmem:[%s227 + $0x60] sm:$0xf]
        %v245 = vld [vmem:[%s227 + $0x64] sm:$0xf]
        %v246 = vld [vmem:[%s227 + $0x6c] sm:$0xf]
        %v247 = vld [vmem:[%s227 + $0x70] sm:$0xf]
        %vm248 = vcmask 257024
        %249 = vst.msk [vmem:[#allocation4] sm:$0xf] %vm248, %v228
        %250 = vst.msk [vmem:[#allocation4 + $0x4] sm:$0xf] %vm248, %v229
        %251 = vst.msk [vmem:[#allocation4 + $0x8] sm:$0xf] %vm248, %v230
        %252 = vst.msk [vmem:[#allocation4 + $0xc] sm:$0xf] %vm248, %v231
        %253 = vst.msk [vmem:[#allocation4 + $0x10] sm:$0xf] %vm248, %v232
        %254 = vst.msk [vmem:[#allocation4 + $0x14] sm:$0xf] %vm248, %v233
        %255 = vst.msk [vmem:[#allocation4 + $0x18] sm:$0xf] %vm248, %v234
        %256 = vst.msk [vmem:[#allocation4 + $0x1c] sm:$0xf] %vm248, %v235
        %257 = vst.msk [vmem:[#allocation4 + $0x20] sm:$0xf] %vm248, %v236
        %258 = vst.msk [vmem:[#allocation4 + $0x24] sm:$0xf] %vm248, %v237
        %259 = vst.msk [vmem:[#allocation4 + $0x28] sm:$0xf] %vm248, %v238
        %260 = vst.msk [vmem:[#allocation4 + $0x2c] sm:$0xf] %vm248, %v239
        %261 = vst.msk [vmem:[#allocation4 + $0x30] sm:$0xf] %vm248, %v240
        %262 = vst.msk [vmem:[#allocation4 + $0x34] sm:$0xf] %vm248, %v241
        %263 = vst.msk [vmem:[#allocation4 + $0x38] sm:$0xf] %vm248, %v242
        %264 = vst.msk [vmem:[#allocation4 + $0x3c] sm:$0xf] %vm248, %v243
        %265 = vst.msk [vmem:[#allocation4 + $0x40] sm:$0xf] %vm248, %v244
        %266 = vst.msk [vmem:[#allocation4 + $0x44] sm:$0xf] %vm248, %v245
        %267 = vst.msk [vmem:[#allocation4 + $0x48] sm:$0xf] %vm248, %v246
        %268 = vst.msk [vmem:[#allocation4 + $0x4c] sm:$0xf] %vm248, %v247
        %v269 = vld [vmem:[#allocation4] sm:$0xf]
        %v270 = vld [vmem:[#allocation4 + $0x4] sm:$0xf]
        %v271 = vld [vmem:[#allocation4 + $0x8] sm:$0xf]
        %v272 = vld [vmem:[#allocation4 + $0xc] sm:$0xf]
        %v273 = vld [vmem:[#allocation4 + $0x10] sm:$0xf]
        %v274 = vld [vmem:[#allocation4 + $0x14] sm:$0xf]
        %v275 = vld [vmem:[#allocation4 + $0x18] sm:$0xf]
        %v276 = vld [vmem:[#allocation4 + $0x1c] sm:$0xf]
        %v277 = vld [vmem:[#allocation4 + $0x20] sm:$0xf]
        %v278 = vld [vmem:[#allocation4 + $0x24] sm:$0xf]
        %v279 = vld [vmem:[#allocation4 + $0x28] sm:$0xf]
        %v280 = vld [vmem:[#allocation4 + $0x2c] sm:$0xf]
        %v281 = vld [vmem:[#allocation4 + $0x30] sm:$0xf]
        %v282 = vld [vmem:[#allocation4 + $0x34] sm:$0xf]
        %v283 = vld [vmem:[#allocation4 + $0x38] sm:$0xf]
        %v284 = vld [vmem:[#allocation4 + $0x3c] sm:$0xf]
        %v285 = vunpack.c.l.bf16 %v269
        %v286 = vunpack.c.l.bf16 %v270
        %v287 = vunpack.c.l.bf16 %v271
        %v288 = vunpack.c.l.bf16 %v272
        %v289 = vunpack.c.l.bf16 %v273
        %v290 = vunpack.c.l.bf16 %v274
        %v291 = vunpack.c.l.bf16 %v275
        %v292 = vunpack.c.l.bf16 %v276
        %v293 = vunpack.c.l.bf16 %v277
        %v294 = vunpack.c.l.bf16 %v278
        %v295 = vunpack.c.l.bf16 %v279
        %v296 = vunpack.c.l.bf16 %v280
        %v297 = vunpack.c.l.bf16 %v281
        %v298 = vunpack.c.l.bf16 %v282
        %v299 = vunpack.c.l.bf16 %v283
        %v300 = vunpack.c.l.bf16 %v284
        %v301 = vld [vmem:[#allocation2] sm:$0xff]
        %v302 = vld [vmem:[%s1] sm:$0x1]
        %v303 = vperm.slane %v302, 0
        %v304 = vmul.f32 %v285, %v303
        %v305 = vmul.f32 %v286, %v303
        %v306 = vmul.f32 %v287, %v303
        %v307 = vmul.f32 %v288, %v303
        %v308 = vmul.f32 %v289, %v303
        %v309 = vmul.f32 %v290, %v303
        %v310 = vmul.f32 %v291, %v303
        %v311 = vmul.f32 %v292, %v303
        %v312 = vmul.f32 %v293, %v303
        %v313 = vmul.f32 %v294, %v303
        %v314 = vmul.f32 %v295, %v303
        %v315 = vmul.f32 %v296, %v303
        %v316 = vmul.f32 %v297, %v303
        %v317 = vmul.f32 %v298, %v303
        %v318 = vmul.f32 %v299, %v303
        %v319 = vmul.f32 %v300, %v303
        %vm320 = vcmask 261120
        %v321 = vsel %vm320, %v304, 0.0
        %322 = vadd.xlane.f32.xlu0 %v321
        %v323 = vpop.xlane.xlu0 %322
        %v324 = vsel %vm320, %v305, 0.0
        %325 = vadd.xlane.f32.xlu0 %v324
        %v326 = vpop.xlane.xlu0 %325
        %v327 = vsel %vm320, %v306, 0.0
        %328 = vadd.xlane.f32.xlu0 %v327
        %v329 = vpop.xlane.xlu0 %328
        %v330 = vsel %vm320, %v307, 0.0
        %331 = vadd.xlane.f32.xlu0 %v330
        %v332 = vpop.xlane.xlu0 %331
        %v333 = vsel %vm320, %v308, 0.0
        %334 = vadd.xlane.f32.xlu0 %v333
        %v335 = vpop.xlane.xlu0 %334
        %v336 = vsel %vm320, %v309, 0.0
        %337 = vadd.xlane.f32.xlu0 %v336
        %v338 = vpop.xlane.xlu0 %337
        %v339 = vsel %vm320, %v310, 0.0
        %340 = vadd.xlane.f32.xlu0 %v339
        %v341 = vpop.xlane.xlu0 %340
        %v342 = vsel %vm320, %v311, 0.0
        %343 = vadd.xlane.f32.xlu0 %v342
        %v344 = vpop.xlane.xlu0 %343
        %v345 = vsel %vm320, %v312, 0.0
        %346 = vadd.xlane.f32.xlu0 %v345
        %v347 = vpop.xlane.xlu0 %346
        %v348 = vsel %vm320, %v313, 0.0
        %349 = vadd.xlane.f32.xlu0 %v348
        %v350 = vpop.xlane.xlu0 %349
        %v351 = vsel %vm320, %v314, 0.0
        %352 = vadd.xlane.f32.xlu0 %v351
        %v353 = vpop.xlane.xlu0 %352
        %v354 = vsel %vm320, %v315, 0.0
        %355 = vadd.xlane.f32.xlu0 %v354
        %v356 = vpop.xlane.xlu0 %355
        %v357 = vsel %vm320, %v316, 0.0
        %358 = vadd.xlane.f32.xlu0 %v357
        %v359 = vpop.xlane.xlu0 %358
        %v360 = vsel %vm320, %v317, 0.0
        %361 = vadd.xlane.f32.xlu0 %v360
        %v362 = vpop.xlane.xlu0 %361
        %v363 = vsel %vm320, %v318, 0.0
        %364 = vadd.xlane.f32.xlu0 %v363
        %v365 = vpop.xlane.xlu0 %364
        %v366 = vsel %vm320, %v319, 0.0
        %367 = vadd.xlane.f32.xlu0 %v366
        %v368 = vpop.xlane.xlu0 %367
        %v385 = vlaneseq
        %v386 = vand.u32 %v385, 127
        %v387 = vperm.slane %v323, %v386
        %v388 = vadd.s32 %v386, 4294967288
        %v389 = vperm.slane %v326, %v388
        %vm390 = vcmask 130112
        %v391 = vsel %vm390, %v389, %v387
        %v392 = vperm.slane %v329, %v386
        %v393 = vperm.slane %v332, %v388
        %v394 = vsel %vm390, %v393, %v392
        %v395 = vperm.slane %v335, %v386
        %v396 = vperm.slane %v338, %v388
        %v397 = vsel %vm390, %v396, %v395
        %v398 = vperm.slane %v341, %v386
        %v399 = vperm.slane %v344, %v388
        %v400 = vsel %vm390, %v399, %v398
        %v401 = vperm.slane %v347, %v386
        %v402 = vperm.slane %v350, %v388
        %v403 = vsel %vm390, %v402, %v401
        %v404 = vperm.slane %v353, %v386
        %v405 = vperm.slane %v356, %v388
        %v406 = vsel %vm390, %v405, %v404
        %v407 = vperm.slane %v359, %v386
        %v408 = vperm.slane %v362, %v388
        %v409 = vsel %vm390, %v408, %v407
        %v410 = vperm.slane %v365, %v386
        %v411 = vperm.slane %v368, %v388
        %v412 = vsel %vm390, %v411, %v410
        %vm413 = vcmask 1041409
        %v414 = vsel %vm413, %v394, %v391
        %vm415 = vcmask 1042434
        %v416 = vsel %vm415, %v397, %v414
        %vm417 = vcmask 1043459
        %v418 = vsel %vm417, %v400, %v416
        %vm419 = vcmask 1044484
        %v420 = vsel %vm419, %v403, %v418
        %vm421 = vcmask 1045509
        %v422 = vsel %vm421, %v406, %v420
        %vm423 = vcmask 1046534
        %v424 = vsel %vm423, %v409, %v422
        %vm425 = vcmask 1047559
        %v426 = vsel %vm425, %v412, %v424
        %v428 = vadd.f32 %v301, %v426
        %429 = vst.msk [vmem:[#allocation2] sm:$0xff] %vm214, %v428
        %v430 = vld [vmem:[#allocation3] sm:$0xff]
        %v431 = vld [vmem:[%s2] sm:$0x1]
        %v432 = vperm.slane %v431, 0
        %v433 = vmul.f32 %v285, %v432
        %v434 = vmul.f32 %v286, %v432
        %v435 = vmul.f32 %v287, %v432
        %v436 = vmul.f32 %v288, %v432
        %v437 = vmul.f32 %v289, %v432
        %v438 = vmul.f32 %v290, %v432
        %v439 = vmul.f32 %v291, %v432
        %v440 = vmul.f32 %v292, %v432
        %v441 = vmul.f32 %v293, %v432
        %v442 = vmul.f32 %v294, %v432
        %v443 = vmul.f32 %v295, %v432
        %v444 = vmul.f32 %v296, %v432
        %v445 = vmul.f32 %v297, %v432
        %v446 = vmul.f32 %v298, %v432
        %v447 = vmul.f32 %v299, %v432
        %v448 = vmul.f32 %v300, %v432
        %v449 = vsel %vm320, %v433, 0.0
        %450 = vadd.xlane.f32.xlu0 %v449
        %v451 = vpop.xlane.xlu0 %450
        %v452 = vsel %vm320, %v434, 0.0
        %453 = vadd.xlane.f32.xlu0 %v452
        %v454 = vpop.xlane.xlu0 %453
        %v455 = vsel %vm320, %v435, 0.0
        %456 = vadd.xlane.f32.xlu0 %v455
        %v457 = vpop.xlane.xlu0 %456
        %v458 = vsel %vm320, %v436, 0.0
        %459 = vadd.xlane.f32.xlu0 %v458
        %v460 = vpop.xlane.xlu0 %459
        %v461 = vsel %vm320, %v437, 0.0
        %462 = vadd.xlane.f32.xlu0 %v461
        %v463 = vpop.xlane.xlu0 %462
        %v464 = vsel %vm320, %v438, 0.0
        %465 = vadd.xlane.f32.xlu0 %v464
        %v466 = vpop.xlane.xlu0 %465
        %v467 = vsel %vm320, %v439, 0.0
        %468 = vadd.xlane.f32.xlu0 %v467
        %v469 = vpop.xlane.xlu0 %468
        %v470 = vsel %vm320, %v440, 0.0
        %471 = vadd.xlane.f32.xlu0 %v470
        %v472 = vpop.xlane.xlu0 %471
        %v473 = vsel %vm320, %v441, 0.0
        %474 = vadd.xlane.f32.xlu0 %v473
        %v475 = vpop.xlane.xlu0 %474
        %v476 = vsel %vm320, %v442, 0.0
        %477 = vadd.xlane.f32.xlu0 %v476
        %v478 = vpop.xlane.xlu0 %477
        %v479 = vsel %vm320, %v443, 0.0
        %480 = vadd.xlane.f32.xlu0 %v479
        %v481 = vpop.xlane.xlu0 %480
        %v482 = vsel %vm320, %v444, 0.0
        %483 = vadd.xlane.f32.xlu0 %v482
        %v484 = vpop.xlane.xlu0 %483
        %v485 = vsel %vm320, %v445, 0.0
        %486 = vadd.xlane.f32.xlu0 %v485
        %v487 = vpop.xlane.xlu0 %486
        %v488 = vsel %vm320, %v446, 0.0
        %489 = vadd.xlane.f32.xlu0 %v488
        %v490 = vpop.xlane.xlu0 %489
        %v491 = vsel %vm320, %v447, 0.0
        %492 = vadd.xlane.f32.xlu0 %v491
        %v493 = vpop.xlane.xlu0 %492
        %v494 = vsel %vm320, %v448, 0.0
        %495 = vadd.xlane.f32.xlu0 %v494
        %v496 = vpop.xlane.xlu0 %495
        %v513 = vperm.slane %v451, %v386
        %v514 = vperm.slane %v454, %v388
        %v515 = vsel %vm390, %v514, %v513
        %v516 = vperm.slane %v457, %v386
        %v517 = vperm.slane %v460, %v388
        %v518 = vsel %vm390, %v517, %v516
        %v519 = vperm.slane %v463, %v386
        %v520 = vperm.slane %v466, %v388
        %v521 = vsel %vm390, %v520, %v519
        %v522 = vperm.slane %v469, %v386
        %v523 = vperm.slane %v472, %v388
        %v524 = vsel %vm390, %v523, %v522
        %v525 = vperm.slane %v475, %v386
        %v526 = vperm.slane %v478, %v388
        %v527 = vsel %vm390, %v526, %v525
        %v528 = vperm.slane %v481, %v386
        %v529 = vperm.slane %v484, %v388
        %v530 = vsel %vm390, %v529, %v528
        %v531 = vperm.slane %v487, %v386
        %v532 = vperm.slane %v490, %v388
        %v533 = vsel %vm390, %v532, %v531
        %v534 = vperm.slane %v493, %v386
        %v535 = vperm.slane %v496, %v388
        %v536 = vsel %vm390, %v535, %v534
        %v537 = vsel %vm413, %v518, %v515
        %v538 = vsel %vm415, %v521, %v537
        %v539 = vsel %vm417, %v524, %v538
        %v540 = vsel %vm419, %v527, %v539
        %v541 = vsel %vm421, %v530, %v540
        %v542 = vsel %vm423, %v533, %v541
        %v543 = vsel %vm425, %v536, %v542
        %v545 = vadd.f32 %v430, %v543
        %546 = vst.msk [vmem:[#allocation3] sm:$0xff] %vm214, %v545
        %s547 = scalar_lea.vmem [#allocation4], 8
        %v548 = vld [vmem:[%s547] sm:$0xf]
        %v549 = vld [vmem:[%s547 + $0x4] sm:$0xf]
        %v550 = vld [vmem:[%s547 + $0x8] sm:$0xf]
        %v551 = vld [vmem:[%s547 + $0xc] sm:$0xf]
        %v552 = vld [vmem:[%s547 + $0x10] sm:$0xf]
        %v553 = vld [vmem:[%s547 + $0x14] sm:$0xf]
        %v554 = vld [vmem:[%s547 + $0x18] sm:$0xf]
        %v555 = vld [vmem:[%s547 + $0x1c] sm:$0xf]
        %v556 = vld [vmem:[%s547 + $0x20] sm:$0xf]
        %v557 = vld [vmem:[%s547 + $0x24] sm:$0xf]
        %v558 = vld [vmem:[%s547 + $0x28] sm:$0xf]
        %v559 = vld [vmem:[%s547 + $0x2c] sm:$0xf]
        %v560 = vld [vmem:[%s547 + $0x30] sm:$0xf]
        %v561 = vld [vmem:[%s547 + $0x34] sm:$0xf]
        %v562 = vld [vmem:[%s547 + $0x38] sm:$0xf]
        %v563 = vld [vmem:[%s547 + $0x3c] sm:$0xf]
        %v564 = vunpack.c.l.bf16 %v548
        %v565 = vunpack.c.l.bf16 %v549
        %v566 = vunpack.c.l.bf16 %v550
        %v567 = vunpack.c.l.bf16 %v551
        %v568 = vunpack.c.l.bf16 %v552
        %v569 = vunpack.c.l.bf16 %v553
        %v570 = vunpack.c.l.bf16 %v554
        %v571 = vunpack.c.l.bf16 %v555
        %v572 = vunpack.c.l.bf16 %v556
        %v573 = vunpack.c.l.bf16 %v557
        %v574 = vunpack.c.l.bf16 %v558
        %v575 = vunpack.c.l.bf16 %v559
        %v576 = vunpack.c.l.bf16 %v560
        %v577 = vunpack.c.l.bf16 %v561
        %v578 = vunpack.c.l.bf16 %v562
        %v579 = vunpack.c.l.bf16 %v563
        %v580 = vld [vmem:[#allocation2] sm:$0xff]
        %v581 = vld [vmem:[%s1 + $0x3] sm:$0x1]
        %v582 = vperm.slane %v581, 0
        %v583 = vmul.f32 %v564, %v582
        %v584 = vmul.f32 %v565, %v582
        %v585 = vmul.f32 %v566, %v582
        %v586 = vmul.f32 %v567, %v582
        %v587 = vmul.f32 %v568, %v582
        %v588 = vmul.f32 %v569, %v582
        %v589 = vmul.f32 %v570, %v582
        %v590 = vmul.f32 %v571, %v582
        %v591 = vmul.f32 %v572, %v582
        %v592 = vmul.f32 %v573, %v582
        %v593 = vmul.f32 %v574, %v582
        %v594 = vmul.f32 %v575, %v582
        %v595 = vmul.f32 %v576, %v582
        %v596 = vmul.f32 %v577, %v582
        %v597 = vmul.f32 %v578, %v582
        %v598 = vmul.f32 %v579, %v582
        %v599 = vsel %vm320, %v583, 0.0
        %600 = vadd.xlane.f32.xlu0 %v599
        %v601 = vpop.xlane.xlu0 %600
        %v602 = vsel %vm320, %v584, 0.0
        %603 = vadd.xlane.f32.xlu0 %v602
        %v604 = vpop.xlane.xlu0 %603
        %v605 = vsel %vm320, %v585, 0.0
        %606 = vadd.xlane.f32.xlu0 %v605
        %v607 = vpop.xlane.xlu0 %606
        %v608 = vsel %vm320, %v586, 0.0
        %609 = vadd.xlane.f32.xlu0 %v608
        %v610 = vpop.xlane.xlu0 %609
        %v611 = vsel %vm320, %v587, 0.0
        %612 = vadd.xlane.f32.xlu0 %v611
        %v613 = vpop.xlane.xlu0 %612
        %v614 = vsel %vm320, %v588, 0.0
        %615 = vadd.xlane.f32.xlu0 %v614
        %v616 = vpop.xlane.xlu0 %615
        %v617 = vsel %vm320, %v589, 0.0
        %618 = vadd.xlane.f32.xlu0 %v617
        %v619 = vpop.xlane.xlu0 %618
        %v620 = vsel %vm320, %v590, 0.0
        %621 = vadd.xlane.f32.xlu0 %v620
        %v622 = vpop.xlane.xlu0 %621
        %v623 = vsel %vm320, %v591, 0.0
        %624 = vadd.xlane.f32.xlu0 %v623
        %v625 = vpop.xlane.xlu0 %624
        %v626 = vsel %vm320, %v592, 0.0
        %627 = vadd.xlane.f32.xlu0 %v626
        %v628 = vpop.xlane.xlu0 %627
        %v629 = vsel %vm320, %v593, 0.0
        %630 = vadd.xlane.f32.xlu0 %v629
        %v631 = vpop.xlane.xlu0 %630
        %v632 = vsel %vm320, %v594, 0.0
        %633 = vadd.xlane.f32.xlu0 %v632
        %v634 = vpop.xlane.xlu0 %633
        %v635 = vsel %vm320, %v595, 0.0
        %636 = vadd.xlane.f32.xlu0 %v635
        %v637 = vpop.xlane.xlu0 %636
        %v638 = vsel %vm320, %v596, 0.0
        %639 = vadd.xlane.f32.xlu0 %v638
        %v640 = vpop.xlane.xlu0 %639
        %v641 = vsel %vm320, %v597, 0.0
        %642 = vadd.xlane.f32.xlu0 %v641
        %v643 = vpop.xlane.xlu0 %642
        %v644 = vsel %vm320, %v598, 0.0
        %645 = vadd.xlane.f32.xlu0 %v644
        %v646 = vpop.xlane.xlu0 %645
        %v663 = vperm.slane %v601, %v386
        %v664 = vperm.slane %v604, %v388
        %v665 = vsel %vm390, %v664, %v663
        %v666 = vperm.slane %v607, %v386
        %v667 = vperm.slane %v610, %v388
        %v668 = vsel %vm390, %v667, %v666
        %v669 = vperm.slane %v613, %v386
        %v670 = vperm.slane %v616, %v388
        %v671 = vsel %vm390, %v670, %v669
        %v672 = vperm.slane %v619, %v386
        %v673 = vperm.slane %v622, %v388
        %v674 = vsel %vm390, %v673, %v672
        %v675 = vperm.slane %v625, %v386
        %v676 = vperm.slane %v628, %v388
        %v677 = vsel %vm390, %v676, %v675
        %v678 = vperm.slane %v631, %v386
        %v679 = vperm.slane %v634, %v388
        %v680 = vsel %vm390, %v679, %v678
        %v681 = vperm.slane %v637, %v386
        %v682 = vperm.slane %v640, %v388
        %v683 = vsel %vm390, %v682, %v681
        %v684 = vperm.slane %v643, %v386
        %v685 = vperm.slane %v646, %v388
        %v686 = vsel %vm390, %v685, %v684
        %v687 = vsel %vm413, %v668, %v665
        %v688 = vsel %vm415, %v671, %v687
        %v689 = vsel %vm417, %v674, %v688
        %v690 = vsel %vm419, %v677, %v689
        %v691 = vsel %vm421, %v680, %v690
        %v692 = vsel %vm423, %v683, %v691
        %v693 = vsel %vm425, %v686, %v692
        %v695 = vadd.f32 %v580, %v693
        %696 = vst.msk [vmem:[#allocation2] sm:$0xff] %vm214, %v695
        %v697 = vld [vmem:[#allocation3] sm:$0xff]
        %v698 = vld [vmem:[%s2 + $0x3] sm:$0x1]
        %v699 = vperm.slane %v698, 0
        %v700 = vmul.f32 %v564, %v699
        %v701 = vmul.f32 %v565, %v699
        %v702 = vmul.f32 %v566, %v699
        %v703 = vmul.f32 %v567, %v699
        %v704 = vmul.f32 %v568, %v699
        %v705 = vmul.f32 %v569, %v699
        %v706 = vmul.f32 %v570, %v699
        %v707 = vmul.f32 %v571, %v699
        %v708 = vmul.f32 %v572, %v699
        %v709 = vmul.f32 %v573, %v699
        %v710 = vmul.f32 %v574, %v699
        %v711 = vmul.f32 %v575, %v699
        %v712 = vmul.f32 %v576, %v699
        %v713 = vmul.f32 %v577, %v699
        %v714 = vmul.f32 %v578, %v699
        %v715 = vmul.f32 %v579, %v699
        %v716 = vsel %vm320, %v700, 0.0
        %717 = vadd.xlane.f32.xlu0 %v716
        %v718 = vpop.xlane.xlu0 %717
        %v719 = vsel %vm320, %v701, 0.0
        %720 = vadd.xlane.f32.xlu0 %v719
        %v721 = vpop.xlane.xlu0 %720
        %v722 = vsel %vm320, %v702, 0.0
        %723 = vadd.xlane.f32.xlu0 %v722
        %v724 = vpop.xlane.xlu0 %723
        %v725 = vsel %vm320, %v703, 0.0
        %726 = vadd.xlane.f32.xlu0 %v725
        %v727 = vpop.xlane.xlu0 %726
        %v728 = vsel %vm320, %v704, 0.0
        %729 = vadd.xlane.f32.xlu0 %v728
        %v730 = vpop.xlane.xlu0 %729
        %v731 = vsel %vm320, %v705, 0.0
        %732 = vadd.xlane.f32.xlu0 %v731
        %v733 = vpop.xlane.xlu0 %732
        %v734 = vsel %vm320, %v706, 0.0
        %735 = vadd.xlane.f32.xlu0 %v734
        %v736 = vpop.xlane.xlu0 %735
        %v737 = vsel %vm320, %v707, 0.0
        %738 = vadd.xlane.f32.xlu0 %v737
        %v739 = vpop.xlane.xlu0 %738
        %v740 = vsel %vm320, %v708, 0.0
        %741 = vadd.xlane.f32.xlu0 %v740
        %v742 = vpop.xlane.xlu0 %741
        %v743 = vsel %vm320, %v709, 0.0
        %744 = vadd.xlane.f32.xlu0 %v743
        %v745 = vpop.xlane.xlu0 %744
        %v746 = vsel %vm320, %v710, 0.0
        %747 = vadd.xlane.f32.xlu0 %v746
        %v748 = vpop.xlane.xlu0 %747
        %v749 = vsel %vm320, %v711, 0.0
        %750 = vadd.xlane.f32.xlu0 %v749
        %v751 = vpop.xlane.xlu0 %750
        %v752 = vsel %vm320, %v712, 0.0
        %753 = vadd.xlane.f32.xlu0 %v752
        %v754 = vpop.xlane.xlu0 %753
        %v755 = vsel %vm320, %v713, 0.0
        %756 = vadd.xlane.f32.xlu0 %v755
        %v757 = vpop.xlane.xlu0 %756
        %v758 = vsel %vm320, %v714, 0.0
        %759 = vadd.xlane.f32.xlu0 %v758
        %v760 = vpop.xlane.xlu0 %759
        %v761 = vsel %vm320, %v715, 0.0
        %762 = vadd.xlane.f32.xlu0 %v761
        %v763 = vpop.xlane.xlu0 %762
        %v780 = vperm.slane %v718, %v386
        %v781 = vperm.slane %v721, %v388
        %v782 = vsel %vm390, %v781, %v780
        %v783 = vperm.slane %v724, %v386
        %v784 = vperm.slane %v727, %v388
        %v785 = vsel %vm390, %v784, %v783
        %v786 = vperm.slane %v730, %v386
        %v787 = vperm.slane %v733, %v388
        %v788 = vsel %vm390, %v787, %v786
        %v789 = vperm.slane %v736, %v386
        %v790 = vperm.slane %v739, %v388
        %v791 = vsel %vm390, %v790, %v789
        %v792 = vperm.slane %v742, %v386
        %v793 = vperm.slane %v745, %v388
        %v794 = vsel %vm390, %v793, %v792
        %v795 = vperm.slane %v748, %v386
        %v796 = vperm.slane %v751, %v388
        %v797 = vsel %vm390, %v796, %v795
        %v798 = vperm.slane %v754, %v386
        %v799 = vperm.slane %v757, %v388
        %v800 = vsel %vm390, %v799, %v798
        %v801 = vperm.slane %v760, %v386
        %v802 = vperm.slane %v763, %v388
        %v803 = vsel %vm390, %v802, %v801
        %v804 = vsel %vm413, %v785, %v782
        %v805 = vsel %vm415, %v788, %v804
        %v806 = vsel %vm417, %v791, %v805
        %v807 = vsel %vm419, %v794, %v806
        %v808 = vsel %vm421, %v797, %v807
        %v809 = vsel %vm423, %v800, %v808
        %v810 = vsel %vm425, %v803, %v809
        %v812 = vadd.f32 %v697, %v810
        %813 = vst.msk [vmem:[#allocation3] sm:$0xff] %vm214, %v812
        %s814 = scalar_lea.vmem [#allocation4], 16
        %v815 = vld [vmem:[%s814] sm:$0xf]
        %v816 = vld [vmem:[%s814 + $0x4] sm:$0xf]
        %v817 = vld [vmem:[%s814 + $0x8] sm:$0xf]
        %v818 = vld [vmem:[%s814 + $0xc] sm:$0xf]
        %v819 = vld [vmem:[%s814 + $0x10] sm:$0xf]
        %v820 = vld [vmem:[%s814 + $0x14] sm:$0xf]
        %v821 = vld [vmem:[%s814 + $0x18] sm:$0xf]
        %v822 = vld [vmem:[%s814 + $0x1c] sm:$0xf]
        %v823 = vld [vmem:[%s814 + $0x20] sm:$0xf]
        %v824 = vld [vmem:[%s814 + $0x24] sm:$0xf]
        %v825 = vld [vmem:[%s814 + $0x28] sm:$0xf]
        %v826 = vld [vmem:[%s814 + $0x2c] sm:$0xf]
        %v827 = vld [vmem:[%s814 + $0x30] sm:$0xf]
        %v828 = vld [vmem:[%s814 + $0x34] sm:$0xf]
        %v829 = vld [vmem:[%s814 + $0x38] sm:$0xf]
        %v830 = vld [vmem:[%s814 + $0x3c] sm:$0xf]
        %v831 = vunpack.c.l.bf16 %v815
        %v832 = vunpack.c.l.bf16 %v816
        %v833 = vunpack.c.l.bf16 %v817
        %v834 = vunpack.c.l.bf16 %v818
        %v835 = vunpack.c.l.bf16 %v819
        %v836 = vunpack.c.l.bf16 %v820
        %v837 = vunpack.c.l.bf16 %v821
        %v838 = vunpack.c.l.bf16 %v822
        %v839 = vunpack.c.l.bf16 %v823
        %v840 = vunpack.c.l.bf16 %v824
        %v841 = vunpack.c.l.bf16 %v825
        %v842 = vunpack.c.l.bf16 %v826
        %v843 = vunpack.c.l.bf16 %v827
        %v844 = vunpack.c.l.bf16 %v828
        %v845 = vunpack.c.l.bf16 %v829
        %v846 = vunpack.c.l.bf16 %v830
        %v847 = vld [vmem:[#allocation2] sm:$0xff]
        %v848 = vld [vmem:[%s1 + $0x6] sm:$0x1]
        %v849 = vperm.slane %v848, 0
        %v850 = vmul.f32 %v831, %v849
        %v851 = vmul.f32 %v832, %v849
        %v852 = vmul.f32 %v833, %v849
        %v853 = vmul.f32 %v834, %v849
        %v854 = vmul.f32 %v835, %v849
        %v855 = vmul.f32 %v836, %v849
        %v856 = vmul.f32 %v837, %v849
        %v857 = vmul.f32 %v838, %v849
        %v858 = vmul.f32 %v839, %v849
        %v859 = vmul.f32 %v840, %v849
        %v860 = vmul.f32 %v841, %v849
        %v861 = vmul.f32 %v842, %v849
        %v862 = vmul.f32 %v843, %v849
        %v863 = vmul.f32 %v844, %v849
        %v864 = vmul.f32 %v845, %v849
        %v865 = vmul.f32 %v846, %v849
        %v866 = vsel %vm320, %v850, 0.0
        %867 = vadd.xlane.f32.xlu0 %v866
        %v868 = vpop.xlane.xlu0 %867
        %v869 = vsel %vm320, %v851, 0.0
        %870 = vadd.xlane.f32.xlu0 %v869
        %v871 = vpop.xlane.xlu0 %870
        %v872 = vsel %vm320, %v852, 0.0
        %873 = vadd.xlane.f32.xlu0 %v872
        %v874 = vpop.xlane.xlu0 %873
        %v875 = vsel %vm320, %v853, 0.0
        %876 = vadd.xlane.f32.xlu0 %v875
        %v877 = vpop.xlane.xlu0 %876
        %v878 = vsel %vm320, %v854, 0.0
        %879 = vadd.xlane.f32.xlu0 %v878
        %v880 = vpop.xlane.xlu0 %879
        %v881 = vsel %vm320, %v855, 0.0
        %882 = vadd.xlane.f32.xlu0 %v881
        %v883 = vpop.xlane.xlu0 %882
        %v884 = vsel %vm320, %v856, 0.0
        %885 = vadd.xlane.f32.xlu0 %v884
        %v886 = vpop.xlane.xlu0 %885
        %v887 = vsel %vm320, %v857, 0.0
        %888 = vadd.xlane.f32.xlu0 %v887
        %v889 = vpop.xlane.xlu0 %888
        %v890 = vsel %vm320, %v858, 0.0
        %891 = vadd.xlane.f32.xlu0 %v890
        %v892 = vpop.xlane.xlu0 %891
        %v893 = vsel %vm320, %v859, 0.0
        %894 = vadd.xlane.f32.xlu0 %v893
        %v895 = vpop.xlane.xlu0 %894
        %v896 = vsel %vm320, %v860, 0.0
        %897 = vadd.xlane.f32.xlu0 %v896
        %v898 = vpop.xlane.xlu0 %897
        %v899 = vsel %vm320, %v861, 0.0
        %900 = vadd.xlane.f32.xlu0 %v899
        %v901 = vpop.xlane.xlu0 %900
        %v902 = vsel %vm320, %v862, 0.0
        %903 = vadd.xlane.f32.xlu0 %v902
        %v904 = vpop.xlane.xlu0 %903
        %v905 = vsel %vm320, %v863, 0.0
        %906 = vadd.xlane.f32.xlu0 %v905
        %v907 = vpop.xlane.xlu0 %906
        %v908 = vsel %vm320, %v864, 0.0
        %909 = vadd.xlane.f32.xlu0 %v908
        %v910 = vpop.xlane.xlu0 %909
        %v911 = vsel %vm320, %v865, 0.0
        %912 = vadd.xlane.f32.xlu0 %v911
        %v913 = vpop.xlane.xlu0 %912
        %v930 = vperm.slane %v868, %v386
        %v931 = vperm.slane %v871, %v388
        %v932 = vsel %vm390, %v931, %v930
        %v933 = vperm.slane %v874, %v386
        %v934 = vperm.slane %v877, %v388
        %v935 = vsel %vm390, %v934, %v933
        %v936 = vperm.slane %v880, %v386
        %v937 = vperm.slane %v883, %v388
        %v938 = vsel %vm390, %v937, %v936
        %v939 = vperm.slane %v886, %v386
        %v940 = vperm.slane %v889, %v388
        %v941 = vsel %vm390, %v940, %v939
        %v942 = vperm.slane %v892, %v386
        %v943 = vperm.slane %v895, %v388
        %v944 = vsel %vm390, %v943, %v942
        %v945 = vperm.slane %v898, %v386
        %v946 = vperm.slane %v901, %v388
        %v947 = vsel %vm390, %v946, %v945
        %v948 = vperm.slane %v904, %v386
        %v949 = vperm.slane %v907, %v388
        %v950 = vsel %vm390, %v949, %v948
        %v951 = vperm.slane %v910, %v386
        %v952 = vperm.slane %v913, %v388
        %v953 = vsel %vm390, %v952, %v951
        %v954 = vsel %vm413, %v935, %v932
        %v955 = vsel %vm415, %v938, %v954
        %v956 = vsel %vm417, %v941, %v955
        %v957 = vsel %vm419, %v944, %v956
        %v958 = vsel %vm421, %v947, %v957
        %v959 = vsel %vm423, %v950, %v958
        %v960 = vsel %vm425, %v953, %v959
        %v962 = vadd.f32 %v847, %v960
        %963 = vst.msk [vmem:[#allocation2] sm:$0xff] %vm214, %v962
        %v964 = vld [vmem:[#allocation3] sm:$0xff]
        %v965 = vld [vmem:[%s2 + $0x6] sm:$0x1]
        %v966 = vperm.slane %v965, 0
        %v967 = vmul.f32 %v831, %v966
        %v968 = vmul.f32 %v832, %v966
        %v969 = vmul.f32 %v833, %v966
        %v970 = vmul.f32 %v834, %v966
        %v971 = vmul.f32 %v835, %v966
        %v972 = vmul.f32 %v836, %v966
        %v973 = vmul.f32 %v837, %v966
        %v974 = vmul.f32 %v838, %v966
        %v975 = vmul.f32 %v839, %v966
        %v976 = vmul.f32 %v840, %v966
        %v977 = vmul.f32 %v841, %v966
        %v978 = vmul.f32 %v842, %v966
        %v979 = vmul.f32 %v843, %v966
        %v980 = vmul.f32 %v844, %v966
        %v981 = vmul.f32 %v845, %v966
        %v982 = vmul.f32 %v846, %v966
        %v983 = vsel %vm320, %v967, 0.0
        %984 = vadd.xlane.f32.xlu0 %v983
        %v985 = vpop.xlane.xlu0 %984
        %v986 = vsel %vm320, %v968, 0.0
        %987 = vadd.xlane.f32.xlu0 %v986
        %v988 = vpop.xlane.xlu0 %987
        %v989 = vsel %vm320, %v969, 0.0
        %990 = vadd.xlane.f32.xlu0 %v989
        %v991 = vpop.xlane.xlu0 %990
        %v992 = vsel %vm320, %v970, 0.0
        %993 = vadd.xlane.f32.xlu0 %v992
        %v994 = vpop.xlane.xlu0 %993
        %v995 = vsel %vm320, %v971, 0.0
        %996 = vadd.xlane.f32.xlu0 %v995
        %v997 = vpop.xlane.xlu0 %996
        %v998 = vsel %vm320, %v972, 0.0
        %999 = vadd.xlane.f32.xlu0 %v998
        %v1000 = vpop.xlane.xlu0 %999
        %v1001 = vsel %vm320, %v973, 0.0
        %1002 = vadd.xlane.f32.xlu0 %v1001
        %v1003 = vpop.xlane.xlu0 %1002
        %v1004 = vsel %vm320, %v974, 0.0
        %1005 = vadd.xlane.f32.xlu0 %v1004
        %v1006 = vpop.xlane.xlu0 %1005
        %v1007 = vsel %vm320, %v975, 0.0
        %1008 = vadd.xlane.f32.xlu0 %v1007
        %v1009 = vpop.xlane.xlu0 %1008
        %v1010 = vsel %vm320, %v976, 0.0
        %1011 = vadd.xlane.f32.xlu0 %v1010
        %v1012 = vpop.xlane.xlu0 %1011
        %v1013 = vsel %vm320, %v977, 0.0
        %1014 = vadd.xlane.f32.xlu0 %v1013
        %v1015 = vpop.xlane.xlu0 %1014
        %v1016 = vsel %vm320, %v978, 0.0
        %1017 = vadd.xlane.f32.xlu0 %v1016
        %v1018 = vpop.xlane.xlu0 %1017
        %v1019 = vsel %vm320, %v979, 0.0
        %1020 = vadd.xlane.f32.xlu0 %v1019
        %v1021 = vpop.xlane.xlu0 %1020
        %v1022 = vsel %vm320, %v980, 0.0
        %1023 = vadd.xlane.f32.xlu0 %v1022
        %v1024 = vpop.xlane.xlu0 %1023
        %v1025 = vsel %vm320, %v981, 0.0
        %1026 = vadd.xlane.f32.xlu0 %v1025
        %v1027 = vpop.xlane.xlu0 %1026
        %v1028 = vsel %vm320, %v982, 0.0
        %1029 = vadd.xlane.f32.xlu0 %v1028
        %v1030 = vpop.xlane.xlu0 %1029
        %v1047 = vperm.slane %v985, %v386
        %v1048 = vperm.slane %v988, %v388
        %v1049 = vsel %vm390, %v1048, %v1047
        %v1050 = vperm.slane %v991, %v386
        %v1051 = vperm.slane %v994, %v388
        %v1052 = vsel %vm390, %v1051, %v1050
        %v1053 = vperm.slane %v997, %v386
        %v1054 = vperm.slane %v1000, %v388
        %v1055 = vsel %vm390, %v1054, %v1053
        %v1056 = vperm.slane %v1003, %v386
        %v1057 = vperm.slane %v1006, %v388
        %v1058 = vsel %vm390, %v1057, %v1056
        %v1059 = vperm.slane %v1009, %v386
        %v1060 = vperm.slane %v1012, %v388
        %v1061 = vsel %vm390, %v1060, %v1059
        %v1062 = vperm.slane %v1015, %v386
        %v1063 = vperm.slane %v1018, %v388
        %v1064 = vsel %vm390, %v1063, %v1062
        %v1065 = vperm.slane %v1021, %v386
        %v1066 = vperm.slane %v1024, %v388
        %v1067 = vsel %vm390, %v1066, %v1065
        %v1068 = vperm.slane %v1027, %v386
        %v1069 = vperm.slane %v1030, %v388
        %v1070 = vsel %vm390, %v1069, %v1068
        %v1071 = vsel %vm413, %v1052, %v1049
        %v1072 = vsel %vm415, %v1055, %v1071
        %v1073 = vsel %vm417, %v1058, %v1072
        %v1074 = vsel %vm419, %v1061, %v1073
        %v1075 = vsel %vm421, %v1064, %v1074
        %v1076 = vsel %vm423, %v1067, %v1075
        %v1077 = vsel %vm425, %v1070, %v1076
        %v1079 = vadd.f32 %v964, %v1077
        %1080 = vst.msk [vmem:[#allocation3] sm:$0xff] %vm214, %v1079
        %v1081 = vld [vmem:[%s227] sm:$0xf]
        %v1082 = vld [vmem:[%s227 + $0x4] sm:$0xf]
        %v1083 = vld [vmem:[%s227 + $0x8] sm:$0x1]
        %v1084 = vld [vmem:[%s227 + $0xc] sm:$0xf]
        %v1085 = vld [vmem:[%s227 + $0x10] sm:$0xf]
        %v1086 = vld [vmem:[%s227 + $0x14] sm:$0x1]
        %v1087 = vld [vmem:[%s227 + $0x18] sm:$0xf]
        %v1088 = vld [vmem:[%s227 + $0x1c] sm:$0xf]
        %v1089 = vld [vmem:[%s227 + $0x20] sm:$0x1]
        %v1090 = vld [vmem:[%s227 + $0x24] sm:$0xf]
        %v1091 = vld [vmem:[%s227 + $0x28] sm:$0xf]
        %v1092 = vld [vmem:[%s227 + $0x2c] sm:$0x1]
        %v1093 = vld [vmem:[%s227 + $0x30] sm:$0xf]
        %v1094 = vld [vmem:[%s227 + $0x34] sm:$0xf]
        %v1095 = vld [vmem:[%s227 + $0x38] sm:$0x1]
        %v1096 = vld [vmem:[%s227 + $0x3c] sm:$0xf]
        %v1097 = vld [vmem:[%s227 + $0x40] sm:$0xf]
        %v1098 = vld [vmem:[%s227 + $0x44] sm:$0x1]
        %v1099 = vld [vmem:[%s227 + $0x48] sm:$0xf]
        %v1100 = vld [vmem:[%s227 + $0x4c] sm:$0xf]
        %v1101 = vld [vmem:[%s227 + $0x50] sm:$0x1]
        %v1102 = vld [vmem:[%s227 + $0x54] sm:$0xf]
        %v1103 = vld [vmem:[%s227 + $0x58] sm:$0xf]
        %v1104 = vld [vmem:[%s227 + $0x5c] sm:$0x1]
        %v1105 = vld [vmem:[%s227 + $0x60] sm:$0xf]
        %v1106 = vld [vmem:[%s227 + $0x64] sm:$0xf]
        %v1107 = vld [vmem:[%s227 + $0x68] sm:$0x1]
        %v1108 = vld [vmem:[%s227 + $0x6c] sm:$0xf]
        %v1109 = vld [vmem:[%s227 + $0x70] sm:$0xf]
        %v1110 = vld [vmem:[%s227 + $0x74] sm:$0x1]
        %vm1111 = vsmask.f32 3328
        %vm1112 = vsmask.f32 7440
        %vm1113 = vmor %vm1111, %vm1112
        %v1115 = vshrl.u32 %v1081, 16
        %v1117 = vrot.slane %v1115, 4
        %v1118 = vshll.u32 %v1081, 16
        %v1120 = vrot.slane %v1118, 5
        %v1121 = vor.u32 %v1117, %v1120
        %v1122 = vrot.slane %v1121, 4
        %v1124 = vshll.u32 %v1082, 16
        %v1126 = vrot.slane %v1124, 5
        %v1127 = vsel %vm1113, %v1122, %v1126
        %v1128 = vshrl.u32 %v1082, 16
        %v1130 = vrot.slane %v1128, 4
        %v1131 = vor.u32 %v1130, %v1126
        %v1132 = vrot.slane %v1131, 4
        %v1134 = vshll.u32 %v1083, 16
        %v1136 = vrot.slane %v1134, 5
        %v1137 = vsel %vm1113, %v1132, %v1136
        %v1139 = vshrl.u32 %v1084, 16
        %v1141 = vrot.slane %v1139, 4
        %v1142 = vshll.u32 %v1084, 16
        %v1144 = vrot.slane %v1142, 5
        %v1145 = vor.u32 %v1141, %v1144
        %v1146 = vrot.slane %v1145, 4
        %v1148 = vshll.u32 %v1085, 16
        %v1150 = vrot.slane %v1148, 5
        %v1151 = vsel %vm1113, %v1146, %v1150
        %v1152 = vshrl.u32 %v1085, 16
        %v1154 = vrot.slane %v1152, 4
        %v1155 = vor.u32 %v1154, %v1150
        %v1156 = vrot.slane %v1155, 4
        %v1158 = vshll.u32 %v1086, 16
        %v1160 = vrot.slane %v1158, 5
        %v1161 = vsel %vm1113, %v1156, %v1160
        %v1163 = vshrl.u32 %v1087, 16
        %v1165 = vrot.slane %v1163, 4
        %v1166 = vshll.u32 %v1087, 16
        %v1168 = vrot.slane %v1166, 5
        %v1169 = vor.u32 %v1165, %v1168
        %v1170 = vrot.slane %v1169, 4
        %v1172 = vshll.u32 %v1088, 16
        %v1174 = vrot.slane %v1172, 5
        %v1175 = vsel %vm1113, %v1170, %v1174
        %v1176 = vshrl.u32 %v1088, 16
        %v1178 = vrot.slane %v1176, 4
        %v1179 = vor.u32 %v1178, %v1174
        %v1180 = vrot.slane %v1179, 4
        %v1182 = vshll.u32 %v1089, 16
        %v1184 = vrot.slane %v1182, 5
        %v1185 = vsel %vm1113, %v1180, %v1184
        %v1187 = vshrl.u32 %v1090, 16
        %v1189 = vrot.slane %v1187, 4
        %v1190 = vshll.u32 %v1090, 16
        %v1192 = vrot.slane %v1190, 5
        %v1193 = vor.u32 %v1189, %v1192
        %v1194 = vrot.slane %v1193, 4
        %v1196 = vshll.u32 %v1091, 16
        %v1198 = vrot.slane %v1196, 5
        %v1199 = vsel %vm1113, %v1194, %v1198
        %v1200 = vshrl.u32 %v1091, 16
        %v1202 = vrot.slane %v1200, 4
        %v1203 = vor.u32 %v1202, %v1198
        %v1204 = vrot.slane %v1203, 4
        %v1206 = vshll.u32 %v1092, 16
        %v1208 = vrot.slane %v1206, 5
        %v1209 = vsel %vm1113, %v1204, %v1208
        %v1211 = vshrl.u32 %v1093, 16
        %v1213 = vrot.slane %v1211, 4
        %v1214 = vshll.u32 %v1093, 16
        %v1216 = vrot.slane %v1214, 5
        %v1217 = vor.u32 %v1213, %v1216
        %v1218 = vrot.slane %v1217, 4
        %v1220 = vshll.u32 %v1094, 16
        %v1222 = vrot.slane %v1220, 5
        %v1223 = vsel %vm1113, %v1218, %v1222
        %v1224 = vshrl.u32 %v1094, 16
        %v1226 = vrot.slane %v1224, 4
        %v1227 = vor.u32 %v1226, %v1222
        %v1228 = vrot.slane %v1227, 4
        %v1230 = vshll.u32 %v1095, 16
        %v1232 = vrot.slane %v1230, 5
        %v1233 = vsel %vm1113, %v1228, %v1232
        %v1235 = vshrl.u32 %v1096, 16
        %v1237 = vrot.slane %v1235, 4
        %v1238 = vshll.u32 %v1096, 16
        %v1240 = vrot.slane %v1238, 5
        %v1241 = vor.u32 %v1237, %v1240
        %v1242 = vrot.slane %v1241, 4
        %v1244 = vshll.u32 %v1097, 16
        %v1246 = vrot.slane %v1244, 5
        %v1247 = vsel %vm1113, %v1242, %v1246
        %v1248 = vshrl.u32 %v1097, 16
        %v1250 = vrot.slane %v1248, 4
        %v1251 = vor.u32 %v1250, %v1246
        %v1252 = vrot.slane %v1251, 4
        %v1254 = vshll.u32 %v1098, 16
        %v1256 = vrot.slane %v1254, 5
        %v1257 = vsel %vm1113, %v1252, %v1256
        %v1259 = vshrl.u32 %v1099, 16
        %v1261 = vrot.slane %v1259, 4
        %v1262 = vshll.u32 %v1099, 16
        %v1264 = vrot.slane %v1262, 5
        %v1265 = vor.u32 %v1261, %v1264
        %v1266 = vrot.slane %v1265, 4
        %v1268 = vshll.u32 %v1100, 16
        %v1270 = vrot.slane %v1268, 5
        %v1271 = vsel %vm1113, %v1266, %v1270
        %v1272 = vshrl.u32 %v1100, 16
        %v1274 = vrot.slane %v1272, 4
        %v1275 = vor.u32 %v1274, %v1270
        %v1276 = vrot.slane %v1275, 4
        %v1278 = vshll.u32 %v1101, 16
        %v1280 = vrot.slane %v1278, 5
        %v1281 = vsel %vm1113, %v1276, %v1280
        %v1283 = vshrl.u32 %v1102, 16
        %v1285 = vrot.slane %v1283, 4
        %v1286 = vshll.u32 %v1102, 16
        %v1288 = vrot.slane %v1286, 5
        %v1289 = vor.u32 %v1285, %v1288
        %v1290 = vrot.slane %v1289, 4
        %v1292 = vshll.u32 %v1103, 16
        %v1294 = vrot.slane %v1292, 5
        %v1295 = vsel %vm1113, %v1290, %v1294
        %v1296 = vshrl.u32 %v1103, 16
        %v1298 = vrot.slane %v1296, 4
        %v1299 = vor.u32 %v1298, %v1294
        %v1300 = vrot.slane %v1299, 4
        %v1302 = vshll.u32 %v1104, 16
        %v1304 = vrot.slane %v1302, 5
        %v1305 = vsel %vm1113, %v1300, %v1304
        %v1307 = vshrl.u32 %v1105, 16
        %v1309 = vrot.slane %v1307, 4
        %v1310 = vshll.u32 %v1105, 16
        %v1312 = vrot.slane %v1310, 5
        %v1313 = vor.u32 %v1309, %v1312
        %v1314 = vrot.slane %v1313, 4
        %v1316 = vshll.u32 %v1106, 16
        %v1318 = vrot.slane %v1316, 5
        %v1319 = vsel %vm1113, %v1314, %v1318
        %v1320 = vshrl.u32 %v1106, 16
        %v1322 = vrot.slane %v1320, 4
        %v1323 = vor.u32 %v1322, %v1318
        %v1324 = vrot.slane %v1323, 4
        %v1326 = vshll.u32 %v1107, 16
        %v1328 = vrot.slane %v1326, 5
        %v1329 = vsel %vm1113, %v1324, %v1328
        %v1331 = vshrl.u32 %v1108, 16
        %v1333 = vrot.slane %v1331, 4
        %v1334 = vshll.u32 %v1108, 16
        %v1336 = vrot.slane %v1334, 5
        %v1337 = vor.u32 %v1333, %v1336
        %v1338 = vrot.slane %v1337, 4
        %v1340 = vshll.u32 %v1109, 16
        %v1342 = vrot.slane %v1340, 5
        %v1343 = vsel %vm1113, %v1338, %v1342
        %v1344 = vshrl.u32 %v1109, 16
        %v1346 = vrot.slane %v1344, 4
        %v1347 = vor.u32 %v1346, %v1342
        %v1348 = vrot.slane %v1347, 4
        %v1350 = vshll.u32 %v1110, 16
        %v1352 = vrot.slane %v1350, 5
        %v1353 = vsel %vm1113, %v1348, %v1352
        %1374 = vst.msk [vmem:[#allocation4] sm:$0xf] %vm248, %v1127
        %1375 = vst.msk [vmem:[#allocation4 + $0x4] sm:$0xf] %vm248, %v1137
        %1376 = vst.msk [vmem:[#allocation4 + $0x8] sm:$0xf] %vm248, %v1151
        %1377 = vst.msk [vmem:[#allocation4 + $0xc] sm:$0xf] %vm248, %v1161
        %1378 = vst.msk [vmem:[#allocation4 + $0x10] sm:$0xf] %vm248, %v1175
        %1379 = vst.msk [vmem:[#allocation4 + $0x14] sm:$0xf] %vm248, %v1185
        %1380 = vst.msk [vmem:[#allocation4 + $0x18] sm:$0xf] %vm248, %v1199
        %1381 = vst.msk [vmem:[#allocation4 + $0x1c] sm:$0xf] %vm248, %v1209
        %1382 = vst.msk [vmem:[#allocation4 + $0x20] sm:$0xf] %vm248, %v1223
        %1383 = vst.msk [vmem:[#allocation4 + $0x24] sm:$0xf] %vm248, %v1233
        %1384 = vst.msk [vmem:[#allocation4 + $0x28] sm:$0xf] %vm248, %v1247
        %1385 = vst.msk [vmem:[#allocation4 + $0x2c] sm:$0xf] %vm248, %v1257
        %1386 = vst.msk [vmem:[#allocation4 + $0x30] sm:$0xf] %vm248, %v1271
        %1387 = vst.msk [vmem:[#allocation4 + $0x34] sm:$0xf] %vm248, %v1281
        %1388 = vst.msk [vmem:[#allocation4 + $0x38] sm:$0xf] %vm248, %v1295
        %1389 = vst.msk [vmem:[#allocation4 + $0x3c] sm:$0xf] %vm248, %v1305
        %1390 = vst.msk [vmem:[#allocation4 + $0x40] sm:$0xf] %vm248, %v1319
        %1391 = vst.msk [vmem:[#allocation4 + $0x44] sm:$0xf] %vm248, %v1329
        %1392 = vst.msk [vmem:[#allocation4 + $0x48] sm:$0xf] %vm248, %v1343
        %1393 = vst.msk [vmem:[#allocation4 + $0x4c] sm:$0xf] %vm248, %v1353
        %v1394 = vld [vmem:[#allocation4] sm:$0xf]
        %v1395 = vld [vmem:[#allocation4 + $0x4] sm:$0xf]
        %v1396 = vld [vmem:[#allocation4 + $0x8] sm:$0xf]
        %v1397 = vld [vmem:[#allocation4 + $0xc] sm:$0xf]
        %v1398 = vld [vmem:[#allocation4 + $0x10] sm:$0xf]
        %v1399 = vld [vmem:[#allocation4 + $0x14] sm:$0xf]
        %v1400 = vld [vmem:[#allocation4 + $0x18] sm:$0xf]
        %v1401 = vld [vmem:[#allocation4 + $0x1c] sm:$0xf]
        %v1402 = vld [vmem:[#allocation4 + $0x20] sm:$0xf]
        %v1403 = vld [vmem:[#allocation4 + $0x24] sm:$0xf]
        %v1404 = vld [vmem:[#allocation4 + $0x28] sm:$0xf]
        %v1405 = vld [vmem:[#allocation4 + $0x2c] sm:$0xf]
        %v1406 = vld [vmem:[#allocation4 + $0x30] sm:$0xf]
        %v1407 = vld [vmem:[#allocation4 + $0x34] sm:$0xf]
        %v1408 = vld [vmem:[#allocation4 + $0x38] sm:$0xf]
        %v1409 = vld [vmem:[#allocation4 + $0x3c] sm:$0xf]
        %v1410 = vunpack.c.l.bf16 %v1394
        %v1411 = vunpack.c.l.bf16 %v1395
        %v1412 = vunpack.c.l.bf16 %v1396
        %v1413 = vunpack.c.l.bf16 %v1397
        %v1414 = vunpack.c.l.bf16 %v1398
        %v1415 = vunpack.c.l.bf16 %v1399
        %v1416 = vunpack.c.l.bf16 %v1400
        %v1417 = vunpack.c.l.bf16 %v1401
        %v1418 = vunpack.c.l.bf16 %v1402
        %v1419 = vunpack.c.l.bf16 %v1403
        %v1420 = vunpack.c.l.bf16 %v1404
        %v1421 = vunpack.c.l.bf16 %v1405
        %v1422 = vunpack.c.l.bf16 %v1406
        %v1423 = vunpack.c.l.bf16 %v1407
        %v1424 = vunpack.c.l.bf16 %v1408
        %v1425 = vunpack.c.l.bf16 %v1409
        %v1426 = vld [vmem:[#allocation2] sm:$0xff]
        %v1427 = vld [vmem:[%s1 + $0x1] sm:$0x1]
        %v1428 = vperm.slane %v1427, 0
        %v1429 = vmul.f32 %v1410, %v1428
        %v1430 = vmul.f32 %v1411, %v1428
        %v1431 = vmul.f32 %v1412, %v1428
        %v1432 = vmul.f32 %v1413, %v1428
        %v1433 = vmul.f32 %v1414, %v1428
        %v1434 = vmul.f32 %v1415, %v1428
        %v1435 = vmul.f32 %v1416, %v1428
        %v1436 = vmul.f32 %v1417, %v1428
        %v1437 = vmul.f32 %v1418, %v1428
        %v1438 = vmul.f32 %v1419, %v1428
        %v1439 = vmul.f32 %v1420, %v1428
        %v1440 = vmul.f32 %v1421, %v1428
        %v1441 = vmul.f32 %v1422, %v1428
        %v1442 = vmul.f32 %v1423, %v1428
        %v1443 = vmul.f32 %v1424, %v1428
        %v1444 = vmul.f32 %v1425, %v1428
        %v1445 = vsel %vm320, %v1429, 0.0
        %1446 = vadd.xlane.f32.xlu0 %v1445
        %v1447 = vpop.xlane.xlu0 %1446
        %v1448 = vsel %vm320, %v1430, 0.0
        %1449 = vadd.xlane.f32.xlu0 %v1448
        %v1450 = vpop.xlane.xlu0 %1449
        %v1451 = vsel %vm320, %v1431, 0.0
        %1452 = vadd.xlane.f32.xlu0 %v1451
        %v1453 = vpop.xlane.xlu0 %1452
        %v1454 = vsel %vm320, %v1432, 0.0
        %1455 = vadd.xlane.f32.xlu0 %v1454
        %v1456 = vpop.xlane.xlu0 %1455
        %v1457 = vsel %vm320, %v1433, 0.0
        %1458 = vadd.xlane.f32.xlu0 %v1457
        %v1459 = vpop.xlane.xlu0 %1458
        %v1460 = vsel %vm320, %v1434, 0.0
        %1461 = vadd.xlane.f32.xlu0 %v1460
        %v1462 = vpop.xlane.xlu0 %1461
        %v1463 = vsel %vm320, %v1435, 0.0
        %1464 = vadd.xlane.f32.xlu0 %v1463
        %v1465 = vpop.xlane.xlu0 %1464
        %v1466 = vsel %vm320, %v1436, 0.0
        %1467 = vadd.xlane.f32.xlu0 %v1466
        %v1468 = vpop.xlane.xlu0 %1467
        %v1469 = vsel %vm320, %v1437, 0.0
        %1470 = vadd.xlane.f32.xlu0 %v1469
        %v1471 = vpop.xlane.xlu0 %1470
        %v1472 = vsel %vm320, %v1438, 0.0
        %1473 = vadd.xlane.f32.xlu0 %v1472
        %v1474 = vpop.xlane.xlu0 %1473
        %v1475 = vsel %vm320, %v1439, 0.0
        %1476 = vadd.xlane.f32.xlu0 %v1475
        %v1477 = vpop.xlane.xlu0 %1476
        %v1478 = vsel %vm320, %v1440, 0.0
        %1479 = vadd.xlane.f32.xlu0 %v1478
        %v1480 = vpop.xlane.xlu0 %1479
        %v1481 = vsel %vm320, %v1441, 0.0
        %1482 = vadd.xlane.f32.xlu0 %v1481
        %v1483 = vpop.xlane.xlu0 %1482
        %v1484 = vsel %vm320, %v1442, 0.0
        %1485 = vadd.xlane.f32.xlu0 %v1484
        %v1486 = vpop.xlane.xlu0 %1485
        %v1487 = vsel %vm320, %v1443, 0.0
        %1488 = vadd.xlane.f32.xlu0 %v1487
        %v1489 = vpop.xlane.xlu0 %1488
        %v1490 = vsel %vm320, %v1444, 0.0
        %1491 = vadd.xlane.f32.xlu0 %v1490
        %v1492 = vpop.xlane.xlu0 %1491
        %v1509 = vperm.slane %v1447, %v386
        %v1510 = vperm.slane %v1450, %v388
        %v1511 = vsel %vm390, %v1510, %v1509
        %v1512 = vperm.slane %v1453, %v386
        %v1513 = vperm.slane %v1456, %v388
        %v1514 = vsel %vm390, %v1513, %v1512
        %v1515 = vperm.slane %v1459, %v386
        %v1516 = vperm.slane %v1462, %v388
        %v1517 = vsel %vm390, %v1516, %v1515
        %v1518 = vperm.slane %v1465, %v386
        %v1519 = vperm.slane %v1468, %v388
        %v1520 = vsel %vm390, %v1519, %v1518
        %v1521 = vperm.slane %v1471, %v386
        %v1522 = vperm.slane %v1474, %v388
        %v1523 = vsel %vm390, %v1522, %v1521
        %v1524 = vperm.slane %v1477, %v386
        %v1525 = vperm.slane %v1480, %v388
        %v1526 = vsel %vm390, %v1525, %v1524
        %v1527 = vperm.slane %v1483, %v386
        %v1528 = vperm.slane %v1486, %v388
        %v1529 = vsel %vm390, %v1528, %v1527
        %v1530 = vperm.slane %v1489, %v386
        %v1531 = vperm.slane %v1492, %v388
        %v1532 = vsel %vm390, %v1531, %v1530
        %v1533 = vsel %vm413, %v1514, %v1511
        %v1534 = vsel %vm415, %v1517, %v1533
        %v1535 = vsel %vm417, %v1520, %v1534
        %v1536 = vsel %vm419, %v1523, %v1535
        %v1537 = vsel %vm421, %v1526, %v1536
        %v1538 = vsel %vm423, %v1529, %v1537
        %v1539 = vsel %vm425, %v1532, %v1538
        %v1541 = vadd.f32 %v1426, %v1539
        %1542 = vst.msk [vmem:[#allocation2] sm:$0xff] %vm214, %v1541
        %v1543 = vld [vmem:[#allocation3] sm:$0xff]
        %v1544 = vld [vmem:[%s2 + $0x1] sm:$0x1]
        %v1545 = vperm.slane %v1544, 0
        %v1546 = vmul.f32 %v1410, %v1545
        %v1547 = vmul.f32 %v1411, %v1545
        %v1548 = vmul.f32 %v1412, %v1545
        %v1549 = vmul.f32 %v1413, %v1545
        %v1550 = vmul.f32 %v1414, %v1545
        %v1551 = vmul.f32 %v1415, %v1545
        %v1552 = vmul.f32 %v1416, %v1545
        %v1553 = vmul.f32 %v1417, %v1545
        %v1554 = vmul.f32 %v1418, %v1545
        %v1555 = vmul.f32 %v1419, %v1545
        %v1556 = vmul.f32 %v1420, %v1545
        %v1557 = vmul.f32 %v1421, %v1545
        %v1558 = vmul.f32 %v1422, %v1545
        %v1559 = vmul.f32 %v1423, %v1545
        %v1560 = vmul.f32 %v1424, %v1545
        %v1561 = vmul.f32 %v1425, %v1545
        %v1562 = vsel %vm320, %v1546, 0.0
        %1563 = vadd.xlane.f32.xlu0 %v1562
        %v1564 = vpop.xlane.xlu0 %1563
        %v1565 = vsel %vm320, %v1547, 0.0
        %1566 = vadd.xlane.f32.xlu0 %v1565
        %v1567 = vpop.xlane.xlu0 %1566
        %v1568 = vsel %vm320, %v1548, 0.0
        %1569 = vadd.xlane.f32.xlu0 %v1568
        %v1570 = vpop.xlane.xlu0 %1569
        %v1571 = vsel %vm320, %v1549, 0.0
        %1572 = vadd.xlane.f32.xlu0 %v1571
        %v1573 = vpop.xlane.xlu0 %1572
        %v1574 = vsel %vm320, %v1550, 0.0
        %1575 = vadd.xlane.f32.xlu0 %v1574
        %v1576 = vpop.xlane.xlu0 %1575
        %v1577 = vsel %vm320, %v1551, 0.0
        %1578 = vadd.xlane.f32.xlu0 %v1577
        %v1579 = vpop.xlane.xlu0 %1578
        %v1580 = vsel %vm320, %v1552, 0.0
        %1581 = vadd.xlane.f32.xlu0 %v1580
        %v1582 = vpop.xlane.xlu0 %1581
        %v1583 = vsel %vm320, %v1553, 0.0
        %1584 = vadd.xlane.f32.xlu0 %v1583
        %v1585 = vpop.xlane.xlu0 %1584
        %v1586 = vsel %vm320, %v1554, 0.0
        %1587 = vadd.xlane.f32.xlu0 %v1586
        %v1588 = vpop.xlane.xlu0 %1587
        %v1589 = vsel %vm320, %v1555, 0.0
        %1590 = vadd.xlane.f32.xlu0 %v1589
        %v1591 = vpop.xlane.xlu0 %1590
        %v1592 = vsel %vm320, %v1556, 0.0
        %1593 = vadd.xlane.f32.xlu0 %v1592
        %v1594 = vpop.xlane.xlu0 %1593
        %v1595 = vsel %vm320, %v1557, 0.0
        %1596 = vadd.xlane.f32.xlu0 %v1595
        %v1597 = vpop.xlane.xlu0 %1596
        %v1598 = vsel %vm320, %v1558, 0.0
        %1599 = vadd.xlane.f32.xlu0 %v1598
        %v1600 = vpop.xlane.xlu0 %1599
        %v1601 = vsel %vm320, %v1559, 0.0
        %1602 = vadd.xlane.f32.xlu0 %v1601
        %v1603 = vpop.xlane.xlu0 %1602
        %v1604 = vsel %vm320, %v1560, 0.0
        %1605 = vadd.xlane.f32.xlu0 %v1604
        %v1606 = vpop.xlane.xlu0 %1605
        %v1607 = vsel %vm320, %v1561, 0.0
        %1608 = vadd.xlane.f32.xlu0 %v1607
        %v1609 = vpop.xlane.xlu0 %1608
        %v1626 = vperm.slane %v1564, %v386
        %v1627 = vperm.slane %v1567, %v388
        %v1628 = vsel %vm390, %v1627, %v1626
        %v1629 = vperm.slane %v1570, %v386
        %v1630 = vperm.slane %v1573, %v388
        %v1631 = vsel %vm390, %v1630, %v1629
        %v1632 = vperm.slane %v1576, %v386
        %v1633 = vperm.slane %v1579, %v388
        %v1634 = vsel %vm390, %v1633, %v1632
        %v1635 = vperm.slane %v1582, %v386
        %v1636 = vperm.slane %v1585, %v388
        %v1637 = vsel %vm390, %v1636, %v1635
        %v1638 = vperm.slane %v1588, %v386
        %v1639 = vperm.slane %v1591, %v388
        %v1640 = vsel %vm390, %v1639, %v1638
        %v1641 = vperm.slane %v1594, %v386
        %v1642 = vperm.slane %v1597, %v388
        %v1643 = vsel %vm390, %v1642, %v1641
        %v1644 = vperm.slane %v1600, %v386
        %v1645 = vperm.slane %v1603, %v388
        %v1646 = vsel %vm390, %v1645, %v1644
        %v1647 = vperm.slane %v1606, %v386
        %v1648 = vperm.slane %v1609, %v388
        %v1649 = vsel %vm390, %v1648, %v1647
        %v1650 = vsel %vm413, %v1631, %v1628
        %v1651 = vsel %vm415, %v1634, %v1650
        %v1652 = vsel %vm417, %v1637, %v1651
        %v1653 = vsel %vm419, %v1640, %v1652
        %v1654 = vsel %vm421, %v1643, %v1653
        %v1655 = vsel %vm423, %v1646, %v1654
        %v1656 = vsel %vm425, %v1649, %v1655
        %v1658 = vadd.f32 %v1543, %v1656
        %1659 = vst.msk [vmem:[#allocation3] sm:$0xff] %vm214, %v1658
        %v1660 = vld [vmem:[%s547] sm:$0xf]
        %v1661 = vld [vmem:[%s547 + $0x4] sm:$0xf]
        %v1662 = vld [vmem:[%s547 + $0x8] sm:$0xf]
        %v1663 = vld [vmem:[%s547 + $0xc] sm:$0xf]
        %v1664 = vld [vmem:[%s547 + $0x10] sm:$0xf]
        %v1665 = vld [vmem:[%s547 + $0x14] sm:$0xf]
        %v1666 = vld [vmem:[%s547 + $0x18] sm:$0xf]
        %v1667 = vld [vmem:[%s547 + $0x1c] sm:$0xf]
        %v1668 = vld [vmem:[%s547 + $0x20] sm:$0xf]
        %v1669 = vld [vmem:[%s547 + $0x24] sm:$0xf]
        %v1670 = vld [vmem:[%s547 + $0x28] sm:$0xf]
        %v1671 = vld [vmem:[%s547 + $0x2c] sm:$0xf]
        %v1672 = vld [vmem:[%s547 + $0x30] sm:$0xf]
        %v1673 = vld [vmem:[%s547 + $0x34] sm:$0xf]
        %v1674 = vld [vmem:[%s547 + $0x38] sm:$0xf]
        %v1675 = vld [vmem:[%s547 + $0x3c] sm:$0xf]
        %v1676 = vunpack.c.l.bf16 %v1660
        %v1677 = vunpack.c.l.bf16 %v1661
        %v1678 = vunpack.c.l.bf16 %v1662
        %v1679 = vunpack.c.l.bf16 %v1663
        %v1680 = vunpack.c.l.bf16 %v1664
        %v1681 = vunpack.c.l.bf16 %v1665
        %v1682 = vunpack.c.l.bf16 %v1666
        %v1683 = vunpack.c.l.bf16 %v1667
        %v1684 = vunpack.c.l.bf16 %v1668
        %v1685 = vunpack.c.l.bf16 %v1669
        %v1686 = vunpack.c.l.bf16 %v1670
        %v1687 = vunpack.c.l.bf16 %v1671
        %v1688 = vunpack.c.l.bf16 %v1672
        %v1689 = vunpack.c.l.bf16 %v1673
        %v1690 = vunpack.c.l.bf16 %v1674
        %v1691 = vunpack.c.l.bf16 %v1675
        %v1692 = vld [vmem:[#allocation2] sm:$0xff]
        %v1693 = vld [vmem:[%s1 + $0x4] sm:$0x1]
        %v1694 = vperm.slane %v1693, 0
        %v1695 = vmul.f32 %v1676, %v1694
        %v1696 = vmul.f32 %v1677, %v1694
        %v1697 = vmul.f32 %v1678, %v1694
        %v1698 = vmul.f32 %v1679, %v1694
        %v1699 = vmul.f32 %v1680, %v1694
        %v1700 = vmul.f32 %v1681, %v1694
        %v1701 = vmul.f32 %v1682, %v1694
        %v1702 = vmul.f32 %v1683, %v1694
        %v1703 = vmul.f32 %v1684, %v1694
        %v1704 = vmul.f32 %v1685, %v1694
        %v1705 = vmul.f32 %v1686, %v1694
        %v1706 = vmul.f32 %v1687, %v1694
        %v1707 = vmul.f32 %v1688, %v1694
        %v1708 = vmul.f32 %v1689, %v1694
        %v1709 = vmul.f32 %v1690, %v1694
        %v1710 = vmul.f32 %v1691, %v1694
        %v1711 = vsel %vm320, %v1695, 0.0
        %1712 = vadd.xlane.f32.xlu0 %v1711
        %v1713 = vpop.xlane.xlu0 %1712
        %v1714 = vsel %vm320, %v1696, 0.0
        %1715 = vadd.xlane.f32.xlu0 %v1714
        %v1716 = vpop.xlane.xlu0 %1715
        %v1717 = vsel %vm320, %v1697, 0.0
        %1718 = vadd.xlane.f32.xlu0 %v1717
        %v1719 = vpop.xlane.xlu0 %1718
        %v1720 = vsel %vm320, %v1698, 0.0
        %1721 = vadd.xlane.f32.xlu0 %v1720
        %v1722 = vpop.xlane.xlu0 %1721
        %v1723 = vsel %vm320, %v1699, 0.0
        %1724 = vadd.xlane.f32.xlu0 %v1723
        %v1725 = vpop.xlane.xlu0 %1724
        %v1726 = vsel %vm320, %v1700, 0.0
        %1727 = vadd.xlane.f32.xlu0 %v1726
        %v1728 = vpop.xlane.xlu0 %1727
        %v1729 = vsel %vm320, %v1701, 0.0
        %1730 = vadd.xlane.f32.xlu0 %v1729
        %v1731 = vpop.xlane.xlu0 %1730
        %v1732 = vsel %vm320, %v1702, 0.0
        %1733 = vadd.xlane.f32.xlu0 %v1732
        %v1734 = vpop.xlane.xlu0 %1733
        %v1735 = vsel %vm320, %v1703, 0.0
        %1736 = vadd.xlane.f32.xlu0 %v1735
        %v1737 = vpop.xlane.xlu0 %1736
        %v1738 = vsel %vm320, %v1704, 0.0
        %1739 = vadd.xlane.f32.xlu0 %v1738
        %v1740 = vpop.xlane.xlu0 %1739
        %v1741 = vsel %vm320, %v1705, 0.0
        %1742 = vadd.xlane.f32.xlu0 %v1741
        %v1743 = vpop.xlane.xlu0 %1742
        %v1744 = vsel %vm320, %v1706, 0.0
        %1745 = vadd.xlane.f32.xlu0 %v1744
        %v1746 = vpop.xlane.xlu0 %1745
        %v1747 = vsel %vm320, %v1707, 0.0
        %1748 = vadd.xlane.f32.xlu0 %v1747
        %v1749 = vpop.xlane.xlu0 %1748
        %v1750 = vsel %vm320, %v1708, 0.0
        %1751 = vadd.xlane.f32.xlu0 %v1750
        %v1752 = vpop.xlane.xlu0 %1751
        %v1753 = vsel %vm320, %v1709, 0.0
        %1754 = vadd.xlane.f32.xlu0 %v1753
        %v1755 = vpop.xlane.xlu0 %1754
        %v1756 = vsel %vm320, %v1710, 0.0
        %1757 = vadd.xlane.f32.xlu0 %v1756
        %v1758 = vpop.xlane.xlu0 %1757
        %v1775 = vperm.slane %v1713, %v386
        %v1776 = vperm.slane %v1716, %v388
        %v1777 = vsel %vm390, %v1776, %v1775
        %v1778 = vperm.slane %v1719, %v386
        %v1779 = vperm.slane %v1722, %v388
        %v1780 = vsel %vm390, %v1779, %v1778
        %v1781 = vperm.slane %v1725, %v386
        %v1782 = vperm.slane %v1728, %v388
        %v1783 = vsel %vm390, %v1782, %v1781
        %v1784 = vperm.slane %v1731, %v386
        %v1785 = vperm.slane %v1734, %v388
        %v1786 = vsel %vm390, %v1785, %v1784
        %v1787 = vperm.slane %v1737, %v386
        %v1788 = vperm.slane %v1740, %v388
        %v1789 = vsel %vm390, %v1788, %v1787
        %v1790 = vperm.slane %v1743, %v386
        %v1791 = vperm.slane %v1746, %v388
        %v1792 = vsel %vm390, %v1791, %v1790
        %v1793 = vperm.slane %v1749, %v386
        %v1794 = vperm.slane %v1752, %v388
        %v1795 = vsel %vm390, %v1794, %v1793
        %v1796 = vperm.slane %v1755, %v386
        %v1797 = vperm.slane %v1758, %v388
        %v1798 = vsel %vm390, %v1797, %v1796
        %v1799 = vsel %vm413, %v1780, %v1777
        %v1800 = vsel %vm415, %v1783, %v1799
        %v1801 = vsel %vm417, %v1786, %v1800
        %v1802 = vsel %vm419, %v1789, %v1801
        %v1803 = vsel %vm421, %v1792, %v1802
        %v1804 = vsel %vm423, %v1795, %v1803
        %v1805 = vsel %vm425, %v1798, %v1804
        %v1807 = vadd.f32 %v1692, %v1805
        %1808 = vst.msk [vmem:[#allocation2] sm:$0xff] %vm214, %v1807
        %v1809 = vld [vmem:[#allocation3] sm:$0xff]
        %v1810 = vld [vmem:[%s2 + $0x4] sm:$0x1]
        %v1811 = vperm.slane %v1810, 0
        %v1812 = vmul.f32 %v1676, %v1811
        %v1813 = vmul.f32 %v1677, %v1811
        %v1814 = vmul.f32 %v1678, %v1811
        %v1815 = vmul.f32 %v1679, %v1811
        %v1816 = vmul.f32 %v1680, %v1811
        %v1817 = vmul.f32 %v1681, %v1811
        %v1818 = vmul.f32 %v1682, %v1811
        %v1819 = vmul.f32 %v1683, %v1811
        %v1820 = vmul.f32 %v1684, %v1811
        %v1821 = vmul.f32 %v1685, %v1811
        %v1822 = vmul.f32 %v1686, %v1811
        %v1823 = vmul.f32 %v1687, %v1811
        %v1824 = vmul.f32 %v1688, %v1811
        %v1825 = vmul.f32 %v1689, %v1811
        %v1826 = vmul.f32 %v1690, %v1811
        %v1827 = vmul.f32 %v1691, %v1811
        %v1828 = vsel %vm320, %v1812, 0.0
        %1829 = vadd.xlane.f32.xlu0 %v1828
        %v1830 = vpop.xlane.xlu0 %1829
        %v1831 = vsel %vm320, %v1813, 0.0
        %1832 = vadd.xlane.f32.xlu0 %v1831
        %v1833 = vpop.xlane.xlu0 %1832
        %v1834 = vsel %vm320, %v1814, 0.0
        %1835 = vadd.xlane.f32.xlu0 %v1834
        %v1836 = vpop.xlane.xlu0 %1835
        %v1837 = vsel %vm320, %v1815, 0.0
        %1838 = vadd.xlane.f32.xlu0 %v1837
        %v1839 = vpop.xlane.xlu0 %1838
        %v1840 = vsel %vm320, %v1816, 0.0
        %1841 = vadd.xlane.f32.xlu0 %v1840
        %v1842 = vpop.xlane.xlu0 %1841
        %v1843 = vsel %vm320, %v1817, 0.0
        %1844 = vadd.xlane.f32.xlu0 %v1843
        %v1845 = vpop.xlane.xlu0 %1844
        %v1846 = vsel %vm320, %v1818, 0.0
        %1847 = vadd.xlane.f32.xlu0 %v1846
        %v1848 = vpop.xlane.xlu0 %1847
        %v1849 = vsel %vm320, %v1819, 0.0
        %1850 = vadd.xlane.f32.xlu0 %v1849
        %v1851 = vpop.xlane.xlu0 %1850
        %v1852 = vsel %vm320, %v1820, 0.0
        %1853 = vadd.xlane.f32.xlu0 %v1852
        %v1854 = vpop.xlane.xlu0 %1853
        %v1855 = vsel %vm320, %v1821, 0.0
        %1856 = vadd.xlane.f32.xlu0 %v1855
        %v1857 = vpop.xlane.xlu0 %1856
        %v1858 = vsel %vm320, %v1822, 0.0
        %1859 = vadd.xlane.f32.xlu0 %v1858
        %v1860 = vpop.xlane.xlu0 %1859
        %v1861 = vsel %vm320, %v1823, 0.0
        %1862 = vadd.xlane.f32.xlu0 %v1861
        %v1863 = vpop.xlane.xlu0 %1862
        %v1864 = vsel %vm320, %v1824, 0.0
        %1865 = vadd.xlane.f32.xlu0 %v1864
        %v1866 = vpop.xlane.xlu0 %1865
        %v1867 = vsel %vm320, %v1825, 0.0
        %1868 = vadd.xlane.f32.xlu0 %v1867
        %v1869 = vpop.xlane.xlu0 %1868
        %v1870 = vsel %vm320, %v1826, 0.0
        %1871 = vadd.xlane.f32.xlu0 %v1870
        %v1872 = vpop.xlane.xlu0 %1871
        %v1873 = vsel %vm320, %v1827, 0.0
        %1874 = vadd.xlane.f32.xlu0 %v1873
        %v1875 = vpop.xlane.xlu0 %1874
        %v1892 = vperm.slane %v1830, %v386
        %v1893 = vperm.slane %v1833, %v388
        %v1894 = vsel %vm390, %v1893, %v1892
        %v1895 = vperm.slane %v1836, %v386
        %v1896 = vperm.slane %v1839, %v388
        %v1897 = vsel %vm390, %v1896, %v1895
        %v1898 = vperm.slane %v1842, %v386
        %v1899 = vperm.slane %v1845, %v388
        %v1900 = vsel %vm390, %v1899, %v1898
        %v1901 = vperm.slane %v1848, %v386
        %v1902 = vperm.slane %v1851, %v388
        %v1903 = vsel %vm390, %v1902, %v1901
        %v1904 = vperm.slane %v1854, %v386
        %v1905 = vperm.slane %v1857, %v388
        %v1906 = vsel %vm390, %v1905, %v1904
        %v1907 = vperm.slane %v1860, %v386
        %v1908 = vperm.slane %v1863, %v388
        %v1909 = vsel %vm390, %v1908, %v1907
        %v1910 = vperm.slane %v1866, %v386
        %v1911 = vperm.slane %v1869, %v388
        %v1912 = vsel %vm390, %v1911, %v1910
        %v1913 = vperm.slane %v1872, %v386
        %v1914 = vperm.slane %v1875, %v388
        %v1915 = vsel %vm390, %v1914, %v1913
        %v1916 = vsel %vm413, %v1897, %v1894
        %v1917 = vsel %vm415, %v1900, %v1916
        %v1918 = vsel %vm417, %v1903, %v1917
        %v1919 = vsel %vm419, %v1906, %v1918
        %v1920 = vsel %vm421, %v1909, %v1919
        %v1921 = vsel %vm423, %v1912, %v1920
        %v1922 = vsel %vm425, %v1915, %v1921
        %v1924 = vadd.f32 %v1809, %v1922
        %1925 = vst.msk [vmem:[#allocation3] sm:$0xff] %vm214, %v1924
        %v1926 = vld [vmem:[%s814] sm:$0xf]
        %v1927 = vld [vmem:[%s814 + $0x4] sm:$0xf]
        %v1928 = vld [vmem:[%s814 + $0x8] sm:$0xf]
        %v1929 = vld [vmem:[%s814 + $0xc] sm:$0xf]
        %v1930 = vld [vmem:[%s814 + $0x10] sm:$0xf]
        %v1931 = vld [vmem:[%s814 + $0x14] sm:$0xf]
        %v1932 = vld [vmem:[%s814 + $0x18] sm:$0xf]
        %v1933 = vld [vmem:[%s814 + $0x1c] sm:$0xf]
        %v1934 = vld [vmem:[%s814 + $0x20] sm:$0xf]
        %v1935 = vld [vmem:[%s814 + $0x24] sm:$0xf]
        %v1936 = vld [vmem:[%s814 + $0x28] sm:$0xf]
        %v1937 = vld [vmem:[%s814 + $0x2c] sm:$0xf]
        %v1938 = vld [vmem:[%s814 + $0x30] sm:$0xf]
        %v1939 = vld [vmem:[%s814 + $0x34] sm:$0xf]
        %v1940 = vld [vmem:[%s814 + $0x38] sm:$0xf]
        %v1941 = vld [vmem:[%s814 + $0x3c] sm:$0xf]
        %v1942 = vunpack.c.l.bf16 %v1926
        %v1943 = vunpack.c.l.bf16 %v1927
        %v1944 = vunpack.c.l.bf16 %v1928
        %v1945 = vunpack.c.l.bf16 %v1929
        %v1946 = vunpack.c.l.bf16 %v1930
        %v1947 = vunpack.c.l.bf16 %v1931
        %v1948 = vunpack.c.l.bf16 %v1932
        %v1949 = vunpack.c.l.bf16 %v1933
        %v1950 = vunpack.c.l.bf16 %v1934
        %v1951 = vunpack.c.l.bf16 %v1935
        %v1952 = vunpack.c.l.bf16 %v1936
        %v1953 = vunpack.c.l.bf16 %v1937
        %v1954 = vunpack.c.l.bf16 %v1938
        %v1955 = vunpack.c.l.bf16 %v1939
        %v1956 = vunpack.c.l.bf16 %v1940
        %v1957 = vunpack.c.l.bf16 %v1941
        %v1958 = vld [vmem:[#allocation2] sm:$0xff]
        %v1959 = vld [vmem:[%s1 + $0x7] sm:$0x1]
        %v1960 = vperm.slane %v1959, 0
        %v1961 = vmul.f32 %v1942, %v1960
        %v1962 = vmul.f32 %v1943, %v1960
        %v1963 = vmul.f32 %v1944, %v1960
        %v1964 = vmul.f32 %v1945, %v1960
        %v1965 = vmul.f32 %v1946, %v1960
        %v1966 = vmul.f32 %v1947, %v1960
        %v1967 = vmul.f32 %v1948, %v1960
        %v1968 = vmul.f32 %v1949, %v1960
        %v1969 = vmul.f32 %v1950, %v1960
        %v1970 = vmul.f32 %v1951, %v1960
        %v1971 = vmul.f32 %v1952, %v1960
        %v1972 = vmul.f32 %v1953, %v1960
        %v1973 = vmul.f32 %v1954, %v1960
        %v1974 = vmul.f32 %v1955, %v1960
        %v1975 = vmul.f32 %v1956, %v1960
        %v1976 = vmul.f32 %v1957, %v1960
        %v1977 = vsel %vm320, %v1961, 0.0
        %1978 = vadd.xlane.f32.xlu0 %v1977
        %v1979 = vpop.xlane.xlu0 %1978
        %v1980 = vsel %vm320, %v1962, 0.0
        %1981 = vadd.xlane.f32.xlu0 %v1980
        %v1982 = vpop.xlane.xlu0 %1981
        %v1983 = vsel %vm320, %v1963, 0.0
        %1984 = vadd.xlane.f32.xlu0 %v1983
        %v1985 = vpop.xlane.xlu0 %1984
        %v1986 = vsel %vm320, %v1964, 0.0
        %1987 = vadd.xlane.f32.xlu0 %v1986
        %v1988 = vpop.xlane.xlu0 %1987
        %v1989 = vsel %vm320, %v1965, 0.0
        %1990 = vadd.xlane.f32.xlu0 %v1989
        %v1991 = vpop.xlane.xlu0 %1990
        %v1992 = vsel %vm320, %v1966, 0.0
        %1993 = vadd.xlane.f32.xlu0 %v1992
        %v1994 = vpop.xlane.xlu0 %1993
        %v1995 = vsel %vm320, %v1967, 0.0
        %1996 = vadd.xlane.f32.xlu0 %v1995
        %v1997 = vpop.xlane.xlu0 %1996
        %v1998 = vsel %vm320, %v1968, 0.0
        %1999 = vadd.xlane.f32.xlu0 %v1998
        %v2000 = vpop.xlane.xlu0 %1999
        %v2001 = vsel %vm320, %v1969, 0.0
        %2002 = vadd.xlane.f32.xlu0 %v2001
        %v2003 = vpop.xlane.xlu0 %2002
        %v2004 = vsel %vm320, %v1970, 0.0
        %2005 = vadd.xlane.f32.xlu0 %v2004
        %v2006 = vpop.xlane.xlu0 %2005
        %v2007 = vsel %vm320, %v1971, 0.0
        %2008 = vadd.xlane.f32.xlu0 %v2007
        %v2009 = vpop.xlane.xlu0 %2008
        %v2010 = vsel %vm320, %v1972, 0.0
        %2011 = vadd.xlane.f32.xlu0 %v2010
        %v2012 = vpop.xlane.xlu0 %2011
        %v2013 = vsel %vm320, %v1973, 0.0
        %2014 = vadd.xlane.f32.xlu0 %v2013
        %v2015 = vpop.xlane.xlu0 %2014
        %v2016 = vsel %vm320, %v1974, 0.0
        %2017 = vadd.xlane.f32.xlu0 %v2016
        %v2018 = vpop.xlane.xlu0 %2017
        %v2019 = vsel %vm320, %v1975, 0.0
        %2020 = vadd.xlane.f32.xlu0 %v2019
        %v2021 = vpop.xlane.xlu0 %2020
        %v2022 = vsel %vm320, %v1976, 0.0
        %2023 = vadd.xlane.f32.xlu0 %v2022
        %v2024 = vpop.xlane.xlu0 %2023
        %v2041 = vperm.slane %v1979, %v386
        %v2042 = vperm.slane %v1982, %v388
        %v2043 = vsel %vm390, %v2042, %v2041
        %v2044 = vperm.slane %v1985, %v386
        %v2045 = vperm.slane %v1988, %v388
        %v2046 = vsel %vm390, %v2045, %v2044
        %v2047 = vperm.slane %v1991, %v386
        %v2048 = vperm.slane %v1994, %v388
        %v2049 = vsel %vm390, %v2048, %v2047
        %v2050 = vperm.slane %v1997, %v386
        %v2051 = vperm.slane %v2000, %v388
        %v2052 = vsel %vm390, %v2051, %v2050
        %v2053 = vperm.slane %v2003, %v386
        %v2054 = vperm.slane %v2006, %v388
        %v2055 = vsel %vm390, %v2054, %v2053
        %v2056 = vperm.slane %v2009, %v386
        %v2057 = vperm.slane %v2012, %v388
        %v2058 = vsel %vm390, %v2057, %v2056
        %v2059 = vperm.slane %v2015, %v386
        %v2060 = vperm.slane %v2018, %v388
        %v2061 = vsel %vm390, %v2060, %v2059
        %v2062 = vperm.slane %v2021, %v386
        %v2063 = vperm.slane %v2024, %v388
        %v2064 = vsel %vm390, %v2063, %v2062
        %v2065 = vsel %vm413, %v2046, %v2043
        %v2066 = vsel %vm415, %v2049, %v2065
        %v2067 = vsel %vm417, %v2052, %v2066
        %v2068 = vsel %vm419, %v2055, %v2067
        %v2069 = vsel %vm421, %v2058, %v2068
        %v2070 = vsel %vm423, %v2061, %v2069
        %v2071 = vsel %vm425, %v2064, %v2070
        %v2073 = vadd.f32 %v1958, %v2071
        %2074 = vst.msk [vmem:[#allocation2] sm:$0xff] %vm214, %v2073
        %v2075 = vld [vmem:[#allocation3] sm:$0xff]
        %v2076 = vld [vmem:[%s2 + $0x7] sm:$0x1]
        %v2077 = vperm.slane %v2076, 0
        %v2078 = vmul.f32 %v1942, %v2077
        %v2079 = vmul.f32 %v1943, %v2077
        %v2080 = vmul.f32 %v1944, %v2077
        %v2081 = vmul.f32 %v1945, %v2077
        %v2082 = vmul.f32 %v1946, %v2077
        %v2083 = vmul.f32 %v1947, %v2077
        %v2084 = vmul.f32 %v1948, %v2077
        %v2085 = vmul.f32 %v1949, %v2077
        %v2086 = vmul.f32 %v1950, %v2077
        %v2087 = vmul.f32 %v1951, %v2077
        %v2088 = vmul.f32 %v1952, %v2077
        %v2089 = vmul.f32 %v1953, %v2077
        %v2090 = vmul.f32 %v1954, %v2077
        %v2091 = vmul.f32 %v1955, %v2077
        %v2092 = vmul.f32 %v1956, %v2077
        %v2093 = vmul.f32 %v1957, %v2077
        %v2094 = vsel %vm320, %v2078, 0.0
        %2095 = vadd.xlane.f32.xlu0 %v2094
        %v2096 = vpop.xlane.xlu0 %2095
        %v2097 = vsel %vm320, %v2079, 0.0
        %2098 = vadd.xlane.f32.xlu0 %v2097
        %v2099 = vpop.xlane.xlu0 %2098
        %v2100 = vsel %vm320, %v2080, 0.0
        %2101 = vadd.xlane.f32.xlu0 %v2100
        %v2102 = vpop.xlane.xlu0 %2101
        %v2103 = vsel %vm320, %v2081, 0.0
        %2104 = vadd.xlane.f32.xlu0 %v2103
        %v2105 = vpop.xlane.xlu0 %2104
        %v2106 = vsel %vm320, %v2082, 0.0
        %2107 = vadd.xlane.f32.xlu0 %v2106
        %v2108 = vpop.xlane.xlu0 %2107
        %v2109 = vsel %vm320, %v2083, 0.0
        %2110 = vadd.xlane.f32.xlu0 %v2109
        %v2111 = vpop.xlane.xlu0 %2110
        %v2112 = vsel %vm320, %v2084, 0.0
        %2113 = vadd.xlane.f32.xlu0 %v2112
        %v2114 = vpop.xlane.xlu0 %2113
        %v2115 = vsel %vm320, %v2085, 0.0
        %2116 = vadd.xlane.f32.xlu0 %v2115
        %v2117 = vpop.xlane.xlu0 %2116
        %v2118 = vsel %vm320, %v2086, 0.0
        %2119 = vadd.xlane.f32.xlu0 %v2118
        %v2120 = vpop.xlane.xlu0 %2119
        %v2121 = vsel %vm320, %v2087, 0.0
        %2122 = vadd.xlane.f32.xlu0 %v2121
        %v2123 = vpop.xlane.xlu0 %2122
        %v2124 = vsel %vm320, %v2088, 0.0
        %2125 = vadd.xlane.f32.xlu0 %v2124
        %v2126 = vpop.xlane.xlu0 %2125
        %v2127 = vsel %vm320, %v2089, 0.0
        %2128 = vadd.xlane.f32.xlu0 %v2127
        %v2129 = vpop.xlane.xlu0 %2128
        %v2130 = vsel %vm320, %v2090, 0.0
        %2131 = vadd.xlane.f32.xlu0 %v2130
        %v2132 = vpop.xlane.xlu0 %2131
        %v2133 = vsel %vm320, %v2091, 0.0
        %2134 = vadd.xlane.f32.xlu0 %v2133
        %v2135 = vpop.xlane.xlu0 %2134
        %v2136 = vsel %vm320, %v2092, 0.0
        %2137 = vadd.xlane.f32.xlu0 %v2136
        %v2138 = vpop.xlane.xlu0 %2137
        %v2139 = vsel %vm320, %v2093, 0.0
        %2140 = vadd.xlane.f32.xlu0 %v2139
        %v2141 = vpop.xlane.xlu0 %2140
        %v2158 = vperm.slane %v2096, %v386
        %v2159 = vperm.slane %v2099, %v388
        %v2160 = vsel %vm390, %v2159, %v2158
        %v2161 = vperm.slane %v2102, %v386
        %v2162 = vperm.slane %v2105, %v388
        %v2163 = vsel %vm390, %v2162, %v2161
        %v2164 = vperm.slane %v2108, %v386
        %v2165 = vperm.slane %v2111, %v388
        %v2166 = vsel %vm390, %v2165, %v2164
        %v2167 = vperm.slane %v2114, %v386
        %v2168 = vperm.slane %v2117, %v388
        %v2169 = vsel %vm390, %v2168, %v2167
        %v2170 = vperm.slane %v2120, %v386
        %v2171 = vperm.slane %v2123, %v388
        %v2172 = vsel %vm390, %v2171, %v2170
        %v2173 = vperm.slane %v2126, %v386
        %v2174 = vperm.slane %v2129, %v388
        %v2175 = vsel %vm390, %v2174, %v2173
        %v2176 = vperm.slane %v2132, %v386
        %v2177 = vperm.slane %v2135, %v388
        %v2178 = vsel %vm390, %v2177, %v2176
        %v2179 = vperm.slane %v2138, %v386
        %v2180 = vperm.slane %v2141, %v388
        %v2181 = vsel %vm390, %v2180, %v2179
        %v2182 = vsel %vm413, %v2163, %v2160
        %v2183 = vsel %vm415, %v2166, %v2182
        %v2184 = vsel %vm417, %v2169, %v2183
        %v2185 = vsel %vm419, %v2172, %v2184
        %v2186 = vsel %vm421, %v2175, %v2185
        %v2187 = vsel %vm423, %v2178, %v2186
        %v2188 = vsel %vm425, %v2181, %v2187
        %v2190 = vadd.f32 %v2075, %v2188
        %2191 = vst.msk [vmem:[#allocation3] sm:$0xff] %vm214, %v2190
        %v2192 = vld [vmem:[%s227] sm:$0xe]
        %v2193 = vld [vmem:[%s227 + $0x4] sm:$0xf]
        %v2194 = vld [vmem:[%s227 + $0x8] sm:$0x1]
        %v2195 = vld [vmem:[%s227 + $0xc] sm:$0xe]
        %v2196 = vld [vmem:[%s227 + $0x10] sm:$0xf]
        %v2197 = vld [vmem:[%s227 + $0x14] sm:$0x1]
        %v2198 = vld [vmem:[%s227 + $0x18] sm:$0xe]
        %v2199 = vld [vmem:[%s227 + $0x1c] sm:$0xf]
        %v2200 = vld [vmem:[%s227 + $0x20] sm:$0x1]
        %v2201 = vld [vmem:[%s227 + $0x24] sm:$0xe]
        %v2202 = vld [vmem:[%s227 + $0x28] sm:$0xf]
        %v2203 = vld [vmem:[%s227 + $0x2c] sm:$0x1]
        %v2204 = vld [vmem:[%s227 + $0x30] sm:$0xe]
        %v2205 = vld [vmem:[%s227 + $0x34] sm:$0xf]
        %v2206 = vld [vmem:[%s227 + $0x38] sm:$0x1]
        %v2207 = vld [vmem:[%s227 + $0x3c] sm:$0xe]
        %v2208 = vld [vmem:[%s227 + $0x40] sm:$0xf]
        %v2209 = vld [vmem:[%s227 + $0x44] sm:$0x1]
        %v2210 = vld [vmem:[%s227 + $0x48] sm:$0xe]
        %v2211 = vld [vmem:[%s227 + $0x4c] sm:$0xf]
        %v2212 = vld [vmem:[%s227 + $0x50] sm:$0x1]
        %v2213 = vld [vmem:[%s227 + $0x54] sm:$0xe]
        %v2214 = vld [vmem:[%s227 + $0x58] sm:$0xf]
        %v2215 = vld [vmem:[%s227 + $0x5c] sm:$0x1]
        %v2216 = vld [vmem:[%s227 + $0x60] sm:$0xe]
        %v2217 = vld [vmem:[%s227 + $0x64] sm:$0xf]
        %v2218 = vld [vmem:[%s227 + $0x68] sm:$0x1]
        %v2219 = vld [vmem:[%s227 + $0x6c] sm:$0xe]
        %v2220 = vld [vmem:[%s227 + $0x70] sm:$0xf]
        %v2221 = vld [vmem:[%s227 + $0x74] sm:$0x1]
        %vm2252 = vcmask 1042432
        %vm2253 = vcmask 1046532
        %vm2254 = vmor %vm2252, %vm2253
        %v2255 = vrot.slane %v2192, 5
        %v2256 = vrot.slane %v2255, 4
        %v2257 = vrot.slane %v2193, 5
        %v2258 = vsel %vm2254, %v2256, %v2257
        %v2259 = vrot.slane %v2257, 4
        %v2260 = vrot.slane %v2194, 5
        %v2261 = vsel %vm2254, %v2259, %v2260
        %v2262 = vrot.slane %v2195, 5
        %v2263 = vrot.slane %v2262, 4
        %v2264 = vrot.slane %v2196, 5
        %v2265 = vsel %vm2254, %v2263, %v2264
        %v2266 = vrot.slane %v2264, 4
        %v2267 = vrot.slane %v2197, 5
        %v2268 = vsel %vm2254, %v2266, %v2267
        %v2269 = vrot.slane %v2198, 5
        %v2270 = vrot.slane %v2269, 4
        %v2271 = vrot.slane %v2199, 5
        %v2272 = vsel %vm2254, %v2270, %v2271
        %v2273 = vrot.slane %v2271, 4
        %v2274 = vrot.slane %v2200, 5
        %v2275 = vsel %vm2254, %v2273, %v2274
        %v2276 = vrot.slane %v2201, 5
        %v2277 = vrot.slane %v2276, 4
        %v2278 = vrot.slane %v2202, 5
        %v2279 = vsel %vm2254, %v2277, %v2278
        %v2280 = vrot.slane %v2278, 4
        %v2281 = vrot.slane %v2203, 5
        %v2282 = vsel %vm2254, %v2280, %v2281
        %v2283 = vrot.slane %v2204, 5
        %v2284 = vrot.slane %v2283, 4
        %v2285 = vrot.slane %v2205, 5
        %v2286 = vsel %vm2254, %v2284, %v2285
        %v2287 = vrot.slane %v2285, 4
        %v2288 = vrot.slane %v2206, 5
        %v2289 = vsel %vm2254, %v2287, %v2288
        %v2290 = vrot.slane %v2207, 5
        %v2291 = vrot.slane %v2290, 4
        %v2292 = vrot.slane %v2208, 5
        %v2293 = vsel %vm2254, %v2291, %v2292
        %v2294 = vrot.slane %v2292, 4
        %v2295 = vrot.slane %v2209, 5
        %v2296 = vsel %vm2254, %v2294, %v2295
        %v2297 = vrot.slane %v2210, 5
        %v2298 = vrot.slane %v2297, 4
        %v2299 = vrot.slane %v2211, 5
        %v2300 = vsel %vm2254, %v2298, %v2299
        %v2301 = vrot.slane %v2299, 4
        %v2302 = vrot.slane %v2212, 5
        %v2303 = vsel %vm2254, %v2301, %v2302
        %v2304 = vrot.slane %v2213, 5
        %v2305 = vrot.slane %v2304, 4
        %v2306 = vrot.slane %v2214, 5
        %v2307 = vsel %vm2254, %v2305, %v2306
        %v2308 = vrot.slane %v2306, 4
        %v2309 = vrot.slane %v2215, 5
        %v2310 = vsel %vm2254, %v2308, %v2309
        %v2311 = vrot.slane %v2216, 5
        %v2312 = vrot.slane %v2311, 4
        %v2313 = vrot.slane %v2217, 5
        %v2314 = vsel %vm2254, %v2312, %v2313
        %v2315 = vrot.slane %v2313, 4
        %v2316 = vrot.slane %v2218, 5
        %v2317 = vsel %vm2254, %v2315, %v2316
        %v2318 = vrot.slane %v2219, 5
        %v2319 = vrot.slane %v2318, 4
        %v2320 = vrot.slane %v2220, 5
        %v2321 = vsel %vm2254, %v2319, %v2320
        %v2322 = vrot.slane %v2320, 4
        %v2323 = vrot.slane %v2221, 5
        %v2324 = vsel %vm2254, %v2322, %v2323
        %2345 = vst.msk [vmem:[#allocation4] sm:$0xf] %vm248, %v2258
        %2346 = vst.msk [vmem:[#allocation4 + $0x4] sm:$0xf] %vm248, %v2261
        %2347 = vst.msk [vmem:[#allocation4 + $0x8] sm:$0xf] %vm248, %v2265
        %2348 = vst.msk [vmem:[#allocation4 + $0xc] sm:$0xf] %vm248, %v2268
        %2349 = vst.msk [vmem:[#allocation4 + $0x10] sm:$0xf] %vm248, %v2272
        %2350 = vst.msk [vmem:[#allocation4 + $0x14] sm:$0xf] %vm248, %v2275
        %2351 = vst.msk [vmem:[#allocation4 + $0x18] sm:$0xf] %vm248, %v2279
        %2352 = vst.msk [vmem:[#allocation4 + $0x1c] sm:$0xf] %vm248, %v2282
        %2353 = vst.msk [vmem:[#allocation4 + $0x20] sm:$0xf] %vm248, %v2286
        %2354 = vst.msk [vmem:[#allocation4 + $0x24] sm:$0xf] %vm248, %v2289
        %2355 = vst.msk [vmem:[#allocation4 + $0x28] sm:$0xf] %vm248, %v2293
        %2356 = vst.msk [vmem:[#allocation4 + $0x2c] sm:$0xf] %vm248, %v2296
        %2357 = vst.msk [vmem:[#allocation4 + $0x30] sm:$0xf] %vm248, %v2300
        %2358 = vst.msk [vmem:[#allocation4 + $0x34] sm:$0xf] %vm248, %v2303
        %2359 = vst.msk [vmem:[#allocation4 + $0x38] sm:$0xf] %vm248, %v2307
        %2360 = vst.msk [vmem:[#allocation4 + $0x3c] sm:$0xf] %vm248, %v2310
        %2361 = vst.msk [vmem:[#allocation4 + $0x40] sm:$0xf] %vm248, %v2314
        %2362 = vst.msk [vmem:[#allocation4 + $0x44] sm:$0xf] %vm248, %v2317
        %2363 = vst.msk [vmem:[#allocation4 + $0x48] sm:$0xf] %vm248, %v2321
        %2364 = vst.msk [vmem:[#allocation4 + $0x4c] sm:$0xf] %vm248, %v2324
        %v2365 = vld [vmem:[#allocation4] sm:$0xf]
        %v2366 = vld [vmem:[#allocation4 + $0x4] sm:$0xf]
        %v2367 = vld [vmem:[#allocation4 + $0x8] sm:$0xf]
        %v2368 = vld [vmem:[#allocation4 + $0xc] sm:$0xf]
        %v2369 = vld [vmem:[#allocation4 + $0x10] sm:$0xf]
        %v2370 = vld [vmem:[#allocation4 + $0x14] sm:$0xf]
        %v2371 = vld [vmem:[#allocation4 + $0x18] sm:$0xf]
        %v2372 = vld [vmem:[#allocation4 + $0x1c] sm:$0xf]
        %v2373 = vld [vmem:[#allocation4 + $0x20] sm:$0xf]
        %v2374 = vld [vmem:[#allocation4 + $0x24] sm:$0xf]
        %v2375 = vld [vmem:[#allocation4 + $0x28] sm:$0xf]
        %v2376 = vld [vmem:[#allocation4 + $0x2c] sm:$0xf]
        %v2377 = vld [vmem:[#allocation4 + $0x30] sm:$0xf]
        %v2378 = vld [vmem:[#allocation4 + $0x34] sm:$0xf]
        %v2379 = vld [vmem:[#allocation4 + $0x38] sm:$0xf]
        %v2380 = vld [vmem:[#allocation4 + $0x3c] sm:$0xf]
        %v2381 = vunpack.c.l.bf16 %v2365
        %v2382 = vunpack.c.l.bf16 %v2366
        %v2383 = vunpack.c.l.bf16 %v2367
        %v2384 = vunpack.c.l.bf16 %v2368
        %v2385 = vunpack.c.l.bf16 %v2369
        %v2386 = vunpack.c.l.bf16 %v2370
        %v2387 = vunpack.c.l.bf16 %v2371
        %v2388 = vunpack.c.l.bf16 %v2372
        %v2389 = vunpack.c.l.bf16 %v2373
        %v2390 = vunpack.c.l.bf16 %v2374
        %v2391 = vunpack.c.l.bf16 %v2375
        %v2392 = vunpack.c.l.bf16 %v2376
        %v2393 = vunpack.c.l.bf16 %v2377
        %v2394 = vunpack.c.l.bf16 %v2378
        %v2395 = vunpack.c.l.bf16 %v2379
        %v2396 = vunpack.c.l.bf16 %v2380
        %v2397 = vld [vmem:[#allocation2] sm:$0xff]
        %v2398 = vld [vmem:[%s1 + $0x2] sm:$0x1]
        %v2399 = vperm.slane %v2398, 0
        %v2400 = vmul.f32 %v2381, %v2399
        %v2401 = vmul.f32 %v2382, %v2399
        %v2402 = vmul.f32 %v2383, %v2399
        %v2403 = vmul.f32 %v2384, %v2399
        %v2404 = vmul.f32 %v2385, %v2399
        %v2405 = vmul.f32 %v2386, %v2399
        %v2406 = vmul.f32 %v2387, %v2399
        %v2407 = vmul.f32 %v2388, %v2399
        %v2408 = vmul.f32 %v2389, %v2399
        %v2409 = vmul.f32 %v2390, %v2399
        %v2410 = vmul.f32 %v2391, %v2399
        %v2411 = vmul.f32 %v2392, %v2399
        %v2412 = vmul.f32 %v2393, %v2399
        %v2413 = vmul.f32 %v2394, %v2399
        %v2414 = vmul.f32 %v2395, %v2399
        %v2415 = vmul.f32 %v2396, %v2399
        %v2416 = vsel %vm320, %v2400, 0.0
        %2417 = vadd.xlane.f32.xlu0 %v2416
        %v2418 = vpop.xlane.xlu0 %2417
        %v2419 = vsel %vm320, %v2401, 0.0
        %2420 = vadd.xlane.f32.xlu0 %v2419
        %v2421 = vpop.xlane.xlu0 %2420
        %v2422 = vsel %vm320, %v2402, 0.0
        %2423 = vadd.xlane.f32.xlu0 %v2422
        %v2424 = vpop.xlane.xlu0 %2423
        %v2425 = vsel %vm320, %v2403, 0.0
        %2426 = vadd.xlane.f32.xlu0 %v2425
        %v2427 = vpop.xlane.xlu0 %2426
        %v2428 = vsel %vm320, %v2404, 0.0
        %2429 = vadd.xlane.f32.xlu0 %v2428
        %v2430 = vpop.xlane.xlu0 %2429
        %v2431 = vsel %vm320, %v2405, 0.0
        %2432 = vadd.xlane.f32.xlu0 %v2431
        %v2433 = vpop.xlane.xlu0 %2432
        %v2434 = vsel %vm320, %v2406, 0.0
        %2435 = vadd.xlane.f32.xlu0 %v2434
        %v2436 = vpop.xlane.xlu0 %2435
        %v2437 = vsel %vm320, %v2407, 0.0
        %2438 = vadd.xlane.f32.xlu0 %v2437
        %v2439 = vpop.xlane.xlu0 %2438
        %v2440 = vsel %vm320, %v2408, 0.0
        %2441 = vadd.xlane.f32.xlu0 %v2440
        %v2442 = vpop.xlane.xlu0 %2441
        %v2443 = vsel %vm320, %v2409, 0.0
        %2444 = vadd.xlane.f32.xlu0 %v2443
        %v2445 = vpop.xlane.xlu0 %2444
        %v2446 = vsel %vm320, %v2410, 0.0
        %2447 = vadd.xlane.f32.xlu0 %v2446
        %v2448 = vpop.xlane.xlu0 %2447
        %v2449 = vsel %vm320, %v2411, 0.0
        %2450 = vadd.xlane.f32.xlu0 %v2449
        %v2451 = vpop.xlane.xlu0 %2450
        %v2452 = vsel %vm320, %v2412, 0.0
        %2453 = vadd.xlane.f32.xlu0 %v2452
        %v2454 = vpop.xlane.xlu0 %2453
        %v2455 = vsel %vm320, %v2413, 0.0
        %2456 = vadd.xlane.f32.xlu0 %v2455
        %v2457 = vpop.xlane.xlu0 %2456
        %v2458 = vsel %vm320, %v2414, 0.0
        %2459 = vadd.xlane.f32.xlu0 %v2458
        %v2460 = vpop.xlane.xlu0 %2459
        %v2461 = vsel %vm320, %v2415, 0.0
        %2462 = vadd.xlane.f32.xlu0 %v2461
        %v2463 = vpop.xlane.xlu0 %2462
        %v2480 = vperm.slane %v2418, %v386
        %v2481 = vperm.slane %v2421, %v388
        %v2482 = vsel %vm390, %v2481, %v2480
        %v2483 = vperm.slane %v2424, %v386
        %v2484 = vperm.slane %v2427, %v388
        %v2485 = vsel %vm390, %v2484, %v2483
        %v2486 = vperm.slane %v2430, %v386
        %v2487 = vperm.slane %v2433, %v388
        %v2488 = vsel %vm390, %v2487, %v2486
        %v2489 = vperm.slane %v2436, %v386
        %v2490 = vperm.slane %v2439, %v388
        %v2491 = vsel %vm390, %v2490, %v2489
        %v2492 = vperm.slane %v2442, %v386
        %v2493 = vperm.slane %v2445, %v388
        %v2494 = vsel %vm390, %v2493, %v2492
        %v2495 = vperm.slane %v2448, %v386
        %v2496 = vperm.slane %v2451, %v388
        %v2497 = vsel %vm390, %v2496, %v2495
        %v2498 = vperm.slane %v2454, %v386
        %v2499 = vperm.slane %v2457, %v388
        %v2500 = vsel %vm390, %v2499, %v2498
        %v2501 = vperm.slane %v2460, %v386
        %v2502 = vperm.slane %v2463, %v388
        %v2503 = vsel %vm390, %v2502, %v2501
        %v2504 = vsel %vm413, %v2485, %v2482
        %v2505 = vsel %vm415, %v2488, %v2504
        %v2506 = vsel %vm417, %v2491, %v2505
        %v2507 = vsel %vm419, %v2494, %v2506
        %v2508 = vsel %vm421, %v2497, %v2507
        %v2509 = vsel %vm423, %v2500, %v2508
        %v2510 = vsel %vm425, %v2503, %v2509
        %v2512 = vadd.f32 %v2397, %v2510
        %2513 = vst.msk [vmem:[#allocation2] sm:$0xff] %vm214, %v2512
        %v2514 = vld [vmem:[#allocation3] sm:$0xff]
        %v2515 = vld [vmem:[%s2 + $0x2] sm:$0x1]
        %v2516 = vperm.slane %v2515, 0
        %v2517 = vmul.f32 %v2381, %v2516
        %v2518 = vmul.f32 %v2382, %v2516
        %v2519 = vmul.f32 %v2383, %v2516
        %v2520 = vmul.f32 %v2384, %v2516
        %v2521 = vmul.f32 %v2385, %v2516
        %v2522 = vmul.f32 %v2386, %v2516
        %v2523 = vmul.f32 %v2387, %v2516
        %v2524 = vmul.f32 %v2388, %v2516
        %v2525 = vmul.f32 %v2389, %v2516
        %v2526 = vmul.f32 %v2390, %v2516
        %v2527 = vmul.f32 %v2391, %v2516
        %v2528 = vmul.f32 %v2392, %v2516
        %v2529 = vmul.f32 %v2393, %v2516
        %v2530 = vmul.f32 %v2394, %v2516
        %v2531 = vmul.f32 %v2395, %v2516
        %v2532 = vmul.f32 %v2396, %v2516
        %v2533 = vsel %vm320, %v2517, 0.0
        %2534 = vadd.xlane.f32.xlu0 %v2533
        %v2535 = vpop.xlane.xlu0 %2534
        %v2536 = vsel %vm320, %v2518, 0.0
        %2537 = vadd.xlane.f32.xlu0 %v2536
        %v2538 = vpop.xlane.xlu0 %2537
        %v2539 = vsel %vm320, %v2519, 0.0
        %2540 = vadd.xlane.f32.xlu0 %v2539
        %v2541 = vpop.xlane.xlu0 %2540
        %v2542 = vsel %vm320, %v2520, 0.0
        %2543 = vadd.xlane.f32.xlu0 %v2542
        %v2544 = vpop.xlane.xlu0 %2543
        %v2545 = vsel %vm320, %v2521, 0.0
        %2546 = vadd.xlane.f32.xlu0 %v2545
        %v2547 = vpop.xlane.xlu0 %2546
        %v2548 = vsel %vm320, %v2522, 0.0
        %2549 = vadd.xlane.f32.xlu0 %v2548
        %v2550 = vpop.xlane.xlu0 %2549
        %v2551 = vsel %vm320, %v2523, 0.0
        %2552 = vadd.xlane.f32.xlu0 %v2551
        %v2553 = vpop.xlane.xlu0 %2552
        %v2554 = vsel %vm320, %v2524, 0.0
        %2555 = vadd.xlane.f32.xlu0 %v2554
        %v2556 = vpop.xlane.xlu0 %2555
        %v2557 = vsel %vm320, %v2525, 0.0
        %2558 = vadd.xlane.f32.xlu0 %v2557
        %v2559 = vpop.xlane.xlu0 %2558
        %v2560 = vsel %vm320, %v2526, 0.0
        %2561 = vadd.xlane.f32.xlu0 %v2560
        %v2562 = vpop.xlane.xlu0 %2561
        %v2563 = vsel %vm320, %v2527, 0.0
        %2564 = vadd.xlane.f32.xlu0 %v2563
        %v2565 = vpop.xlane.xlu0 %2564
        %v2566 = vsel %vm320, %v2528, 0.0
        %2567 = vadd.xlane.f32.xlu0 %v2566
        %v2568 = vpop.xlane.xlu0 %2567
        %v2569 = vsel %vm320, %v2529, 0.0
        %2570 = vadd.xlane.f32.xlu0 %v2569
        %v2571 = vpop.xlane.xlu0 %2570
        %v2572 = vsel %vm320, %v2530, 0.0
        %2573 = vadd.xlane.f32.xlu0 %v2572
        %v2574 = vpop.xlane.xlu0 %2573
        %v2575 = vsel %vm320, %v2531, 0.0
        %2576 = vadd.xlane.f32.xlu0 %v2575
        %v2577 = vpop.xlane.xlu0 %2576
        %v2578 = vsel %vm320, %v2532, 0.0
        %2579 = vadd.xlane.f32.xlu0 %v2578
        %v2580 = vpop.xlane.xlu0 %2579
        %v2597 = vperm.slane %v2535, %v386
        %v2598 = vperm.slane %v2538, %v388
        %v2599 = vsel %vm390, %v2598, %v2597
        %v2600 = vperm.slane %v2541, %v386
        %v2601 = vperm.slane %v2544, %v388
        %v2602 = vsel %vm390, %v2601, %v2600
        %v2603 = vperm.slane %v2547, %v386
        %v2604 = vperm.slane %v2550, %v388
        %v2605 = vsel %vm390, %v2604, %v2603
        %v2606 = vperm.slane %v2553, %v386
        %v2607 = vperm.slane %v2556, %v388
        %v2608 = vsel %vm390, %v2607, %v2606
        %v2609 = vperm.slane %v2559, %v386
        %v2610 = vperm.slane %v2562, %v388
        %v2611 = vsel %vm390, %v2610, %v2609
        %v2612 = vperm.slane %v2565, %v386
        %v2613 = vperm.slane %v2568, %v388
        %v2614 = vsel %vm390, %v2613, %v2612
        %v2615 = vperm.slane %v2571, %v386
        %v2616 = vperm.slane %v2574, %v388
        %v2617 = vsel %vm390, %v2616, %v2615
        %v2618 = vperm.slane %v2577, %v386
        %v2619 = vperm.slane %v2580, %v388
        %v2620 = vsel %vm390, %v2619, %v2618
        %v2621 = vsel %vm413, %v2602, %v2599
        %v2622 = vsel %vm415, %v2605, %v2621
        %v2623 = vsel %vm417, %v2608, %v2622
        %v2624 = vsel %vm419, %v2611, %v2623
        %v2625 = vsel %vm421, %v2614, %v2624
        %v2626 = vsel %vm423, %v2617, %v2625
        %v2627 = vsel %vm425, %v2620, %v2626
        %v2629 = vadd.f32 %v2514, %v2627
        %2630 = vst.msk [vmem:[#allocation3] sm:$0xff] %vm214, %v2629
        %v2631 = vld [vmem:[%s547] sm:$0xf]
        %v2632 = vld [vmem:[%s547 + $0x4] sm:$0xf]
        %v2633 = vld [vmem:[%s547 + $0x8] sm:$0xf]
        %v2634 = vld [vmem:[%s547 + $0xc] sm:$0xf]
        %v2635 = vld [vmem:[%s547 + $0x10] sm:$0xf]
        %v2636 = vld [vmem:[%s547 + $0x14] sm:$0xf]
        %v2637 = vld [vmem:[%s547 + $0x18] sm:$0xf]
        %v2638 = vld [vmem:[%s547 + $0x1c] sm:$0xf]
        %v2639 = vld [vmem:[%s547 + $0x20] sm:$0xf]
        %v2640 = vld [vmem:[%s547 + $0x24] sm:$0xf]
        %v2641 = vld [vmem:[%s547 + $0x28] sm:$0xf]
        %v2642 = vld [vmem:[%s547 + $0x2c] sm:$0xf]
        %v2643 = vld [vmem:[%s547 + $0x30] sm:$0xf]
        %v2644 = vld [vmem:[%s547 + $0x34] sm:$0xf]
        %v2645 = vld [vmem:[%s547 + $0x38] sm:$0xf]
        %v2646 = vld [vmem:[%s547 + $0x3c] sm:$0xf]
        %v2647 = vunpack.c.l.bf16 %v2631
        %v2648 = vunpack.c.l.bf16 %v2632
        %v2649 = vunpack.c.l.bf16 %v2633
        %v2650 = vunpack.c.l.bf16 %v2634
        %v2651 = vunpack.c.l.bf16 %v2635
        %v2652 = vunpack.c.l.bf16 %v2636
        %v2653 = vunpack.c.l.bf16 %v2637
        %v2654 = vunpack.c.l.bf16 %v2638
        %v2655 = vunpack.c.l.bf16 %v2639
        %v2656 = vunpack.c.l.bf16 %v2640
        %v2657 = vunpack.c.l.bf16 %v2641
        %v2658 = vunpack.c.l.bf16 %v2642
        %v2659 = vunpack.c.l.bf16 %v2643
        %v2660 = vunpack.c.l.bf16 %v2644
        %v2661 = vunpack.c.l.bf16 %v2645
        %v2662 = vunpack.c.l.bf16 %v2646
        %v2663 = vld [vmem:[#allocation2] sm:$0xff]
        %v2664 = vld [vmem:[%s1 + $0x5] sm:$0x1]
        %v2665 = vperm.slane %v2664, 0
        %v2666 = vmul.f32 %v2647, %v2665
        %v2667 = vmul.f32 %v2648, %v2665
        %v2668 = vmul.f32 %v2649, %v2665
        %v2669 = vmul.f32 %v2650, %v2665
        %v2670 = vmul.f32 %v2651, %v2665
        %v2671 = vmul.f32 %v2652, %v2665
        %v2672 = vmul.f32 %v2653, %v2665
        %v2673 = vmul.f32 %v2654, %v2665
        %v2674 = vmul.f32 %v2655, %v2665
        %v2675 = vmul.f32 %v2656, %v2665
        %v2676 = vmul.f32 %v2657, %v2665
        %v2677 = vmul.f32 %v2658, %v2665
        %v2678 = vmul.f32 %v2659, %v2665
        %v2679 = vmul.f32 %v2660, %v2665
        %v2680 = vmul.f32 %v2661, %v2665
        %v2681 = vmul.f32 %v2662, %v2665
        %v2682 = vsel %vm320, %v2666, 0.0
        %2683 = vadd.xlane.f32.xlu0 %v2682
        %v2684 = vpop.xlane.xlu0 %2683
        %v2685 = vsel %vm320, %v2667, 0.0
        %2686 = vadd.xlane.f32.xlu0 %v2685
        %v2687 = vpop.xlane.xlu0 %2686
        %v2688 = vsel %vm320, %v2668, 0.0
        %2689 = vadd.xlane.f32.xlu0 %v2688
        %v2690 = vpop.xlane.xlu0 %2689
        %v2691 = vsel %vm320, %v2669, 0.0
        %2692 = vadd.xlane.f32.xlu0 %v2691
        %v2693 = vpop.xlane.xlu0 %2692
        %v2694 = vsel %vm320, %v2670, 0.0
        %2695 = vadd.xlane.f32.xlu0 %v2694
        %v2696 = vpop.xlane.xlu0 %2695
        %v2697 = vsel %vm320, %v2671, 0.0
        %2698 = vadd.xlane.f32.xlu0 %v2697
        %v2699 = vpop.xlane.xlu0 %2698
        %v2700 = vsel %vm320, %v2672, 0.0
        %2701 = vadd.xlane.f32.xlu0 %v2700
        %v2702 = vpop.xlane.xlu0 %2701
        %v2703 = vsel %vm320, %v2673, 0.0
        %2704 = vadd.xlane.f32.xlu0 %v2703
        %v2705 = vpop.xlane.xlu0 %2704
        %v2706 = vsel %vm320, %v2674, 0.0
        %2707 = vadd.xlane.f32.xlu0 %v2706
        %v2708 = vpop.xlane.xlu0 %2707
        %v2709 = vsel %vm320, %v2675, 0.0
        %2710 = vadd.xlane.f32.xlu0 %v2709
        %v2711 = vpop.xlane.xlu0 %2710
        %v2712 = vsel %vm320, %v2676, 0.0
        %2713 = vadd.xlane.f32.xlu0 %v2712
        %v2714 = vpop.xlane.xlu0 %2713
        %v2715 = vsel %vm320, %v2677, 0.0
        %2716 = vadd.xlane.f32.xlu0 %v2715
        %v2717 = vpop.xlane.xlu0 %2716
        %v2718 = vsel %vm320, %v2678, 0.0
        %2719 = vadd.xlane.f32.xlu0 %v2718
        %v2720 = vpop.xlane.xlu0 %2719
        %v2721 = vsel %vm320, %v2679, 0.0
        %2722 = vadd.xlane.f32.xlu0 %v2721
        %v2723 = vpop.xlane.xlu0 %2722
        %v2724 = vsel %vm320, %v2680, 0.0
        %2725 = vadd.xlane.f32.xlu0 %v2724
        %v2726 = vpop.xlane.xlu0 %2725
        %v2727 = vsel %vm320, %v2681, 0.0
        %2728 = vadd.xlane.f32.xlu0 %v2727
        %v2729 = vpop.xlane.xlu0 %2728
        %v2746 = vperm.slane %v2684, %v386
        %v2747 = vperm.slane %v2687, %v388
        %v2748 = vsel %vm390, %v2747, %v2746
        %v2749 = vperm.slane %v2690, %v386
        %v2750 = vperm.slane %v2693, %v388
        %v2751 = vsel %vm390, %v2750, %v2749
        %v2752 = vperm.slane %v2696, %v386
        %v2753 = vperm.slane %v2699, %v388
        %v2754 = vsel %vm390, %v2753, %v2752
        %v2755 = vperm.slane %v2702, %v386
        %v2756 = vperm.slane %v2705, %v388
        %v2757 = vsel %vm390, %v2756, %v2755
        %v2758 = vperm.slane %v2708, %v386
        %v2759 = vperm.slane %v2711, %v388
        %v2760 = vsel %vm390, %v2759, %v2758
        %v2761 = vperm.slane %v2714, %v386
        %v2762 = vperm.slane %v2717, %v388
        %v2763 = vsel %vm390, %v2762, %v2761
        %v2764 = vperm.slane %v2720, %v386
        %v2765 = vperm.slane %v2723, %v388
        %v2766 = vsel %vm390, %v2765, %v2764
        %v2767 = vperm.slane %v2726, %v386
        %v2768 = vperm.slane %v2729, %v388
        %v2769 = vsel %vm390, %v2768, %v2767
        %v2770 = vsel %vm413, %v2751, %v2748
        %v2771 = vsel %vm415, %v2754, %v2770
        %v2772 = vsel %vm417, %v2757, %v2771
        %v2773 = vsel %vm419, %v2760, %v2772
        %v2774 = vsel %vm421, %v2763, %v2773
        %v2775 = vsel %vm423, %v2766, %v2774
        %v2776 = vsel %vm425, %v2769, %v2775
        %v2778 = vadd.f32 %v2663, %v2776
        %2779 = vst.msk [vmem:[#allocation2] sm:$0xff] %vm214, %v2778
        %v2780 = vld [vmem:[#allocation3] sm:$0xff]
        %v2781 = vld [vmem:[%s2 + $0x5] sm:$0x1]
        %v2782 = vperm.slane %v2781, 0
        %v2783 = vmul.f32 %v2647, %v2782
        %v2784 = vmul.f32 %v2648, %v2782
        %v2785 = vmul.f32 %v2649, %v2782
        %v2786 = vmul.f32 %v2650, %v2782
        %v2787 = vmul.f32 %v2651, %v2782
        %v2788 = vmul.f32 %v2652, %v2782
        %v2789 = vmul.f32 %v2653, %v2782
        %v2790 = vmul.f32 %v2654, %v2782
        %v2791 = vmul.f32 %v2655, %v2782
        %v2792 = vmul.f32 %v2656, %v2782
        %v2793 = vmul.f32 %v2657, %v2782
        %v2794 = vmul.f32 %v2658, %v2782
        %v2795 = vmul.f32 %v2659, %v2782
        %v2796 = vmul.f32 %v2660, %v2782
        %v2797 = vmul.f32 %v2661, %v2782
        %v2798 = vmul.f32 %v2662, %v2782
        %v2799 = vsel %vm320, %v2783, 0.0
        %2800 = vadd.xlane.f32.xlu0 %v2799
        %v2801 = vpop.xlane.xlu0 %2800
        %v2802 = vsel %vm320, %v2784, 0.0
        %2803 = vadd.xlane.f32.xlu0 %v2802
        %v2804 = vpop.xlane.xlu0 %2803
        %v2805 = vsel %vm320, %v2785, 0.0
        %2806 = vadd.xlane.f32.xlu0 %v2805
        %v2807 = vpop.xlane.xlu0 %2806
        %v2808 = vsel %vm320, %v2786, 0.0
        %2809 = vadd.xlane.f32.xlu0 %v2808
        %v2810 = vpop.xlane.xlu0 %2809
        %v2811 = vsel %vm320, %v2787, 0.0
        %2812 = vadd.xlane.f32.xlu0 %v2811
        %v2813 = vpop.xlane.xlu0 %2812
        %v2814 = vsel %vm320, %v2788, 0.0
        %2815 = vadd.xlane.f32.xlu0 %v2814
        %v2816 = vpop.xlane.xlu0 %2815
        %v2817 = vsel %vm320, %v2789, 0.0
        %2818 = vadd.xlane.f32.xlu0 %v2817
        %v2819 = vpop.xlane.xlu0 %2818
        %v2820 = vsel %vm320, %v2790, 0.0
        %2821 = vadd.xlane.f32.xlu0 %v2820
        %v2822 = vpop.xlane.xlu0 %2821
        %v2823 = vsel %vm320, %v2791, 0.0
        %2824 = vadd.xlane.f32.xlu0 %v2823
        %v2825 = vpop.xlane.xlu0 %2824
        %v2826 = vsel %vm320, %v2792, 0.0
        %2827 = vadd.xlane.f32.xlu0 %v2826
        %v2828 = vpop.xlane.xlu0 %2827
        %v2829 = vsel %vm320, %v2793, 0.0
        %2830 = vadd.xlane.f32.xlu0 %v2829
        %v2831 = vpop.xlane.xlu0 %2830
        %v2832 = vsel %vm320, %v2794, 0.0
        %2833 = vadd.xlane.f32.xlu0 %v2832
        %v2834 = vpop.xlane.xlu0 %2833
        %v2835 = vsel %vm320, %v2795, 0.0
        %2836 = vadd.xlane.f32.xlu0 %v2835
        %v2837 = vpop.xlane.xlu0 %2836
        %v2838 = vsel %vm320, %v2796, 0.0
        %2839 = vadd.xlane.f32.xlu0 %v2838
        %v2840 = vpop.xlane.xlu0 %2839
        %v2841 = vsel %vm320, %v2797, 0.0
        %2842 = vadd.xlane.f32.xlu0 %v2841
        %v2843 = vpop.xlane.xlu0 %2842
        %v2844 = vsel %vm320, %v2798, 0.0
        %2845 = vadd.xlane.f32.xlu0 %v2844
        %v2846 = vpop.xlane.xlu0 %2845
        %v2863 = vperm.slane %v2801, %v386
        %v2864 = vperm.slane %v2804, %v388
        %v2865 = vsel %vm390, %v2864, %v2863
        %v2866 = vperm.slane %v2807, %v386
        %v2867 = vperm.slane %v2810, %v388
        %v2868 = vsel %vm390, %v2867, %v2866
        %v2869 = vperm.slane %v2813, %v386
        %v2870 = vperm.slane %v2816, %v388
        %v2871 = vsel %vm390, %v2870, %v2869
        %v2872 = vperm.slane %v2819, %v386
        %v2873 = vperm.slane %v2822, %v388
        %v2874 = vsel %vm390, %v2873, %v2872
        %v2875 = vperm.slane %v2825, %v386
        %v2876 = vperm.slane %v2828, %v388
        %v2877 = vsel %vm390, %v2876, %v2875
        %v2878 = vperm.slane %v2831, %v386
        %v2879 = vperm.slane %v2834, %v388
        %v2880 = vsel %vm390, %v2879, %v2878
        %v2881 = vperm.slane %v2837, %v386
        %v2882 = vperm.slane %v2840, %v388
        %v2883 = vsel %vm390, %v2882, %v2881
        %v2884 = vperm.slane %v2843, %v386
        %v2885 = vperm.slane %v2846, %v388
        %v2886 = vsel %vm390, %v2885, %v2884
        %v2887 = vsel %vm413, %v2868, %v2865
        %v2888 = vsel %vm415, %v2871, %v2887
        %v2889 = vsel %vm417, %v2874, %v2888
        %v2890 = vsel %vm419, %v2877, %v2889
        %v2891 = vsel %vm421, %v2880, %v2890
        %v2892 = vsel %vm423, %v2883, %v2891
        %v2893 = vsel %vm425, %v2886, %v2892
        %v2895 = vadd.f32 %v2780, %v2893
        %2896 = vst.msk [vmem:[#allocation3] sm:$0xff] %vm214, %v2895
        %v2897 = vld [vmem:[%s814] sm:$0xf]
        %v2898 = vld [vmem:[%s814 + $0x4] sm:$0xf]
        %v2899 = vld [vmem:[%s814 + $0x8] sm:$0xf]
        %v2900 = vld [vmem:[%s814 + $0xc] sm:$0xf]
        %v2901 = vld [vmem:[%s814 + $0x10] sm:$0xf]
        %v2902 = vld [vmem:[%s814 + $0x14] sm:$0xf]
        %v2903 = vld [vmem:[%s814 + $0x18] sm:$0xf]
        %v2904 = vld [vmem:[%s814 + $0x1c] sm:$0xf]
        %v2905 = vld [vmem:[%s814 + $0x20] sm:$0xf]
        %v2906 = vld [vmem:[%s814 + $0x24] sm:$0xf]
        %v2907 = vld [vmem:[%s814 + $0x28] sm:$0xf]
        %v2908 = vld [vmem:[%s814 + $0x2c] sm:$0xf]
        %v2909 = vld [vmem:[%s814 + $0x30] sm:$0xf]
        %v2910 = vld [vmem:[%s814 + $0x34] sm:$0xf]
        %v2911 = vld [vmem:[%s814 + $0x38] sm:$0xf]
        %v2912 = vld [vmem:[%s814 + $0x3c] sm:$0xf]
        %v2913 = vunpack.c.l.bf16 %v2897
        %v2914 = vunpack.c.l.bf16 %v2898
        %v2915 = vunpack.c.l.bf16 %v2899
        %v2916 = vunpack.c.l.bf16 %v2900
        %v2917 = vunpack.c.l.bf16 %v2901
        %v2918 = vunpack.c.l.bf16 %v2902
        %v2919 = vunpack.c.l.bf16 %v2903
        %v2920 = vunpack.c.l.bf16 %v2904
        %v2921 = vunpack.c.l.bf16 %v2905
        %v2922 = vunpack.c.l.bf16 %v2906
        %v2923 = vunpack.c.l.bf16 %v2907
        %v2924 = vunpack.c.l.bf16 %v2908
        %v2925 = vunpack.c.l.bf16 %v2909
        %v2926 = vunpack.c.l.bf16 %v2910
        %v2927 = vunpack.c.l.bf16 %v2911
        %v2928 = vunpack.c.l.bf16 %v2912
        %v2929 = vld [vmem:[#allocation2] sm:$0xff]
        %v2930 = vld [vmem:[%s1 + $0x8] sm:$0x1]
        %v2931 = vperm.slane %v2930, 0
        %v2932 = vmul.f32 %v2913, %v2931
        %v2933 = vmul.f32 %v2914, %v2931
        %v2934 = vmul.f32 %v2915, %v2931
        %v2935 = vmul.f32 %v2916, %v2931
        %v2936 = vmul.f32 %v2917, %v2931
        %v2937 = vmul.f32 %v2918, %v2931
        %v2938 = vmul.f32 %v2919, %v2931
        %v2939 = vmul.f32 %v2920, %v2931
        %v2940 = vmul.f32 %v2921, %v2931
        %v2941 = vmul.f32 %v2922, %v2931
        %v2942 = vmul.f32 %v2923, %v2931
        %v2943 = vmul.f32 %v2924, %v2931
        %v2944 = vmul.f32 %v2925, %v2931
        %v2945 = vmul.f32 %v2926, %v2931
        %v2946 = vmul.f32 %v2927, %v2931
        %v2947 = vmul.f32 %v2928, %v2931
        %v2948 = vsel %vm320, %v2932, 0.0
        %2949 = vadd.xlane.f32.xlu0 %v2948
        %v2950 = vpop.xlane.xlu0 %2949
        %v2951 = vsel %vm320, %v2933, 0.0
        %2952 = vadd.xlane.f32.xlu0 %v2951
        %v2953 = vpop.xlane.xlu0 %2952
        %v2954 = vsel %vm320, %v2934, 0.0
        %2955 = vadd.xlane.f32.xlu0 %v2954
        %v2956 = vpop.xlane.xlu0 %2955
        %v2957 = vsel %vm320, %v2935, 0.0
        %2958 = vadd.xlane.f32.xlu0 %v2957
        %v2959 = vpop.xlane.xlu0 %2958
        %v2960 = vsel %vm320, %v2936, 0.0
        %2961 = vadd.xlane.f32.xlu0 %v2960
        %v2962 = vpop.xlane.xlu0 %2961
        %v2963 = vsel %vm320, %v2937, 0.0
        %2964 = vadd.xlane.f32.xlu0 %v2963
        %v2965 = vpop.xlane.xlu0 %2964
        %v2966 = vsel %vm320, %v2938, 0.0
        %2967 = vadd.xlane.f32.xlu0 %v2966
        %v2968 = vpop.xlane.xlu0 %2967
        %v2969 = vsel %vm320, %v2939, 0.0
        %2970 = vadd.xlane.f32.xlu0 %v2969
        %v2971 = vpop.xlane.xlu0 %2970
        %v2972 = vsel %vm320, %v2940, 0.0
        %2973 = vadd.xlane.f32.xlu0 %v2972
        %v2974 = vpop.xlane.xlu0 %2973
        %v2975 = vsel %vm320, %v2941, 0.0
        %2976 = vadd.xlane.f32.xlu0 %v2975
        %v2977 = vpop.xlane.xlu0 %2976
        %v2978 = vsel %vm320, %v2942, 0.0
        %2979 = vadd.xlane.f32.xlu0 %v2978
        %v2980 = vpop.xlane.xlu0 %2979
        %v2981 = vsel %vm320, %v2943, 0.0
        %2982 = vadd.xlane.f32.xlu0 %v2981
        %v2983 = vpop.xlane.xlu0 %2982
        %v2984 = vsel %vm320, %v2944, 0.0
        %2985 = vadd.xlane.f32.xlu0 %v2984
        %v2986 = vpop.xlane.xlu0 %2985
        %v2987 = vsel %vm320, %v2945, 0.0
        %2988 = vadd.xlane.f32.xlu0 %v2987
        %v2989 = vpop.xlane.xlu0 %2988
        %v2990 = vsel %vm320, %v2946, 0.0
        %2991 = vadd.xlane.f32.xlu0 %v2990
        %v2992 = vpop.xlane.xlu0 %2991
        %v2993 = vsel %vm320, %v2947, 0.0
        %2994 = vadd.xlane.f32.xlu0 %v2993
        %v2995 = vpop.xlane.xlu0 %2994
        %v3012 = vperm.slane %v2950, %v386
        %v3013 = vperm.slane %v2953, %v388
        %v3014 = vsel %vm390, %v3013, %v3012
        %v3015 = vperm.slane %v2956, %v386
        %v3016 = vperm.slane %v2959, %v388
        %v3017 = vsel %vm390, %v3016, %v3015
        %v3018 = vperm.slane %v2962, %v386
        %v3019 = vperm.slane %v2965, %v388
        %v3020 = vsel %vm390, %v3019, %v3018
        %v3021 = vperm.slane %v2968, %v386
        %v3022 = vperm.slane %v2971, %v388
        %v3023 = vsel %vm390, %v3022, %v3021
        %v3024 = vperm.slane %v2974, %v386
        %v3025 = vperm.slane %v2977, %v388
        %v3026 = vsel %vm390, %v3025, %v3024
        %v3027 = vperm.slane %v2980, %v386
        %v3028 = vperm.slane %v2983, %v388
        %v3029 = vsel %vm390, %v3028, %v3027
        %v3030 = vperm.slane %v2986, %v386
        %v3031 = vperm.slane %v2989, %v388
        %v3032 = vsel %vm390, %v3031, %v3030
        %v3033 = vperm.slane %v2992, %v386
        %v3034 = vperm.slane %v2995, %v388
        %v3035 = vsel %vm390, %v3034, %v3033
        %v3036 = vsel %vm413, %v3017, %v3014
        %v3037 = vsel %vm415, %v3020, %v3036
        %v3038 = vsel %vm417, %v3023, %v3037
        %v3039 = vsel %vm419, %v3026, %v3038
        %v3040 = vsel %vm421, %v3029, %v3039
        %v3041 = vsel %vm423, %v3032, %v3040
        %v3042 = vsel %vm425, %v3035, %v3041
        %v3044 = vadd.f32 %v2929, %v3042
        %3045 = vst.msk [vmem:[#allocation2] sm:$0xff] %vm214, %v3044
        %v3046 = vld [vmem:[#allocation3] sm:$0xff]
        %v3047 = vld [vmem:[%s2 + $0x8] sm:$0x1]
        %v3048 = vperm.slane %v3047, 0
        %v3049 = vmul.f32 %v2913, %v3048
        %v3050 = vmul.f32 %v2914, %v3048
        %v3051 = vmul.f32 %v2915, %v3048
        %v3052 = vmul.f32 %v2916, %v3048
        %v3053 = vmul.f32 %v2917, %v3048
        %v3054 = vmul.f32 %v2918, %v3048
        %v3055 = vmul.f32 %v2919, %v3048
        %v3056 = vmul.f32 %v2920, %v3048
        %v3057 = vmul.f32 %v2921, %v3048
        %v3058 = vmul.f32 %v2922, %v3048
        %v3059 = vmul.f32 %v2923, %v3048
        %v3060 = vmul.f32 %v2924, %v3048
        %v3061 = vmul.f32 %v2925, %v3048
        %v3062 = vmul.f32 %v2926, %v3048
        %v3063 = vmul.f32 %v2927, %v3048
        %v3064 = vmul.f32 %v2928, %v3048
        %v3065 = vsel %vm320, %v3049, 0.0
        %3066 = vadd.xlane.f32.xlu0 %v3065
        %v3067 = vpop.xlane.xlu0 %3066
        %v3068 = vsel %vm320, %v3050, 0.0
        %3069 = vadd.xlane.f32.xlu0 %v3068
        %v3070 = vpop.xlane.xlu0 %3069
        %v3071 = vsel %vm320, %v3051, 0.0
        %3072 = vadd.xlane.f32.xlu0 %v3071
        %v3073 = vpop.xlane.xlu0 %3072
        %v3074 = vsel %vm320, %v3052, 0.0
        %3075 = vadd.xlane.f32.xlu0 %v3074
        %v3076 = vpop.xlane.xlu0 %3075
        %v3077 = vsel %vm320, %v3053, 0.0
        %3078 = vadd.xlane.f32.xlu0 %v3077
        %v3079 = vpop.xlane.xlu0 %3078
        %v3080 = vsel %vm320, %v3054, 0.0
        %3081 = vadd.xlane.f32.xlu0 %v3080
        %v3082 = vpop.xlane.xlu0 %3081
        %v3083 = vsel %vm320, %v3055, 0.0
        %3084 = vadd.xlane.f32.xlu0 %v3083
        %v3085 = vpop.xlane.xlu0 %3084
        %v3086 = vsel %vm320, %v3056, 0.0
        %3087 = vadd.xlane.f32.xlu0 %v3086
        %v3088 = vpop.xlane.xlu0 %3087
        %v3089 = vsel %vm320, %v3057, 0.0
        %3090 = vadd.xlane.f32.xlu0 %v3089
        %v3091 = vpop.xlane.xlu0 %3090
        %v3092 = vsel %vm320, %v3058, 0.0
        %3093 = vadd.xlane.f32.xlu0 %v3092
        %v3094 = vpop.xlane.xlu0 %3093
        %v3095 = vsel %vm320, %v3059, 0.0
        %3096 = vadd.xlane.f32.xlu0 %v3095
        %v3097 = vpop.xlane.xlu0 %3096
        %v3098 = vsel %vm320, %v3060, 0.0
        %3099 = vadd.xlane.f32.xlu0 %v3098
        %v3100 = vpop.xlane.xlu0 %3099
        %v3101 = vsel %vm320, %v3061, 0.0
        %3102 = vadd.xlane.f32.xlu0 %v3101
        %v3103 = vpop.xlane.xlu0 %3102
        %v3104 = vsel %vm320, %v3062, 0.0
        %3105 = vadd.xlane.f32.xlu0 %v3104
        %v3106 = vpop.xlane.xlu0 %3105
        %v3107 = vsel %vm320, %v3063, 0.0
        %3108 = vadd.xlane.f32.xlu0 %v3107
        %v3109 = vpop.xlane.xlu0 %3108
        %v3110 = vsel %vm320, %v3064, 0.0
        %3111 = vadd.xlane.f32.xlu0 %v3110
        %v3112 = vpop.xlane.xlu0 %3111
        %v3129 = vperm.slane %v3067, %v386
        %v3130 = vperm.slane %v3070, %v388
        %v3131 = vsel %vm390, %v3130, %v3129
        %v3132 = vperm.slane %v3073, %v386
        %v3133 = vperm.slane %v3076, %v388
        %v3134 = vsel %vm390, %v3133, %v3132
        %v3135 = vperm.slane %v3079, %v386
        %v3136 = vperm.slane %v3082, %v388
        %v3137 = vsel %vm390, %v3136, %v3135
        %v3138 = vperm.slane %v3085, %v386
        %v3139 = vperm.slane %v3088, %v388
        %v3140 = vsel %vm390, %v3139, %v3138
        %v3141 = vperm.slane %v3091, %v386
        %v3142 = vperm.slane %v3094, %v388
        %v3143 = vsel %vm390, %v3142, %v3141
        %v3144 = vperm.slane %v3097, %v386
        %v3145 = vperm.slane %v3100, %v388
        %v3146 = vsel %vm390, %v3145, %v3144
        %v3147 = vperm.slane %v3103, %v386
        %v3148 = vperm.slane %v3106, %v388
        %v3149 = vsel %vm390, %v3148, %v3147
        %v3150 = vperm.slane %v3109, %v386
        %v3151 = vperm.slane %v3112, %v388
        %v3152 = vsel %vm390, %v3151, %v3150
        %v3153 = vsel %vm413, %v3134, %v3131
        %v3154 = vsel %vm415, %v3137, %v3153
        %v3155 = vsel %vm417, %v3140, %v3154
        %v3156 = vsel %vm419, %v3143, %v3155
        %v3157 = vsel %vm421, %v3146, %v3156
        %v3158 = vsel %vm423, %v3149, %v3157
        %v3159 = vsel %vm425, %v3152, %v3158
        %v3161 = vadd.f32 %v3046, %v3159
        %3162 = vst.msk [vmem:[#allocation3] sm:$0xff] %vm214, %v3161
        %v3163 = vld [vmem:[#allocation2] sm:$0xff]
        %3164 = vst.msk [vmem:[%s200] sm:$0xff] %vm214, %v3163
        %v3165 = vld [vmem:[#allocation3] sm:$0xff]
        %s3166 = scalar_lea.vmem %s200, 8 [#allocation5]
        %3167 = vst.msk [vmem:[%s3166] sm:$0xff] %vm214, %v3165
        %s3168 = sand.u32 %s126, 1
        %s3169 = sand.u32 %s126, 1
        %s3170 = smul.addr %s3169, 16
        %s3171 = scalar_lea.vmem [#allocation5], %s3170
        // Predicated region
        $region37: #{_lambda_.26} parent=35 // pred_check
          %p3172 = pneg %p136
        $region38: #{_lambda_.26} parent=35 // pred_check_branch
          %3174 = sbr.rel (%p3172) target = $region40
        $region39: #{_lambda_.26} parent=35 // pred_region
          %s3175 = smul.addr %s19, 4
          %s3176 = sadd.s32 %s20, %s3175
          %s3177 = smul.addr %s3176, 8
          %s3178 = scalar_lea.vmem %s4, %s3177
          // Predicated region
          $region41: #{_lambda_.26} parent=39 // pred_check
            _
          $region42: #{_lambda_.26} parent=39 // pred_check_branch
            %3180 = sbr.rel (0) target = $region44
          $region43: #{_lambda_.26} parent=39 // pred_region
            // Predicated region
            $region45: #{_lambda_.26} parent=43 // pred_check
              _
            $region46: #{_lambda_.26} parent=43 // pred_check_branch
              %3182 = sbr.rel (0) target = $region48
            $region47: #{_lambda_.26} parent=43 // pred_region
              // Predicated region
              $region60: #{_lambda_.26} parent=47 // pred_check
                _
              $region61: #{_lambda_.26} parent=47 // pred_check_branch
                %3200 = sbr.rel (0) target = $region63
              $region62: #{_lambda_.26} parent=47 // pred_region
                loop: start=0, step=1, limit=1
                $region64: #{_lambda_.26} parent=62 // loop_pre_header
                  _
                $region65: #{_lambda_.26} parent=62 // loop_header
                  %s3202 = sphi 0, %s3206
                  %p3203 = scmp.ge.s32.totalorder %s3202, 1
                  %s3207 = sphi %s3171, %s3171
                  %s3208 = sphi %s3178, %s3178
                $region66: #{_lambda_.26} parent=62 // loop_header_branch
                  %3205 = sbr.rel (%p3203) target = $region70
                $region67: #{_lambda_.26} parent=62 // loop_body
                  %v3209 = vld [vmem:[%s3207] sm:$0xff]
                  %3210 = vst [vmem:[%s3208] sm:$0xff] %v3209
                  %v3211 = vld [vmem:[%s3207 + $0x8] sm:$0xff]
                  %3212 = vst [vmem:[%s3208 + $0x10] sm:$0xff] %v3211
                $region68: #{_lambda_.26} parent=62 // loop_footer
                  %s3206 = sadd.s32 1, %s3202
                $region69: #{_lambda_.26} parent=62 // loop_footer_branch
                  %3201 = sbr.rel target = $region65
                $region70: #{_lambda_.26} parent=62 // loop_exit
                  _
              $region63: #{_lambda_.26} parent=47 // pred_fallthru
                _
              // Predicated region
              $region71: #{_lambda_.26} parent=47 // pred_check
                _
              $region72: #{_lambda_.26} parent=47 // pred_check_branch
                %3214 = sbr.rel target = $region74
              $region73: #{_lambda_.26} parent=47 // pred_region
                _
              $region74: #{_lambda_.26} parent=47 // pred_fallthru
                _
            $region48: #{_lambda_.26} parent=43 // pred_fallthru
              _
            // Predicated region
            $region49: #{_lambda_.26} parent=43 // pred_check
              _
            $region50: #{_lambda_.26} parent=43 // pred_check_branch
              %3184 = sbr.rel target = $region52
            $region51: #{_lambda_.26} parent=43 // pred_region
              %s3186 = ssub.s32 256, 1
              loop: start=0, step=1, limit=1
              $region53: #{_lambda_.26} parent=51 // loop_pre_header
                _
              $region54: #{_lambda_.26} parent=51 // loop_header
                %s3188 = sphi 0, %s3192
                %p3189 = scmp.ge.s32.totalorder %s3188, 1
                %s3193 = sphi %s3171, %s3171
                %s3194 = sphi %s3178, %s3178
              $region55: #{_lambda_.26} parent=51 // loop_header_branch
                %3191 = sbr.rel (%p3189) target = $region59
              $region56: #{_lambda_.26} parent=51 // loop_body
                %v3195 = vld [vmem:[%s3193] sm:%s3186]
                %3196 = vst [vmem:[%s3194] sm:%s3186] %v3195
                %v3197 = vld [vmem:[%s3193 + $0x8] sm:%s3186]
                %3198 = vst [vmem:[%s3194 + $0x10] sm:%s3186] %v3197
              $region57: #{_lambda_.26} parent=51 // loop_footer
                %s3192 = sadd.s32 1, %s3188
              $region58: #{_lambda_.26} parent=51 // loop_footer_branch
                %3187 = sbr.rel target = $region54
              $region59: #{_lambda_.26} parent=51 // loop_exit
                _
            $region52: #{_lambda_.26} parent=43 // pred_fallthru
              _
          $region44: #{_lambda_.26} parent=39 // pred_fallthru
            _
          %3215 = vnop
        $region40: #{_lambda_.26} parent=35 // pred_fallthru
          _
      $region36: #{_lambda_.26} parent=5 // pred_fallthru
        _
      %p3216 = scmp.le.s32.totalorder 2, %s10
      // Predicated region
      $region75: #{_lambda_.26} parent=5 // pred_check
        %p3217 = pneg %p3216
      $region76: #{_lambda_.26} parent=5 // pred_check_branch
        %3219 = sbr.rel (%p3217) target = $region78
      $region77: #{_lambda_.26} parent=5 // pred_region
        %s3220 = ssub.s32 %s10, 2
        // Predicated region
        $region79: #{_lambda_.26} parent=77 // pred_check
          %p3221 = pneg %p142
        $region80: #{_lambda_.26} parent=77 // pred_check_branch
          %3223 = sbr.rel (%p3221) target = $region82
        $region81: #{_lambda_.26} parent=77 // pred_region
          %s3224 = sand.u32 %s127, 1
          %s3225 = sand.u32 %s127, 1
          %s3226 = smul.addr %s3225, 16
          %s3227 = scalar_lea.vmem [#allocation5], %s3226
        $region82: #{_lambda_.26} parent=77 // pred_fallthru
          _
      $region78: #{_lambda_.26} parent=5 // pred_fallthru
        _
    $region6: #{_lambda_.26} parent=1 // loop_footer
      %s14 = sadd.s32 1, %s10
    $region7: #{_lambda_.26} parent=1 // loop_footer_branch
      %9 = sbr.rel target = $region3
    $region8: #{_lambda_.26} parent=1 // loop_exit
      _

</llo_original>
